<compile_context>
chip_gen: v7x
topology: tpu7x:2x2x1
jax: 0.10.0
libtpu: 0.0.40
codegen_flags: <defaults>
</compile_context>

<pallas_src>
import math
from functools import partial

import jax
import jax.numpy as jnp
from jax.experimental import pallas as pl
from jax.experimental.pallas import tpu as pltpu


HALO = 16  # halo rows fetched from the next row tile; must cover K'-1 (K' <= 7 here)


def _round_up(x, m):
    return (x + m - 1) // m * m


# ----------------------------------------------------------------------------
# Pallas kernel: generic fused "tapped" conv
#   out[m, :] = act( sum_d  x[m + d, :] @ W[d]  + bias )  (+ residual)
# ----------------------------------------------------------------------------
def _tapped_conv_kernel(x_ref, h_ref, w_ref, b_ref, *rest, ktaps, act, add_residual):
    if add_residual:
        r_ref, o_ref = rest
    else:
        (o_ref,) = rest
    tl = o_ref.shape[1]
    co = o_ref.shape[2]

    # (TL + HALO, Ci) bf16 window: current row tile + halo rows from the next tile.
    win = jnp.concatenate([x_ref[0], h_ref[0]], axis=0)

    acc = jnp.zeros((tl, co), jnp.float32)
    for d in range(ktaps):                        # static, fully unrolled tap loop
        part = jnp.dot(win, w_ref[d], preferred_element_type=jnp.float32)
        acc = acc + part[d:d + tl, :]             # shift result rows by the tap offset

    y = acc + b_ref[...]                          # folded-BatchNorm bias (f32)
    if act == "relu":
        y = jnp.maximum(y, 0.0)
    elif act == "tanh":
        y = jnp.tanh(y)
    if add_residual:
        y = y + r_ref[0].astype(jnp.float32)
    o_ref[0] = y.astype(o_ref.dtype)


def tapped_conv(x, w, bias, rout, act="none", residual=None,
                out_dtype=jnp.bfloat16, max_tl=256):
    """x: (B, R, Ci) bf16 with R >= rout + K' - 1 (already padded left/right);
    w: (K', Ci, Co) bf16 (BN scale folded in); bias: (Co,) f32;
    residual: (B, rout, Co) bf16 or None.  Returns (B, rout, Co)."""
    B, R, Ci = x.shape
    Kt, Ci2, Co = w.shape
    assert Ci2 == Ci and Kt <= HALO + 1

    TL = min(max_tl, _round_up(rout, HALO))
    nblk = pl.cdiv(rout, TL)
    rp = nblk * TL
    need = rp + HALO
    assert need >= R
    x = jnp.pad(x, ((0, 0), (0, need - R), (0, 0)))
    b2 = bias.reshape(1, Co).astype(jnp.float32)

    inputs = [x, x, w, b2]
    in_specs = [
        pl.BlockSpec((1, TL, Ci), lambda b, i: (b, i, 0)),
        pl.BlockSpec((1, HALO, Ci), lambda b, i: (b, (i + 1) * (TL // HALO), 0)),
        pl.BlockSpec((Kt, Ci, Co), lambda b, i: (0, 0, 0)),
        pl.BlockSpec((1, Co), lambda b, i: (0, 0)),
    ]
    add_res = residual is not None
    if add_res:
        res = jnp.pad(residual, ((0, 0), (0, rp - residual.shape[1]), (0, 0)))
        inputs.append(res)
        in_specs.append(pl.BlockSpec((1, TL, Co), lambda b, i: (b, i, 0)))

    out = pl.pallas_call(
        partial(_tapped_conv_kernel, ktaps=Kt, act=act, add_residual=add_res),
        out_shape=jax.ShapeDtypeStruct((B, rp, Co), out_dtype),
        grid=(B, nblk),
        in_specs=in_specs,
        out_specs=pl.BlockSpec((1, TL, Co), lambda b, i: (b, i, 0)),
        compiler_params=pltpu.CompilerParams(
            dimension_semantics=("parallel", "parallel"),
            vmem_limit_bytes=48 * 1024 * 1024),
    )(*inputs)
    return out[:, :rout, :]


# ----------------------------------------------------------------------------
# Layer wrappers (phase packing / polyphase glue only; no HBM im2col)
# ----------------------------------------------------------------------------
def conv_layer(h, w_packed, bias, *, K, stride, padding, act, residual=None,
               out_dtype=jnp.bfloat16):
    """Strided Conv1d + folded BN + activation (+ residual).  h: (B, L, Cin) bf16."""
    B, L, Cin = h.shape
    Kp = w_packed.shape[0]
    Lout = (L + 2 * padding - K) // stride + 1
    Lp = (Lout - 1) * stride + Kp * stride           # padded length, multiple of stride
    left, right = padding, Lp - padding - L
    assert right >= 0
    hp = jnp.pad(h, ((0, 0), (left, right), (0, 0)))
    xph = hp.reshape(B, Lp // stride, stride * Cin)  # phase-packed stride-1 view (free)
    return tapped_conv(xph, w_packed, bias, Lout, act=act, residual=residual,
                       out_dtype=out_dtype)


def deconv_layer(h, w_packed, bias, *, K, stride, padding, act,
                 out_dtype=jnp.bfloat16):
    """ConvTranspose1d + folded BN + activation via polyphase decomposition."""
    B, L, Cin = h.shape
    assert K % stride == 0 and K - stride - 2 * padding == 0
    t_hi = (stride - 1 + padding) // stride
    t_lo = padding // stride - (K // stride - 1)
    hp = jnp.pad(h, ((0, 0), (-t_lo, t_hi), (0, 0)))
    ph = tapped_conv(hp, w_packed, bias, L, act=act, out_dtype=out_dtype)
    Cout = ph.shape[-1] // stride
    return ph.reshape(B, L * stride, Cout)           # interleave the output phases (free)


# ----------------------------------------------------------------------------
# Weight packing (done once at init; BN scale folded in, cast to bf16)
# ----------------------------------------------------------------------------
def _pack_conv_weight(w, scale, stride):
    """PyTorch Conv1d weight (Cout, Cin, K) -> phase-packed taps (K', stride*Cin, Cout)."""
    Cout, Cin, K = w.shape
    Kp = (K - 1) // stride + 1
    wpad = jnp.pad(w, ((0, 0), (0, 0), (0, Kp * stride - K)))
    wp = (wpad.reshape(Cout, Cin, Kp, stride)
              .transpose(2, 3, 1, 0)                 # (K', stride, Cin, Cout)
              .reshape(Kp, stride * Cin, Cout))
    return (wp * scale[None, None, :]).astype(jnp.bfloat16)


def _pack_deconv_weight(w, scale, stride, padding):
    """PyTorch ConvTranspose1d weight (Cin, Cout, K) -> polyphase taps
    (K', Cin, stride*Cout); output channel r*Cout+co holds output phase r."""
    Cin, Cout, K = w.shape
    assert K % stride == 0
    t_hi = (stride - 1 + padding) // stride
    t_lo = padding // stride - (K // stride - 1)
    Kp = t_hi - t_lo + 1
    d = jnp.arange(Kp)[:, None]
    r = jnp.arange(stride)[None, :]
    k = r + padding - stride * (d + t_lo)            # (K', stride) tap -> kernel index
    valid = ((k >= 0) & (k < K)).astype(w.dtype)
    wg = jnp.take(w, jnp.clip(k, 0, K - 1), axis=2)  # (Cin, Cout, K', stride)
    wg = wg * valid[None, None, :, :]
    wp = wg.transpose(2, 0, 3, 1).reshape(Kp, Cin, stride * Cout)
    wp = wp * jnp.tile(scale, stride)[None, None, :]
    return wp.astype(jnp.bfloat16)


# ----------------------------------------------------------------------------
# Deterministic parameter construction (matches module __init__ shapes)
# ----------------------------------------------------------------------------
def _xavier_uniform(key, shape):
    receptive = math.prod(shape[2:]) if len(shape) > 2 else 1
    fan_in = shape[1] * receptive
    fan_out = shape[0] * receptive
    bound = math.sqrt(6.0 / (fan_in + fan_out))
    return jax.random.uniform(key, shape, jnp.float32, -bound, bound)


def _bn_fold(key, c, eps=1e-5):
    # Inference-mode BatchNorm folded to a per-channel (scale, bias) affine.
    kg, kb, km, kv = jax.random.split(key, 4)
    gamma = 1.0 + 0.1 * jax.random.normal(kg, (c,), jnp.float32)
    beta = 0.1 * jax.random.normal(kb, (c,), jnp.float32)
    mean = 0.1 * jax.random.normal(km, (c,), jnp.float32)
    var = 1.0 + 0.1 * jax.random.uniform(kv, (c,), jnp.float32)
    scale = gamma / jnp.sqrt(var + eps)
    bias = beta - mean * scale
    return scale, bias


def init_params(key, conv_dim=32, n_res_blocks=6):
    keys = iter(jax.random.split(key, 128))

    def conv_p(cin, cout, k, stride, bn=True):
        w = _xavier_uniform(next(keys), (cout, cin, k))
        if bn:
            s, b = _bn_fold(next(keys), cout)
        else:
            s, b = jnp.ones((cout,), jnp.float32), jnp.zeros((cout,), jnp.float32)
        return {"w": _pack_conv_weight(w, s, stride), "b": b}

    def deconv_p(cin, cout, k, stride, padding, bn=True):
        w = _xavier_uniform(next(keys), (cin, cout, k))
        if bn:
            s, b = _bn_fold(next(keys), cout)
        else:
            s, b = jnp.ones((cout,), jnp.float32), jnp.zeros((cout,), jnp.float32)
        return {"w": _pack_deconv_weight(w, s, stride, padding),
                "b": jnp.tile(b, stride)}

    cd = conv_dim
    return {
        "conv1": conv_p(1, cd, 25, 4),
        "conv2": conv_p(cd, cd * 4, 25, 4),
        "conv3": conv_p(cd * 4, cd * 8, 25, 4),
        "conv4": conv_p(cd * 8, cd * 16, 25, 4),
        "res": [{"c1": conv_p(cd * 16, cd * 16, 3, 1),
                 "c2": conv_p(cd * 16, cd * 16, 3, 1)}
                for _ in range(n_res_blocks)],
        "deconv1": deconv_p(cd * 16, cd * 8, 24, 4, 10),
        "deconv2": deconv_p(cd * 8, cd * 4, 24, 4, 10),
        "deconv3": deconv_p(cd * 4, cd, 24, 4, 10),
        "deconv4": deconv_p(cd, 1, 24, 4, 10, bn=False),
    }


# ----------------------------------------------------------------------------
# Full forward pass (mirrors CycleGenerator.forward)
# ----------------------------------------------------------------------------
def cycle_generator_forward(params, x):
    """x: (B, 1, L) NCW float32 (matches nn.Conv1d input); returns (B, 1, L)."""
    h = x.transpose(0, 2, 1).astype(jnp.bfloat16)          # -> (B, L, C) channels-last

    for name in ("conv1", "conv2", "conv3", "conv4"):
        p = params[name]
        h = conv_layer(h, p["w"], p["b"], K=25, stride=4, padding=11, act="relu")

    for rb in params["res"]:
        c1, c2 = rb["c1"], rb["c2"]
        t = conv_layer(h, c1["w"], c1["b"], K=3, stride=1, padding=1, act="relu")
        h = conv_layer(t, c2["w"], c2["b"], K=3, stride=1, padding=1, act="none",
                       residual=h)

    for name in ("deconv1", "deconv2", "deconv3"):
        p = params[name]
        h = deconv_layer(h, p["w"], p["b"], K=24, stride=4, padding=10, act="relu")
    p = params["deconv4"]
    h = deconv_layer(h, p["w"], p["b"], K=24, stride=4, padding=10, act="tanh",
                     out_dtype=jnp.float32)

    return h.transpose(0, 2, 1)                            # back to (B, 1, L) NCW


if __name__ == "__main__":
    key = jax.random.PRNGKey(0)
    kp, kx = jax.random.split(key)

    # Small but structurally faithful configuration.
    conv_dim, n_res_blocks = 8, 2
    B, L = 2, 256

    params = init_params(kp, conv_dim=conv_dim, n_res_blocks=n_res_blocks)
    x = jax.random.normal(kx, (B, 1, L), jnp.float32)      # NCW, matches nn.Conv1d input

    fwd = jax.jit(cycle_generator_forward)
    y = jax.block_until_ready(fwd(params, x))

    assert y.shape == (B, 1, L), y.shape
    assert bool(jnp.all(jnp.isfinite(y)))
    assert bool(jnp.all(jnp.abs(y) <= 1.0 + 1e-6))         # tanh output range
    print("KERNEL_OK")
</pallas_src>

<mosaic_0001>
module attributes {stable_mosaic.version = 11 : i64} {
  func.func @_tapped_conv_kernel(%arg0: i32, %arg1: i32, %arg2: memref<1x64x4xbf16, #tpu.memory_space<vmem>>, %arg3: memref<1x16x4xbf16, #tpu.memory_space<vmem>>, %arg4: memref<7x4x8xbf16, #tpu.memory_space<vmem>>, %arg5: memref<1x8xf32, #tpu.memory_space<vmem>>, %arg6: memref<1x64x8xbf16, #tpu.memory_space<vmem>>) attributes {dimension_semantics = [#tpu.dimension_semantics<parallel>, #tpu.dimension_semantics<parallel>], iteration_bounds = array<i64: 2, 1>, scalar_prefetch = 0 : i64, scratch_operands = 0 : i64, tpu.core_type = #tpu.core_type<tc>, window_params = [{transform_indices = @transform_0, window_bounds = array<i64: 1, 64, 4>}, {transform_indices = @transform_1, window_bounds = array<i64: 1, 16, 4>}, {pipeline_mode = #tpu.pipeline_mode<synchronous>, transform_indices = @transform_2, window_bounds = array<i64: 7, 4, 8>}, {pipeline_mode = #tpu.pipeline_mode<synchronous>, transform_indices = @transform_3, window_bounds = array<i64: 1, 8>}, {transform_indices = @transform_4, window_bounds = array<i64: 1, 64, 8>}]} {
    %c0 = arith.constant 0 : index
    %c0_0 = arith.constant 0 : index
    %c0_1 = arith.constant 0 : index
    %0 = vector.load %arg2[%c0, %c0_0, %c0_1] : memref<1x64x4xbf16, #tpu.memory_space<vmem>>, vector<1x64x4xbf16>
    %1 = vector.shape_cast %0 : vector<1x64x4xbf16> to vector<64x4xbf16>
    %c0_2 = arith.constant 0 : index
    %c0_3 = arith.constant 0 : index
    %c0_4 = arith.constant 0 : index
    %2 = vector.load %arg3[%c0_2, %c0_3, %c0_4] : memref<1x16x4xbf16, #tpu.memory_space<vmem>>, vector<1x16x4xbf16>
    %3 = vector.shape_cast %2 : vector<1x16x4xbf16> to vector<16x4xbf16>
    %4 = tpu.concatenate %1, %3 in 0 : vector<64x4xbf16>, vector<16x4xbf16> -> vector<80x4xbf16>
    %cst = arith.constant 0.000000e+00 : f32
    %5 = vector.broadcast %cst : f32 to vector<64x8xf32>
    %c0_5 = arith.constant 0 : index
    %c0_6 = arith.constant 0 : index
    %c0_7 = arith.constant 0 : index
    %6 = vector.load %arg4[%c0_5, %c0_6, %c0_7] : memref<7x4x8xbf16, #tpu.memory_space<vmem>>, vector<1x4x8xbf16>
    %7 = vector.shape_cast %6 : vector<1x4x8xbf16> to vector<4x8xbf16>
    %cst_8 = arith.constant dense<0.000000e+00> : vector<80x8xf32>
    %8 = tpu.matmul %4, %7, %cst_8 {dimension_numbers = #tpu.dot_dimension_numbers<[1], [0], [0], [1], [0, 0, 1, 1], [], []>} : vector<80x4xbf16>, vector<4x8xbf16>, vector<80x8xf32> -> vector<80x8xf32>
    %9 = vector.extract_strided_slice %8 {offsets = [0, 0], sizes = [64, 8], strides = [1, 1]} : vector<80x8xf32> to vector<64x8xf32>
    %10 = arith.addf %5, %9 : vector<64x8xf32>
    %c1 = arith.constant 1 : index
    %c0_9 = arith.constant 0 : index
    %c0_10 = arith.constant 0 : index
    %11 = vector.load %arg4[%c1, %c0_9, %c0_10] : memref<7x4x8xbf16, #tpu.memory_space<vmem>>, vector<1x4x8xbf16>
    %12 = vector.shape_cast %11 : vector<1x4x8xbf16> to vector<4x8xbf16>
    %cst_11 = arith.constant dense<0.000000e+00> : vector<80x8xf32>
    %13 = tpu.matmul %4, %12, %cst_11 {dimension_numbers = #tpu.dot_dimension_numbers<[1], [0], [0], [1], [0, 0, 1, 1], [], []>} : vector<80x4xbf16>, vector<4x8xbf16>, vector<80x8xf32> -> vector<80x8xf32>
    %14 = vector.extract_strided_slice %13 {offsets = [1, 0], sizes = [64, 8], strides = [1, 1]} : vector<80x8xf32> to vector<64x8xf32>
    %15 = arith.addf %10, %14 : vector<64x8xf32>
    %c2 = arith.constant 2 : index
    %c0_12 = arith.constant 0 : index
    %c0_13 = arith.constant 0 : index
    %16 = vector.load %arg4[%c2, %c0_12, %c0_13] : memref<7x4x8xbf16, #tpu.memory_space<vmem>>, vector<1x4x8xbf16>
    %17 = vector.shape_cast %16 : vector<1x4x8xbf16> to vector<4x8xbf16>
    %cst_14 = arith.constant dense<0.000000e+00> : vector<80x8xf32>
    %18 = tpu.matmul %4, %17, %cst_14 {dimension_numbers = #tpu.dot_dimension_numbers<[1], [0], [0], [1], [0, 0, 1, 1], [], []>} : vector<80x4xbf16>, vector<4x8xbf16>, vector<80x8xf32> -> vector<80x8xf32>
    %19 = vector.extract_strided_slice %18 {offsets = [2, 0], sizes = [64, 8], strides = [1, 1]} : vector<80x8xf32> to vector<64x8xf32>
    %20 = arith.addf %15, %19 : vector<64x8xf32>
    %c3 = arith.constant 3 : index
    %c0_15 = arith.constant 0 : index
    %c0_16 = arith.constant 0 : index
    %21 = vector.load %arg4[%c3, %c0_15, %c0_16] : memref<7x4x8xbf16, #tpu.memory_space<vmem>>, vector<1x4x8xbf16>
    %22 = vector.shape_cast %21 : vector<1x4x8xbf16> to vector<4x8xbf16>
    %cst_17 = arith.constant dense<0.000000e+00> : vector<80x8xf32>
    %23 = tpu.matmul %4, %22, %cst_17 {dimension_numbers = #tpu.dot_dimension_numbers<[1], [0], [0], [1], [0, 0, 1, 1], [], []>} : vector<80x4xbf16>, vector<4x8xbf16>, vector<80x8xf32> -> vector<80x8xf32>
    %24 = vector.extract_strided_slice %23 {offsets = [3, 0], sizes = [64, 8], strides = [1, 1]} : vector<80x8xf32> to vector<64x8xf32>
    %25 = arith.addf %20, %24 : vector<64x8xf32>
    %c4 = arith.constant 4 : index
    %c0_18 = arith.constant 0 : index
    %c0_19 = arith.constant 0 : index
    %26 = vector.load %arg4[%c4, %c0_18, %c0_19] : memref<7x4x8xbf16, #tpu.memory_space<vmem>>, vector<1x4x8xbf16>
    %27 = vector.shape_cast %26 : vector<1x4x8xbf16> to vector<4x8xbf16>
    %cst_20 = arith.constant dense<0.000000e+00> : vector<80x8xf32>
    %28 = tpu.matmul %4, %27, %cst_20 {dimension_numbers = #tpu.dot_dimension_numbers<[1], [0], [0], [1], [0, 0, 1, 1], [], []>} : vector<80x4xbf16>, vector<4x8xbf16>, vector<80x8xf32> -> vector<80x8xf32>
    %29 = vector.extract_strided_slice %28 {offsets = [4, 0], sizes = [64, 8], strides = [1, 1]} : vector<80x8xf32> to vector<64x8xf32>
    %30 = arith.addf %25, %29 : vector<64x8xf32>
    %c5 = arith.constant 5 : index
    %c0_21 = arith.constant 0 : index
    %c0_22 = arith.constant 0 : index
    %31 = vector.load %arg4[%c5, %c0_21, %c0_22] : memref<7x4x8xbf16, #tpu.memory_space<vmem>>, vector<1x4x8xbf16>
    %32 = vector.shape_cast %31 : vector<1x4x8xbf16> to vector<4x8xbf16>
    %cst_23 = arith.constant dense<0.000000e+00> : vector<80x8xf32>
    %33 = tpu.matmul %4, %32, %cst_23 {dimension_numbers = #tpu.dot_dimension_numbers<[1], [0], [0], [1], [0, 0, 1, 1], [], []>} : vector<80x4xbf16>, vector<4x8xbf16>, vector<80x8xf32> -> vector<80x8xf32>
    %34 = vector.extract_strided_slice %33 {offsets = [5, 0], sizes = [64, 8], strides = [1, 1]} : vector<80x8xf32> to vector<64x8xf32>
    %35 = arith.addf %30, %34 : vector<64x8xf32>
    %c6 = arith.constant 6 : index
    %c0_24 = arith.constant 0 : index
    %c0_25 = arith.constant 0 : index
    %36 = vector.load %arg4[%c6, %c0_24, %c0_25] : memref<7x4x8xbf16, #tpu.memory_space<vmem>>, vector<1x4x8xbf16>
    %37 = vector.shape_cast %36 : vector<1x4x8xbf16> to vector<4x8xbf16>
    %cst_26 = arith.constant dense<0.000000e+00> : vector<80x8xf32>
    %38 = tpu.matmul %4, %37, %cst_26 {dimension_numbers = #tpu.dot_dimension_numbers<[1], [0], [0], [1], [0, 0, 1, 1], [], []>} : vector<80x4xbf16>, vector<4x8xbf16>, vector<80x8xf32> -> vector<80x8xf32>
    %39 = vector.extract_strided_slice %38 {offsets = [6, 0], sizes = [64, 8], strides = [1, 1]} : vector<80x8xf32> to vector<64x8xf32>
    %40 = arith.addf %35, %39 : vector<64x8xf32>
    %c0_27 = arith.constant 0 : index
    %c0_28 = arith.constant 0 : index
    %41 = vector.load %arg5[%c0_27, %c0_28] : memref<1x8xf32, #tpu.memory_space<vmem>>, vector<1x8xf32>
    %42 = vector.broadcast %41 : vector<1x8xf32> to vector<64x8xf32>
    %43 = arith.addf %40, %42 : vector<64x8xf32>
    %cst_29 = arith.constant 0.000000e+00 : f32
    %44 = vector.broadcast %cst_29 : f32 to vector<64x8xf32>
    %45 = arith.maximumf %43, %44 : vector<64x8xf32>
    %46 = arith.truncf %45 : vector<64x8xf32> to vector<64x8xbf16>
    %c0_30 = arith.constant 0 : index
    %c0_31 = arith.constant 0 : index
    %c0_32 = arith.constant 0 : index
    %47 = vector.load %arg6[%c0_30, %c0_31, %c0_32] : memref<1x64x8xbf16, #tpu.memory_space<vmem>>, vector<1x64x8xbf16>
    %48 = vector.shape_cast %47 : vector<1x64x8xbf16> to vector<64x8xbf16>
    %49 = vector.shape_cast %46 : vector<64x8xbf16> to vector<1x64x8xbf16>
    tpu.vector_store %arg6[%c0_30, %c0_31, %c0_32], %49 {strides = array<i32>} : memref<1x64x8xbf16, #tpu.memory_space<vmem>>, vector<1x64x8xbf16>,
    return
  }
  func.func @transform_0(%arg0: i32, %arg1: i32) -> (i32, i32, i32) {
    %c0_i32 = arith.constant 0 : i32
    %c0_i32_0 = arith.constant 0 : i32
    return %arg0, %arg1, %c0_i32 : i32, i32, i32
  }
  func.func @transform_1(%arg0: i32, %arg1: i32) -> (i32, i32, i32) {
    %c1_i32 = arith.constant 1 : i32
    %0 = arith.addi %arg1, %c1_i32 : i32
    %c4_i32 = arith.constant 4 : i32
    %1 = arith.muli %0, %c4_i32 : i32
    %c0_i32 = arith.constant 0 : i32
    %c0_i32_0 = arith.constant 0 : i32
    return %arg0, %1, %c0_i32 : i32, i32, i32
  }
  func.func @transform_2(%arg0: i32, %arg1: i32) -> (i32, i32, i32) {
    %c0_i32 = arith.constant 0 : i32
    %c0_i32_0 = arith.constant 0 : i32
    %c0_i32_1 = arith.constant 0 : i32
    %c0_i32_2 = arith.constant 0 : i32
    return %c0_i32, %c0_i32_0, %c0_i32_1 : i32, i32, i32
  }
  func.func @transform_3(%arg0: i32, %arg1: i32) -> (i32, i32) {
    %c0_i32 = arith.constant 0 : i32
    %c0_i32_0 = arith.constant 0 : i32
    %c0_i32_1 = arith.constant 0 : i32
    return %c0_i32, %c0_i32_0 : i32, i32
  }
  func.func @transform_4(%arg0: i32, %arg1: i32) -> (i32, i32, i32) {
    %c0_i32 = arith.constant 0 : i32
    %c0_i32_0 = arith.constant 0 : i32
    return %arg0, %arg1, %c0_i32 : i32, i32, i32
  }
}

module attributes {stable_mosaic.version = 11 : i64} {
  func.func @_tapped_conv_kernel(%arg0: i32, %arg1: i32, %arg2: memref<1x16x32xbf16, #tpu.memory_space<vmem>>, %arg3: memref<1x16x32xbf16, #tpu.memory_space<vmem>>, %arg4: memref<7x32x32xbf16, #tpu.memory_space<vmem>>, %arg5: memref<1x32xf32, #tpu.memory_space<vmem>>, %arg6: memref<1x16x32xbf16, #tpu.memory_space<vmem>>) attributes {dimension_semantics = [#tpu.dimension_semantics<parallel>, #tpu.dimension_semantics<parallel>], iteration_bounds = array<i64: 2, 1>, scalar_prefetch = 0 : i64, scratch_operands = 0 : i64, tpu.core_type = #tpu.core_type<tc>, window_params = [{transform_indices = @transform_0, window_bounds = array<i64: 1, 16, 32>}, {transform_indices = @transform_1, window_bounds = array<i64: 1, 16, 32>}, {pipeline_mode = #tpu.pipeline_mode<synchronous>, transform_indices = @transform_2, window_bounds = array<i64: 7, 32, 32>}, {pipeline_mode = #tpu.pipeline_mode<synchronous>, transform_indices = @transform_3, window_bounds = array<i64: 1, 32>}, {transform_indices = @transform_4, window_bounds = array<i64: 1, 16, 32>}]} {
    %c0 = arith.constant 0 : index
    %c0_0 = arith.constant 0 : index
    %c0_1 = arith.constant 0 : index
    %0 = vector.load %arg2[%c0, %c0_0, %c0_1] : memref<1x16x32xbf16, #tpu.memory_space<vmem>>, vector<1x16x32xbf16>
    %1 = vector.shape_cast %0 : vector<1x16x32xbf16> to vector<16x32xbf16>
    %c0_2 = arith.constant 0 : index
    %c0_3 = arith.constant 0 : index
    %c0_4 = arith.constant 0 : index
    %2 = vector.load %arg3[%c0_2, %c0_3, %c0_4] : memref<1x16x32xbf16, #tpu.memory_space<vmem>>, vector<1x16x32xbf16>
    %3 = vector.shape_cast %2 : vector<1x16x32xbf16> to vector<16x32xbf16>
    %4 = tpu.concatenate %1, %3 in 0 : vector<16x32xbf16>, vector<16x32xbf16> -> vector<32x32xbf16>
    %cst = arith.constant 0.000000e+00 : f32
    %5 = vector.broadcast %cst : f32 to vector<16x32xf32>
    %c0_5 = arith.constant 0 : index
    %c0_6 = arith.constant 0 : index
    %c0_7 = arith.constant 0 : index
    %6 = vector.load %arg4[%c0_5, %c0_6, %c0_7] : memref<7x32x32xbf16, #tpu.memory_space<vmem>>, vector<1x32x32xbf16>
    %7 = vector.shape_cast %6 : vector<1x32x32xbf16> to vector<32x32xbf16>
    %cst_8 = arith.constant dense<0.000000e+00> : vector<32x32xf32>
    %8 = tpu.matmul %4, %7, %cst_8 {dimension_numbers = #tpu.dot_dimension_numbers<[1], [0], [0], [1], [0, 0, 1, 1], [], []>} : vector<32x32xbf16>, vector<32x32xbf16>, vector<32x32xf32> -> vector<32x32xf32>
    %9 = vector.extract_strided_slice %8 {offsets = [0, 0], sizes = [16, 32], strides = [1, 1]} : vector<32x32xf32> to vector<16x32xf32>
    %10 = arith.addf %5, %9 : vector<16x32xf32>
    %c1 = arith.constant 1 : index
    %c0_9 = arith.constant 0 : index
    %c0_10 = arith.constant 0 : index
    %11 = vector.load %arg4[%c1, %c0_9, %c0_10] : memref<7x32x32xbf16, #tpu.memory_space<vmem>>, vector<1x32x32xbf16>
    %12 = vector.shape_cast %11 : vector<1x32x32xbf16> to vector<32x32xbf16>
    %cst_11 = arith.constant dense<0.000000e+00> : vector<32x32xf32>
    %13 = tpu.matmul %4, %12, %cst_11 {dimension_numbers = #tpu.dot_dimension_numbers<[1], [0], [0], [1], [0, 0, 1, 1], [], []>} : vector<32x32xbf16>, vector<32x32xbf16>, vector<32x32xf32> -> vector<32x32xf32>
    %14 = vector.extract_strided_slice %13 {offsets = [1, 0], sizes = [16, 32], strides = [1, 1]} : vector<32x32xf32> to vector<16x32xf32>
    %15 = arith.addf %10, %14 : vector<16x32xf32>
    %c2 = arith.constant 2 : index
    %c0_12 = arith.constant 0 : index
    %c0_13 = arith.constant 0 : index
    %16 = vector.load %arg4[%c2, %c0_12, %c0_13] : memref<7x32x32xbf16, #tpu.memory_space<vmem>>, vector<1x32x32xbf16>
    %17 = vector.shape_cast %16 : vector<1x32x32xbf16> to vector<32x32xbf16>
    %cst_14 = arith.constant dense<0.000000e+00> : vector<32x32xf32>
    %18 = tpu.matmul %4, %17, %cst_14 {dimension_numbers = #tpu.dot_dimension_numbers<[1], [0], [0], [1], [0, 0, 1, 1], [], []>} : vector<32x32xbf16>, vector<32x32xbf16>, vector<32x32xf32> -> vector<32x32xf32>
    %19 = vector.extract_strided_slice %18 {offsets = [2, 0], sizes = [16, 32], strides = [1, 1]} : vector<32x32xf32> to vector<16x32xf32>
    %20 = arith.addf %15, %19 : vector<16x32xf32>
    %c3 = arith.constant 3 : index
    %c0_15 = arith.constant 0 : index
    %c0_16 = arith.constant 0 : index
    %21 = vector.load %arg4[%c3, %c0_15, %c0_16] : memref<7x32x32xbf16, #tpu.memory_space<vmem>>, vector<1x32x32xbf16>
    %22 = vector.shape_cast %21 : vector<1x32x32xbf16> to vector<32x32xbf16>
    %cst_17 = arith.constant dense<0.000000e+00> : vector<32x32xf32>
    %23 = tpu.matmul %4, %22, %cst_17 {dimension_numbers = #tpu.dot_dimension_numbers<[1], [0], [0], [1], [0, 0, 1, 1], [], []>} : vector<32x32xbf16>, vector<32x32xbf16>, vector<32x32xf32> -> vector<32x32xf32>
    %24 = vector.extract_strided_slice %23 {offsets = [3, 0], sizes = [16, 32], strides = [1, 1]} : vector<32x32xf32> to vector<16x32xf32>
    %25 = arith.addf %20, %24 : vector<16x32xf32>
    %c4 = arith.constant 4 : index
    %c0_18 = arith.constant 0 : index
    %c0_19 = arith.constant 0 : index
    %26 = vector.load %arg4[%c4, %c0_18, %c0_19] : memref<7x32x32xbf16, #tpu.memory_space<vmem>>, vector<1x32x32xbf16>
    %27 = vector.shape_cast %26 : vector<1x32x32xbf16> to vector<32x32xbf16>
    %cst_20 = arith.constant dense<0.000000e+00> : vector<32x32xf32>
    %28 = tpu.matmul %4, %27, %cst_20 {dimension_numbers = #tpu.dot_dimension_numbers<[1], [0], [0], [1], [0, 0, 1, 1], [], []>} : vector<32x32xbf16>, vector<32x32xbf16>, vector<32x32xf32> -> vector<32x32xf32>
    %29 = vector.extract_strided_slice %28 {offsets = [4, 0], sizes = [16, 32], strides = [1, 1]} : vector<32x32xf32> to vector<16x32xf32>
    %30 = arith.addf %25, %29 : vector<16x32xf32>
    %c5 = arith.constant 5 : index
    %c0_21 = arith.constant 0 : index
    %c0_22 = arith.constant 0 : index
    %31 = vector.load %arg4[%c5, %c0_21, %c0_22] : memref<7x32x32xbf16, #tpu.memory_space<vmem>>, vector<1x32x32xbf16>
    %32 = vector.shape_cast %31 : vector<1x32x32xbf16> to vector<32x32xbf16>
    %cst_23 = arith.constant dense<0.000000e+00> : vector<32x32xf32>
    %33 = tpu.matmul %4, %32, %cst_23 {dimension_numbers = #tpu.dot_dimension_numbers<[1], [0], [0], [1], [0, 0, 1, 1], [], []>} : vector<32x32xbf16>, vector<32x32xbf16>, vector<32x32xf32> -> vector<32x32xf32>
    %34 = vector.extract_strided_slice %33 {offsets = [5, 0], sizes = [16, 32], strides = [1, 1]} : vector<32x32xf32> to vector<16x32xf32>
    %35 = arith.addf %30, %34 : vector<16x32xf32>
    %c6 = arith.constant 6 : index
    %c0_24 = arith.constant 0 : index
    %c0_25 = arith.constant 0 : index
    %36 = vector.load %arg4[%c6, %c0_24, %c0_25] : memref<7x32x32xbf16, #tpu.memory_space<vmem>>, vector<1x32x32xbf16>
    %37 = vector.shape_cast %36 : vector<1x32x32xbf16> to vector<32x32xbf16>
    %cst_26 = arith.constant dense<0.000000e+00> : vector<32x32xf32>
    %38 = tpu.matmul %4, %37, %cst_26 {dimension_numbers = #tpu.dot_dimension_numbers<[1], [0], [0], [1], [0, 0, 1, 1], [], []>} : vector<32x32xbf16>, vector<32x32xbf16>, vector<32x32xf32> -> vector<32x32xf32>
    %39 = vector.extract_strided_slice %38 {offsets = [6, 0], sizes = [16, 32], strides = [1, 1]} : vector<32x32xf32> to vector<16x32xf32>
    %40 = arith.addf %35, %39 : vector<16x32xf32>
    %c0_27 = arith.constant 0 : index
    %c0_28 = arith.constant 0 : index
    %41 = vector.load %arg5[%c0_27, %c0_28] : memref<1x32xf32, #tpu.memory_space<vmem>>, vector<1x32xf32>
    %42 = vector.broadcast %41 : vector<1x32xf32> to vector<16x32xf32>
    %43 = arith.addf %40, %42 : vector<16x32xf32>
    %cst_29 = arith.constant 0.000000e+00 : f32
    %44 = vector.broadcast %cst_29 : f32 to vector<16x32xf32>
    %45 = arith.maximumf %43, %44 : vector<16x32xf32>
    %46 = arith.truncf %45 : vector<16x32xf32> to vector<16x32xbf16>
    %c0_30 = arith.constant 0 : index
    %c0_31 = arith.constant 0 : index
    %c0_32 = arith.constant 0 : index
    %47 = vector.load %arg6[%c0_30, %c0_31, %c0_32] : memref<1x16x32xbf16, #tpu.memory_space<vmem>>, vector<1x16x32xbf16>
    %48 = vector.shape_cast %47 : vector<1x16x32xbf16> to vector<16x32xbf16>
    %49 = vector.shape_cast %46 : vector<16x32xbf16> to vector<1x16x32xbf16>
    tpu.vector_store %arg6[%c0_30, %c0_31, %c0_32], %49 {strides = array<i32>} : memref<1x16x32xbf16, #tpu.memory_space<vmem>>, vector<1x16x32xbf16>,
    return
  }
  func.func @transform_0(%arg0: i32, %arg1: i32) -> (i32, i32, i32) {
    %c0_i32 = arith.constant 0 : i32
    %c0_i32_0 = arith.constant 0 : i32
    return %arg0, %arg1, %c0_i32 : i32, i32, i32
  }
  func.func @transform_1(%arg0: i32, %arg1: i32) -> (i32, i32, i32) {
    %c1_i32 = arith.constant 1 : i32
    %0 = arith.addi %arg1, %c1_i32 : i32
    %c1_i32_0 = arith.constant 1 : i32
    %1 = arith.muli %0, %c1_i32_0 : i32
    %c0_i32 = arith.constant 0 : i32
    %c0_i32_1 = arith.constant 0 : i32
    return %arg0, %1, %c0_i32 : i32, i32, i32
  }
  func.func @transform_2(%arg0: i32, %arg1: i32) -> (i32, i32, i32) {
    %c0_i32 = arith.constant 0 : i32
    %c0_i32_0 = arith.constant 0 : i32
    %c0_i32_1 = arith.constant 0 : i32
    %c0_i32_2 = arith.constant 0 : i32
    return %c0_i32, %c0_i32_0, %c0_i32_1 : i32, i32, i32
  }
  func.func @transform_3(%arg0: i32, %arg1: i32) -> (i32, i32) {
    %c0_i32 = arith.constant 0 : i32
    %c0_i32_0 = arith.constant 0 : i32
    %c0_i32_1 = arith.constant 0 : i32
    return %c0_i32, %c0_i32_0 : i32, i32
  }
  func.func @transform_4(%arg0: i32, %arg1: i32) -> (i32, i32, i32) {
    %c0_i32 = arith.constant 0 : i32
    %c0_i32_0 = arith.constant 0 : i32
    return %arg0, %arg1, %c0_i32 : i32, i32, i32
  }
}

module attributes {stable_mosaic.version = 11 : i64} {
  func.func @_tapped_conv_kernel(%arg0: i32, %arg1: i32, %arg2: memref<1x16x128xbf16, #tpu.memory_space<vmem>>, %arg3: memref<1x16x128xbf16, #tpu.memory_space<vmem>>, %arg4: memref<7x128x64xbf16, #tpu.memory_space<vmem>>, %arg5: memref<1x64xf32, #tpu.memory_space<vmem>>, %arg6: memref<1x16x64xbf16, #tpu.memory_space<vmem>>) attributes {dimension_semantics = [#tpu.dimension_semantics<parallel>, #tpu.dimension_semantics<parallel>], iteration_bounds = array<i64: 2, 1>, scalar_prefetch = 0 : i64, scratch_operands = 0 : i64, tpu.core_type = #tpu.core_type<tc>, window_params = [{transform_indices = @transform_0, window_bounds = array<i64: 1, 16, 128>}, {transform_indices = @transform_1, window_bounds = array<i64: 1, 16, 128>}, {pipeline_mode = #tpu.pipeline_mode<synchronous>, transform_indices = @transform_2, window_bounds = array<i64: 7, 128, 64>}, {pipeline_mode = #tpu.pipeline_mode<synchronous>, transform_indices = @transform_3, window_bounds = array<i64: 1, 64>}, {transform_indices = @transform_4, window_bounds = array<i64: 1, 16, 64>}]} {
    %c0 = arith.constant 0 : index
    %c0_0 = arith.constant 0 : index
    %c0_1 = arith.constant 0 : index
    %0 = vector.load %arg2[%c0, %c0_0, %c0_1] : memref<1x16x128xbf16, #tpu.memory_space<vmem>>, vector<1x16x128xbf16>
    %1 = vector.shape_cast %0 : vector<1x16x128xbf16> to vector<16x128xbf16>
    %c0_2 = arith.constant 0 : index
    %c0_3 = arith.constant 0 : index
    %c0_4 = arith.constant 0 : index
    %2 = vector.load %arg3[%c0_2, %c0_3, %c0_4] : memref<1x16x128xbf16, #tpu.memory_space<vmem>>, vector<1x16x128xbf16>
    %3 = vector.shape_cast %2 : vector<1x16x128xbf16> to vector<16x128xbf16>
    %4 = tpu.concatenate %1, %3 in 0 : vector<16x128xbf16>, vector<16x128xbf16> -> vector<32x128xbf16>
    %cst = arith.constant 0.000000e+00 : f32
    %5 = vector.broadcast %cst : f32 to vector<16x64xf32>
    %c0_5 = arith.constant 0 : index
    %c0_6 = arith.constant 0 : index
    %c0_7 = arith.constant 0 : index
    %6 = vector.load %arg4[%c0_5, %c0_6, %c0_7] : memref<7x128x64xbf16, #tpu.memory_space<vmem>>, vector<1x128x64xbf16>
    %7 = vector.shape_cast %6 : vector<1x128x64xbf16> to vector<128x64xbf16>
    %cst_8 = arith.constant dense<0.000000e+00> : vector<32x64xf32>
    %8 = tpu.matmul %4, %7, %cst_8 {dimension_numbers = #tpu.dot_dimension_numbers<[1], [0], [0], [1], [0, 0, 1, 1], [], []>} : vector<32x128xbf16>, vector<128x64xbf16>, vector<32x64xf32> -> vector<32x64xf32>
    %9 = vector.extract_strided_slice %8 {offsets = [0, 0], sizes = [16, 64], strides = [1, 1]} : vector<32x64xf32> to vector<16x64xf32>
    %10 = arith.addf %5, %9 : vector<16x64xf32>
    %c1 = arith.constant 1 : index
    %c0_9 = arith.constant 0 : index
    %c0_10 = arith.constant 0 : index
    %11 = vector.load %arg4[%c1, %c0_9, %c0_10] : memref<7x128x64xbf16, #tpu.memory_space<vmem>>, vector<1x128x64xbf16>
    %12 = vector.shape_cast %11 : vector<1x128x64xbf16> to vector<128x64xbf16>
    %cst_11 = arith.constant dense<0.000000e+00> : vector<32x64xf32>
    %13 = tpu.matmul %4, %12, %cst_11 {dimension_numbers = #tpu.dot_dimension_numbers<[1], [0], [0], [1], [0, 0, 1, 1], [], []>} : vector<32x128xbf16>, vector<128x64xbf16>, vector<32x64xf32> -> vector<32x64xf32>
    %14 = vector.extract_strided_slice %13 {offsets = [1, 0], sizes = [16, 64], strides = [1, 1]} : vector<32x64xf32> to vector<16x64xf32>
    %15 = arith.addf %10, %14 : vector<16x64xf32>
    %c2 = arith.constant 2 : index
    %c0_12 = arith.constant 0 : index
    %c0_13 = arith.constant 0 : index
    %16 = vector.load %arg4[%c2, %c0_12, %c0_13] : memref<7x128x64xbf16, #tpu.memory_space<vmem>>, vector<1x128x64xbf16>
    %17 = vector.shape_cast %16 : vector<1x128x64xbf16> to vector<128x64xbf16>
    %cst_14 = arith.constant dense<0.000000e+00> : vector<32x64xf32>
    %18 = tpu.matmul %4, %17, %cst_14 {dimension_numbers = #tpu.dot_dimension_numbers<[1], [0], [0], [1], [0, 0, 1, 1], [], []>} : vector<32x128xbf16>, vector<128x64xbf16>, vector<32x64xf32> -> vector<32x64xf32>
    %19 = vector.extract_strided_slice %18 {offsets = [2, 0], sizes = [16, 64], strides = [1, 1]} : vector<32x64xf32> to vector<16x64xf32>
    %20 = arith.addf %15, %19 : vector<16x64xf32>
    %c3 = arith.constant 3 : index
    %c0_15 = arith.constant 0 : index
    %c0_16 = arith.constant 0 : index
    %21 = vector.load %arg4[%c3, %c0_15, %c0_16] : memref<7x128x64xbf16, #tpu.memory_space<vmem>>, vector<1x128x64xbf16>
    %22 = vector.shape_cast %21 : vector<1x128x64xbf16> to vector<128x64xbf16>
    %cst_17 = arith.constant dense<0.000000e+00> : vector<32x64xf32>
    %23 = tpu.matmul %4, %22, %cst_17 {dimension_numbers = #tpu.dot_dimension_numbers<[1], [0], [0], [1], [0, 0, 1, 1], [], []>} : vector<32x128xbf16>, vector<128x64xbf16>, vector<32x64xf32> -> vector<32x64xf32>
    %24 = vector.extract_strided_slice %23 {offsets = [3, 0], sizes = [16, 64], strides = [1, 1]} : vector<32x64xf32> to vector<16x64xf32>
    %25 = arith.addf %20, %24 : vector<16x64xf32>
    %c4 = arith.constant 4 : index
    %c0_18 = arith.constant 0 : index
    %c0_19 = arith.constant 0 : index
    %26 = vector.load %arg4[%c4, %c0_18, %c0_19] : memref<7x128x64xbf16, #tpu.memory_space<vmem>>, vector<1x128x64xbf16>
    %27 = vector.shape_cast %26 : vector<1x128x64xbf16> to vector<128x64xbf16>
    %cst_20 = arith.constant dense<0.000000e+00> : vector<32x64xf32>
    %28 = tpu.matmul %4, %27, %cst_20 {dimension_numbers = #tpu.dot_dimension_numbers<[1], [0], [0], [1], [0, 0, 1, 1], [], []>} : vector<32x128xbf16>, vector<128x64xbf16>, vector<32x64xf32> -> vector<32x64xf32>
    %29 = vector.extract_strided_slice %28 {offsets = [4, 0], sizes = [16, 64], strides = [1, 1]} : vector<32x64xf32> to vector<16x64xf32>
    %30 = arith.addf %25, %29 : vector<16x64xf32>
    %c5 = arith.constant 5 : index
    %c0_21 = arith.constant 0 : index
    %c0_22 = arith.constant 0 : index
    %31 = vector.load %arg4[%c5, %c0_21, %c0_22] : memref<7x128x64xbf16, #tpu.memory_space<vmem>>, vector<1x128x64xbf16>
    %32 = vector.shape_cast %31 : vector<1x128x64xbf16> to vector<128x64xbf16>
    %cst_23 = arith.constant dense<0.000000e+00> : vector<32x64xf32>
    %33 = tpu.matmul %4, %32, %cst_23 {dimension_numbers = #tpu.dot_dimension_numbers<[1], [0], [0], [1], [0, 0, 1, 1], [], []>} : vector<32x128xbf16>, vector<128x64xbf16>, vector<32x64xf32> -> vector<32x64xf32>
    %34 = vector.extract_strided_slice %33 {offsets = [5, 0], sizes = [16, 64], strides = [1, 1]} : vector<32x64xf32> to vector<16x64xf32>
    %35 = arith.addf %30, %34 : vector<16x64xf32>
    %c6 = arith.constant 6 : index
    %c0_24 = arith.constant 0 : index
    %c0_25 = arith.constant 0 : index
    %36 = vector.load %arg4[%c6, %c0_24, %c0_25] : memref<7x128x64xbf16, #tpu.memory_space<vmem>>, vector<1x128x64xbf16>
    %37 = vector.shape_cast %36 : vector<1x128x64xbf16> to vector<128x64xbf16>
    %cst_26 = arith.constant dense<0.000000e+00> : vector<32x64xf32>
    %38 = tpu.matmul %4, %37, %cst_26 {dimension_numbers = #tpu.dot_dimension_numbers<[1], [0], [0], [1], [0, 0, 1, 1], [], []>} : vector<32x128xbf16>, vector<128x64xbf16>, vector<32x64xf32> -> vector<32x64xf32>
    %39 = vector.extract_strided_slice %38 {offsets = [6, 0], sizes = [16, 64], strides = [1, 1]} : vector<32x64xf32> to vector<16x64xf32>
    %40 = arith.addf %35, %39 : vector<16x64xf32>
    %c0_27 = arith.constant 0 : index
    %c0_28 = arith.constant 0 : index
    %41 = vector.load %arg5[%c0_27, %c0_28] : memref<1x64xf32, #tpu.memory_space<vmem>>, vector<1x64xf32>
    %42 = vector.broadcast %41 : vector<1x64xf32> to vector<16x64xf32>
    %43 = arith.addf %40, %42 : vector<16x64xf32>
    %cst_29 = arith.constant 0.000000e+00 : f32
    %44 = vector.broadcast %cst_29 : f32 to vector<16x64xf32>
    %45 = arith.maximumf %43, %44 : vector<16x64xf32>
    %46 = arith.truncf %45 : vector<16x64xf32> to vector<16x64xbf16>
    %c0_30 = arith.constant 0 : index
    %c0_31 = arith.constant 0 : index
    %c0_32 = arith.constant 0 : index
    %47 = vector.load %arg6[%c0_30, %c0_31, %c0_32] : memref<1x16x64xbf16, #tpu.memory_space<vmem>>, vector<1x16x64xbf16>
    %48 = vector.shape_cast %47 : vector<1x16x64xbf16> to vector<16x64xbf16>
    %49 = vector.shape_cast %46 : vector<16x64xbf16> to vector<1x16x64xbf16>
    tpu.vector_store %arg6[%c0_30, %c0_31, %c0_32], %49 {strides = array<i32>} : memref<1x16x64xbf16, #tpu.memory_space<vmem>>, vector<1x16x64xbf16>,
    return
  }
  func.func @transform_0(%arg0: i32, %arg1: i32) -> (i32, i32, i32) {
    %c0_i32 = arith.constant 0 : i32
    %c0_i32_0 = arith.constant 0 : i32
    return %arg0, %arg1, %c0_i32 : i32, i32, i32
  }
  func.func @transform_1(%arg0: i32, %arg1: i32) -> (i32, i32, i32) {
    %c1_i32 = arith.constant 1 : i32
    %0 = arith.addi %arg1, %c1_i32 : i32
    %c1_i32_0 = arith.constant 1 : i32
    %1 = arith.muli %0, %c1_i32_0 : i32
    %c0_i32 = arith.constant 0 : i32
    %c0_i32_1 = arith.constant 0 : i32
    return %arg0, %1, %c0_i32 : i32, i32, i32
  }
  func.func @transform_2(%arg0: i32, %arg1: i32) -> (i32, i32, i32) {
    %c0_i32 = arith.constant 0 : i32
    %c0_i32_0 = arith.constant 0 : i32
    %c0_i32_1 = arith.constant 0 : i32
    %c0_i32_2 = arith.constant 0 : i32
    return %c0_i32, %c0_i32_0, %c0_i32_1 : i32, i32, i32
  }
  func.func @transform_3(%arg0: i32, %arg1: i32) -> (i32, i32) {
    %c0_i32 = arith.constant 0 : i32
    %c0_i32_0 = arith.constant 0 : i32
    %c0_i32_1 = arith.constant 0 : i32
    return %c0_i32, %c0_i32_0 : i32, i32
  }
  func.func @transform_4(%arg0: i32, %arg1: i32) -> (i32, i32, i32) {
    %c0_i32 = arith.constant 0 : i32
    %c0_i32_0 = arith.constant 0 : i32
    return %arg0, %arg1, %c0_i32 : i32, i32, i32
  }
}

module attributes {stable_mosaic.version = 11 : i64} {
  func.func @_tapped_conv_kernel(%arg0: i32, %arg1: i32, %arg2: memref<1x16x256xbf16, #tpu.memory_space<vmem>>, %arg3: memref<1x16x256xbf16, #tpu.memory_space<vmem>>, %arg4: memref<7x256x128xbf16, #tpu.memory_space<vmem>>, %arg5: memref<1x128xf32, #tpu.memory_space<vmem>>, %arg6: memref<1x16x128xbf16, #tpu.memory_space<vmem>>) attributes {dimension_semantics = [#tpu.dimension_semantics<parallel>, #tpu.dimension_semantics<parallel>], iteration_bounds = array<i64: 2, 1>, scalar_prefetch = 0 : i64, scratch_operands = 0 : i64, tpu.core_type = #tpu.core_type<tc>, window_params = [{transform_indices = @transform_0, window_bounds = array<i64: 1, 16, 256>}, {transform_indices = @transform_1, window_bounds = array<i64: 1, 16, 256>}, {pipeline_mode = #tpu.pipeline_mode<synchronous>, transform_indices = @transform_2, window_bounds = array<i64: 7, 256, 128>}, {pipeline_mode = #tpu.pipeline_mode<synchronous>, transform_indices = @transform_3, window_bounds = array<i64: 1, 128>}, {transform_indices = @transform_4, window_bounds = array<i64: 1, 16, 128>}]} {
    %c0 = arith.constant 0 : index
    %c0_0 = arith.constant 0 : index
    %c0_1 = arith.constant 0 : index
    %0 = vector.load %arg2[%c0, %c0_0, %c0_1] : memref<1x16x256xbf16, #tpu.memory_space<vmem>>, vector<1x16x256xbf16>
    %1 = vector.shape_cast %0 : vector<1x16x256xbf16> to vector<16x256xbf16>
    %c0_2 = arith.constant 0 : index
    %c0_3 = arith.constant 0 : index
    %c0_4 = arith.constant 0 : index
    %2 = vector.load %arg3[%c0_2, %c0_3, %c0_4] : memref<1x16x256xbf16, #tpu.memory_space<vmem>>, vector<1x16x256xbf16>
    %3 = vector.shape_cast %2 : vector<1x16x256xbf16> to vector<16x256xbf16>
    %4 = tpu.concatenate %1, %3 in 0 : vector<16x256xbf16>, vector<16x256xbf16> -> vector<32x256xbf16>
    %cst = arith.constant 0.000000e+00 : f32
    %5 = vector.broadcast %cst : f32 to vector<16x128xf32>
    %c0_5 = arith.constant 0 : index
    %c0_6 = arith.constant 0 : index
    %c0_7 = arith.constant 0 : index
    %6 = vector.load %arg4[%c0_5, %c0_6, %c0_7] : memref<7x256x128xbf16, #tpu.memory_space<vmem>>, vector<1x256x128xbf16>
    %7 = vector.shape_cast %6 : vector<1x256x128xbf16> to vector<256x128xbf16>
    %cst_8 = arith.constant dense<0.000000e+00> : vector<32x128xf32>
    %8 = tpu.matmul %4, %7, %cst_8 {dimension_numbers = #tpu.dot_dimension_numbers<[1], [0], [0], [1], [0, 0, 1, 1], [], []>} : vector<32x256xbf16>, vector<256x128xbf16>, vector<32x128xf32> -> vector<32x128xf32>
    %9 = vector.extract_strided_slice %8 {offsets = [0, 0], sizes = [16, 128], strides = [1, 1]} : vector<32x128xf32> to vector<16x128xf32>
    %10 = arith.addf %5, %9 : vector<16x128xf32>
    %c1 = arith.constant 1 : index
    %c0_9 = arith.constant 0 : index
    %c0_10 = arith.constant 0 : index
    %11 = vector.load %arg4[%c1, %c0_9, %c0_10] : memref<7x256x128xbf16, #tpu.memory_space<vmem>>, vector<1x256x128xbf16>
    %12 = vector.shape_cast %11 : vector<1x256x128xbf16> to vector<256x128xbf16>
    %cst_11 = arith.constant dense<0.000000e+00> : vector<32x128xf32>
    %13 = tpu.matmul %4, %12, %cst_11 {dimension_numbers = #tpu.dot_dimension_numbers<[1], [0], [0], [1], [0, 0, 1, 1], [], []>} : vector<32x256xbf16>, vector<256x128xbf16>, vector<32x128xf32> -> vector<32x128xf32>
    %14 = vector.extract_strided_slice %13 {offsets = [1, 0], sizes = [16, 128], strides = [1, 1]} : vector<32x128xf32> to vector<16x128xf32>
    %15 = arith.addf %10, %14 : vector<16x128xf32>
    %c2 = arith.constant 2 : index
    %c0_12 = arith.constant 0 : index
    %c0_13 = arith.constant 0 : index
    %16 = vector.load %arg4[%c2, %c0_12, %c0_13] : memref<7x256x128xbf16, #tpu.memory_space<vmem>>, vector<1x256x128xbf16>
    %17 = vector.shape_cast %16 : vector<1x256x128xbf16> to vector<256x128xbf16>
    %cst_14 = arith.constant dense<0.000000e+00> : vector<32x128xf32>
    %18 = tpu.matmul %4, %17, %cst_14 {dimension_numbers = #tpu.dot_dimension_numbers<[1], [0], [0], [1], [0, 0, 1, 1], [], []>} : vector<32x256xbf16>, vector<256x128xbf16>, vector<32x128xf32> -> vector<32x128xf32>
    %19 = vector.extract_strided_slice %18 {offsets = [2, 0], sizes = [16, 128], strides = [1, 1]} : vector<32x128xf32> to vector<16x128xf32>
    %20 = arith.addf %15, %19 : vector<16x128xf32>
    %c3 = arith.constant 3 : index
    %c0_15 = arith.constant 0 : index
    %c0_16 = arith.constant 0 : index
    %21 = vector.load %arg4[%c3, %c0_15, %c0_16] : memref<7x256x128xbf16, #tpu.memory_space<vmem>>, vector<1x256x128xbf16>
    %22 = vector.shape_cast %21 : vector<1x256x128xbf16> to vector<256x128xbf16>
    %cst_17 = arith.constant dense<0.000000e+00> : vector<32x128xf32>
    %23 = tpu.matmul %4, %22, %cst_17 {dimension_numbers = #tpu.dot_dimension_numbers<[1], [0], [0], [1], [0, 0, 1, 1], [], []>} : vector<32x256xbf16>, vector<256x128xbf16>, vector<32x128xf32> -> vector<32x128xf32>
    %24 = vector.extract_strided_slice %23 {offsets = [3, 0], sizes = [16, 128], strides = [1, 1]} : vector<32x128xf32> to vector<16x128xf32>
    %25 = arith.addf %20, %24 : vector<16x128xf32>
    %c4 = arith.constant 4 : index
    %c0_18 = arith.constant 0 : index
    %c0_19 = arith.constant 0 : index
    %26 = vector.load %arg4[%c4, %c0_18, %c0_19] : memref<7x256x128xbf16, #tpu.memory_space<vmem>>, vector<1x256x128xbf16>
    %27 = vector.shape_cast %26 : vector<1x256x128xbf16> to vector<256x128xbf16>
    %cst_20 = arith.constant dense<0.000000e+00> : vector<32x128xf32>
    %28 = tpu.matmul %4, %27, %cst_20 {dimension_numbers = #tpu.dot_dimension_numbers<[1], [0], [0], [1], [0, 0, 1, 1], [], []>} : vector<32x256xbf16>, vector<256x128xbf16>, vector<32x128xf32> -> vector<32x128xf32>
    %29 = vector.extract_strided_slice %28 {offsets = [4, 0], sizes = [16, 128], strides = [1, 1]} : vector<32x128xf32> to vector<16x128xf32>
    %30 = arith.addf %25, %29 : vector<16x128xf32>
    %c5 = arith.constant 5 : index
    %c0_21 = arith.constant 0 : index
    %c0_22 = arith.constant 0 : index
    %31 = vector.load %arg4[%c5, %c0_21, %c0_22] : memref<7x256x128xbf16, #tpu.memory_space<vmem>>, vector<1x256x128xbf16>
    %32 = vector.shape_cast %31 : vector<1x256x128xbf16> to vector<256x128xbf16>
    %cst_23 = arith.constant dense<0.000000e+00> : vector<32x128xf32>
    %33 = tpu.matmul %4, %32, %cst_23 {dimension_numbers = #tpu.dot_dimension_numbers<[1], [0], [0], [1], [0, 0, 1, 1], [], []>} : vector<32x256xbf16>, vector<256x128xbf16>, vector<32x128xf32> -> vector<32x128xf32>
    %34 = vector.extract_strided_slice %33 {offsets = [5, 0], sizes = [16, 128], strides = [1, 1]} : vector<32x128xf32> to vector<16x128xf32>
    %35 = arith.addf %30, %34 : vector<16x128xf32>
    %c6 = arith.constant 6 : index
    %c0_24 = arith.constant 0 : index
    %c0_25 = arith.constant 0 : index
    %36 = vector.load %arg4[%c6, %c0_24, %c0_25] : memref<7x256x128xbf16, #tpu.memory_space<vmem>>, vector<1x256x128xbf16>
    %37 = vector.shape_cast %36 : vector<1x256x128xbf16> to vector<256x128xbf16>
    %cst_26 = arith.constant dense<0.000000e+00> : vector<32x128xf32>
    %38 = tpu.matmul %4, %37, %cst_26 {dimension_numbers = #tpu.dot_dimension_numbers<[1], [0], [0], [1], [0, 0, 1, 1], [], []>} : vector<32x256xbf16>, vector<256x128xbf16>, vector<32x128xf32> -> vector<32x128xf32>
    %39 = vector.extract_strided_slice %38 {offsets = [6, 0], sizes = [16, 128], strides = [1, 1]} : vector<32x128xf32> to vector<16x128xf32>
    %40 = arith.addf %35, %39 : vector<16x128xf32>
    %c0_27 = arith.constant 0 : index
    %c0_28 = arith.constant 0 : index
    %41 = vector.load %arg5[%c0_27, %c0_28] : memref<1x128xf32, #tpu.memory_space<vmem>>, vector<1x128xf32>
    %42 = vector.broadcast %41 : vector<1x128xf32> to vector<16x128xf32>
    %43 = arith.addf %40, %42 : vector<16x128xf32>
    %cst_29 = arith.constant 0.000000e+00 : f32
    %44 = vector.broadcast %cst_29 : f32 to vector<16x128xf32>
    %45 = arith.maximumf %43, %44 : vector<16x128xf32>
    %46 = arith.truncf %45 : vector<16x128xf32> to vector<16x128xbf16>
    %c0_30 = arith.constant 0 : index
    %c0_31 = arith.constant 0 : index
    %c0_32 = arith.constant 0 : index
    %47 = vector.load %arg6[%c0_30, %c0_31, %c0_32] : memref<1x16x128xbf16, #tpu.memory_space<vmem>>, vector<1x16x128xbf16>
    %48 = vector.shape_cast %47 : vector<1x16x128xbf16> to vector<16x128xbf16>
    %49 = vector.shape_cast %46 : vector<16x128xbf16> to vector<1x16x128xbf16>
    tpu.vector_store %arg6[%c0_30, %c0_31, %c0_32], %49 {strides = array<i32>} : memref<1x16x128xbf16, #tpu.memory_space<vmem>>, vector<1x16x128xbf16>,
    return
  }
  func.func @transform_0(%arg0: i32, %arg1: i32) -> (i32, i32, i32) {
    %c0_i32 = arith.constant 0 : i32
    %c0_i32_0 = arith.constant 0 : i32
    return %arg0, %arg1, %c0_i32 : i32, i32, i32
  }
  func.func @transform_1(%arg0: i32, %arg1: i32) -> (i32, i32, i32) {
    %c1_i32 = arith.constant 1 : i32
    %0 = arith.addi %arg1, %c1_i32 : i32
    %c1_i32_0 = arith.constant 1 : i32
    %1 = arith.muli %0, %c1_i32_0 : i32
    %c0_i32 = arith.constant 0 : i32
    %c0_i32_1 = arith.constant 0 : i32
    return %arg0, %1, %c0_i32 : i32, i32, i32
  }
  func.func @transform_2(%arg0: i32, %arg1: i32) -> (i32, i32, i32) {
    %c0_i32 = arith.constant 0 : i32
    %c0_i32_0 = arith.constant 0 : i32
    %c0_i32_1 = arith.constant 0 : i32
    %c0_i32_2 = arith.constant 0 : i32
    return %c0_i32, %c0_i32_0, %c0_i32_1 : i32, i32, i32
  }
  func.func @transform_3(%arg0: i32, %arg1: i32) -> (i32, i32) {
    %c0_i32 = arith.constant 0 : i32
    %c0_i32_0 = arith.constant 0 : i32
    %c0_i32_1 = arith.constant 0 : i32
    return %c0_i32, %c0_i32_0 : i32, i32
  }
  func.func @transform_4(%arg0: i32, %arg1: i32) -> (i32, i32, i32) {
    %c0_i32 = arith.constant 0 : i32
    %c0_i32_0 = arith.constant 0 : i32
    return %arg0, %arg1, %c0_i32 : i32, i32, i32
  }
}

module attributes {stable_mosaic.version = 11 : i64} {
  func.func @_tapped_conv_kernel(%arg0: i32, %arg1: i32, %arg2: memref<1x16x128xbf16, #tpu.memory_space<vmem>>, %arg3: memref<1x16x128xbf16, #tpu.memory_space<vmem>>, %arg4: memref<3x128x128xbf16, #tpu.memory_space<vmem>>, %arg5: memref<1x128xf32, #tpu.memory_space<vmem>>, %arg6: memref<1x16x128xbf16, #tpu.memory_space<vmem>>) attributes {dimension_semantics = [#tpu.dimension_semantics<parallel>, #tpu.dimension_semantics<parallel>], iteration_bounds = array<i64: 2, 1>, scalar_prefetch = 0 : i64, scratch_operands = 0 : i64, tpu.core_type = #tpu.core_type<tc>, window_params = [{transform_indices = @transform_0, window_bounds = array<i64: 1, 16, 128>}, {transform_indices = @transform_1, window_bounds = array<i64: 1, 16, 128>}, {pipeline_mode = #tpu.pipeline_mode<synchronous>, transform_indices = @transform_2, window_bounds = array<i64: 3, 128, 128>}, {pipeline_mode = #tpu.pipeline_mode<synchronous>, transform_indices = @transform_3, window_bounds = array<i64: 1, 128>}, {transform_indices = @transform_4, window_bounds = array<i64: 1, 16, 128>}]} {
    %c0 = arith.constant 0 : index
    %c0_0 = arith.constant 0 : index
    %c0_1 = arith.constant 0 : index
    %0 = vector.load %arg2[%c0, %c0_0, %c0_1] : memref<1x16x128xbf16, #tpu.memory_space<vmem>>, vector<1x16x128xbf16>
    %1 = vector.shape_cast %0 : vector<1x16x128xbf16> to vector<16x128xbf16>
    %c0_2 = arith.constant 0 : index
    %c0_3 = arith.constant 0 : index
    %c0_4 = arith.constant 0 : index
    %2 = vector.load %arg3[%c0_2, %c0_3, %c0_4] : memref<1x16x128xbf16, #tpu.memory_space<vmem>>, vector<1x16x128xbf16>
    %3 = vector.shape_cast %2 : vector<1x16x128xbf16> to vector<16x128xbf16>
    %4 = tpu.concatenate %1, %3 in 0 : vector<16x128xbf16>, vector<16x128xbf16> -> vector<32x128xbf16>
    %cst = arith.constant 0.000000e+00 : f32
    %5 = vector.broadcast %cst : f32 to vector<16x128xf32>
    %c0_5 = arith.constant 0 : index
    %c0_6 = arith.constant 0 : index
    %c0_7 = arith.constant 0 : index
    %6 = vector.load %arg4[%c0_5, %c0_6, %c0_7] : memref<3x128x128xbf16, #tpu.memory_space<vmem>>, vector<1x128x128xbf16>
    %7 = vector.shape_cast %6 : vector<1x128x128xbf16> to vector<128x128xbf16>
    %cst_8 = arith.constant dense<0.000000e+00> : vector<32x128xf32>
    %8 = tpu.matmul %4, %7, %cst_8 {dimension_numbers = #tpu.dot_dimension_numbers<[1], [0], [0], [1], [0, 0, 1, 1], [], []>} : vector<32x128xbf16>, vector<128x128xbf16>, vector<32x128xf32> -> vector<32x128xf32>
    %9 = vector.extract_strided_slice %8 {offsets = [0, 0], sizes = [16, 128], strides = [1, 1]} : vector<32x128xf32> to vector<16x128xf32>
    %10 = arith.addf %5, %9 : vector<16x128xf32>
    %c1 = arith.constant 1 : index
    %c0_9 = arith.constant 0 : index
    %c0_10 = arith.constant 0 : index
    %11 = vector.load %arg4[%c1, %c0_9, %c0_10] : memref<3x128x128xbf16, #tpu.memory_space<vmem>>, vector<1x128x128xbf16>
    %12 = vector.shape_cast %11 : vector<1x128x128xbf16> to vector<128x128xbf16>
    %cst_11 = arith.constant dense<0.000000e+00> : vector<32x128xf32>
    %13 = tpu.matmul %4, %12, %cst_11 {dimension_numbers = #tpu.dot_dimension_numbers<[1], [0], [0], [1], [0, 0, 1, 1], [], []>} : vector<32x128xbf16>, vector<128x128xbf16>, vector<32x128xf32> -> vector<32x128xf32>
    %14 = vector.extract_strided_slice %13 {offsets = [1, 0], sizes = [16, 128], strides = [1, 1]} : vector<32x128xf32> to vector<16x128xf32>
    %15 = arith.addf %10, %14 : vector<16x128xf32>
    %c2 = arith.constant 2 : index
    %c0_12 = arith.constant 0 : index
    %c0_13 = arith.constant 0 : index
    %16 = vector.load %arg4[%c2, %c0_12, %c0_13] : memref<3x128x128xbf16, #tpu.memory_space<vmem>>, vector<1x128x128xbf16>
    %17 = vector.shape_cast %16 : vector<1x128x128xbf16> to vector<128x128xbf16>
    %cst_14 = arith.constant dense<0.000000e+00> : vector<32x128xf32>
    %18 = tpu.matmul %4, %17, %cst_14 {dimension_numbers = #tpu.dot_dimension_numbers<[1], [0], [0], [1], [0, 0, 1, 1], [], []>} : vector<32x128xbf16>, vector<128x128xbf16>, vector<32x128xf32> -> vector<32x128xf32>
    %19 = vector.extract_strided_slice %18 {offsets = [2, 0], sizes = [16, 128], strides = [1, 1]} : vector<32x128xf32> to vector<16x128xf32>
    %20 = arith.addf %15, %19 : vector<16x128xf32>
    %c0_15 = arith.constant 0 : index
    %c0_16 = arith.constant 0 : index
    %21 = vector.load %arg5[%c0_15, %c0_16] : memref<1x128xf32, #tpu.memory_space<vmem>>, vector<1x128xf32>
    %22 = vector.broadcast %21 : vector<1x128xf32> to vector<16x128xf32>
    %23 = arith.addf %20, %22 : vector<16x128xf32>
    %cst_17 = arith.constant 0.000000e+00 : f32
    %24 = vector.broadcast %cst_17 : f32 to vector<16x128xf32>
    %25 = arith.maximumf %23, %24 : vector<16x128xf32>
    %26 = arith.truncf %25 : vector<16x128xf32> to vector<16x128xbf16>
    %c0_18 = arith.constant 0 : index
    %c0_19 = arith.constant 0 : index
    %c0_20 = arith.constant 0 : index
    %27 = vector.load %arg6[%c0_18, %c0_19, %c0_20] : memref<1x16x128xbf16, #tpu.memory_space<vmem>>, vector<1x16x128xbf16>
    %28 = vector.shape_cast %27 : vector<1x16x128xbf16> to vector<16x128xbf16>
    %29 = vector.shape_cast %26 : vector<16x128xbf16> to vector<1x16x128xbf16>
    tpu.vector_store %arg6[%c0_18, %c0_19, %c0_20], %29 {strides = array<i32>} : memref<1x16x128xbf16, #tpu.memory_space<vmem>>, vector<1x16x128xbf16>,
    return
  }
  func.func @transform_0(%arg0: i32, %arg1: i32) -> (i32, i32, i32) {
    %c0_i32 = arith.constant 0 : i32
    %c0_i32_0 = arith.constant 0 : i32
    return %arg0, %arg1, %c0_i32 : i32, i32, i32
  }
  func.func @transform_1(%arg0: i32, %arg1: i32) -> (i32, i32, i32) {
    %c1_i32 = arith.constant 1 : i32
    %0 = arith.addi %arg1, %c1_i32 : i32
    %c1_i32_0 = arith.constant 1 : i32
    %1 = arith.muli %0, %c1_i32_0 : i32
    %c0_i32 = arith.constant 0 : i32
    %c0_i32_1 = arith.constant 0 : i32
    return %arg0, %1, %c0_i32 : i32, i32, i32
  }
  func.func @transform_2(%arg0: i32, %arg1: i32) -> (i32, i32, i32) {
    %c0_i32 = arith.constant 0 : i32
    %c0_i32_0 = arith.constant 0 : i32
    %c0_i32_1 = arith.constant 0 : i32
    %c0_i32_2 = arith.constant 0 : i32
    return %c0_i32, %c0_i32_0, %c0_i32_1 : i32, i32, i32
  }
  func.func @transform_3(%arg0: i32, %arg1: i32) -> (i32, i32) {
    %c0_i32 = arith.constant 0 : i32
    %c0_i32_0 = arith.constant 0 : i32
    %c0_i32_1 = arith.constant 0 : i32
    return %c0_i32, %c0_i32_0 : i32, i32
  }
  func.func @transform_4(%arg0: i32, %arg1: i32) -> (i32, i32, i32) {
    %c0_i32 = arith.constant 0 : i32
    %c0_i32_0 = arith.constant 0 : i32
    return %arg0, %arg1, %c0_i32 : i32, i32, i32
  }
}

module attributes {stable_mosaic.version = 11 : i64} {
  func.func @_tapped_conv_kernel(%arg0: i32, %arg1: i32, %arg2: memref<1x16x128xbf16, #tpu.memory_space<vmem>>, %arg3: memref<1x16x128xbf16, #tpu.memory_space<vmem>>, %arg4: memref<3x128x128xbf16, #tpu.memory_space<vmem>>, %arg5: memref<1x128xf32, #tpu.memory_space<vmem>>, %arg6: memref<1x16x128xbf16, #tpu.memory_space<vmem>>, %arg7: memref<1x16x128xbf16, #tpu.memory_space<vmem>>) attributes {dimension_semantics = [#tpu.dimension_semantics<parallel>, #tpu.dimension_semantics<parallel>], iteration_bounds = array<i64: 2, 1>, scalar_prefetch = 0 : i64, scratch_operands = 0 : i64, tpu.core_type = #tpu.core_type<tc>, window_params = [{transform_indices = @transform_0, window_bounds = array<i64: 1, 16, 128>}, {transform_indices = @transform_1, window_bounds = array<i64: 1, 16, 128>}, {pipeline_mode = #tpu.pipeline_mode<synchronous>, transform_indices = @transform_2, window_bounds = array<i64: 3, 128, 128>}, {pipeline_mode = #tpu.pipeline_mode<synchronous>, transform_indices = @transform_3, window_bounds = array<i64: 1, 128>}, {transform_indices = @transform_4, window_bounds = array<i64: 1, 16, 128>}, {transform_indices = @transform_5, window_bounds = array<i64: 1, 16, 128>}]} {
    %c0 = arith.constant 0 : index
    %c0_0 = arith.constant 0 : index
    %c0_1 = arith.constant 0 : index
    %0 = vector.load %arg2[%c0, %c0_0, %c0_1] : memref<1x16x128xbf16, #tpu.memory_space<vmem>>, vector<1x16x128xbf16>
    %1 = vector.shape_cast %0 : vector<1x16x128xbf16> to vector<16x128xbf16>
    %c0_2 = arith.constant 0 : index
    %c0_3 = arith.constant 0 : index
    %c0_4 = arith.constant 0 : index
    %2 = vector.load %arg3[%c0_2, %c0_3, %c0_4] : memref<1x16x128xbf16, #tpu.memory_space<vmem>>, vector<1x16x128xbf16>
    %3 = vector.shape_cast %2 : vector<1x16x128xbf16> to vector<16x128xbf16>
    %4 = tpu.concatenate %1, %3 in 0 : vector<16x128xbf16>, vector<16x128xbf16> -> vector<32x128xbf16>
    %cst = arith.constant 0.000000e+00 : f32
    %5 = vector.broadcast %cst : f32 to vector<16x128xf32>
    %c0_5 = arith.constant 0 : index
    %c0_6 = arith.constant 0 : index
    %c0_7 = arith.constant 0 : index
    %6 = vector.load %arg4[%c0_5, %c0_6, %c0_7] : memref<3x128x128xbf16, #tpu.memory_space<vmem>>, vector<1x128x128xbf16>
    %7 = vector.shape_cast %6 : vector<1x128x128xbf16> to vector<128x128xbf16>
    %cst_8 = arith.constant dense<0.000000e+00> : vector<32x128xf32>
    %8 = tpu.matmul %4, %7, %cst_8 {dimension_numbers = #tpu.dot_dimension_numbers<[1], [0], [0], [1], [0, 0, 1, 1], [], []>} : vector<32x128xbf16>, vector<128x128xbf16>, vector<32x128xf32> -> vector<32x128xf32>
    %9 = vector.extract_strided_slice %8 {offsets = [0, 0], sizes = [16, 128], strides = [1, 1]} : vector<32x128xf32> to vector<16x128xf32>
    %10 = arith.addf %5, %9 : vector<16x128xf32>
    %c1 = arith.constant 1 : index
    %c0_9 = arith.constant 0 : index
    %c0_10 = arith.constant 0 : index
    %11 = vector.load %arg4[%c1, %c0_9, %c0_10] : memref<3x128x128xbf16, #tpu.memory_space<vmem>>, vector<1x128x128xbf16>
    %12 = vector.shape_cast %11 : vector<1x128x128xbf16> to vector<128x128xbf16>
    %cst_11 = arith.constant dense<0.000000e+00> : vector<32x128xf32>
    %13 = tpu.matmul %4, %12, %cst_11 {dimension_numbers = #tpu.dot_dimension_numbers<[1], [0], [0], [1], [0, 0, 1, 1], [], []>} : vector<32x128xbf16>, vector<128x128xbf16>, vector<32x128xf32> -> vector<32x128xf32>
    %14 = vector.extract_strided_slice %13 {offsets = [1, 0], sizes = [16, 128], strides = [1, 1]} : vector<32x128xf32> to vector<16x128xf32>
    %15 = arith.addf %10, %14 : vector<16x128xf32>
    %c2 = arith.constant 2 : index
    %c0_12 = arith.constant 0 : index
    %c0_13 = arith.constant 0 : index
    %16 = vector.load %arg4[%c2, %c0_12, %c0_13] : memref<3x128x128xbf16, #tpu.memory_space<vmem>>, vector<1x128x128xbf16>
    %17 = vector.shape_cast %16 : vector<1x128x128xbf16> to vector<128x128xbf16>
    %cst_14 = arith.constant dense<0.000000e+00> : vector<32x128xf32>
    %18 = tpu.matmul %4, %17, %cst_14 {dimension_numbers = #tpu.dot_dimension_numbers<[1], [0], [0], [1], [0, 0, 1, 1], [], []>} : vector<32x128xbf16>, vector<128x128xbf16>, vector<32x128xf32> -> vector<32x128xf32>
    %19 = vector.extract_strided_slice %18 {offsets = [2, 0], sizes = [16, 128], strides = [1, 1]} : vector<32x128xf32> to vector<16x128xf32>
    %20 = arith.addf %15, %19 : vector<16x128xf32>
    %c0_15 = arith.constant 0 : index
    %c0_16 = arith.constant 0 : index
    %21 = vector.load %arg5[%c0_15, %c0_16] : memref<1x128xf32, #tpu.memory_space<vmem>>, vector<1x128xf32>
    %22 = vector.broadcast %21 : vector<1x128xf32> to vector<16x128xf32>
    %23 = arith.addf %20, %22 : vector<16x128xf32>
    %c0_17 = arith.constant 0 : index
    %c0_18 = arith.constant 0 : index
    %c0_19 = arith.constant 0 : index
    %24 = vector.load %arg6[%c0_17, %c0_18, %c0_19] : memref<1x16x128xbf16, #tpu.memory_space<vmem>>, vector<1x16x128xbf16>
    %25 = vector.shape_cast %24 : vector<1x16x128xbf16> to vector<16x128xbf16>
    %26 = arith.extf %25 : vector<16x128xbf16> to vector<16x128xf32>
    %27 = arith.addf %23, %26 : vector<16x128xf32>
    %28 = arith.truncf %27 : vector<16x128xf32> to vector<16x128xbf16>
    %c0_20 = arith.constant 0 : index
    %c0_21 = arith.constant 0 : index
    %c0_22 = arith.constant 0 : index
    %29 = vector.load %arg7[%c0_20, %c0_21, %c0_22] : memref<1x16x128xbf16, #tpu.memory_space<vmem>>, vector<1x16x128xbf16>
    %30 = vector.shape_cast %29 : vector<1x16x128xbf16> to vector<16x128xbf16>
    %31 = vector.shape_cast %28 : vector<16x128xbf16> to vector<1x16x128xbf16>
    tpu.vector_store %arg7[%c0_20, %c0_21, %c0_22], %31 {strides = array<i32>} : memref<1x16x128xbf16, #tpu.memory_space<vmem>>, vector<1x16x128xbf16>,
    return
  }
  func.func @transform_0(%arg0: i32, %arg1: i32) -> (i32, i32, i32) {
    %c0_i32 = arith.constant 0 : i32
    %c0_i32_0 = arith.constant 0 : i32
    return %arg0, %arg1, %c0_i32 : i32, i32, i32
  }
  func.func @transform_1(%arg0: i32, %arg1: i32) -> (i32, i32, i32) {
    %c1_i32 = arith.constant 1 : i32
    %0 = arith.addi %arg1, %c1_i32 : i32
    %c1_i32_0 = arith.constant 1 : i32
    %1 = arith.muli %0, %c1_i32_0 : i32
    %c0_i32 = arith.constant 0 : i32
    %c0_i32_1 = arith.constant 0 : i32
    return %arg0, %1, %c0_i32 : i32, i32, i32
  }
  func.func @transform_2(%arg0: i32, %arg1: i32) -> (i32, i32, i32) {
    %c0_i32 = arith.constant 0 : i32
    %c0_i32_0 = arith.constant 0 : i32
    %c0_i32_1 = arith.constant 0 : i32
    %c0_i32_2 = arith.constant 0 : i32
    return %c0_i32, %c0_i32_0, %c0_i32_1 : i32, i32, i32
  }
  func.func @transform_3(%arg0: i32, %arg1: i32) -> (i32, i32) {
    %c0_i32 = arith.constant 0 : i32
    %c0_i32_0 = arith.constant 0 : i32
    %c0_i32_1 = arith.constant 0 : i32
    return %c0_i32, %c0_i32_0 : i32, i32
  }
  func.func @transform_4(%arg0: i32, %arg1: i32) -> (i32, i32, i32) {
    %c0_i32 = arith.constant 0 : i32
    %c0_i32_0 = arith.constant 0 : i32
    return %arg0, %arg1, %c0_i32 : i32, i32, i32
  }
  func.func @transform_5(%arg0: i32, %arg1: i32) -> (i32, i32, i32) {
    %c0_i32 = arith.constant 0 : i32
    %c0_i32_0 = arith.constant 0 : i32
    return %arg0, %arg1, %c0_i32 : i32, i32, i32
  }
}

module attributes {stable_mosaic.version = 11 : i64} {
  func.func @_tapped_conv_kernel(%arg0: i32, %arg1: i32, %arg2: memref<1x16x128xbf16, #tpu.memory_space<vmem>>, %arg3: memref<1x16x128xbf16, #tpu.memory_space<vmem>>, %arg4: memref<7x128x256xbf16, #tpu.memory_space<vmem>>, %arg5: memref<1x256xf32, #tpu.memory_space<vmem>>, %arg6: memref<1x16x256xbf16, #tpu.memory_space<vmem>>) attributes {dimension_semantics = [#tpu.dimension_semantics<parallel>, #tpu.dimension_semantics<parallel>], iteration_bounds = array<i64: 2, 1>, scalar_prefetch = 0 : i64, scratch_operands = 0 : i64, tpu.core_type = #tpu.core_type<tc>, window_params = [{transform_indices = @transform_0, window_bounds = array<i64: 1, 16, 128>}, {transform_indices = @transform_1, window_bounds = array<i64: 1, 16, 128>}, {pipeline_mode = #tpu.pipeline_mode<synchronous>, transform_indices = @transform_2, window_bounds = array<i64: 7, 128, 256>}, {pipeline_mode = #tpu.pipeline_mode<synchronous>, transform_indices = @transform_3, window_bounds = array<i64: 1, 256>}, {transform_indices = @transform_4, window_bounds = array<i64: 1, 16, 256>}]} {
    %c0 = arith.constant 0 : index
    %c0_0 = arith.constant 0 : index
    %c0_1 = arith.constant 0 : index
    %0 = vector.load %arg2[%c0, %c0_0, %c0_1] : memref<1x16x128xbf16, #tpu.memory_space<vmem>>, vector<1x16x128xbf16>
    %1 = vector.shape_cast %0 : vector<1x16x128xbf16> to vector<16x128xbf16>
    %c0_2 = arith.constant 0 : index
    %c0_3 = arith.constant 0 : index
    %c0_4 = arith.constant 0 : index
    %2 = vector.load %arg3[%c0_2, %c0_3, %c0_4] : memref<1x16x128xbf16, #tpu.memory_space<vmem>>, vector<1x16x128xbf16>
    %3 = vector.shape_cast %2 : vector<1x16x128xbf16> to vector<16x128xbf16>
    %4 = tpu.concatenate %1, %3 in 0 : vector<16x128xbf16>, vector<16x128xbf16> -> vector<32x128xbf16>
    %cst = arith.constant 0.000000e+00 : f32
    %5 = vector.broadcast %cst : f32 to vector<16x256xf32>
    %c0_5 = arith.constant 0 : index
    %c0_6 = arith.constant 0 : index
    %c0_7 = arith.constant 0 : index
    %6 = vector.load %arg4[%c0_5, %c0_6, %c0_7] : memref<7x128x256xbf16, #tpu.memory_space<vmem>>, vector<1x128x256xbf16>
    %7 = vector.shape_cast %6 : vector<1x128x256xbf16> to vector<128x256xbf16>
    %cst_8 = arith.constant dense<0.000000e+00> : vector<32x256xf32>
    %8 = tpu.matmul %4, %7, %cst_8 {dimension_numbers = #tpu.dot_dimension_numbers<[1], [0], [0], [1], [0, 0, 1, 1], [], []>} : vector<32x128xbf16>, vector<128x256xbf16>, vector<32x256xf32> -> vector<32x256xf32>
    %9 = vector.extract_strided_slice %8 {offsets = [0, 0], sizes = [16, 256], strides = [1, 1]} : vector<32x256xf32> to vector<16x256xf32>
    %10 = arith.addf %5, %9 : vector<16x256xf32>
    %c1 = arith.constant 1 : index
    %c0_9 = arith.constant 0 : index
    %c0_10 = arith.constant 0 : index
    %11 = vector.load %arg4[%c1, %c0_9, %c0_10] : memref<7x128x256xbf16, #tpu.memory_space<vmem>>, vector<1x128x256xbf16>
    %12 = vector.shape_cast %11 : vector<1x128x256xbf16> to vector<128x256xbf16>
    %cst_11 = arith.constant dense<0.000000e+00> : vector<32x256xf32>
    %13 = tpu.matmul %4, %12, %cst_11 {dimension_numbers = #tpu.dot_dimension_numbers<[1], [0], [0], [1], [0, 0, 1, 1], [], []>} : vector<32x128xbf16>, vector<128x256xbf16>, vector<32x256xf32> -> vector<32x256xf32>
    %14 = vector.extract_strided_slice %13 {offsets = [1, 0], sizes = [16, 256], strides = [1, 1]} : vector<32x256xf32> to vector<16x256xf32>
    %15 = arith.addf %10, %14 : vector<16x256xf32>
    %c2 = arith.constant 2 : index
    %c0_12 = arith.constant 0 : index
    %c0_13 = arith.constant 0 : index
    %16 = vector.load %arg4[%c2, %c0_12, %c0_13] : memref<7x128x256xbf16, #tpu.memory_space<vmem>>, vector<1x128x256xbf16>
    %17 = vector.shape_cast %16 : vector<1x128x256xbf16> to vector<128x256xbf16>
    %cst_14 = arith.constant dense<0.000000e+00> : vector<32x256xf32>
    %18 = tpu.matmul %4, %17, %cst_14 {dimension_numbers = #tpu.dot_dimension_numbers<[1], [0], [0], [1], [0, 0, 1, 1], [], []>} : vector<32x128xbf16>, vector<128x256xbf16>, vector<32x256xf32> -> vector<32x256xf32>
    %19 = vector.extract_strided_slice %18 {offsets = [2, 0], sizes = [16, 256], strides = [1, 1]} : vector<32x256xf32> to vector<16x256xf32>
    %20 = arith.addf %15, %19 : vector<16x256xf32>
    %c3 = arith.constant 3 : index
    %c0_15 = arith.constant 0 : index
    %c0_16 = arith.constant 0 : index
    %21 = vector.load %arg4[%c3, %c0_15, %c0_16] : memref<7x128x256xbf16, #tpu.memory_space<vmem>>, vector<1x128x256xbf16>
    %22 = vector.shape_cast %21 : vector<1x128x256xbf16> to vector<128x256xbf16>
    %cst_17 = arith.constant dense<0.000000e+00> : vector<32x256xf32>
    %23 = tpu.matmul %4, %22, %cst_17 {dimension_numbers = #tpu.dot_dimension_numbers<[1], [0], [0], [1], [0, 0, 1, 1], [], []>} : vector<32x128xbf16>, vector<128x256xbf16>, vector<32x256xf32> -> vector<32x256xf32>
    %24 = vector.extract_strided_slice %23 {offsets = [3, 0], sizes = [16, 256], strides = [1, 1]} : vector<32x256xf32> to vector<16x256xf32>
    %25 = arith.addf %20, %24 : vector<16x256xf32>
    %c4 = arith.constant 4 : index
    %c0_18 = arith.constant 0 : index
    %c0_19 = arith.constant 0 : index
    %26 = vector.load %arg4[%c4, %c0_18, %c0_19] : memref<7x128x256xbf16, #tpu.memory_space<vmem>>, vector<1x128x256xbf16>
    %27 = vector.shape_cast %26 : vector<1x128x256xbf16> to vector<128x256xbf16>
    %cst_20 = arith.constant dense<0.000000e+00> : vector<32x256xf32>
    %28 = tpu.matmul %4, %27, %cst_20 {dimension_numbers = #tpu.dot_dimension_numbers<[1], [0], [0], [1], [0, 0, 1, 1], [], []>} : vector<32x128xbf16>, vector<128x256xbf16>, vector<32x256xf32> -> vector<32x256xf32>
    %29 = vector.extract_strided_slice %28 {offsets = [4, 0], sizes = [16, 256], strides = [1, 1]} : vector<32x256xf32> to vector<16x256xf32>
    %30 = arith.addf %25, %29 : vector<16x256xf32>
    %c5 = arith.constant 5 : index
    %c0_21 = arith.constant 0 : index
    %c0_22 = arith.constant 0 : index
    %31 = vector.load %arg4[%c5, %c0_21, %c0_22] : memref<7x128x256xbf16, #tpu.memory_space<vmem>>, vector<1x128x256xbf16>
    %32 = vector.shape_cast %31 : vector<1x128x256xbf16> to vector<128x256xbf16>
    %cst_23 = arith.constant dense<0.000000e+00> : vector<32x256xf32>
    %33 = tpu.matmul %4, %32, %cst_23 {dimension_numbers = #tpu.dot_dimension_numbers<[1], [0], [0], [1], [0, 0, 1, 1], [], []>} : vector<32x128xbf16>, vector<128x256xbf16>, vector<32x256xf32> -> vector<32x256xf32>
    %34 = vector.extract_strided_slice %33 {offsets = [5, 0], sizes = [16, 256], strides = [1, 1]} : vector<32x256xf32> to vector<16x256xf32>
    %35 = arith.addf %30, %34 : vector<16x256xf32>
    %c6 = arith.constant 6 : index
    %c0_24 = arith.constant 0 : index
    %c0_25 = arith.constant 0 : index
    %36 = vector.load %arg4[%c6, %c0_24, %c0_25] : memref<7x128x256xbf16, #tpu.memory_space<vmem>>, vector<1x128x256xbf16>
    %37 = vector.shape_cast %36 : vector<1x128x256xbf16> to vector<128x256xbf16>
    %cst_26 = arith.constant dense<0.000000e+00> : vector<32x256xf32>
    %38 = tpu.matmul %4, %37, %cst_26 {dimension_numbers = #tpu.dot_dimension_numbers<[1], [0], [0], [1], [0, 0, 1, 1], [], []>} : vector<32x128xbf16>, vector<128x256xbf16>, vector<32x256xf32> -> vector<32x256xf32>
    %39 = vector.extract_strided_slice %38 {offsets = [6, 0], sizes = [16, 256], strides = [1, 1]} : vector<32x256xf32> to vector<16x256xf32>
    %40 = arith.addf %35, %39 : vector<16x256xf32>
    %c0_27 = arith.constant 0 : index
    %c0_28 = arith.constant 0 : index
    %41 = vector.load %arg5[%c0_27, %c0_28] : memref<1x256xf32, #tpu.memory_space<vmem>>, vector<1x256xf32>
    %42 = vector.broadcast %41 : vector<1x256xf32> to vector<16x256xf32>
    %43 = arith.addf %40, %42 : vector<16x256xf32>
    %cst_29 = arith.constant 0.000000e+00 : f32
    %44 = vector.broadcast %cst_29 : f32 to vector<16x256xf32>
    %45 = arith.maximumf %43, %44 : vector<16x256xf32>
    %46 = arith.truncf %45 : vector<16x256xf32> to vector<16x256xbf16>
    %c0_30 = arith.constant 0 : index
    %c0_31 = arith.constant 0 : index
    %c0_32 = arith.constant 0 : index
    %47 = vector.load %arg6[%c0_30, %c0_31, %c0_32] : memref<1x16x256xbf16, #tpu.memory_space<vmem>>, vector<1x16x256xbf16>
    %48 = vector.shape_cast %47 : vector<1x16x256xbf16> to vector<16x256xbf16>
    %49 = vector.shape_cast %46 : vector<16x256xbf16> to vector<1x16x256xbf16>
    tpu.vector_store %arg6[%c0_30, %c0_31, %c0_32], %49 {strides = array<i32>} : memref<1x16x256xbf16, #tpu.memory_space<vmem>>, vector<1x16x256xbf16>,
    return
  }
  func.func @transform_0(%arg0: i32, %arg1: i32) -> (i32, i32, i32) {
    %c0_i32 = arith.constant 0 : i32
    %c0_i32_0 = arith.constant 0 : i32
    return %arg0, %arg1, %c0_i32 : i32, i32, i32
  }
  func.func @transform_1(%arg0: i32, %arg1: i32) -> (i32, i32, i32) {
    %c1_i32 = arith.constant 1 : i32
    %0 = arith.addi %arg1, %c1_i32 : i32
    %c1_i32_0 = arith.constant 1 : i32
    %1 = arith.muli %0, %c1_i32_0 : i32
    %c0_i32 = arith.constant 0 : i32
    %c0_i32_1 = arith.constant 0 : i32
    return %arg0, %1, %c0_i32 : i32, i32, i32
  }
  func.func @transform_2(%arg0: i32, %arg1: i32) -> (i32, i32, i32) {
    %c0_i32 = arith.constant 0 : i32
    %c0_i32_0 = arith.constant 0 : i32
    %c0_i32_1 = arith.constant 0 : i32
    %c0_i32_2 = arith.constant 0 : i32
    return %c0_i32, %c0_i32_0, %c0_i32_1 : i32, i32, i32
  }
  func.func @transform_3(%arg0: i32, %arg1: i32) -> (i32, i32) {
    %c0_i32 = arith.constant 0 : i32
    %c0_i32_0 = arith.constant 0 : i32
    %c0_i32_1 = arith.constant 0 : i32
    return %c0_i32, %c0_i32_0 : i32, i32
  }
  func.func @transform_4(%arg0: i32, %arg1: i32) -> (i32, i32, i32) {
    %c0_i32 = arith.constant 0 : i32
    %c0_i32_0 = arith.constant 0 : i32
    return %arg0, %arg1, %c0_i32 : i32, i32, i32
  }
}

module attributes {stable_mosaic.version = 11 : i64} {
  func.func @_tapped_conv_kernel(%arg0: i32, %arg1: i32, %arg2: memref<1x16x64xbf16, #tpu.memory_space<vmem>>, %arg3: memref<1x16x64xbf16, #tpu.memory_space<vmem>>, %arg4: memref<7x64x128xbf16, #tpu.memory_space<vmem>>, %arg5: memref<1x128xf32, #tpu.memory_space<vmem>>, %arg6: memref<1x16x128xbf16, #tpu.memory_space<vmem>>) attributes {dimension_semantics = [#tpu.dimension_semantics<parallel>, #tpu.dimension_semantics<parallel>], iteration_bounds = array<i64: 2, 1>, scalar_prefetch = 0 : i64, scratch_operands = 0 : i64, tpu.core_type = #tpu.core_type<tc>, window_params = [{transform_indices = @transform_0, window_bounds = array<i64: 1, 16, 64>}, {transform_indices = @transform_1, window_bounds = array<i64: 1, 16, 64>}, {pipeline_mode = #tpu.pipeline_mode<synchronous>, transform_indices = @transform_2, window_bounds = array<i64: 7, 64, 128>}, {pipeline_mode = #tpu.pipeline_mode<synchronous>, transform_indices = @transform_3, window_bounds = array<i64: 1, 128>}, {transform_indices = @transform_4, window_bounds = array<i64: 1, 16, 128>}]} {
    %c0 = arith.constant 0 : index
    %c0_0 = arith.constant 0 : index
    %c0_1 = arith.constant 0 : index
    %0 = vector.load %arg2[%c0, %c0_0, %c0_1] : memref<1x16x64xbf16, #tpu.memory_space<vmem>>, vector<1x16x64xbf16>
    %1 = vector.shape_cast %0 : vector<1x16x64xbf16> to vector<16x64xbf16>
    %c0_2 = arith.constant 0 : index
    %c0_3 = arith.constant 0 : index
    %c0_4 = arith.constant 0 : index
    %2 = vector.load %arg3[%c0_2, %c0_3, %c0_4] : memref<1x16x64xbf16, #tpu.memory_space<vmem>>, vector<1x16x64xbf16>
    %3 = vector.shape_cast %2 : vector<1x16x64xbf16> to vector<16x64xbf16>
    %4 = tpu.concatenate %1, %3 in 0 : vector<16x64xbf16>, vector<16x64xbf16> -> vector<32x64xbf16>
    %cst = arith.constant 0.000000e+00 : f32
    %5 = vector.broadcast %cst : f32 to vector<16x128xf32>
    %c0_5 = arith.constant 0 : index
    %c0_6 = arith.constant 0 : index
    %c0_7 = arith.constant 0 : index
    %6 = vector.load %arg4[%c0_5, %c0_6, %c0_7] : memref<7x64x128xbf16, #tpu.memory_space<vmem>>, vector<1x64x128xbf16>
    %7 = vector.shape_cast %6 : vector<1x64x128xbf16> to vector<64x128xbf16>
    %cst_8 = arith.constant dense<0.000000e+00> : vector<32x128xf32>
    %8 = tpu.matmul %4, %7, %cst_8 {dimension_numbers = #tpu.dot_dimension_numbers<[1], [0], [0], [1], [0, 0, 1, 1], [], []>} : vector<32x64xbf16>, vector<64x128xbf16>, vector<32x128xf32> -> vector<32x128xf32>
    %9 = vector.extract_strided_slice %8 {offsets = [0, 0], sizes = [16, 128], strides = [1, 1]} : vector<32x128xf32> to vector<16x128xf32>
    %10 = arith.addf %5, %9 : vector<16x128xf32>
    %c1 = arith.constant 1 : index
    %c0_9 = arith.constant 0 : index
    %c0_10 = arith.constant 0 : index
    %11 = vector.load %arg4[%c1, %c0_9, %c0_10] : memref<7x64x128xbf16, #tpu.memory_space<vmem>>, vector<1x64x128xbf16>
    %12 = vector.shape_cast %11 : vector<1x64x128xbf16> to vector<64x128xbf16>
    %cst_11 = arith.constant dense<0.000000e+00> : vector<32x128xf32>
    %13 = tpu.matmul %4, %12, %cst_11 {dimension_numbers = #tpu.dot_dimension_numbers<[1], [0], [0], [1], [0, 0, 1, 1], [], []>} : vector<32x64xbf16>, vector<64x128xbf16>, vector<32x128xf32> -> vector<32x128xf32>
    %14 = vector.extract_strided_slice %13 {offsets = [1, 0], sizes = [16, 128], strides = [1, 1]} : vector<32x128xf32> to vector<16x128xf32>
    %15 = arith.addf %10, %14 : vector<16x128xf32>
    %c2 = arith.constant 2 : index
    %c0_12 = arith.constant 0 : index
    %c0_13 = arith.constant 0 : index
    %16 = vector.load %arg4[%c2, %c0_12, %c0_13] : memref<7x64x128xbf16, #tpu.memory_space<vmem>>, vector<1x64x128xbf16>
    %17 = vector.shape_cast %16 : vector<1x64x128xbf16> to vector<64x128xbf16>
    %cst_14 = arith.constant dense<0.000000e+00> : vector<32x128xf32>
    %18 = tpu.matmul %4, %17, %cst_14 {dimension_numbers = #tpu.dot_dimension_numbers<[1], [0], [0], [1], [0, 0, 1, 1], [], []>} : vector<32x64xbf16>, vector<64x128xbf16>, vector<32x128xf32> -> vector<32x128xf32>
    %19 = vector.extract_strided_slice %18 {offsets = [2, 0], sizes = [16, 128], strides = [1, 1]} : vector<32x128xf32> to vector<16x128xf32>
    %20 = arith.addf %15, %19 : vector<16x128xf32>
    %c3 = arith.constant 3 : index
    %c0_15 = arith.constant 0 : index
    %c0_16 = arith.constant 0 : index
    %21 = vector.load %arg4[%c3, %c0_15, %c0_16] : memref<7x64x128xbf16, #tpu.memory_space<vmem>>, vector<1x64x128xbf16>
    %22 = vector.shape_cast %21 : vector<1x64x128xbf16> to vector<64x128xbf16>
    %cst_17 = arith.constant dense<0.000000e+00> : vector<32x128xf32>
    %23 = tpu.matmul %4, %22, %cst_17 {dimension_numbers = #tpu.dot_dimension_numbers<[1], [0], [0], [1], [0, 0, 1, 1], [], []>} : vector<32x64xbf16>, vector<64x128xbf16>, vector<32x128xf32> -> vector<32x128xf32>
    %24 = vector.extract_strided_slice %23 {offsets = [3, 0], sizes = [16, 128], strides = [1, 1]} : vector<32x128xf32> to vector<16x128xf32>
    %25 = arith.addf %20, %24 : vector<16x128xf32>
    %c4 = arith.constant 4 : index
    %c0_18 = arith.constant 0 : index
    %c0_19 = arith.constant 0 : index
    %26 = vector.load %arg4[%c4, %c0_18, %c0_19] : memref<7x64x128xbf16, #tpu.memory_space<vmem>>, vector<1x64x128xbf16>
    %27 = vector.shape_cast %26 : vector<1x64x128xbf16> to vector<64x128xbf16>
    %cst_20 = arith.constant dense<0.000000e+00> : vector<32x128xf32>
    %28 = tpu.matmul %4, %27, %cst_20 {dimension_numbers = #tpu.dot_dimension_numbers<[1], [0], [0], [1], [0, 0, 1, 1], [], []>} : vector<32x64xbf16>, vector<64x128xbf16>, vector<32x128xf32> -> vector<32x128xf32>
    %29 = vector.extract_strided_slice %28 {offsets = [4, 0], sizes = [16, 128], strides = [1, 1]} : vector<32x128xf32> to vector<16x128xf32>
    %30 = arith.addf %25, %29 : vector<16x128xf32>
    %c5 = arith.constant 5 : index
    %c0_21 = arith.constant 0 : index
    %c0_22 = arith.constant 0 : index
    %31 = vector.load %arg4[%c5, %c0_21, %c0_22] : memref<7x64x128xbf16, #tpu.memory_space<vmem>>, vector<1x64x128xbf16>
    %32 = vector.shape_cast %31 : vector<1x64x128xbf16> to vector<64x128xbf16>
    %cst_23 = arith.constant dense<0.000000e+00> : vector<32x128xf32>
    %33 = tpu.matmul %4, %32, %cst_23 {dimension_numbers = #tpu.dot_dimension_numbers<[1], [0], [0], [1], [0, 0, 1, 1], [], []>} : vector<32x64xbf16>, vector<64x128xbf16>, vector<32x128xf32> -> vector<32x128xf32>
    %34 = vector.extract_strided_slice %33 {offsets = [5, 0], sizes = [16, 128], strides = [1, 1]} : vector<32x128xf32> to vector<16x128xf32>
    %35 = arith.addf %30, %34 : vector<16x128xf32>
    %c6 = arith.constant 6 : index
    %c0_24 = arith.constant 0 : index
    %c0_25 = arith.constant 0 : index
    %36 = vector.load %arg4[%c6, %c0_24, %c0_25] : memref<7x64x128xbf16, #tpu.memory_space<vmem>>, vector<1x64x128xbf16>
    %37 = vector.shape_cast %36 : vector<1x64x128xbf16> to vector<64x128xbf16>
    %cst_26 = arith.constant dense<0.000000e+00> : vector<32x128xf32>
    %38 = tpu.matmul %4, %37, %cst_26 {dimension_numbers = #tpu.dot_dimension_numbers<[1], [0], [0], [1], [0, 0, 1, 1], [], []>} : vector<32x64xbf16>, vector<64x128xbf16>, vector<32x128xf32> -> vector<32x128xf32>
    %39 = vector.extract_strided_slice %38 {offsets = [6, 0], sizes = [16, 128], strides = [1, 1]} : vector<32x128xf32> to vector<16x128xf32>
    %40 = arith.addf %35, %39 : vector<16x128xf32>
    %c0_27 = arith.constant 0 : index
    %c0_28 = arith.constant 0 : index
    %41 = vector.load %arg5[%c0_27, %c0_28] : memref<1x128xf32, #tpu.memory_space<vmem>>, vector<1x128xf32>
    %42 = vector.broadcast %41 : vector<1x128xf32> to vector<16x128xf32>
    %43 = arith.addf %40, %42 : vector<16x128xf32>
    %cst_29 = arith.constant 0.000000e+00 : f32
    %44 = vector.broadcast %cst_29 : f32 to vector<16x128xf32>
    %45 = arith.maximumf %43, %44 : vector<16x128xf32>
    %46 = arith.truncf %45 : vector<16x128xf32> to vector<16x128xbf16>
    %c0_30 = arith.constant 0 : index
    %c0_31 = arith.constant 0 : index
    %c0_32 = arith.constant 0 : index
    %47 = vector.load %arg6[%c0_30, %c0_31, %c0_32] : memref<1x16x128xbf16, #tpu.memory_space<vmem>>, vector<1x16x128xbf16>
    %48 = vector.shape_cast %47 : vector<1x16x128xbf16> to vector<16x128xbf16>
    %49 = vector.shape_cast %46 : vector<16x128xbf16> to vector<1x16x128xbf16>
    tpu.vector_store %arg6[%c0_30, %c0_31, %c0_32], %49 {strides = array<i32>} : memref<1x16x128xbf16, #tpu.memory_space<vmem>>, vector<1x16x128xbf16>,
    return
  }
  func.func @transform_0(%arg0: i32, %arg1: i32) -> (i32, i32, i32) {
    %c0_i32 = arith.constant 0 : i32
    %c0_i32_0 = arith.constant 0 : i32
    return %arg0, %arg1, %c0_i32 : i32, i32, i32
  }
  func.func @transform_1(%arg0: i32, %arg1: i32) -> (i32, i32, i32) {
    %c1_i32 = arith.constant 1 : i32
    %0 = arith.addi %arg1, %c1_i32 : i32
    %c1_i32_0 = arith.constant 1 : i32
    %1 = arith.muli %0, %c1_i32_0 : i32
    %c0_i32 = arith.constant 0 : i32
    %c0_i32_1 = arith.constant 0 : i32
    return %arg0, %1, %c0_i32 : i32, i32, i32
  }
  func.func @transform_2(%arg0: i32, %arg1: i32) -> (i32, i32, i32) {
    %c0_i32 = arith.constant 0 : i32
    %c0_i32_0 = arith.constant 0 : i32
    %c0_i32_1 = arith.constant 0 : i32
    %c0_i32_2 = arith.constant 0 : i32
    return %c0_i32, %c0_i32_0, %c0_i32_1 : i32, i32, i32
  }
  func.func @transform_3(%arg0: i32, %arg1: i32) -> (i32, i32) {
    %c0_i32 = arith.constant 0 : i32
    %c0_i32_0 = arith.constant 0 : i32
    %c0_i32_1 = arith.constant 0 : i32
    return %c0_i32, %c0_i32_0 : i32, i32
  }
  func.func @transform_4(%arg0: i32, %arg1: i32) -> (i32, i32, i32) {
    %c0_i32 = arith.constant 0 : i32
    %c0_i32_0 = arith.constant 0 : i32
    return %arg0, %arg1, %c0_i32 : i32, i32, i32
  }
}

module attributes {stable_mosaic.version = 11 : i64} {
  func.func @_tapped_conv_kernel(%arg0: i32, %arg1: i32, %arg2: memref<1x64x8xbf16, #tpu.memory_space<vmem>>, %arg3: memref<1x16x8xbf16, #tpu.memory_space<vmem>>, %arg4: memref<7x8x4xbf16, #tpu.memory_space<vmem>>, %arg5: memref<1x4xf32, #tpu.memory_space<vmem>>, %arg6: memref<1x64x4xf32, #tpu.memory_space<vmem>>) attributes {dimension_semantics = [#tpu.dimension_semantics<parallel>, #tpu.dimension_semantics<parallel>], iteration_bounds = array<i64: 2, 1>, scalar_prefetch = 0 : i64, scratch_operands = 0 : i64, tpu.core_type = #tpu.core_type<tc>, window_params = [{transform_indices = @transform_0, window_bounds = array<i64: 1, 64, 8>}, {transform_indices = @transform_1, window_bounds = array<i64: 1, 16, 8>}, {pipeline_mode = #tpu.pipeline_mode<synchronous>, transform_indices = @transform_2, window_bounds = array<i64: 7, 8, 4>}, {pipeline_mode = #tpu.pipeline_mode<synchronous>, transform_indices = @transform_3, window_bounds = array<i64: 1, 4>}, {transform_indices = @transform_4, window_bounds = array<i64: 1, 64, 4>}]} {
    %c0 = arith.constant 0 : index
    %c0_0 = arith.constant 0 : index
    %c0_1 = arith.constant 0 : index
    %0 = vector.load %arg2[%c0, %c0_0, %c0_1] : memref<1x64x8xbf16, #tpu.memory_space<vmem>>, vector<1x64x8xbf16>
    %1 = vector.shape_cast %0 : vector<1x64x8xbf16> to vector<64x8xbf16>
    %c0_2 = arith.constant 0 : index
    %c0_3 = arith.constant 0 : index
    %c0_4 = arith.constant 0 : index
    %2 = vector.load %arg3[%c0_2, %c0_3, %c0_4] : memref<1x16x8xbf16, #tpu.memory_space<vmem>>, vector<1x16x8xbf16>
    %3 = vector.shape_cast %2 : vector<1x16x8xbf16> to vector<16x8xbf16>
    %4 = tpu.concatenate %1, %3 in 0 : vector<64x8xbf16>, vector<16x8xbf16> -> vector<80x8xbf16>
    %cst = arith.constant 0.000000e+00 : f32
    %5 = vector.broadcast %cst : f32 to vector<64x4xf32>
    %c0_5 = arith.constant 0 : index
    %c0_6 = arith.constant 0 : index
    %c0_7 = arith.constant 0 : index
    %6 = vector.load %arg4[%c0_5, %c0_6, %c0_7] : memref<7x8x4xbf16, #tpu.memory_space<vmem>>, vector<1x8x4xbf16>
    %7 = vector.shape_cast %6 : vector<1x8x4xbf16> to vector<8x4xbf16>
    %cst_8 = arith.constant dense<0.000000e+00> : vector<80x4xf32>
    %8 = tpu.matmul %4, %7, %cst_8 {dimension_numbers = #tpu.dot_dimension_numbers<[1], [0], [0], [1], [0, 0, 1, 1], [], []>} : vector<80x8xbf16>, vector<8x4xbf16>, vector<80x4xf32> -> vector<80x4xf32>
    %9 = vector.extract_strided_slice %8 {offsets = [0, 0], sizes = [64, 4], strides = [1, 1]} : vector<80x4xf32> to vector<64x4xf32>
    %10 = arith.addf %5, %9 : vector<64x4xf32>
    %c1 = arith.constant 1 : index
    %c0_9 = arith.constant 0 : index
    %c0_10 = arith.constant 0 : index
    %11 = vector.load %arg4[%c1, %c0_9, %c0_10] : memref<7x8x4xbf16, #tpu.memory_space<vmem>>, vector<1x8x4xbf16>
    %12 = vector.shape_cast %11 : vector<1x8x4xbf16> to vector<8x4xbf16>
    %cst_11 = arith.constant dense<0.000000e+00> : vector<80x4xf32>
    %13 = tpu.matmul %4, %12, %cst_11 {dimension_numbers = #tpu.dot_dimension_numbers<[1], [0], [0], [1], [0, 0, 1, 1], [], []>} : vector<80x8xbf16>, vector<8x4xbf16>, vector<80x4xf32> -> vector<80x4xf32>
    %14 = vector.extract_strided_slice %13 {offsets = [1, 0], sizes = [64, 4], strides = [1, 1]} : vector<80x4xf32> to vector<64x4xf32>
    %15 = arith.addf %10, %14 : vector<64x4xf32>
    %c2 = arith.constant 2 : index
    %c0_12 = arith.constant 0 : index
    %c0_13 = arith.constant 0 : index
    %16 = vector.load %arg4[%c2, %c0_12, %c0_13] : memref<7x8x4xbf16, #tpu.memory_space<vmem>>, vector<1x8x4xbf16>
    %17 = vector.shape_cast %16 : vector<1x8x4xbf16> to vector<8x4xbf16>
    %cst_14 = arith.constant dense<0.000000e+00> : vector<80x4xf32>
    %18 = tpu.matmul %4, %17, %cst_14 {dimension_numbers = #tpu.dot_dimension_numbers<[1], [0], [0], [1], [0, 0, 1, 1], [], []>} : vector<80x8xbf16>, vector<8x4xbf16>, vector<80x4xf32> -> vector<80x4xf32>
    %19 = vector.extract_strided_slice %18 {offsets = [2, 0], sizes = [64, 4], strides = [1, 1]} : vector<80x4xf32> to vector<64x4xf32>
    %20 = arith.addf %15, %19 : vector<64x4xf32>
    %c3 = arith.constant 3 : index
    %c0_15 = arith.constant 0 : index
    %c0_16 = arith.constant 0 : index
    %21 = vector.load %arg4[%c3, %c0_15, %c0_16] : memref<7x8x4xbf16, #tpu.memory_space<vmem>>, vector<1x8x4xbf16>
    %22 = vector.shape_cast %21 : vector<1x8x4xbf16> to vector<8x4xbf16>
    %cst_17 = arith.constant dense<0.000000e+00> : vector<80x4xf32>
    %23 = tpu.matmul %4, %22, %cst_17 {dimension_numbers = #tpu.dot_dimension_numbers<[1], [0], [0], [1], [0, 0, 1, 1], [], []>} : vector<80x8xbf16>, vector<8x4xbf16>, vector<80x4xf32> -> vector<80x4xf32>
    %24 = vector.extract_strided_slice %23 {offsets = [3, 0], sizes = [64, 4], strides = [1, 1]} : vector<80x4xf32> to vector<64x4xf32>
    %25 = arith.addf %20, %24 : vector<64x4xf32>
    %c4 = arith.constant 4 : index
    %c0_18 = arith.constant 0 : index
    %c0_19 = arith.constant 0 : index
    %26 = vector.load %arg4[%c4, %c0_18, %c0_19] : memref<7x8x4xbf16, #tpu.memory_space<vmem>>, vector<1x8x4xbf16>
    %27 = vector.shape_cast %26 : vector<1x8x4xbf16> to vector<8x4xbf16>
    %cst_20 = arith.constant dense<0.000000e+00> : vector<80x4xf32>
    %28 = tpu.matmul %4, %27, %cst_20 {dimension_numbers = #tpu.dot_dimension_numbers<[1], [0], [0], [1], [0, 0, 1, 1], [], []>} : vector<80x8xbf16>, vector<8x4xbf16>, vector<80x4xf32> -> vector<80x4xf32>
    %29 = vector.extract_strided_slice %28 {offsets = [4, 0], sizes = [64, 4], strides = [1, 1]} : vector<80x4xf32> to vector<64x4xf32>
    %30 = arith.addf %25, %29 : vector<64x4xf32>
    %c5 = arith.constant 5 : index
    %c0_21 = arith.constant 0 : index
    %c0_22 = arith.constant 0 : index
    %31 = vector.load %arg4[%c5, %c0_21, %c0_22] : memref<7x8x4xbf16, #tpu.memory_space<vmem>>, vector<1x8x4xbf16>
    %32 = vector.shape_cast %31 : vector<1x8x4xbf16> to vector<8x4xbf16>
    %cst_23 = arith.constant dense<0.000000e+00> : vector<80x4xf32>
    %33 = tpu.matmul %4, %32, %cst_23 {dimension_numbers = #tpu.dot_dimension_numbers<[1], [0], [0], [1], [0, 0, 1, 1], [], []>} : vector<80x8xbf16>, vector<8x4xbf16>, vector<80x4xf32> -> vector<80x4xf32>
    %34 = vector.extract_strided_slice %33 {offsets = [5, 0], sizes = [64, 4], strides = [1, 1]} : vector<80x4xf32> to vector<64x4xf32>
    %35 = arith.addf %30, %34 : vector<64x4xf32>
    %c6 = arith.constant 6 : index
    %c0_24 = arith.constant 0 : index
    %c0_25 = arith.constant 0 : index
    %36 = vector.load %arg4[%c6, %c0_24, %c0_25] : memref<7x8x4xbf16, #tpu.memory_space<vmem>>, vector<1x8x4xbf16>
    %37 = vector.shape_cast %36 : vector<1x8x4xbf16> to vector<8x4xbf16>
    %cst_26 = arith.constant dense<0.000000e+00> : vector<80x4xf32>
    %38 = tpu.matmul %4, %37, %cst_26 {dimension_numbers = #tpu.dot_dimension_numbers<[1], [0], [0], [1], [0, 0, 1, 1], [], []>} : vector<80x8xbf16>, vector<8x4xbf16>, vector<80x4xf32> -> vector<80x4xf32>
    %39 = vector.extract_strided_slice %38 {offsets = [6, 0], sizes = [64, 4], strides = [1, 1]} : vector<80x4xf32> to vector<64x4xf32>
    %40 = arith.addf %35, %39 : vector<64x4xf32>
    %c0_27 = arith.constant 0 : index
    %c0_28 = arith.constant 0 : index
    %41 = vector.load %arg5[%c0_27, %c0_28] : memref<1x4xf32, #tpu.memory_space<vmem>>, vector<1x4xf32>
    %42 = vector.broadcast %41 : vector<1x4xf32> to vector<64x4xf32>
    %43 = arith.addf %40, %42 : vector<64x4xf32>
    %44 = math.tanh %43 : vector<64x4xf32>
    %c0_29 = arith.constant 0 : index
    %c0_30 = arith.constant 0 : index
    %c0_31 = arith.constant 0 : index
    %45 = vector.load %arg6[%c0_29, %c0_30, %c0_31] : memref<1x64x4xf32, #tpu.memory_space<vmem>>, vector<1x64x4xf32>
    %46 = vector.shape_cast %45 : vector<1x64x4xf32> to vector<64x4xf32>
    %47 = vector.shape_cast %44 : vector<64x4xf32> to vector<1x64x4xf32>
    tpu.vector_store %arg6[%c0_29, %c0_30, %c0_31], %47 {strides = array<i32>} : memref<1x64x4xf32, #tpu.memory_space<vmem>>, vector<1x64x4xf32>,
    return
  }
  func.func @transform_0(%arg0: i32, %arg1: i32) -> (i32, i32, i32) {
    %c0_i32 = arith.constant 0 : i32
    %c0_i32_0 = arith.constant 0 : i32
    return %arg0, %arg1, %c0_i32 : i32, i32, i32
  }
  func.func @transform_1(%arg0: i32, %arg1: i32) -> (i32, i32, i32) {
    %c1_i32 = arith.constant 1 : i32
    %0 = arith.addi %arg1, %c1_i32 : i32
    %c4_i32 = arith.constant 4 : i32
    %1 = arith.muli %0, %c4_i32 : i32
    %c0_i32 = arith.constant 0 : i32
    %c0_i32_0 = arith.constant 0 : i32
    return %arg0, %1, %c0_i32 : i32, i32, i32
  }
  func.func @transform_2(%arg0: i32, %arg1: i32) -> (i32, i32, i32) {
    %c0_i32 = arith.constant 0 : i32
    %c0_i32_0 = arith.constant 0 : i32
    %c0_i32_1 = arith.constant 0 : i32
    %c0_i32_2 = arith.constant 0 : i32
    return %c0_i32, %c0_i32_0, %c0_i32_1 : i32, i32, i32
  }
  func.func @transform_3(%arg0: i32, %arg1: i32) -> (i32, i32) {
    %c0_i32 = arith.constant 0 : i32
    %c0_i32_0 = arith.constant 0 : i32
    %c0_i32_1 = arith.constant 0 : i32
    return %c0_i32, %c0_i32_0 : i32, i32
  }
  func.func @transform_4(%arg0: i32, %arg1: i32) -> (i32, i32, i32) {
    %c0_i32 = arith.constant 0 : i32
    %c0_i32_0 = arith.constant 0 : i32
    return %arg0, %arg1, %c0_i32 : i32, i32, i32
  }
}

</mosaic_0001>

<llo_original>
// kernel: cycle_generator_forward.13
$region0: #{cycle_generator_forward.13}
  #allocation0 [shape = 'u32[]', space=smem, size = 0x4, offset = 0x4, fixed_abs, tag = 'smem constant byte address 0x4 - core index']
  #allocation1 [shape = 'u32[144,128]{1,0:T(1,128)}', space=vmem, size = 0x12000, scoped, tag = 'internal scratch']
  %s0 = inlined_call_operand.vmem [shape: bf16[2,32,32], index: 0, kind: input, shape index: {}, may-alias: {0,1}]
  %s1 = inlined_call_operand.vmem [shape: bf16[2,32,32], index: 1, kind: input, shape index: {}, may-alias: {0,1}]
  %s2 = inlined_call_operand.vmem [shape: bf16[7,32,32], index: 2, kind: input, shape index: {}]
  %s3 = inlined_call_operand.vmem [shape: f32[1,32], index: 3, kind: input, shape index: {}]
  %s4 = inlined_call_operand.vmem [shape: bf16[2,16,32], index: 4, kind: output, shape index: {}]
  %s5 = sld [smem:[#allocation0]]
  $region49: #{cycle_generator_forward.13} parent=0
    _
  %s7 = ssub.s32 1, %s5
  %s8 = scalar_select 0, %s7, %s5
  loop: start=0, step=1, limit=4
  $region2: #{cycle_generator_forward.13} parent=0 // loop_pre_header
    _
  $region3: #{cycle_generator_forward.13} parent=0 // loop_header
    %s10 = sphi 0, %s14
    %p11 = scmp.ge.s32.totalorder %s10, 4
    %s17 = sphi 0, %s29
    %s18 = sphi 0, %s25
    %s19 = sphi 0, %s17
    %s20 = sphi 0, %s18
    %s21 = sphi 0, %s19
    %s22 = sphi 0, %s20
    %s34 = sphi 0, %s36
    %s37 = sphi 0, %s34
    %s38 = sphi 0, %s37
    %s54 = sphi 0, %s38
    %s64 = sphi 0, %s66
    %s67 = sphi 0, %s64
    %s68 = sphi 0, %s67
    %s84 = sphi 0, %s68
    %s88 = sphi 0, %s88
    %s90 = sphi 0, %s88
    %s91 = sphi 0, %s90
    %s105 = sphi 0, %s91
    %s109 = sphi 0, %s109
    %s111 = sphi 0, %s109
    %s112 = sphi 0, %s111
    %s126 = sphi 0, %s112
    %s134 = sphi 0, %s136
    %s137 = sphi 0, %s134
    %s138 = sphi 0, %s137
    %s154 = sphi 0, %s138
  $region4: #{cycle_generator_forward.13} parent=0 // loop_header_branch
    %13 = sbr.rel (%p11) target = $region8
  $region5: #{cycle_generator_forward.13} parent=0 // loop_body
    %s15 = ssub.s32 %s10, 1
    %s16 = ssub.s32 %s10, 2
    %s23 = sadd.s32 1, %s18
    %p24 = scmp.ge.s32.totalorder %s23, 1
    %s25 = scalar_select %p24, 0, %s23
    %s26 = sadd.s32 1, %s17
    %s27 = scalar_select %p24, %s26, %s17
    %p28 = scmp.ge.s32.totalorder %s27, 2
    %s29 = scalar_select %p28, 0, %s27
    %s30 = ssub.s32 %s17, %s29
    %s31 = ssub.s32 %s18, %s25
    %s32 = sor.u32 %s30, %s31
    %p33 = scmp.eq.s32.totalorder %s32, 0
    %s35 = sadd.s32 %s34, 1
    %s36 = scalar_select %p33, %s34, %s35
    %p39 = pneg %p33
    %p40 = scmp.eq.s32.totalorder %s10, 1
    %p41 = por %p39, %p40
    %p42 = scmp.ne.s32.totalorder %s34, %s37
    %p43 = scmp.eq.s32.totalorder %s10, 0
    %p44 = por %p42, %p43
    %p45 = scmp.ne.s32.totalorder %s34, %s37
    %p46 = scmp.eq.s32.totalorder %s15, 1
    %p47 = por %p45, %p46
    %p48 = scmp.ne.s32.totalorder %s37, %s38
    %p49 = scmp.eq.s32.totalorder %s15, 0
    %p50 = por %p48, %p49
    %p51 = scmp.ne.s32.totalorder %s37, %s38
    %p52 = scmp.eq.s32.totalorder %s16, 1
    %p53 = por %p51, %p52
    %p55 = scmp.ne.s32.totalorder %s38, %s54
    %p56 = scmp.eq.s32.totalorder %s16, 0
    %p57 = por %p55, %p56
    %s58 = sadd.s32 %s18, 1
    %s59 = sadd.s32 %s25, 1
    %s60 = ssub.s32 %s17, %s29
    %s61 = ssub.s32 %s58, %s59
    %s62 = sor.u32 %s60, %s61
    %p63 = scmp.eq.s32.totalorder %s62, 0
    %s65 = sadd.s32 %s64, 1
    %s66 = scalar_select %p63, %s64, %s65
    %p69 = pneg %p63
    %p70 = scmp.eq.s32.totalorder %s10, 1
    %p71 = por %p69, %p70
    %p72 = scmp.ne.s32.totalorder %s64, %s67
    %p73 = scmp.eq.s32.totalorder %s10, 0
    %p74 = por %p72, %p73
    %p75 = scmp.ne.s32.totalorder %s64, %s67
    %p76 = scmp.eq.s32.totalorder %s15, 1
    %p77 = por %p75, %p76
    %p78 = scmp.ne.s32.totalorder %s67, %s68
    %p79 = scmp.eq.s32.totalorder %s15, 0
    %p80 = por %p78, %p79
    %p81 = scmp.ne.s32.totalorder %s67, %s68
    %p82 = scmp.eq.s32.totalorder %s16, 1
    %p83 = por %p81, %p82
    %p85 = scmp.ne.s32.totalorder %s68, %s84
    %p86 = scmp.eq.s32.totalorder %s16, 0
    %p87 = por %p85, %p86
    %s89 = sadd.s32 %s88, 1
    %p92 = scmp.eq.s32.totalorder %s10, 1
    %p93 = scmp.ne.s32.totalorder %s88, %s90
    %p94 = scmp.eq.s32.totalorder %s10, 0
    %p95 = por %p93, %p94
    %p96 = scmp.ne.s32.totalorder %s88, %s90
    %p97 = scmp.eq.s32.totalorder %s15, 1
    %p98 = por %p96, %p97
    %p99 = scmp.ne.s32.totalorder %s90, %s91
    %p100 = scmp.eq.s32.totalorder %s15, 0
    %p101 = por %p99, %p100
    %p102 = scmp.ne.s32.totalorder %s90, %s91
    %p103 = scmp.eq.s32.totalorder %s16, 1
    %p104 = por %p102, %p103
    %p106 = scmp.ne.s32.totalorder %s91, %s105
    %p107 = scmp.eq.s32.totalorder %s16, 0
    %p108 = por %p106, %p107
    %s110 = sadd.s32 %s109, 1
    %p113 = scmp.eq.s32.totalorder %s10, 1
    %p114 = scmp.ne.s32.totalorder %s109, %s111
    %p115 = scmp.eq.s32.totalorder %s10, 0
    %p116 = por %p114, %p115
    %p117 = scmp.ne.s32.totalorder %s109, %s111
    %p118 = scmp.eq.s32.totalorder %s15, 1
    %p119 = por %p117, %p118
    %p120 = scmp.ne.s32.totalorder %s111, %s112
    %p121 = scmp.eq.s32.totalorder %s15, 0
    %p122 = por %p120, %p121
    %p123 = scmp.ne.s32.totalorder %s111, %s112
    %p124 = scmp.eq.s32.totalorder %s16, 1
    %p125 = por %p123, %p124
    %p127 = scmp.ne.s32.totalorder %s112, %s126
    %p128 = scmp.eq.s32.totalorder %s16, 0
    %p129 = por %p127, %p128
    %s130 = ssub.s32 %s17, %s29
    %s131 = ssub.s32 %s18, %s25
    %s132 = sor.u32 %s130, %s131
    %p133 = scmp.eq.s32.totalorder %s132, 0
    %s135 = sadd.s32 %s134, 1
    %s136 = scalar_select %p133, %s134, %s135
    %p139 = pneg %p133
    %p140 = scmp.eq.s32.totalorder %s10, 1
    %p141 = por %p139, %p140
    %p142 = scmp.ne.s32.totalorder %s134, %s137
    %p143 = scmp.eq.s32.totalorder %s10, 0
    %p144 = por %p142, %p143
    %p145 = scmp.ne.s32.totalorder %s134, %s137
    %p146 = scmp.eq.s32.totalorder %s15, 1
    %p147 = por %p145, %p146
    %p148 = scmp.ne.s32.totalorder %s137, %s138
    %p149 = scmp.eq.s32.totalorder %s15, 0
    %p150 = por %p148, %p149
    %p151 = scmp.ne.s32.totalorder %s137, %s138
    %p152 = scmp.eq.s32.totalorder %s16, 1
    %p153 = por %p151, %p152
    %p155 = scmp.ne.s32.totalorder %s138, %s154
    %p156 = scmp.eq.s32.totalorder %s16, 0
    %p157 = por %p155, %p156
    %p158 = scmp.le.s32.totalorder 1, %s10
    %p159 = scmp.lt.s32.totalorder %s10, 3
    %p160 = pnand %p158, %p159
    %p161 = pneg %p160
    // Predicated region
    $region9: #{cycle_generator_forward.13} parent=5 // pred_check
      _
    $region10: #{cycle_generator_forward.13} parent=5 // pred_check_branch
      %163 = sbr.rel (%p160) target = $region12
    $region11: #{cycle_generator_forward.13} parent=5 // pred_region
      %s164 = ssub.s32 %s10, 1
      // Predicated region
      $region13: #{cycle_generator_forward.13} parent=11 // pred_check
        %p165 = pneg %p101
      $region14: #{cycle_generator_forward.13} parent=11 // pred_check_branch
        %167 = sbr.rel (%p165) target = $region16
      $region15: #{cycle_generator_forward.13} parent=11 // pred_region
        _
      $region16: #{cycle_generator_forward.13} parent=11 // pred_fallthru
        _
      // Predicated region
      $region17: #{cycle_generator_forward.13} parent=11 // pred_check
        %p168 = pneg %p122
      $region18: #{cycle_generator_forward.13} parent=11 // pred_check_branch
        %170 = sbr.rel (%p168) target = $region20
      $region19: #{cycle_generator_forward.13} parent=11 // pred_region
        _
      $region20: #{cycle_generator_forward.13} parent=11 // pred_fallthru
        _
    $region12: #{cycle_generator_forward.13} parent=5 // pred_fallthru
      _
    %p171 = scmp.lt.s32.totalorder %s10, 2
    // Predicated region
    $region21: #{cycle_generator_forward.13} parent=5 // pred_check
      %p172 = pneg %p171
    $region22: #{cycle_generator_forward.13} parent=5 // pred_check_branch
      %174 = sbr.rel (%p172) target = $region24
    $region23: #{cycle_generator_forward.13} parent=5 // pred_region
      // Predicated region
      $region25: #{cycle_generator_forward.13} parent=23 // pred_check
        %p175 = pneg %p44
      $region26: #{cycle_generator_forward.13} parent=23 // pred_check_branch
        %177 = sbr.rel (%p175) target = $region28
      $region27: #{cycle_generator_forward.13} parent=23 // pred_region
        %s178 = smul.u32 2, %s18
        %p179 = scmp.lt.s32.totalorder %s17, 1
        %s180 = scalar_select %p179, %s17, 1
        %p181 = scmp.lt.s32.totalorder %s178, 3
        %s182 = scalar_select %p181, %s178, 3
        %s183 = smul.addr %s180, 4
        %s184 = sadd.s32 %s182, %s183
        %s185 = smul.addr %s184, 4
        %s186 = scalar_lea.vmem %s0, %s185
        %s187 = smul.u32 2, %s18
      $region28: #{cycle_generator_forward.13} parent=23 // pred_fallthru
        _
      // Predicated region
      $region29: #{cycle_generator_forward.13} parent=23 // pred_check
        %p188 = pneg %p74
      $region30: #{cycle_generator_forward.13} parent=23 // pred_check_branch
        %190 = sbr.rel (%p188) target = $region32
      $region31: #{cycle_generator_forward.13} parent=23 // pred_region
        %s191 = sadd.s32 %s18, 1
        %s192 = smul.u32 2, %s191
        %p193 = scmp.lt.s32.totalorder %s17, 1
        %s194 = scalar_select %p193, %s17, 1
        %p195 = scmp.lt.s32.totalorder %s192, 3
        %s196 = scalar_select %p195, %s192, 3
        %s197 = smul.addr %s194, 4
        %s198 = sadd.s32 %s196, %s197
        %s199 = smul.addr %s198, 4
        %s200 = scalar_lea.vmem %s1, %s199
        %s201 = sadd.s32 %s18, 1
        %s202 = smul.u32 2, %s201
      $region32: #{cycle_generator_forward.13} parent=23 // pred_fallthru
        _
    $region24: #{cycle_generator_forward.13} parent=5 // pred_fallthru
      _
    %p203 = scmp.le.s32.totalorder 1, %s10
    %p204 = scmp.lt.s32.totalorder %s10, 3
    %p205 = pnand %p203, %p204
    %p206 = pneg %p205
    // Predicated region
    $region33: #{cycle_generator_forward.13} parent=5 // pred_check
      _
    $region34: #{cycle_generator_forward.13} parent=5 // pred_check_branch
      %208 = sbr.rel (%p205) target = $region36
    $region35: #{cycle_generator_forward.13} parent=5 // pred_region
      %s209 = ssub.s32 %s10, 1
      %s210 = smul.u32 2, %s20
      %p211 = scmp.lt.s32.totalorder %s19, 1
      %s212 = scalar_select %p211, %s19, 1
      %p213 = scmp.lt.s32.totalorder %s210, 3
      %s214 = scalar_select %p213, %s210, 3
      %s215 = smul.addr %s212, 4
      %s216 = sadd.s32 %s214, %s215
      %s217 = smul.addr %s216, 4
      %s218 = scalar_lea.vmem %s0, %s217
      %p219 = pneg %p50
      %p220 = pneg %p47
      %s221 = sadd.s32 %s20, 1
      %s222 = smul.u32 2, %s221
      %p223 = scmp.lt.s32.totalorder %s19, 1
      %s224 = scalar_select %p223, %s19, 1
      %p225 = scmp.lt.s32.totalorder %s222, 3
      %s226 = scalar_select %p225, %s222, 3
      %s227 = smul.addr %s224, 4
      %s228 = sadd.s32 %s226, %s227
      %s229 = smul.addr %s228, 4
      %s230 = scalar_lea.vmem %s1, %s229
      %p231 = pneg %p80
      %p232 = pneg %p77
      %p233 = pneg %p101
      %p234 = pneg %p98
      %p235 = pneg %p122
      %p236 = pneg %p119
      %p237 = pneg %p150
      %p238 = pneg %p147
      %s239 = smul.u32 2, %s20
      %p240 = scmp.lt.s32.totalorder %s19, 1
      %s241 = scalar_select %p240, %s19, 1
      %p242 = scmp.lt.s32.totalorder %s239, 1
      %s243 = scalar_select %p242, %s239, 1
      %s244 = smul.addr %s241, 2
      %s245 = sadd.s32 %s243, %s244
      %s246 = smul.addr %s245, 4
      %s247 = scalar_lea.vmem %s4, %s246
      %s248 = smul.u32 2, %s20
      %p249 = scmp.lt.s32.totalorder %s19, 1
      %s250 = scalar_select %p249, %s19, 1
      %p251 = scmp.lt.s32.totalorder %s248, 3
      %s252 = scalar_select %p251, %s248, 3
      %s253 = smul.addr %s250, 4
      %s254 = sadd.s32 %s252, %s253
      %s255 = smul.addr %s254, 4
      %s256 = scalar_lea.vmem %s0, %s255
      %s257 = smul.u32 2, %s20
      %s258 = sadd.s32 %s20, 1
      %s259 = smul.u32 2, %s258
      %p260 = scmp.lt.s32.totalorder %s19, 1
      %s261 = scalar_select %p260, %s19, 1
      %p262 = scmp.lt.s32.totalorder %s259, 3
      %s263 = scalar_select %p262, %s259, 3
      %s264 = smul.addr %s261, 4
      %s265 = sadd.s32 %s263, %s264
      %s266 = smul.addr %s265, 4
      %s267 = scalar_lea.vmem %s1, %s266
      %s268 = sadd.s32 %s20, 1
      %s269 = smul.u32 2, %s268
      %s270 = smul.u32 2, %s20
      %p271 = scmp.lt.s32.totalorder %s19, 1
      %s272 = scalar_select %p271, %s19, 1
      %p273 = scmp.lt.s32.totalorder %s270, 1
      %s274 = scalar_select %p273, %s270, 1
      %s275 = smul.addr %s272, 2
      %s276 = sadd.s32 %s274, %s275
      %s277 = smul.addr %s276, 4
      %s278 = scalar_lea.vmem %s4, %s277
      %s279 = smul.u32 2, %s20
      %v281 = vld [vmem:[%s256] sm:$0xf]
      %v282 = vld [vmem:[%s256 + $0x4] sm:$0xf]
      %v283 = vld [vmem:[%s267] sm:$0xf]
      %v284 = vld [vmem:[%s267 + $0x4] sm:$0xf]
      %v287 = vunpack.c.l.b16 %v281
      %v288 = vunpack.c.l.b16 %v282
      %v289 = vpack.c.b16 %v288, %v287
      %v292 = vunpack.c.l.b16 %v283
      %v293 = vunpack.c.l.b16 %v284
      %v294 = vpack.c.b16 %v293, %v292
      %v295 = vld [vmem:[%s2] sm:$0xf]
      %v296 = vld [vmem:[%s2 + $0x4] sm:$0xf]
      %v297 = vld [vmem:[%s2 + $0x8] sm:$0xf]
      %v298 = vld [vmem:[%s2 + $0xc] sm:$0xf]
      %v303 = vunpack.c.l.b16 %v295
      %v304 = vunpack.c.l.b16 %v296
      %v305 = vunpack.c.l.b16 %v297
      %v306 = vunpack.c.l.b16 %v298
      %v307 = vpack.c.b16 %v304, %v303
      %v308 = vpack.c.b16 %v306, %v305
      %vm311 = vcmask 261120
      %v313 = vsel %vm311, %v289, 0
      %v316 = vsel %vm311, %v294, 0
      %318 = vmatprep.subr.bf16.mxu0 0
      %319 = vmatpush1.bf16.msra.mxu0 %v307
      %320 = vmatprep.subr.bf16.mxu0 0
      %321 = vmatpush1.bf16.msra.mxu0 %v308
      %322 = vmatprep.subr.bf16.mxu0 0
      %323 = vmatpush1.bf16.msra.mxu0 0
      %324 = vmatprep.subr.bf16.mxu0 0
      %325 = vmatpush1.bf16.msra.mxu0 0
      %326 = vmatprep.subr.bf16.mxu0 0
      %327 = vmatpush1.bf16.msra.mxu0 0
      %328 = vmatprep.subr.bf16.mxu0 0
      %329 = vmatpush1.bf16.msra.mxu0 0
      %330 = vmatprep.subr.bf16.mxu0 0
      %331 = vmatpush1.bf16.msra.mxu0 0
      %332 = vmatprep.subr.bf16.mxu0 0
      %333 = vmatpush1.bf16.msra.mxu0 0
      %334 = vmatprep.subr.bf16.mxu0 0
      %335 = vmatpush1.bf16.msra.mxu0 0
      %336 = vmatprep.subr.bf16.mxu0 0
      %337 = vmatpush1.bf16.msra.mxu0 0
      %338 = vmatprep.subr.bf16.mxu0 0
      %339 = vmatpush1.bf16.msra.mxu0 0
      %340 = vmatprep.subr.bf16.mxu0 0
      %341 = vmatpush1.bf16.msra.mxu0 0
      %342 = vmatprep.subr.bf16.mxu0 0
      %343 = vmatpush1.bf16.msra.mxu0 0
      %344 = vmatprep.subr.bf16.mxu0 0
      %345 = vmatpush1.bf16.msra.mxu0 0
      %346 = vmatprep.subr.bf16.mxu0 0
      %347 = vmatpush1.bf16.msra.mxu0 0
      %348 = vmatprep.subr.bf16.mxu0 0
      %349 = vmatpush1.bf16.msra.mxu0 0
      %350 = vmatprep.mubr.bf16.mxu0 0
      %351 = vmatmul.mubr.bf16.gmra.mrb[0].mxu0 %v313
      %v352 = vpop.f32.mrb[0].mxu0
      %v353 = vadd.f32 0.0, %v352
      %v354 = vpop.f32.mrb[0].mxu0
      %v355 = vpop.f32.mrb[0].mxu0
      %v356 = vadd.f32 0.0, %v355
      %v357 = vpop.f32.mrb[0].mxu0
      %358 = vmatprep.mubr.bf16.mxu0 0
      %359 = vmatmul.mubr.bf16.gmra.mrb[0].mxu0 %v316
      %v360 = vpop.f32.mrb[0].mxu0
      %v361 = vpop.f32.mrb[0].mxu0
      %v362 = vpop.f32.mrb[0].mxu0
      %v363 = vpop.f32.mrb[0].mxu0
      %364 = vdwg.mxu0
      %v365 = vadd.f32 %v353, 0.0
      %v366 = vadd.f32 %v356, 0.0
      %s367 = scalar_lea.vmem %s2, 16
      %v368 = vld [vmem:[%s367] sm:$0xf]
      %v369 = vld [vmem:[%s367 + $0x4] sm:$0xf]
      %v370 = vld [vmem:[%s367 + $0x8] sm:$0xf]
      %v371 = vld [vmem:[%s367 + $0xc] sm:$0xf]
      %v376 = vunpack.c.l.b16 %v368
      %v377 = vunpack.c.l.b16 %v369
      %v378 = vunpack.c.l.b16 %v370
      %v379 = vunpack.c.l.b16 %v371
      %v380 = vpack.c.b16 %v377, %v376
      %v381 = vpack.c.b16 %v379, %v378
      %384 = vmatprep.subr.bf16.mxu0 0
      %385 = vmatpush1.bf16.msra.mxu0 %v380
      %386 = vmatprep.subr.bf16.mxu0 0
      %387 = vmatpush1.bf16.msra.mxu0 %v381
      %388 = vmatprep.subr.bf16.mxu0 0
      %389 = vmatpush1.bf16.msra.mxu0 0
      %390 = vmatprep.subr.bf16.mxu0 0
      %391 = vmatpush1.bf16.msra.mxu0 0
      %392 = vmatprep.subr.bf16.mxu0 0
      %393 = vmatpush1.bf16.msra.mxu0 0
      %394 = vmatprep.subr.bf16.mxu0 0
      %395 = vmatpush1.bf16.msra.mxu0 0
      %396 = vmatprep.subr.bf16.mxu0 0
      %397 = vmatpush1.bf16.msra.mxu0 0
      %398 = vmatprep.subr.bf16.mxu0 0
      %399 = vmatpush1.bf16.msra.mxu0 0
      %400 = vmatprep.subr.bf16.mxu0 0
      %401 = vmatpush1.bf16.msra.mxu0 0
      %402 = vmatprep.subr.bf16.mxu0 0
      %403 = vmatpush1.bf16.msra.mxu0 0
      %404 = vmatprep.subr.bf16.mxu0 0
      %405 = vmatpush1.bf16.msra.mxu0 0
      %406 = vmatprep.subr.bf16.mxu0 0
      %407 = vmatpush1.bf16.msra.mxu0 0
      %408 = vmatprep.subr.bf16.mxu0 0
      %409 = vmatpush1.bf16.msra.mxu0 0
      %410 = vmatprep.subr.bf16.mxu0 0
      %411 = vmatpush1.bf16.msra.mxu0 0
      %412 = vmatprep.subr.bf16.mxu0 0
      %413 = vmatpush1.bf16.msra.mxu0 0
      %414 = vmatprep.subr.bf16.mxu0 0
      %415 = vmatpush1.bf16.msra.mxu0 0
      %416 = vmatprep.mubr.bf16.mxu0 0
      %417 = vmatmul.mubr.bf16.gmra.mrb[0].mxu0 %v313
      %v418 = vpop.f32.mrb[0].mxu0
      %v419 = vadd.f32 0.0, %v418
      %v420 = vpop.f32.mrb[0].mxu0
      %v421 = vpop.f32.mrb[0].mxu0
      %v422 = vadd.f32 0.0, %v421
      %v423 = vpop.f32.mrb[0].mxu0
      %424 = vmatprep.mubr.bf16.mxu0 0
      %425 = vmatmul.mubr.bf16.gmra.mrb[0].mxu0 %v316
      %v426 = vpop.f32.mrb[0].mxu0
      %v427 = vadd.f32 0.0, %v426
      %v428 = vpop.f32.mrb[0].mxu0
      %v429 = vpop.f32.mrb[0].mxu0
      %v430 = vpop.f32.mrb[0].mxu0
      %431 = vdwg.mxu0
      %vm435 = vcmask 1046528
      %v436 = vrot.slane %v419, 1
      %v437 = vrot.slane %v422, 1
      %v438 = vsel %vm435, %v436, %v437
      %v439 = vrot.slane %v427, 1
      %v440 = vsel %vm435, %v437, %v439
      %v443 = vadd.f32 %v365, %v438
      %v444 = vadd.f32 %v366, %v440
      %s445 = scalar_lea.vmem %s2, 32
      %v446 = vld [vmem:[%s445] sm:$0xf]
      %v447 = vld [vmem:[%s445 + $0x4] sm:$0xf]
      %v448 = vld [vmem:[%s445 + $0x8] sm:$0xf]
      %v449 = vld [vmem:[%s445 + $0xc] sm:$0xf]
      %v454 = vunpack.c.l.b16 %v446
      %v455 = vunpack.c.l.b16 %v447
      %v456 = vunpack.c.l.b16 %v448
      %v457 = vunpack.c.l.b16 %v449
      %v458 = vpack.c.b16 %v455, %v454
      %v459 = vpack.c.b16 %v457, %v456
      %462 = vmatprep.subr.bf16.mxu0 0
      %463 = vmatpush1.bf16.msra.mxu0 %v458
      %464 = vmatprep.subr.bf16.mxu0 0
      %465 = vmatpush1.bf16.msra.mxu0 %v459
      %466 = vmatprep.subr.bf16.mxu0 0
      %467 = vmatpush1.bf16.msra.mxu0 0
      %468 = vmatprep.subr.bf16.mxu0 0
      %469 = vmatpush1.bf16.msra.mxu0 0
      %470 = vmatprep.subr.bf16.mxu0 0
      %471 = vmatpush1.bf16.msra.mxu0 0
      %472 = vmatprep.subr.bf16.mxu0 0
      %473 = vmatpush1.bf16.msra.mxu0 0
      %474 = vmatprep.subr.bf16.mxu0 0
      %475 = vmatpush1.bf16.msra.mxu0 0
      %476 = vmatprep.subr.bf16.mxu0 0
      %477 = vmatpush1.bf16.msra.mxu0 0
      %478 = vmatprep.subr.bf16.mxu0 0
      %479 = vmatpush1.bf16.msra.mxu0 0
      %480 = vmatprep.subr.bf16.mxu0 0
      %481 = vmatpush1.bf16.msra.mxu0 0
      %482 = vmatprep.subr.bf16.mxu0 0
      %483 = vmatpush1.bf16.msra.mxu0 0
      %484 = vmatprep.subr.bf16.mxu0 0
      %485 = vmatpush1.bf16.msra.mxu0 0
      %486 = vmatprep.subr.bf16.mxu0 0
      %487 = vmatpush1.bf16.msra.mxu0 0
      %488 = vmatprep.subr.bf16.mxu0 0
      %489 = vmatpush1.bf16.msra.mxu0 0
      %490 = vmatprep.subr.bf16.mxu0 0
      %491 = vmatpush1.bf16.msra.mxu0 0
      %492 = vmatprep.subr.bf16.mxu0 0
      %493 = vmatpush1.bf16.msra.mxu0 0
      %494 = vmatprep.mubr.bf16.mxu0 0
      %495 = vmatmul.mubr.bf16.gmra.mrb[0].mxu0 %v313
      %v496 = vpop.f32.mrb[0].mxu0
      %v497 = vadd.f32 0.0, %v496
      %v498 = vpop.f32.mrb[0].mxu0
      %v499 = vpop.f32.mrb[0].mxu0
      %v500 = vadd.f32 0.0, %v499
      %v501 = vpop.f32.mrb[0].mxu0
      %502 = vmatprep.mubr.bf16.mxu0 0
      %503 = vmatmul.mubr.bf16.gmra.mrb[0].mxu0 %v316
      %v504 = vpop.f32.mrb[0].mxu0
      %v505 = vadd.f32 0.0, %v504
      %v506 = vpop.f32.mrb[0].mxu0
      %v507 = vpop.f32.mrb[0].mxu0
      %v508 = vpop.f32.mrb[0].mxu0
      %509 = vdwg.mxu0
      %vm513 = vcmask 1045504
      %v514 = vrot.slane %v497, 2
      %v515 = vrot.slane %v500, 2
      %v516 = vsel %vm513, %v514, %v515
      %v517 = vrot.slane %v505, 2
      %v518 = vsel %vm513, %v515, %v517
      %v521 = vadd.f32 %v443, %v516
      %v522 = vadd.f32 %v444, %v518
      %s523 = scalar_lea.vmem %s2, 48
      %v524 = vld [vmem:[%s523] sm:$0xf]
      %v525 = vld [vmem:[%s523 + $0x4] sm:$0xf]
      %v526 = vld [vmem:[%s523 + $0x8] sm:$0xf]
      %v527 = vld [vmem:[%s523 + $0xc] sm:$0xf]
      %v532 = vunpack.c.l.b16 %v524
      %v533 = vunpack.c.l.b16 %v525
      %v534 = vunpack.c.l.b16 %v526
      %v535 = vunpack.c.l.b16 %v527
      %v536 = vpack.c.b16 %v533, %v532
      %v537 = vpack.c.b16 %v535, %v534
      %540 = vmatprep.subr.bf16.mxu0 0
      %541 = vmatpush1.bf16.msra.mxu0 %v536
      %542 = vmatprep.subr.bf16.mxu0 0
      %543 = vmatpush1.bf16.msra.mxu0 %v537
      %544 = vmatprep.subr.bf16.mxu0 0
      %545 = vmatpush1.bf16.msra.mxu0 0
      %546 = vmatprep.subr.bf16.mxu0 0
      %547 = vmatpush1.bf16.msra.mxu0 0
      %548 = vmatprep.subr.bf16.mxu0 0
      %549 = vmatpush1.bf16.msra.mxu0 0
      %550 = vmatprep.subr.bf16.mxu0 0
      %551 = vmatpush1.bf16.msra.mxu0 0
      %552 = vmatprep.subr.bf16.mxu0 0
      %553 = vmatpush1.bf16.msra.mxu0 0
      %554 = vmatprep.subr.bf16.mxu0 0
      %555 = vmatpush1.bf16.msra.mxu0 0
      %556 = vmatprep.subr.bf16.mxu0 0
      %557 = vmatpush1.bf16.msra.mxu0 0
      %558 = vmatprep.subr.bf16.mxu0 0
      %559 = vmatpush1.bf16.msra.mxu0 0
      %560 = vmatprep.subr.bf16.mxu0 0
      %561 = vmatpush1.bf16.msra.mxu0 0
      %562 = vmatprep.subr.bf16.mxu0 0
      %563 = vmatpush1.bf16.msra.mxu0 0
      %564 = vmatprep.subr.bf16.mxu0 0
      %565 = vmatpush1.bf16.msra.mxu0 0
      %566 = vmatprep.subr.bf16.mxu0 0
      %567 = vmatpush1.bf16.msra.mxu0 0
      %568 = vmatprep.subr.bf16.mxu0 0
      %569 = vmatpush1.bf16.msra.mxu0 0
      %570 = vmatprep.subr.bf16.mxu0 0
      %571 = vmatpush1.bf16.msra.mxu0 0
      %572 = vmatprep.mubr.bf16.mxu0 0
      %573 = vmatmul.mubr.bf16.gmra.mrb[0].mxu0 %v313
      %v574 = vpop.f32.mrb[0].mxu0
      %v575 = vadd.f32 0.0, %v574
      %v576 = vpop.f32.mrb[0].mxu0
      %v577 = vpop.f32.mrb[0].mxu0
      %v578 = vadd.f32 0.0, %v577
      %v579 = vpop.f32.mrb[0].mxu0
      %580 = vmatprep.mubr.bf16.mxu0 0
      %581 = vmatmul.mubr.bf16.gmra.mrb[0].mxu0 %v316
      %v582 = vpop.f32.mrb[0].mxu0
      %v583 = vadd.f32 0.0, %v582
      %v584 = vpop.f32.mrb[0].mxu0
      %v585 = vpop.f32.mrb[0].mxu0
      %v586 = vpop.f32.mrb[0].mxu0
      %587 = vdwg.mxu0
      %vm591 = vcmask 1044480
      %v592 = vrot.slane %v575, 3
      %v593 = vrot.slane %v578, 3
      %v594 = vsel %vm591, %v592, %v593
      %v595 = vrot.slane %v583, 3
      %v596 = vsel %vm591, %v593, %v595
      %v599 = vadd.f32 %v521, %v594
      %v600 = vadd.f32 %v522, %v596
      %s601 = scalar_lea.vmem %s2, 64
      %v602 = vld [vmem:[%s601] sm:$0xf]
      %v603 = vld [vmem:[%s601 + $0x4] sm:$0xf]
      %v604 = vld [vmem:[%s601 + $0x8] sm:$0xf]
      %v605 = vld [vmem:[%s601 + $0xc] sm:$0xf]
      %v610 = vunpack.c.l.b16 %v602
      %v611 = vunpack.c.l.b16 %v603
      %v612 = vunpack.c.l.b16 %v604
      %v613 = vunpack.c.l.b16 %v605
      %v614 = vpack.c.b16 %v611, %v610
      %v615 = vpack.c.b16 %v613, %v612
      %618 = vmatprep.subr.bf16.mxu0 0
      %619 = vmatpush1.bf16.msra.mxu0 %v614
      %620 = vmatprep.subr.bf16.mxu0 0
      %621 = vmatpush1.bf16.msra.mxu0 %v615
      %622 = vmatprep.subr.bf16.mxu0 0
      %623 = vmatpush1.bf16.msra.mxu0 0
      %624 = vmatprep.subr.bf16.mxu0 0
      %625 = vmatpush1.bf16.msra.mxu0 0
      %626 = vmatprep.subr.bf16.mxu0 0
      %627 = vmatpush1.bf16.msra.mxu0 0
      %628 = vmatprep.subr.bf16.mxu0 0
      %629 = vmatpush1.bf16.msra.mxu0 0
      %630 = vmatprep.subr.bf16.mxu0 0
      %631 = vmatpush1.bf16.msra.mxu0 0
      %632 = vmatprep.subr.bf16.mxu0 0
      %633 = vmatpush1.bf16.msra.mxu0 0
      %634 = vmatprep.subr.bf16.mxu0 0
      %635 = vmatpush1.bf16.msra.mxu0 0
      %636 = vmatprep.subr.bf16.mxu0 0
      %637 = vmatpush1.bf16.msra.mxu0 0
      %638 = vmatprep.subr.bf16.mxu0 0
      %639 = vmatpush1.bf16.msra.mxu0 0
      %640 = vmatprep.subr.bf16.mxu0 0
      %641 = vmatpush1.bf16.msra.mxu0 0
      %642 = vmatprep.subr.bf16.mxu0 0
      %643 = vmatpush1.bf16.msra.mxu0 0
      %644 = vmatprep.subr.bf16.mxu0 0
      %645 = vmatpush1.bf16.msra.mxu0 0
      %646 = vmatprep.subr.bf16.mxu0 0
      %647 = vmatpush1.bf16.msra.mxu0 0
      %648 = vmatprep.subr.bf16.mxu0 0
      %649 = vmatpush1.bf16.msra.mxu0 0
      %650 = vmatprep.mubr.bf16.mxu0 0
      %651 = vmatmul.mubr.bf16.gmra.mrb[0].mxu0 %v313
      %v652 = vpop.f32.mrb[0].mxu0
      %v653 = vadd.f32 0.0, %v652
      %v654 = vpop.f32.mrb[0].mxu0
      %v655 = vpop.f32.mrb[0].mxu0
      %v656 = vadd.f32 0.0, %v655
      %v657 = vpop.f32.mrb[0].mxu0
      %658 = vmatprep.mubr.bf16.mxu0 0
      %659 = vmatmul.mubr.bf16.gmra.mrb[0].mxu0 %v316
      %v660 = vpop.f32.mrb[0].mxu0
      %v661 = vadd.f32 0.0, %v660
      %v662 = vpop.f32.mrb[0].mxu0
      %v663 = vpop.f32.mrb[0].mxu0
      %v664 = vpop.f32.mrb[0].mxu0
      %665 = vdwg.mxu0
      %vm669 = vcmask 1043456
      %v670 = vrot.slane %v653, 4
      %v671 = vrot.slane %v656, 4
      %v672 = vsel %vm669, %v670, %v671
      %v673 = vrot.slane %v661, 4
      %v674 = vsel %vm669, %v671, %v673
      %v677 = vadd.f32 %v599, %v672
      %v678 = vadd.f32 %v600, %v674
      %s679 = scalar_lea.vmem %s2, 80
      %v680 = vld [vmem:[%s679] sm:$0xf]
      %v681 = vld [vmem:[%s679 + $0x4] sm:$0xf]
      %v682 = vld [vmem:[%s679 + $0x8] sm:$0xf]
      %v683 = vld [vmem:[%s679 + $0xc] sm:$0xf]
      %v688 = vunpack.c.l.b16 %v680
      %v689 = vunpack.c.l.b16 %v681
      %v690 = vunpack.c.l.b16 %v682
      %v691 = vunpack.c.l.b16 %v683
      %v692 = vpack.c.b16 %v689, %v688
      %v693 = vpack.c.b16 %v691, %v690
      %696 = vmatprep.subr.bf16.mxu0 0
      %697 = vmatpush1.bf16.msra.mxu0 %v692
      %698 = vmatprep.subr.bf16.mxu0 0
      %699 = vmatpush1.bf16.msra.mxu0 %v693
      %700 = vmatprep.subr.bf16.mxu0 0
      %701 = vmatpush1.bf16.msra.mxu0 0
      %702 = vmatprep.subr.bf16.mxu0 0
      %703 = vmatpush1.bf16.msra.mxu0 0
      %704 = vmatprep.subr.bf16.mxu0 0
      %705 = vmatpush1.bf16.msra.mxu0 0
      %706 = vmatprep.subr.bf16.mxu0 0
      %707 = vmatpush1.bf16.msra.mxu0 0
      %708 = vmatprep.subr.bf16.mxu0 0
      %709 = vmatpush1.bf16.msra.mxu0 0
      %710 = vmatprep.subr.bf16.mxu0 0
      %711 = vmatpush1.bf16.msra.mxu0 0
      %712 = vmatprep.subr.bf16.mxu0 0
      %713 = vmatpush1.bf16.msra.mxu0 0
      %714 = vmatprep.subr.bf16.mxu0 0
      %715 = vmatpush1.bf16.msra.mxu0 0
      %716 = vmatprep.subr.bf16.mxu0 0
      %717 = vmatpush1.bf16.msra.mxu0 0
      %718 = vmatprep.subr.bf16.mxu0 0
      %719 = vmatpush1.bf16.msra.mxu0 0
      %720 = vmatprep.subr.bf16.mxu0 0
      %721 = vmatpush1.bf16.msra.mxu0 0
      %722 = vmatprep.subr.bf16.mxu0 0
      %723 = vmatpush1.bf16.msra.mxu0 0
      %724 = vmatprep.subr.bf16.mxu0 0
      %725 = vmatpush1.bf16.msra.mxu0 0
      %726 = vmatprep.subr.bf16.mxu0 0
      %727 = vmatpush1.bf16.msra.mxu0 0
      %728 = vmatprep.mubr.bf16.mxu0 0
      %729 = vmatmul.mubr.bf16.gmra.mrb[0].mxu0 %v313
      %v730 = vpop.f32.mrb[0].mxu0
      %v731 = vadd.f32 0.0, %v730
      %v732 = vpop.f32.mrb[0].mxu0
      %v733 = vpop.f32.mrb[0].mxu0
      %v734 = vadd.f32 0.0, %v733
      %v735 = vpop.f32.mrb[0].mxu0
      %736 = vmatprep.mubr.bf16.mxu0 0
      %737 = vmatmul.mubr.bf16.gmra.mrb[0].mxu0 %v316
      %v738 = vpop.f32.mrb[0].mxu0
      %v739 = vadd.f32 0.0, %v738
      %v740 = vpop.f32.mrb[0].mxu0
      %v741 = vpop.f32.mrb[0].mxu0
      %v742 = vpop.f32.mrb[0].mxu0
      %743 = vdwg.mxu0
      %vm747 = vcmask 1042432
      %v748 = vrot.slane %v731, 5
      %v749 = vrot.slane %v734, 5
      %v750 = vsel %vm747, %v748, %v749
      %v751 = vrot.slane %v739, 5
      %v752 = vsel %vm747, %v749, %v751
      %v755 = vadd.f32 %v677, %v750
      %v756 = vadd.f32 %v678, %v752
      %s757 = scalar_lea.vmem %s2, 96
      %v758 = vld [vmem:[%s757] sm:$0xf]
      %v759 = vld [vmem:[%s757 + $0x4] sm:$0xf]
      %v760 = vld [vmem:[%s757 + $0x8] sm:$0xf]
      %v761 = vld [vmem:[%s757 + $0xc] sm:$0xf]
      %v766 = vunpack.c.l.b16 %v758
      %v767 = vunpack.c.l.b16 %v759
      %v768 = vunpack.c.l.b16 %v760
      %v769 = vunpack.c.l.b16 %v761
      %v770 = vpack.c.b16 %v767, %v766
      %v771 = vpack.c.b16 %v769, %v768
      %774 = vmatprep.subr.bf16.mxu0 0
      %775 = vmatpush1.bf16.msra.mxu0 %v770
      %776 = vmatprep.subr.bf16.mxu0 0
      %777 = vmatpush1.bf16.msra.mxu0 %v771
      %778 = vmatprep.subr.bf16.mxu0 0
      %779 = vmatpush1.bf16.msra.mxu0 0
      %780 = vmatprep.subr.bf16.mxu0 0
      %781 = vmatpush1.bf16.msra.mxu0 0
      %782 = vmatprep.subr.bf16.mxu0 0
      %783 = vmatpush1.bf16.msra.mxu0 0
      %784 = vmatprep.subr.bf16.mxu0 0
      %785 = vmatpush1.bf16.msra.mxu0 0
      %786 = vmatprep.subr.bf16.mxu0 0
      %787 = vmatpush1.bf16.msra.mxu0 0
      %788 = vmatprep.subr.bf16.mxu0 0
      %789 = vmatpush1.bf16.msra.mxu0 0
      %790 = vmatprep.subr.bf16.mxu0 0
      %791 = vmatpush1.bf16.msra.mxu0 0
      %792 = vmatprep.subr.bf16.mxu0 0
      %793 = vmatpush1.bf16.msra.mxu0 0
      %794 = vmatprep.subr.bf16.mxu0 0
      %795 = vmatpush1.bf16.msra.mxu0 0
      %796 = vmatprep.subr.bf16.mxu0 0
      %797 = vmatpush1.bf16.msra.mxu0 0
      %798 = vmatprep.subr.bf16.mxu0 0
      %799 = vmatpush1.bf16.msra.mxu0 0
      %800 = vmatprep.subr.bf16.mxu0 0
      %801 = vmatpush1.bf16.msra.mxu0 0
      %802 = vmatprep.subr.bf16.mxu0 0
      %803 = vmatpush1.bf16.msra.mxu0 0
      %804 = vmatprep.subr.bf16.mxu0 0
      %805 = vmatpush1.bf16.msra.mxu0 0
      %806 = vmatprep.mubr.bf16.mxu0 0
      %807 = vmatmul.mubr.bf16.gmra.mrb[0].mxu0 %v313
      %v808 = vpop.f32.mrb[0].mxu0
      %v809 = vadd.f32 0.0, %v808
      %v810 = vpop.f32.mrb[0].mxu0
      %v811 = vpop.f32.mrb[0].mxu0
      %v812 = vadd.f32 0.0, %v811
      %v813 = vpop.f32.mrb[0].mxu0
      %814 = vmatprep.mubr.bf16.mxu0 0
      %815 = vmatmul.mubr.bf16.gmra.mrb[0].mxu0 %v316
      %v816 = vpop.f32.mrb[0].mxu0
      %v817 = vadd.f32 0.0, %v816
      %v818 = vpop.f32.mrb[0].mxu0
      %v819 = vpop.f32.mrb[0].mxu0
      %v820 = vpop.f32.mrb[0].mxu0
      %821 = vdwg.mxu0
      %vm825 = vcmask 1041408
      %v826 = vrot.slane %v809, 6
      %v827 = vrot.slane %v812, 6
      %v828 = vsel %vm825, %v826, %v827
      %v829 = vrot.slane %v817, 6
      %v830 = vsel %vm825, %v827, %v829
      %v833 = vadd.f32 %v755, %v828
      %v834 = vadd.f32 %v756, %v830
      %v835 = vld [vmem:[%s3] sm:$0x1]
      %v837 = vlaneseq
      %v838 = vshrl.u32 %v837, 7
      %v839 = vsub.s32 0, %v838
      %v840 = vrot.slane %v835, %v839
      %v842 = vadd.f32 %v833, %v840
      %v843 = vadd.f32 %v834, %v840
      %v844 = vmax.f32 %v842, 0.0
      %v845 = vmax.f32 %v843, 0.0
      %v846 = vpack.c.bf16 %v845, %v844
      %v848 = vunpack.c.l.b16 %v846
      %v849 = vunpack.c.h.b16 %v846
      %v850 = vpack.c.b16 %v848, %v848
      %v851 = vpack.c.b16 %v849, %v849
      %vm854 = vcmask 257024
      %855 = vst.msk [vmem:[%s278] sm:$0xf] %vm854, %v850
      %856 = vst.msk [vmem:[%s278 + $0x4] sm:$0xf] %vm854, %v851
      %s857 = smul.u32 2, %s20
      %p858 = scmp.lt.s32.totalorder %s19, 1
      %s859 = scalar_select %p858, %s19, 1
      %p860 = scmp.lt.s32.totalorder %s857, 1
      %s861 = scalar_select %p860, %s857, 1
      %s862 = smul.addr %s859, 2
      %s863 = sadd.s32 %s861, %s862
      %s864 = smul.addr %s863, 4
      %s865 = scalar_lea.vmem %s4, %s864
      // Predicated region
      $region37: #{cycle_generator_forward.13} parent=35 // pred_check
        %p866 = pneg %p147
      $region38: #{cycle_generator_forward.13} parent=35 // pred_check_branch
        %868 = sbr.rel (%p866) target = $region40
      $region39: #{cycle_generator_forward.13} parent=35 // pred_region
        %s869 = smul.u32 2, %s20
      $region40: #{cycle_generator_forward.13} parent=35 // pred_fallthru
        _
    $region36: #{cycle_generator_forward.13} parent=5 // pred_fallthru
      _
    %p870 = scmp.le.s32.totalorder 2, %s10
    // Predicated region
    $region41: #{cycle_generator_forward.13} parent=5 // pred_check
      %p871 = pneg %p870
    $region42: #{cycle_generator_forward.13} parent=5 // pred_check_branch
      %873 = sbr.rel (%p871) target = $region44
    $region43: #{cycle_generator_forward.13} parent=5 // pred_region
      %s874 = ssub.s32 %s10, 2
      // Predicated region
      $region45: #{cycle_generator_forward.13} parent=43 // pred_check
        %p875 = pneg %p153
      $region46: #{cycle_generator_forward.13} parent=43 // pred_check_branch
        %877 = sbr.rel (%p875) target = $region48
      $region47: #{cycle_generator_forward.13} parent=43 // pred_region
        %s878 = smul.u32 2, %s22
        %p879 = scmp.lt.s32.totalorder %s21, 1
        %s880 = scalar_select %p879, %s21, 1
        %p881 = scmp.lt.s32.totalorder %s878, 1
        %s882 = scalar_select %p881, %s878, 1
        %s883 = smul.addr %s880, 2
        %s884 = sadd.s32 %s882, %s883
        %s885 = smul.addr %s884, 4
        %s886 = scalar_lea.vmem %s4, %s885
      $region48: #{cycle_generator_forward.13} parent=43 // pred_fallthru
        _
    $region44: #{cycle_generator_forward.13} parent=5 // pred_fallthru
      _
  $region6: #{cycle_generator_forward.13} parent=0 // loop_footer
    %s14 = sadd.s32 1, %s10
  $region7: #{cycle_generator_forward.13} parent=0 // loop_footer_branch
    %9 = sbr.rel target = $region3
  $region8: #{cycle_generator_forward.13} parent=0 // loop_exit
    _

// kernel: cycle_generator_forward.12
$region0: #{cycle_generator_forward.12}
  #allocation0 [shape = 'u32[]', space=smem, size = 0x4, offset = 0x4, fixed_abs, tag = 'smem constant byte address 0x4 - core index']
  #allocation1 [shape = 'u32[144,128]{1,0:T(1,128)}', space=vmem, size = 0x12000, scoped, tag = 'internal scratch']
  %s0 = inlined_call_operand.vmem [shape: bf16[2,80,4], index: 0, kind: input, shape index: {}, may-alias: {0,1}]
  %s1 = inlined_call_operand.vmem [shape: bf16[2,80,4], index: 1, kind: input, shape index: {}, may-alias: {0,1}]
  %s2 = inlined_call_operand.vmem [shape: bf16[7,4,8], index: 2, kind: input, shape index: {}]
  %s3 = inlined_call_operand.vmem [shape: f32[1,8], index: 3, kind: input, shape index: {}]
  %s4 = inlined_call_operand.vmem [shape: bf16[2,64,8], index: 4, kind: output, shape index: {}]
  %s5 = sld [smem:[#allocation0]]
  $region49: #{cycle_generator_forward.12} parent=0
    _
  %s7 = ssub.s32 1, %s5
  %s8 = scalar_select 0, %s7, %s5
  loop: start=0, step=1, limit=4
  $region2: #{cycle_generator_forward.12} parent=0 // loop_pre_header
    _
  $region3: #{cycle_generator_forward.12} parent=0 // loop_header
    %s10 = sphi 0, %s14
    %p11 = scmp.ge.s32.totalorder %s10, 4
    %s17 = sphi 0, %s29
    %s18 = sphi 0, %s25
    %s19 = sphi 0, %s17
    %s20 = sphi 0, %s18
    %s21 = sphi 0, %s19
    %s22 = sphi 0, %s20
    %s34 = sphi 0, %s36
    %s37 = sphi 0, %s34
    %s38 = sphi 0, %s37
    %s54 = sphi 0, %s38
    %s66 = sphi 0, %s68
    %s69 = sphi 0, %s66
    %s70 = sphi 0, %s69
    %s86 = sphi 0, %s70
    %s90 = sphi 0, %s90
    %s92 = sphi 0, %s90
    %s93 = sphi 0, %s92
    %s107 = sphi 0, %s93
    %s111 = sphi 0, %s111
    %s113 = sphi 0, %s111
    %s114 = sphi 0, %s113
    %s128 = sphi 0, %s114
    %s136 = sphi 0, %s138
    %s139 = sphi 0, %s136
    %s140 = sphi 0, %s139
    %s156 = sphi 0, %s140
  $region4: #{cycle_generator_forward.12} parent=0 // loop_header_branch
    %13 = sbr.rel (%p11) target = $region8
  $region5: #{cycle_generator_forward.12} parent=0 // loop_body
    %s15 = ssub.s32 %s10, 1
    %s16 = ssub.s32 %s10, 2
    %s23 = sadd.s32 1, %s18
    %p24 = scmp.ge.s32.totalorder %s23, 1
    %s25 = scalar_select %p24, 0, %s23
    %s26 = sadd.s32 1, %s17
    %s27 = scalar_select %p24, %s26, %s17
    %p28 = scmp.ge.s32.totalorder %s27, 2
    %s29 = scalar_select %p28, 0, %s27
    %s30 = ssub.s32 %s17, %s29
    %s31 = ssub.s32 %s18, %s25
    %s32 = sor.u32 %s30, %s31
    %p33 = scmp.eq.s32.totalorder %s32, 0
    %s35 = sadd.s32 %s34, 1
    %s36 = scalar_select %p33, %s34, %s35
    %p39 = pneg %p33
    %p40 = scmp.eq.s32.totalorder %s10, 1
    %p41 = por %p39, %p40
    %p42 = scmp.ne.s32.totalorder %s34, %s37
    %p43 = scmp.eq.s32.totalorder %s10, 0
    %p44 = por %p42, %p43
    %p45 = scmp.ne.s32.totalorder %s34, %s37
    %p46 = scmp.eq.s32.totalorder %s15, 1
    %p47 = por %p45, %p46
    %p48 = scmp.ne.s32.totalorder %s37, %s38
    %p49 = scmp.eq.s32.totalorder %s15, 0
    %p50 = por %p48, %p49
    %p51 = scmp.ne.s32.totalorder %s37, %s38
    %p52 = scmp.eq.s32.totalorder %s16, 1
    %p53 = por %p51, %p52
    %p55 = scmp.ne.s32.totalorder %s38, %s54
    %p56 = scmp.eq.s32.totalorder %s16, 0
    %p57 = por %p55, %p56
    %s58 = sadd.s32 %s18, 1
    %s59 = smul.u32 %s58, 4
    %s60 = sadd.s32 %s25, 1
    %s61 = smul.u32 %s60, 4
    %s62 = ssub.s32 %s17, %s29
    %s63 = ssub.s32 %s59, %s61
    %s64 = sor.u32 %s62, %s63
    %p65 = scmp.eq.s32.totalorder %s64, 0
    %s67 = sadd.s32 %s66, 1
    %s68 = scalar_select %p65, %s66, %s67
    %p71 = pneg %p65
    %p72 = scmp.eq.s32.totalorder %s10, 1
    %p73 = por %p71, %p72
    %p74 = scmp.ne.s32.totalorder %s66, %s69
    %p75 = scmp.eq.s32.totalorder %s10, 0
    %p76 = por %p74, %p75
    %p77 = scmp.ne.s32.totalorder %s66, %s69
    %p78 = scmp.eq.s32.totalorder %s15, 1
    %p79 = por %p77, %p78
    %p80 = scmp.ne.s32.totalorder %s69, %s70
    %p81 = scmp.eq.s32.totalorder %s15, 0
    %p82 = por %p80, %p81
    %p83 = scmp.ne.s32.totalorder %s69, %s70
    %p84 = scmp.eq.s32.totalorder %s16, 1
    %p85 = por %p83, %p84
    %p87 = scmp.ne.s32.totalorder %s70, %s86
    %p88 = scmp.eq.s32.totalorder %s16, 0
    %p89 = por %p87, %p88
    %s91 = sadd.s32 %s90, 1
    %p94 = scmp.eq.s32.totalorder %s10, 1
    %p95 = scmp.ne.s32.totalorder %s90, %s92
    %p96 = scmp.eq.s32.totalorder %s10, 0
    %p97 = por %p95, %p96
    %p98 = scmp.ne.s32.totalorder %s90, %s92
    %p99 = scmp.eq.s32.totalorder %s15, 1
    %p100 = por %p98, %p99
    %p101 = scmp.ne.s32.totalorder %s92, %s93
    %p102 = scmp.eq.s32.totalorder %s15, 0
    %p103 = por %p101, %p102
    %p104 = scmp.ne.s32.totalorder %s92, %s93
    %p105 = scmp.eq.s32.totalorder %s16, 1
    %p106 = por %p104, %p105
    %p108 = scmp.ne.s32.totalorder %s93, %s107
    %p109 = scmp.eq.s32.totalorder %s16, 0
    %p110 = por %p108, %p109
    %s112 = sadd.s32 %s111, 1
    %p115 = scmp.eq.s32.totalorder %s10, 1
    %p116 = scmp.ne.s32.totalorder %s111, %s113
    %p117 = scmp.eq.s32.totalorder %s10, 0
    %p118 = por %p116, %p117
    %p119 = scmp.ne.s32.totalorder %s111, %s113
    %p120 = scmp.eq.s32.totalorder %s15, 1
    %p121 = por %p119, %p120
    %p122 = scmp.ne.s32.totalorder %s113, %s114
    %p123 = scmp.eq.s32.totalorder %s15, 0
    %p124 = por %p122, %p123
    %p125 = scmp.ne.s32.totalorder %s113, %s114
    %p126 = scmp.eq.s32.totalorder %s16, 1
    %p127 = por %p125, %p126
    %p129 = scmp.ne.s32.totalorder %s114, %s128
    %p130 = scmp.eq.s32.totalorder %s16, 0
    %p131 = por %p129, %p130
    %s132 = ssub.s32 %s17, %s29
    %s133 = ssub.s32 %s18, %s25
    %s134 = sor.u32 %s132, %s133
    %p135 = scmp.eq.s32.totalorder %s134, 0
    %s137 = sadd.s32 %s136, 1
    %s138 = scalar_select %p135, %s136, %s137
    %p141 = pneg %p135
    %p142 = scmp.eq.s32.totalorder %s10, 1
    %p143 = por %p141, %p142
    %p144 = scmp.ne.s32.totalorder %s136, %s139
    %p145 = scmp.eq.s32.totalorder %s10, 0
    %p146 = por %p144, %p145
    %p147 = scmp.ne.s32.totalorder %s136, %s139
    %p148 = scmp.eq.s32.totalorder %s15, 1
    %p149 = por %p147, %p148
    %p150 = scmp.ne.s32.totalorder %s139, %s140
    %p151 = scmp.eq.s32.totalorder %s15, 0
    %p152 = por %p150, %p151
    %p153 = scmp.ne.s32.totalorder %s139, %s140
    %p154 = scmp.eq.s32.totalorder %s16, 1
    %p155 = por %p153, %p154
    %p157 = scmp.ne.s32.totalorder %s140, %s156
    %p158 = scmp.eq.s32.totalorder %s16, 0
    %p159 = por %p157, %p158
    %p160 = scmp.le.s32.totalorder 1, %s10
    %p161 = scmp.lt.s32.totalorder %s10, 3
    %p162 = pnand %p160, %p161
    %p163 = pneg %p162
    // Predicated region
    $region9: #{cycle_generator_forward.12} parent=5 // pred_check
      _
    $region10: #{cycle_generator_forward.12} parent=5 // pred_check_branch
      %165 = sbr.rel (%p162) target = $region12
    $region11: #{cycle_generator_forward.12} parent=5 // pred_region
      %s166 = ssub.s32 %s10, 1
      // Predicated region
      $region13: #{cycle_generator_forward.12} parent=11 // pred_check
        %p167 = pneg %p103
      $region14: #{cycle_generator_forward.12} parent=11 // pred_check_branch
        %169 = sbr.rel (%p167) target = $region16
      $region15: #{cycle_generator_forward.12} parent=11 // pred_region
        _
      $region16: #{cycle_generator_forward.12} parent=11 // pred_fallthru
        _
      // Predicated region
      $region17: #{cycle_generator_forward.12} parent=11 // pred_check
        %p170 = pneg %p124
      $region18: #{cycle_generator_forward.12} parent=11 // pred_check_branch
        %172 = sbr.rel (%p170) target = $region20
      $region19: #{cycle_generator_forward.12} parent=11 // pred_region
        _
      $region20: #{cycle_generator_forward.12} parent=11 // pred_fallthru
        _
    $region12: #{cycle_generator_forward.12} parent=5 // pred_fallthru
      _
    %p173 = scmp.lt.s32.totalorder %s10, 2
    // Predicated region
    $region21: #{cycle_generator_forward.12} parent=5 // pred_check
      %p174 = pneg %p173
    $region22: #{cycle_generator_forward.12} parent=5 // pred_check_branch
      %176 = sbr.rel (%p174) target = $region24
    $region23: #{cycle_generator_forward.12} parent=5 // pred_region
      // Predicated region
      $region25: #{cycle_generator_forward.12} parent=23 // pred_check
        %p177 = pneg %p44
      $region26: #{cycle_generator_forward.12} parent=23 // pred_check_branch
        %179 = sbr.rel (%p177) target = $region28
      $region27: #{cycle_generator_forward.12} parent=23 // pred_region
        %s180 = smul.u32 8, %s18
        %s181 = ssub.s32 10, %s180
        %p182 = scmp.lt.s32.totalorder %s181, 8
        %s183 = scalar_select %p182, %s181, 8
        %s184 = smul.u32 64, %s183
        %p185 = scmp.lt.s32.totalorder %s17, 1
        %s186 = scalar_select %p185, %s17, 1
        %p187 = scmp.lt.s32.totalorder %s180, 9
        %s188 = scalar_select %p187, %s180, 9
        %s189 = smul.addr %s186, 10
        %s190 = sadd.s32 %s188, %s189
        %s191 = smul.addr %s190, 4
        %s192 = scalar_lea.vmem %s0, %s191
        %s193 = smul.u32 8, %s18
        %s194 = ssub.s32 10, %s193
        %p195 = scmp.lt.s32.totalorder %s194, 8
        %s196 = scalar_select %p195, %s194, 8
        %s197 = smul.u32 64, %s196
      $region28: #{cycle_generator_forward.12} parent=23 // pred_fallthru
        _
      // Predicated region
      $region29: #{cycle_generator_forward.12} parent=23 // pred_check
        %p198 = pneg %p76
      $region30: #{cycle_generator_forward.12} parent=23 // pred_check_branch
        %200 = sbr.rel (%p198) target = $region32
      $region31: #{cycle_generator_forward.12} parent=23 // pred_region
        %s201 = sadd.s32 %s18, 1
        %s202 = smul.u32 %s201, 4
        %s203 = smul.u32 2, %s202
        %p204 = scmp.lt.s32.totalorder %s17, 1
        %s205 = scalar_select %p204, %s17, 1
        %p206 = scmp.lt.s32.totalorder %s203, 9
        %s207 = scalar_select %p206, %s203, 9
        %s208 = smul.addr %s205, 10
        %s209 = sadd.s32 %s207, %s208
        %s210 = smul.addr %s209, 4
        %s211 = scalar_lea.vmem %s1, %s210
        %s212 = sadd.s32 %s18, 1
        %s213 = smul.u32 %s212, 4
        %s214 = smul.u32 2, %s213
      $region32: #{cycle_generator_forward.12} parent=23 // pred_fallthru
        _
    $region24: #{cycle_generator_forward.12} parent=5 // pred_fallthru
      _
    %p215 = scmp.le.s32.totalorder 1, %s10
    %p216 = scmp.lt.s32.totalorder %s10, 3
    %p217 = pnand %p215, %p216
    %p218 = pneg %p217
    // Predicated region
    $region33: #{cycle_generator_forward.12} parent=5 // pred_check
      _
    $region34: #{cycle_generator_forward.12} parent=5 // pred_check_branch
      %220 = sbr.rel (%p217) target = $region36
    $region35: #{cycle_generator_forward.12} parent=5 // pred_region
      %s221 = ssub.s32 %s10, 1
      %s222 = smul.u32 8, %s20
      %s223 = ssub.s32 10, %s222
      %p224 = scmp.lt.s32.totalorder %s223, 8
      %s225 = scalar_select %p224, %s223, 8
      %s226 = smul.u32 64, %s225
      %p227 = scmp.lt.s32.totalorder %s19, 1
      %s228 = scalar_select %p227, %s19, 1
      %p229 = scmp.lt.s32.totalorder %s222, 9
      %s230 = scalar_select %p229, %s222, 9
      %s231 = smul.addr %s228, 10
      %s232 = sadd.s32 %s230, %s231
      %s233 = smul.addr %s232, 4
      %s234 = scalar_lea.vmem %s0, %s233
      %p235 = pneg %p50
      %p236 = pneg %p47
      %s237 = sadd.s32 %s20, 1
      %s238 = smul.u32 %s237, 4
      %s239 = smul.u32 2, %s238
      %p240 = scmp.lt.s32.totalorder %s19, 1
      %s241 = scalar_select %p240, %s19, 1
      %p242 = scmp.lt.s32.totalorder %s239, 9
      %s243 = scalar_select %p242, %s239, 9
      %s244 = smul.addr %s241, 10
      %s245 = sadd.s32 %s243, %s244
      %s246 = smul.addr %s245, 4
      %s247 = scalar_lea.vmem %s1, %s246
      %p248 = pneg %p82
      %p249 = pneg %p79
      %p250 = pneg %p103
      %p251 = pneg %p100
      %p252 = pneg %p124
      %p253 = pneg %p121
      %p254 = pneg %p152
      %p255 = pneg %p149
      %s256 = smul.u32 8, %s20
      %p257 = scmp.lt.s32.totalorder %s19, 1
      %s258 = scalar_select %p257, %s19, 1
      %p259 = scmp.lt.s32.totalorder %s256, 7
      %s260 = scalar_select %p259, %s256, 7
      %s261 = smul.addr %s258, 8
      %s262 = sadd.s32 %s260, %s261
      %s263 = smul.addr %s262, 4
      %s264 = scalar_lea.vmem %s4, %s263
      %s265 = smul.u32 8, %s20
      %s266 = ssub.s32 10, %s265
      %p267 = scmp.lt.s32.totalorder %s266, 8
      %s268 = scalar_select %p267, %s266, 8
      %s269 = smul.u32 64, %s268
      %p270 = scmp.lt.s32.totalorder %s19, 1
      %s271 = scalar_select %p270, %s19, 1
      %p272 = scmp.lt.s32.totalorder %s265, 9
      %s273 = scalar_select %p272, %s265, 9
      %s274 = smul.addr %s271, 10
      %s275 = sadd.s32 %s273, %s274
      %s276 = smul.addr %s275, 4
      %s277 = scalar_lea.vmem %s0, %s276
      %s278 = smul.u32 8, %s20
      %s279 = ssub.s32 10, %s278
      %p280 = scmp.lt.s32.totalorder %s279, 8
      %s281 = scalar_select %p280, %s279, 8
      %s282 = smul.u32 64, %s281
      %s283 = sadd.s32 %s20, 1
      %s284 = smul.u32 %s283, 4
      %s285 = smul.u32 2, %s284
      %p286 = scmp.lt.s32.totalorder %s19, 1
      %s287 = scalar_select %p286, %s19, 1
      %p288 = scmp.lt.s32.totalorder %s285, 9
      %s289 = scalar_select %p288, %s285, 9
      %s290 = smul.addr %s287, 10
      %s291 = sadd.s32 %s289, %s290
      %s292 = smul.addr %s291, 4
      %s293 = scalar_lea.vmem %s1, %s292
      %s294 = sadd.s32 %s20, 1
      %s295 = smul.u32 %s294, 4
      %s296 = smul.u32 2, %s295
      %s297 = smul.u32 8, %s20
      %p298 = scmp.lt.s32.totalorder %s19, 1
      %s299 = scalar_select %p298, %s19, 1
      %p300 = scmp.lt.s32.totalorder %s297, 7
      %s301 = scalar_select %p300, %s297, 7
      %s302 = smul.addr %s299, 8
      %s303 = sadd.s32 %s301, %s302
      %s304 = smul.addr %s303, 4
      %s305 = scalar_lea.vmem %s4, %s304
      %s306 = smul.u32 8, %s20
      %v308 = vld [vmem:[%s277] sm:$0xf]
      %v309 = vld [vmem:[%s277 + $0x4] sm:$0xf]
      %v310 = vld [vmem:[%s277 + $0x8] sm:$0xf]
      %v311 = vld [vmem:[%s277 + $0xc] sm:$0xf]
      %v312 = vld [vmem:[%s277 + $0x10] sm:$0xf]
      %v313 = vld [vmem:[%s277 + $0x14] sm:$0xf]
      %v314 = vld [vmem:[%s277 + $0x18] sm:$0xf]
      %v315 = vld [vmem:[%s277 + $0x1c] sm:$0xf]
      %v316 = vld [vmem:[%s293] sm:$0xf]
      %v317 = vld [vmem:[%s293 + $0x4] sm:$0xf]
      %v326 = vunpack.c.l.b16 %v308
      %v327 = vunpack.c.l.b16 %v309
      %v328 = vunpack.c.l.b16 %v310
      %v329 = vunpack.c.l.b16 %v311
      %v330 = vunpack.c.l.b16 %v312
      %v331 = vunpack.c.l.b16 %v313
      %v332 = vunpack.c.l.b16 %v314
      %v333 = vunpack.c.l.b16 %v315
      %v334 = vpack.c.b16 %v327, %v326
      %v335 = vpack.c.b16 %v329, %v328
      %v336 = vpack.c.b16 %v331, %v330
      %v337 = vpack.c.b16 %v333, %v332
      %v340 = vunpack.c.l.b16 %v316
      %v341 = vunpack.c.l.b16 %v317
      %v342 = vpack.c.b16 %v341, %v340
      %v343 = vld [vmem:[%s2] sm:$0x3]
      %vm344 = vcmask 31744
      %v346 = vsel %vm344, %v334, 0
      %v349 = vsel %vm344, %v335, 0
      %v352 = vsel %vm344, %v336, 0
      %v355 = vsel %vm344, %v337, 0
      %v358 = vsel %vm344, %v342, 0
      %vm360 = vcmask 1041408
      %v362 = vsel %vm360, %v343, 0
      %364 = vmatprep.subr.bf16.mxu0 0
      %365 = vmatpush1.bf16.msra.mxu0 %v362
      %366 = vmatprep.subr.bf16.mxu0 0
      %367 = vmatpush1.bf16.msra.mxu0 0
      %368 = vmatprep.subr.bf16.mxu0 0
      %369 = vmatpush1.bf16.msra.mxu0 0
      %370 = vmatprep.subr.bf16.mxu0 0
      %371 = vmatpush1.bf16.msra.mxu0 0
      %372 = vmatprep.subr.bf16.mxu0 0
      %373 = vmatpush1.bf16.msra.mxu0 0
      %374 = vmatprep.subr.bf16.mxu0 0
      %375 = vmatpush1.bf16.msra.mxu0 0
      %376 = vmatprep.subr.bf16.mxu0 0
      %377 = vmatpush1.bf16.msra.mxu0 0
      %378 = vmatprep.subr.bf16.mxu0 0
      %379 = vmatpush1.bf16.msra.mxu0 0
      %380 = vmatprep.subr.bf16.mxu0 0
      %381 = vmatpush1.bf16.msra.mxu0 0
      %382 = vmatprep.subr.bf16.mxu0 0
      %383 = vmatpush1.bf16.msra.mxu0 0
      %384 = vmatprep.subr.bf16.mxu0 0
      %385 = vmatpush1.bf16.msra.mxu0 0
      %386 = vmatprep.subr.bf16.mxu0 0
      %387 = vmatpush1.bf16.msra.mxu0 0
      %388 = vmatprep.subr.bf16.mxu0 0
      %389 = vmatpush1.bf16.msra.mxu0 0
      %390 = vmatprep.subr.bf16.mxu0 0
      %391 = vmatpush1.bf16.msra.mxu0 0
      %392 = vmatprep.subr.bf16.mxu0 0
      %393 = vmatpush1.bf16.msra.mxu0 0
      %394 = vmatprep.subr.bf16.mxu0 0
      %395 = vmatpush1.bf16.msra.mxu0 0
      %396 = vmatprep.mubr.bf16.mxu0 0
      %397 = vmatmul.mubr.bf16.gmra.mrb[0].mxu0 %v346
      %v398 = vpop.f32.mrb[0].mxu0
      %v399 = vadd.f32 0.0, %v398
      %v400 = vpop.f32.mrb[0].mxu0
      %v401 = vpop.f32.mrb[0].mxu0
      %v402 = vadd.f32 0.0, %v401
      %v403 = vpop.f32.mrb[0].mxu0
      %404 = vmatprep.mubr.bf16.mxu0 0
      %405 = vmatmul.mubr.bf16.gmra.mrb[0].mxu0 %v349
      %v406 = vpop.f32.mrb[0].mxu0
      %v407 = vadd.f32 0.0, %v406
      %v408 = vpop.f32.mrb[0].mxu0
      %v409 = vpop.f32.mrb[0].mxu0
      %v410 = vadd.f32 0.0, %v409
      %v411 = vpop.f32.mrb[0].mxu0
      %412 = vmatprep.mubr.bf16.mxu0 0
      %413 = vmatmul.mubr.bf16.gmra.mrb[0].mxu0 %v352
      %v414 = vpop.f32.mrb[0].mxu0
      %v415 = vadd.f32 0.0, %v414
      %v416 = vpop.f32.mrb[0].mxu0
      %v417 = vpop.f32.mrb[0].mxu0
      %v418 = vadd.f32 0.0, %v417
      %v419 = vpop.f32.mrb[0].mxu0
      %420 = vmatprep.mubr.bf16.mxu0 0
      %421 = vmatmul.mubr.bf16.gmra.mrb[0].mxu0 %v355
      %v422 = vpop.f32.mrb[0].mxu0
      %v423 = vadd.f32 0.0, %v422
      %v424 = vpop.f32.mrb[0].mxu0
      %v425 = vpop.f32.mrb[0].mxu0
      %v426 = vadd.f32 0.0, %v425
      %v427 = vpop.f32.mrb[0].mxu0
      %428 = vmatprep.mubr.bf16.mxu0 0
      %429 = vmatmul.mubr.bf16.gmra.mrb[0].mxu0 %v358
      %v430 = vpop.f32.mrb[0].mxu0
      %v431 = vpop.f32.mrb[0].mxu0
      %v432 = vpop.f32.mrb[0].mxu0
      %v433 = vpop.f32.mrb[0].mxu0
      %434 = vdwg.mxu0
      %v435 = vadd.f32 %v399, 0.0
      %v436 = vadd.f32 %v402, 0.0
      %v437 = vadd.f32 %v407, 0.0
      %v438 = vadd.f32 %v410, 0.0
      %v439 = vadd.f32 %v415, 0.0
      %v440 = vadd.f32 %v418, 0.0
      %v441 = vadd.f32 %v423, 0.0
      %v442 = vadd.f32 %v426, 0.0
      %s443 = scalar_lea.vmem %s2, 2
      %v444 = vld [vmem:[%s443] sm:$0x3]
      %v446 = vsel %vm360, %v444, 0
      %448 = vmatprep.subr.bf16.mxu0 0
      %449 = vmatpush1.bf16.msra.mxu0 %v446
      %450 = vmatprep.subr.bf16.mxu0 0
      %451 = vmatpush1.bf16.msra.mxu0 0
      %452 = vmatprep.subr.bf16.mxu0 0
      %453 = vmatpush1.bf16.msra.mxu0 0
      %454 = vmatprep.subr.bf16.mxu0 0
      %455 = vmatpush1.bf16.msra.mxu0 0
      %456 = vmatprep.subr.bf16.mxu0 0
      %457 = vmatpush1.bf16.msra.mxu0 0
      %458 = vmatprep.subr.bf16.mxu0 0
      %459 = vmatpush1.bf16.msra.mxu0 0
      %460 = vmatprep.subr.bf16.mxu0 0
      %461 = vmatpush1.bf16.msra.mxu0 0
      %462 = vmatprep.subr.bf16.mxu0 0
      %463 = vmatpush1.bf16.msra.mxu0 0
      %464 = vmatprep.subr.bf16.mxu0 0
      %465 = vmatpush1.bf16.msra.mxu0 0
      %466 = vmatprep.subr.bf16.mxu0 0
      %467 = vmatpush1.bf16.msra.mxu0 0
      %468 = vmatprep.subr.bf16.mxu0 0
      %469 = vmatpush1.bf16.msra.mxu0 0
      %470 = vmatprep.subr.bf16.mxu0 0
      %471 = vmatpush1.bf16.msra.mxu0 0
      %472 = vmatprep.subr.bf16.mxu0 0
      %473 = vmatpush1.bf16.msra.mxu0 0
      %474 = vmatprep.subr.bf16.mxu0 0
      %475 = vmatpush1.bf16.msra.mxu0 0
      %476 = vmatprep.subr.bf16.mxu0 0
      %477 = vmatpush1.bf16.msra.mxu0 0
      %478 = vmatprep.subr.bf16.mxu0 0
      %479 = vmatpush1.bf16.msra.mxu0 0
      %480 = vmatprep.mubr.bf16.mxu0 0
      %481 = vmatmul.mubr.bf16.gmra.mrb[0].mxu0 %v346
      %v482 = vpop.f32.mrb[0].mxu0
      %v483 = vadd.f32 0.0, %v482
      %v484 = vpop.f32.mrb[0].mxu0
      %v485 = vpop.f32.mrb[0].mxu0
      %v486 = vadd.f32 0.0, %v485
      %v487 = vpop.f32.mrb[0].mxu0
      %488 = vmatprep.mubr.bf16.mxu0 0
      %489 = vmatmul.mubr.bf16.gmra.mrb[0].mxu0 %v349
      %v490 = vpop.f32.mrb[0].mxu0
      %v491 = vadd.f32 0.0, %v490
      %v492 = vpop.f32.mrb[0].mxu0
      %v493 = vpop.f32.mrb[0].mxu0
      %v494 = vadd.f32 0.0, %v493
      %v495 = vpop.f32.mrb[0].mxu0
      %496 = vmatprep.mubr.bf16.mxu0 0
      %497 = vmatmul.mubr.bf16.gmra.mrb[0].mxu0 %v352
      %v498 = vpop.f32.mrb[0].mxu0
      %v499 = vadd.f32 0.0, %v498
      %v500 = vpop.f32.mrb[0].mxu0
      %v501 = vpop.f32.mrb[0].mxu0
      %v502 = vadd.f32 0.0, %v501
      %v503 = vpop.f32.mrb[0].mxu0
      %504 = vmatprep.mubr.bf16.mxu0 0
      %505 = vmatmul.mubr.bf16.gmra.mrb[0].mxu0 %v355
      %v506 = vpop.f32.mrb[0].mxu0
      %v507 = vadd.f32 0.0, %v506
      %v508 = vpop.f32.mrb[0].mxu0
      %v509 = vpop.f32.mrb[0].mxu0
      %v510 = vadd.f32 0.0, %v509
      %v511 = vpop.f32.mrb[0].mxu0
      %512 = vmatprep.mubr.bf16.mxu0 0
      %513 = vmatmul.mubr.bf16.gmra.mrb[0].mxu0 %v358
      %v514 = vpop.f32.mrb[0].mxu0
      %v515 = vadd.f32 0.0, %v514
      %v516 = vpop.f32.mrb[0].mxu0
      %v517 = vpop.f32.mrb[0].mxu0
      %v518 = vpop.f32.mrb[0].mxu0
      %519 = vdwg.mxu0
      %vm529 = vcmask 1046528
      %v530 = vrot.slane %v483, 1
      %v531 = vrot.slane %v486, 1
      %v532 = vsel %vm529, %v530, %v531
      %v533 = vrot.slane %v491, 1
      %v534 = vsel %vm529, %v531, %v533
      %v535 = vrot.slane %v494, 1
      %v536 = vsel %vm529, %v533, %v535
      %v537 = vrot.slane %v499, 1
      %v538 = vsel %vm529, %v535, %v537
      %v539 = vrot.slane %v502, 1
      %v540 = vsel %vm529, %v537, %v539
      %v541 = vrot.slane %v507, 1
      %v542 = vsel %vm529, %v539, %v541
      %v543 = vrot.slane %v510, 1
      %v544 = vsel %vm529, %v541, %v543
      %v545 = vrot.slane %v515, 1
      %v546 = vsel %vm529, %v543, %v545
      %v555 = vadd.f32 %v435, %v532
      %v556 = vadd.f32 %v436, %v534
      %v557 = vadd.f32 %v437, %v536
      %v558 = vadd.f32 %v438, %v538
      %v559 = vadd.f32 %v439, %v540
      %v560 = vadd.f32 %v440, %v542
      %v561 = vadd.f32 %v441, %v544
      %v562 = vadd.f32 %v442, %v546
      %s563 = scalar_lea.vmem %s2, 4
      %v564 = vld [vmem:[%s563] sm:$0x3]
      %v566 = vsel %vm360, %v564, 0
      %568 = vmatprep.subr.bf16.mxu0 0
      %569 = vmatpush1.bf16.msra.mxu0 %v566
      %570 = vmatprep.subr.bf16.mxu0 0
      %571 = vmatpush1.bf16.msra.mxu0 0
      %572 = vmatprep.subr.bf16.mxu0 0
      %573 = vmatpush1.bf16.msra.mxu0 0
      %574 = vmatprep.subr.bf16.mxu0 0
      %575 = vmatpush1.bf16.msra.mxu0 0
      %576 = vmatprep.subr.bf16.mxu0 0
      %577 = vmatpush1.bf16.msra.mxu0 0
      %578 = vmatprep.subr.bf16.mxu0 0
      %579 = vmatpush1.bf16.msra.mxu0 0
      %580 = vmatprep.subr.bf16.mxu0 0
      %581 = vmatpush1.bf16.msra.mxu0 0
      %582 = vmatprep.subr.bf16.mxu0 0
      %583 = vmatpush1.bf16.msra.mxu0 0
      %584 = vmatprep.subr.bf16.mxu0 0
      %585 = vmatpush1.bf16.msra.mxu0 0
      %586 = vmatprep.subr.bf16.mxu0 0
      %587 = vmatpush1.bf16.msra.mxu0 0
      %588 = vmatprep.subr.bf16.mxu0 0
      %589 = vmatpush1.bf16.msra.mxu0 0
      %590 = vmatprep.subr.bf16.mxu0 0
      %591 = vmatpush1.bf16.msra.mxu0 0
      %592 = vmatprep.subr.bf16.mxu0 0
      %593 = vmatpush1.bf16.msra.mxu0 0
      %594 = vmatprep.subr.bf16.mxu0 0
      %595 = vmatpush1.bf16.msra.mxu0 0
      %596 = vmatprep.subr.bf16.mxu0 0
      %597 = vmatpush1.bf16.msra.mxu0 0
      %598 = vmatprep.subr.bf16.mxu0 0
      %599 = vmatpush1.bf16.msra.mxu0 0
      %600 = vmatprep.mubr.bf16.mxu0 0
      %601 = vmatmul.mubr.bf16.gmra.mrb[0].mxu0 %v346
      %v602 = vpop.f32.mrb[0].mxu0
      %v603 = vadd.f32 0.0, %v602
      %v604 = vpop.f32.mrb[0].mxu0
      %v605 = vpop.f32.mrb[0].mxu0
      %v606 = vadd.f32 0.0, %v605
      %v607 = vpop.f32.mrb[0].mxu0
      %608 = vmatprep.mubr.bf16.mxu0 0
      %609 = vmatmul.mubr.bf16.gmra.mrb[0].mxu0 %v349
      %v610 = vpop.f32.mrb[0].mxu0
      %v611 = vadd.f32 0.0, %v610
      %v612 = vpop.f32.mrb[0].mxu0
      %v613 = vpop.f32.mrb[0].mxu0
      %v614 = vadd.f32 0.0, %v613
      %v615 = vpop.f32.mrb[0].mxu0
      %616 = vmatprep.mubr.bf16.mxu0 0
      %617 = vmatmul.mubr.bf16.gmra.mrb[0].mxu0 %v352
      %v618 = vpop.f32.mrb[0].mxu0
      %v619 = vadd.f32 0.0, %v618
      %v620 = vpop.f32.mrb[0].mxu0
      %v621 = vpop.f32.mrb[0].mxu0
      %v622 = vadd.f32 0.0, %v621
      %v623 = vpop.f32.mrb[0].mxu0
      %624 = vmatprep.mubr.bf16.mxu0 0
      %625 = vmatmul.mubr.bf16.gmra.mrb[0].mxu0 %v355
      %v626 = vpop.f32.mrb[0].mxu0
      %v627 = vadd.f32 0.0, %v626
      %v628 = vpop.f32.mrb[0].mxu0
      %v629 = vpop.f32.mrb[0].mxu0
      %v630 = vadd.f32 0.0, %v629
      %v631 = vpop.f32.mrb[0].mxu0
      %632 = vmatprep.mubr.bf16.mxu0 0
      %633 = vmatmul.mubr.bf16.gmra.mrb[0].mxu0 %v358
      %v634 = vpop.f32.mrb[0].mxu0
      %v635 = vadd.f32 0.0, %v634
      %v636 = vpop.f32.mrb[0].mxu0
      %v637 = vpop.f32.mrb[0].mxu0
      %v638 = vpop.f32.mrb[0].mxu0
      %639 = vdwg.mxu0
      %vm649 = vcmask 1045504
      %v650 = vrot.slane %v603, 2
      %v651 = vrot.slane %v606, 2
      %v652 = vsel %vm649, %v650, %v651
      %v653 = vrot.slane %v611, 2
      %v654 = vsel %vm649, %v651, %v653
      %v655 = vrot.slane %v614, 2
      %v656 = vsel %vm649, %v653, %v655
      %v657 = vrot.slane %v619, 2
      %v658 = vsel %vm649, %v655, %v657
      %v659 = vrot.slane %v622, 2
      %v660 = vsel %vm649, %v657, %v659
      %v661 = vrot.slane %v627, 2
      %v662 = vsel %vm649, %v659, %v661
      %v663 = vrot.slane %v630, 2
      %v664 = vsel %vm649, %v661, %v663
      %v665 = vrot.slane %v635, 2
      %v666 = vsel %vm649, %v663, %v665
      %v675 = vadd.f32 %v555, %v652
      %v676 = vadd.f32 %v556, %v654
      %v677 = vadd.f32 %v557, %v656
      %v678 = vadd.f32 %v558, %v658
      %v679 = vadd.f32 %v559, %v660
      %v680 = vadd.f32 %v560, %v662
      %v681 = vadd.f32 %v561, %v664
      %v682 = vadd.f32 %v562, %v666
      %s683 = scalar_lea.vmem %s2, 6
      %v684 = vld [vmem:[%s683] sm:$0x3]
      %v686 = vsel %vm360, %v684, 0
      %688 = vmatprep.subr.bf16.mxu0 0
      %689 = vmatpush1.bf16.msra.mxu0 %v686
      %690 = vmatprep.subr.bf16.mxu0 0
      %691 = vmatpush1.bf16.msra.mxu0 0
      %692 = vmatprep.subr.bf16.mxu0 0
      %693 = vmatpush1.bf16.msra.mxu0 0
      %694 = vmatprep.subr.bf16.mxu0 0
      %695 = vmatpush1.bf16.msra.mxu0 0
      %696 = vmatprep.subr.bf16.mxu0 0
      %697 = vmatpush1.bf16.msra.mxu0 0
      %698 = vmatprep.subr.bf16.mxu0 0
      %699 = vmatpush1.bf16.msra.mxu0 0
      %700 = vmatprep.subr.bf16.mxu0 0
      %701 = vmatpush1.bf16.msra.mxu0 0
      %702 = vmatprep.subr.bf16.mxu0 0
      %703 = vmatpush1.bf16.msra.mxu0 0
      %704 = vmatprep.subr.bf16.mxu0 0
      %705 = vmatpush1.bf16.msra.mxu0 0
      %706 = vmatprep.subr.bf16.mxu0 0
      %707 = vmatpush1.bf16.msra.mxu0 0
      %708 = vmatprep.subr.bf16.mxu0 0
      %709 = vmatpush1.bf16.msra.mxu0 0
      %710 = vmatprep.subr.bf16.mxu0 0
      %711 = vmatpush1.bf16.msra.mxu0 0
      %712 = vmatprep.subr.bf16.mxu0 0
      %713 = vmatpush1.bf16.msra.mxu0 0
      %714 = vmatprep.subr.bf16.mxu0 0
      %715 = vmatpush1.bf16.msra.mxu0 0
      %716 = vmatprep.subr.bf16.mxu0 0
      %717 = vmatpush1.bf16.msra.mxu0 0
      %718 = vmatprep.subr.bf16.mxu0 0
      %719 = vmatpush1.bf16.msra.mxu0 0
      %720 = vmatprep.mubr.bf16.mxu0 0
      %721 = vmatmul.mubr.bf16.gmra.mrb[0].mxu0 %v346
      %v722 = vpop.f32.mrb[0].mxu0
      %v723 = vadd.f32 0.0, %v722
      %v724 = vpop.f32.mrb[0].mxu0
      %v725 = vpop.f32.mrb[0].mxu0
      %v726 = vadd.f32 0.0, %v725
      %v727 = vpop.f32.mrb[0].mxu0
      %728 = vmatprep.mubr.bf16.mxu0 0
      %729 = vmatmul.mubr.bf16.gmra.mrb[0].mxu0 %v349
      %v730 = vpop.f32.mrb[0].mxu0
      %v731 = vadd.f32 0.0, %v730
      %v732 = vpop.f32.mrb[0].mxu0
      %v733 = vpop.f32.mrb[0].mxu0
      %v734 = vadd.f32 0.0, %v733
      %v735 = vpop.f32.mrb[0].mxu0
      %736 = vmatprep.mubr.bf16.mxu0 0
      %737 = vmatmul.mubr.bf16.gmra.mrb[0].mxu0 %v352
      %v738 = vpop.f32.mrb[0].mxu0
      %v739 = vadd.f32 0.0, %v738
      %v740 = vpop.f32.mrb[0].mxu0
      %v741 = vpop.f32.mrb[0].mxu0
      %v742 = vadd.f32 0.0, %v741
      %v743 = vpop.f32.mrb[0].mxu0
      %744 = vmatprep.mubr.bf16.mxu0 0
      %745 = vmatmul.mubr.bf16.gmra.mrb[0].mxu0 %v355
      %v746 = vpop.f32.mrb[0].mxu0
      %v747 = vadd.f32 0.0, %v746
      %v748 = vpop.f32.mrb[0].mxu0
      %v749 = vpop.f32.mrb[0].mxu0
      %v750 = vadd.f32 0.0, %v749
      %v751 = vpop.f32.mrb[0].mxu0
      %752 = vmatprep.mubr.bf16.mxu0 0
      %753 = vmatmul.mubr.bf16.gmra.mrb[0].mxu0 %v358
      %v754 = vpop.f32.mrb[0].mxu0
      %v755 = vadd.f32 0.0, %v754
      %v756 = vpop.f32.mrb[0].mxu0
      %v757 = vpop.f32.mrb[0].mxu0
      %v758 = vpop.f32.mrb[0].mxu0
      %759 = vdwg.mxu0
      %vm769 = vcmask 1044480
      %v770 = vrot.slane %v723, 3
      %v771 = vrot.slane %v726, 3
      %v772 = vsel %vm769, %v770, %v771
      %v773 = vrot.slane %v731, 3
      %v774 = vsel %vm769, %v771, %v773
      %v775 = vrot.slane %v734, 3
      %v776 = vsel %vm769, %v773, %v775
      %v777 = vrot.slane %v739, 3
      %v778 = vsel %vm769, %v775, %v777
      %v779 = vrot.slane %v742, 3
      %v780 = vsel %vm769, %v777, %v779
      %v781 = vrot.slane %v747, 3
      %v782 = vsel %vm769, %v779, %v781
      %v783 = vrot.slane %v750, 3
      %v784 = vsel %vm769, %v781, %v783
      %v785 = vrot.slane %v755, 3
      %v786 = vsel %vm769, %v783, %v785
      %v795 = vadd.f32 %v675, %v772
      %v796 = vadd.f32 %v676, %v774
      %v797 = vadd.f32 %v677, %v776
      %v798 = vadd.f32 %v678, %v778
      %v799 = vadd.f32 %v679, %v780
      %v800 = vadd.f32 %v680, %v782
      %v801 = vadd.f32 %v681, %v784
      %v802 = vadd.f32 %v682, %v786
      %s803 = scalar_lea.vmem %s2, 8
      %v804 = vld [vmem:[%s803] sm:$0x3]
      %v806 = vsel %vm360, %v804, 0
      %808 = vmatprep.subr.bf16.mxu0 0
      %809 = vmatpush1.bf16.msra.mxu0 %v806
      %810 = vmatprep.subr.bf16.mxu0 0
      %811 = vmatpush1.bf16.msra.mxu0 0
      %812 = vmatprep.subr.bf16.mxu0 0
      %813 = vmatpush1.bf16.msra.mxu0 0
      %814 = vmatprep.subr.bf16.mxu0 0
      %815 = vmatpush1.bf16.msra.mxu0 0
      %816 = vmatprep.subr.bf16.mxu0 0
      %817 = vmatpush1.bf16.msra.mxu0 0
      %818 = vmatprep.subr.bf16.mxu0 0
      %819 = vmatpush1.bf16.msra.mxu0 0
      %820 = vmatprep.subr.bf16.mxu0 0
      %821 = vmatpush1.bf16.msra.mxu0 0
      %822 = vmatprep.subr.bf16.mxu0 0
      %823 = vmatpush1.bf16.msra.mxu0 0
      %824 = vmatprep.subr.bf16.mxu0 0
      %825 = vmatpush1.bf16.msra.mxu0 0
      %826 = vmatprep.subr.bf16.mxu0 0
      %827 = vmatpush1.bf16.msra.mxu0 0
      %828 = vmatprep.subr.bf16.mxu0 0
      %829 = vmatpush1.bf16.msra.mxu0 0
      %830 = vmatprep.subr.bf16.mxu0 0
      %831 = vmatpush1.bf16.msra.mxu0 0
      %832 = vmatprep.subr.bf16.mxu0 0
      %833 = vmatpush1.bf16.msra.mxu0 0
      %834 = vmatprep.subr.bf16.mxu0 0
      %835 = vmatpush1.bf16.msra.mxu0 0
      %836 = vmatprep.subr.bf16.mxu0 0
      %837 = vmatpush1.bf16.msra.mxu0 0
      %838 = vmatprep.subr.bf16.mxu0 0
      %839 = vmatpush1.bf16.msra.mxu0 0
      %840 = vmatprep.mubr.bf16.mxu0 0
      %841 = vmatmul.mubr.bf16.gmra.mrb[0].mxu0 %v346
      %v842 = vpop.f32.mrb[0].mxu0
      %v843 = vadd.f32 0.0, %v842
      %v844 = vpop.f32.mrb[0].mxu0
      %v845 = vpop.f32.mrb[0].mxu0
      %v846 = vadd.f32 0.0, %v845
      %v847 = vpop.f32.mrb[0].mxu0
      %848 = vmatprep.mubr.bf16.mxu0 0
      %849 = vmatmul.mubr.bf16.gmra.mrb[0].mxu0 %v349
      %v850 = vpop.f32.mrb[0].mxu0
      %v851 = vadd.f32 0.0, %v850
      %v852 = vpop.f32.mrb[0].mxu0
      %v853 = vpop.f32.mrb[0].mxu0
      %v854 = vadd.f32 0.0, %v853
      %v855 = vpop.f32.mrb[0].mxu0
      %856 = vmatprep.mubr.bf16.mxu0 0
      %857 = vmatmul.mubr.bf16.gmra.mrb[0].mxu0 %v352
      %v858 = vpop.f32.mrb[0].mxu0
      %v859 = vadd.f32 0.0, %v858
      %v860 = vpop.f32.mrb[0].mxu0
      %v861 = vpop.f32.mrb[0].mxu0
      %v862 = vadd.f32 0.0, %v861
      %v863 = vpop.f32.mrb[0].mxu0
      %864 = vmatprep.mubr.bf16.mxu0 0
      %865 = vmatmul.mubr.bf16.gmra.mrb[0].mxu0 %v355
      %v866 = vpop.f32.mrb[0].mxu0
      %v867 = vadd.f32 0.0, %v866
      %v868 = vpop.f32.mrb[0].mxu0
      %v869 = vpop.f32.mrb[0].mxu0
      %v870 = vadd.f32 0.0, %v869
      %v871 = vpop.f32.mrb[0].mxu0
      %872 = vmatprep.mubr.bf16.mxu0 0
      %873 = vmatmul.mubr.bf16.gmra.mrb[0].mxu0 %v358
      %v874 = vpop.f32.mrb[0].mxu0
      %v875 = vadd.f32 0.0, %v874
      %v876 = vpop.f32.mrb[0].mxu0
      %v877 = vpop.f32.mrb[0].mxu0
      %v878 = vpop.f32.mrb[0].mxu0
      %879 = vdwg.mxu0
      %vm889 = vcmask 1043456
      %v890 = vrot.slane %v843, 4
      %v891 = vrot.slane %v846, 4
      %v892 = vsel %vm889, %v890, %v891
      %v893 = vrot.slane %v851, 4
      %v894 = vsel %vm889, %v891, %v893
      %v895 = vrot.slane %v854, 4
      %v896 = vsel %vm889, %v893, %v895
      %v897 = vrot.slane %v859, 4
      %v898 = vsel %vm889, %v895, %v897
      %v899 = vrot.slane %v862, 4
      %v900 = vsel %vm889, %v897, %v899
      %v901 = vrot.slane %v867, 4
      %v902 = vsel %vm889, %v899, %v901
      %v903 = vrot.slane %v870, 4
      %v904 = vsel %vm889, %v901, %v903
      %v905 = vrot.slane %v875, 4
      %v906 = vsel %vm889, %v903, %v905
      %v915 = vadd.f32 %v795, %v892
      %v916 = vadd.f32 %v796, %v894
      %v917 = vadd.f32 %v797, %v896
      %v918 = vadd.f32 %v798, %v898
      %v919 = vadd.f32 %v799, %v900
      %v920 = vadd.f32 %v800, %v902
      %v921 = vadd.f32 %v801, %v904
      %v922 = vadd.f32 %v802, %v906
      %s923 = scalar_lea.vmem %s2, 10
      %v924 = vld [vmem:[%s923] sm:$0x3]
      %v926 = vsel %vm360, %v924, 0
      %928 = vmatprep.subr.bf16.mxu0 0
      %929 = vmatpush1.bf16.msra.mxu0 %v926
      %930 = vmatprep.subr.bf16.mxu0 0
      %931 = vmatpush1.bf16.msra.mxu0 0
      %932 = vmatprep.subr.bf16.mxu0 0
      %933 = vmatpush1.bf16.msra.mxu0 0
      %934 = vmatprep.subr.bf16.mxu0 0
      %935 = vmatpush1.bf16.msra.mxu0 0
      %936 = vmatprep.subr.bf16.mxu0 0
      %937 = vmatpush1.bf16.msra.mxu0 0
      %938 = vmatprep.subr.bf16.mxu0 0
      %939 = vmatpush1.bf16.msra.mxu0 0
      %940 = vmatprep.subr.bf16.mxu0 0
      %941 = vmatpush1.bf16.msra.mxu0 0
      %942 = vmatprep.subr.bf16.mxu0 0
      %943 = vmatpush1.bf16.msra.mxu0 0
      %944 = vmatprep.subr.bf16.mxu0 0
      %945 = vmatpush1.bf16.msra.mxu0 0
      %946 = vmatprep.subr.bf16.mxu0 0
      %947 = vmatpush1.bf16.msra.mxu0 0
      %948 = vmatprep.subr.bf16.mxu0 0
      %949 = vmatpush1.bf16.msra.mxu0 0
      %950 = vmatprep.subr.bf16.mxu0 0
      %951 = vmatpush1.bf16.msra.mxu0 0
      %952 = vmatprep.subr.bf16.mxu0 0
      %953 = vmatpush1.bf16.msra.mxu0 0
      %954 = vmatprep.subr.bf16.mxu0 0
      %955 = vmatpush1.bf16.msra.mxu0 0
      %956 = vmatprep.subr.bf16.mxu0 0
      %957 = vmatpush1.bf16.msra.mxu0 0
      %958 = vmatprep.subr.bf16.mxu0 0
      %959 = vmatpush1.bf16.msra.mxu0 0
      %960 = vmatprep.mubr.bf16.mxu0 0
      %961 = vmatmul.mubr.bf16.gmra.mrb[0].mxu0 %v346
      %v962 = vpop.f32.mrb[0].mxu0
      %v963 = vadd.f32 0.0, %v962
      %v964 = vpop.f32.mrb[0].mxu0
      %v965 = vpop.f32.mrb[0].mxu0
      %v966 = vadd.f32 0.0, %v965
      %v967 = vpop.f32.mrb[0].mxu0
      %968 = vmatprep.mubr.bf16.mxu0 0
      %969 = vmatmul.mubr.bf16.gmra.mrb[0].mxu0 %v349
      %v970 = vpop.f32.mrb[0].mxu0
      %v971 = vadd.f32 0.0, %v970
      %v972 = vpop.f32.mrb[0].mxu0
      %v973 = vpop.f32.mrb[0].mxu0
      %v974 = vadd.f32 0.0, %v973
      %v975 = vpop.f32.mrb[0].mxu0
      %976 = vmatprep.mubr.bf16.mxu0 0
      %977 = vmatmul.mubr.bf16.gmra.mrb[0].mxu0 %v352
      %v978 = vpop.f32.mrb[0].mxu0
      %v979 = vadd.f32 0.0, %v978
      %v980 = vpop.f32.mrb[0].mxu0
      %v981 = vpop.f32.mrb[0].mxu0
      %v982 = vadd.f32 0.0, %v981
      %v983 = vpop.f32.mrb[0].mxu0
      %984 = vmatprep.mubr.bf16.mxu0 0
      %985 = vmatmul.mubr.bf16.gmra.mrb[0].mxu0 %v355
      %v986 = vpop.f32.mrb[0].mxu0
      %v987 = vadd.f32 0.0, %v986
      %v988 = vpop.f32.mrb[0].mxu0
      %v989 = vpop.f32.mrb[0].mxu0
      %v990 = vadd.f32 0.0, %v989
      %v991 = vpop.f32.mrb[0].mxu0
      %992 = vmatprep.mubr.bf16.mxu0 0
      %993 = vmatmul.mubr.bf16.gmra.mrb[0].mxu0 %v358
      %v994 = vpop.f32.mrb[0].mxu0
      %v995 = vadd.f32 0.0, %v994
      %v996 = vpop.f32.mrb[0].mxu0
      %v997 = vpop.f32.mrb[0].mxu0
      %v998 = vpop.f32.mrb[0].mxu0
      %999 = vdwg.mxu0
      %vm1009 = vcmask 1042432
      %v1010 = vrot.slane %v963, 5
      %v1011 = vrot.slane %v966, 5
      %v1012 = vsel %vm1009, %v1010, %v1011
      %v1013 = vrot.slane %v971, 5
      %v1014 = vsel %vm1009, %v1011, %v1013
      %v1015 = vrot.slane %v974, 5
      %v1016 = vsel %vm1009, %v1013, %v1015
      %v1017 = vrot.slane %v979, 5
      %v1018 = vsel %vm1009, %v1015, %v1017
      %v1019 = vrot.slane %v982, 5
      %v1020 = vsel %vm1009, %v1017, %v1019
      %v1021 = vrot.slane %v987, 5
      %v1022 = vsel %vm1009, %v1019, %v1021
      %v1023 = vrot.slane %v990, 5
      %v1024 = vsel %vm1009, %v1021, %v1023
      %v1025 = vrot.slane %v995, 5
      %v1026 = vsel %vm1009, %v1023, %v1025
      %v1035 = vadd.f32 %v915, %v1012
      %v1036 = vadd.f32 %v916, %v1014
      %v1037 = vadd.f32 %v917, %v1016
      %v1038 = vadd.f32 %v918, %v1018
      %v1039 = vadd.f32 %v919, %v1020
      %v1040 = vadd.f32 %v920, %v1022
      %v1041 = vadd.f32 %v921, %v1024
      %v1042 = vadd.f32 %v922, %v1026
      %s1043 = scalar_lea.vmem %s2, 12
      %v1044 = vld [vmem:[%s1043] sm:$0x3]
      %v1046 = vsel %vm360, %v1044, 0
      %1048 = vmatprep.subr.bf16.mxu0 0
      %1049 = vmatpush1.bf16.msra.mxu0 %v1046
      %1050 = vmatprep.subr.bf16.mxu0 0
      %1051 = vmatpush1.bf16.msra.mxu0 0
      %1052 = vmatprep.subr.bf16.mxu0 0
      %1053 = vmatpush1.bf16.msra.mxu0 0
      %1054 = vmatprep.subr.bf16.mxu0 0
      %1055 = vmatpush1.bf16.msra.mxu0 0
      %1056 = vmatprep.subr.bf16.mxu0 0
      %1057 = vmatpush1.bf16.msra.mxu0 0
      %1058 = vmatprep.subr.bf16.mxu0 0
      %1059 = vmatpush1.bf16.msra.mxu0 0
      %1060 = vmatprep.subr.bf16.mxu0 0
      %1061 = vmatpush1.bf16.msra.mxu0 0
      %1062 = vmatprep.subr.bf16.mxu0 0
      %1063 = vmatpush1.bf16.msra.mxu0 0
      %1064 = vmatprep.subr.bf16.mxu0 0
      %1065 = vmatpush1.bf16.msra.mxu0 0
      %1066 = vmatprep.subr.bf16.mxu0 0
      %1067 = vmatpush1.bf16.msra.mxu0 0
      %1068 = vmatprep.subr.bf16.mxu0 0
      %1069 = vmatpush1.bf16.msra.mxu0 0
      %1070 = vmatprep.subr.bf16.mxu0 0
      %1071 = vmatpush1.bf16.msra.mxu0 0
      %1072 = vmatprep.subr.bf16.mxu0 0
      %1073 = vmatpush1.bf16.msra.mxu0 0
      %1074 = vmatprep.subr.bf16.mxu0 0
      %1075 = vmatpush1.bf16.msra.mxu0 0
      %1076 = vmatprep.subr.bf16.mxu0 0
      %1077 = vmatpush1.bf16.msra.mxu0 0
      %1078 = vmatprep.subr.bf16.mxu0 0
      %1079 = vmatpush1.bf16.msra.mxu0 0
      %1080 = vmatprep.mubr.bf16.mxu0 0
      %1081 = vmatmul.mubr.bf16.gmra.mrb[0].mxu0 %v346
      %v1082 = vpop.f32.mrb[0].mxu0
      %v1083 = vadd.f32 0.0, %v1082
      %v1084 = vpop.f32.mrb[0].mxu0
      %v1085 = vpop.f32.mrb[0].mxu0
      %v1086 = vadd.f32 0.0, %v1085
      %v1087 = vpop.f32.mrb[0].mxu0
      %1088 = vmatprep.mubr.bf16.mxu0 0
      %1089 = vmatmul.mubr.bf16.gmra.mrb[0].mxu0 %v349
      %v1090 = vpop.f32.mrb[0].mxu0
      %v1091 = vadd.f32 0.0, %v1090
      %v1092 = vpop.f32.mrb[0].mxu0
      %v1093 = vpop.f32.mrb[0].mxu0
      %v1094 = vadd.f32 0.0, %v1093
      %v1095 = vpop.f32.mrb[0].mxu0
      %1096 = vmatprep.mubr.bf16.mxu0 0
      %1097 = vmatmul.mubr.bf16.gmra.mrb[0].mxu0 %v352
      %v1098 = vpop.f32.mrb[0].mxu0
      %v1099 = vadd.f32 0.0, %v1098
      %v1100 = vpop.f32.mrb[0].mxu0
      %v1101 = vpop.f32.mrb[0].mxu0
      %v1102 = vadd.f32 0.0, %v1101
      %v1103 = vpop.f32.mrb[0].mxu0
      %1104 = vmatprep.mubr.bf16.mxu0 0
      %1105 = vmatmul.mubr.bf16.gmra.mrb[0].mxu0 %v355
      %v1106 = vpop.f32.mrb[0].mxu0
      %v1107 = vadd.f32 0.0, %v1106
      %v1108 = vpop.f32.mrb[0].mxu0
      %v1109 = vpop.f32.mrb[0].mxu0
      %v1110 = vadd.f32 0.0, %v1109
      %v1111 = vpop.f32.mrb[0].mxu0
      %1112 = vmatprep.mubr.bf16.mxu0 0
      %1113 = vmatmul.mubr.bf16.gmra.mrb[0].mxu0 %v358
      %v1114 = vpop.f32.mrb[0].mxu0
      %v1115 = vadd.f32 0.0, %v1114
      %v1116 = vpop.f32.mrb[0].mxu0
      %v1117 = vpop.f32.mrb[0].mxu0
      %v1118 = vpop.f32.mrb[0].mxu0
      %1119 = vdwg.mxu0
      %v1129 = vrot.slane %v1083, 6
      %v1130 = vrot.slane %v1086, 6
      %v1131 = vsel %vm360, %v1129, %v1130
      %v1132 = vrot.slane %v1091, 6
      %v1133 = vsel %vm360, %v1130, %v1132
      %v1134 = vrot.slane %v1094, 6
      %v1135 = vsel %vm360, %v1132, %v1134
      %v1136 = vrot.slane %v1099, 6
      %v1137 = vsel %vm360, %v1134, %v1136
      %v1138 = vrot.slane %v1102, 6
      %v1139 = vsel %vm360, %v1136, %v1138
      %v1140 = vrot.slane %v1107, 6
      %v1141 = vsel %vm360, %v1138, %v1140
      %v1142 = vrot.slane %v1110, 6
      %v1143 = vsel %vm360, %v1140, %v1142
      %v1144 = vrot.slane %v1115, 6
      %v1145 = vsel %vm360, %v1142, %v1144
      %v1154 = vadd.f32 %v1035, %v1131
      %v1155 = vadd.f32 %v1036, %v1133
      %v1156 = vadd.f32 %v1037, %v1135
      %v1157 = vadd.f32 %v1038, %v1137
      %v1158 = vadd.f32 %v1039, %v1139
      %v1159 = vadd.f32 %v1040, %v1141
      %v1160 = vadd.f32 %v1041, %v1143
      %v1161 = vadd.f32 %v1042, %v1145
      %v1162 = vld [vmem:[%s3] sm:$0x1]
      %v1164 = vlaneseq
      %v1165 = vshrl.u32 %v1164, 7
      %v1166 = vsub.s32 0, %v1165
      %v1167 = vrot.slane %v1162, %v1166
      %v1169 = vadd.f32 %v1154, %v1167
      %v1170 = vadd.f32 %v1155, %v1167
      %v1171 = vadd.f32 %v1156, %v1167
      %v1172 = vadd.f32 %v1157, %v1167
      %v1173 = vadd.f32 %v1158, %v1167
      %v1174 = vadd.f32 %v1159, %v1167
      %v1175 = vadd.f32 %v1160, %v1167
      %v1176 = vadd.f32 %v1161, %v1167
      %v1177 = vmax.f32 %v1169, 0.0
      %v1178 = vmax.f32 %v1170, 0.0
      %v1179 = vmax.f32 %v1171, 0.0
      %v1180 = vmax.f32 %v1172, 0.0
      %v1181 = vmax.f32 %v1173, 0.0
      %v1182 = vmax.f32 %v1174, 0.0
      %v1183 = vmax.f32 %v1175, 0.0
      %v1184 = vmax.f32 %v1176, 0.0
      %v1185 = vpack.c.bf16 %v1178, %v1177
      %v1186 = vpack.c.bf16 %v1180, %v1179
      %v1187 = vpack.c.bf16 %v1182, %v1181
      %v1188 = vpack.c.bf16 %v1184, %v1183
      %v1193 = vunpack.c.l.b16 %v1185
      %v1194 = vunpack.c.h.b16 %v1185
      %v1195 = vunpack.c.l.b16 %v1186
      %v1196 = vunpack.c.h.b16 %v1186
      %v1197 = vunpack.c.l.b16 %v1187
      %v1198 = vunpack.c.h.b16 %v1187
      %v1199 = vunpack.c.l.b16 %v1188
      %v1200 = vunpack.c.h.b16 %v1188
      %v1201 = vpack.c.b16 %v1193, %v1193
      %v1202 = vpack.c.b16 %v1194, %v1194
      %v1203 = vpack.c.b16 %v1195, %v1195
      %v1204 = vpack.c.b16 %v1196, %v1196
      %v1205 = vpack.c.b16 %v1197, %v1197
      %v1206 = vpack.c.b16 %v1198, %v1198
      %v1207 = vpack.c.b16 %v1199, %v1199
      %v1208 = vpack.c.b16 %v1200, %v1200
      %vm1217 = vcmask 60416
      %1218 = vst.msk [vmem:[%s305] sm:$0xf] %vm1217, %v1201
      %1219 = vst.msk [vmem:[%s305 + $0x4] sm:$0xf] %vm1217, %v1202
      %1220 = vst.msk [vmem:[%s305 + $0x8] sm:$0xf] %vm1217, %v1203
      %1221 = vst.msk [vmem:[%s305 + $0xc] sm:$0xf] %vm1217, %v1204
      %1222 = vst.msk [vmem:[%s305 + $0x10] sm:$0xf] %vm1217, %v1205
      %1223 = vst.msk [vmem:[%s305 + $0x14] sm:$0xf] %vm1217, %v1206
      %1224 = vst.msk [vmem:[%s305 + $0x18] sm:$0xf] %vm1217, %v1207
      %1225 = vst.msk [vmem:[%s305 + $0x1c] sm:$0xf] %vm1217, %v1208
      %s1226 = smul.u32 8, %s20
      %p1227 = scmp.lt.s32.totalorder %s19, 1
      %s1228 = scalar_select %p1227, %s19, 1
      %p1229 = scmp.lt.s32.totalorder %s1226, 7
      %s1230 = scalar_select %p1229, %s1226, 7
      %s1231 = smul.addr %s1228, 8
      %s1232 = sadd.s32 %s1230, %s1231
      %s1233 = smul.addr %s1232, 4
      %s1234 = scalar_lea.vmem %s4, %s1233
      // Predicated region
      $region37: #{cycle_generator_forward.12} parent=35 // pred_check
        %p1235 = pneg %p149
      $region38: #{cycle_generator_forward.12} parent=35 // pred_check_branch
        %1237 = sbr.rel (%p1235) target = $region40
      $region39: #{cycle_generator_forward.12} parent=35 // pred_region
        %s1238 = smul.u32 8, %s20
      $region40: #{cycle_generator_forward.12} parent=35 // pred_fallthru
        _
    $region36: #{cycle_generator_forward.12} parent=5 // pred_fallthru
      _
    %p1239 = scmp.le.s32.totalorder 2, %s10
    // Predicated region
    $region41: #{cycle_generator_forward.12} parent=5 // pred_check
      %p1240 = pneg %p1239
    $region42: #{cycle_generator_forward.12} parent=5 // pred_check_branch
      %1242 = sbr.rel (%p1240) target = $region44
    $region43: #{cycle_generator_forward.12} parent=5 // pred_region
      %s1243 = ssub.s32 %s10, 2
      // Predicated region
      $region45: #{cycle_generator_forward.12} parent=43 // pred_check
        %p1244 = pneg %p155
      $region46: #{cycle_generator_forward.12} parent=43 // pred_check_branch
        %1246 = sbr.rel (%p1244) target = $region48
      $region47: #{cycle_generator_forward.12} parent=43 // pred_region
        %s1247 = smul.u32 8, %s22
        %p1248 = scmp.lt.s32.totalorder %s21, 1
        %s1249 = scalar_select %p1248, %s21, 1
        %p1250 = scmp.lt.s32.totalorder %s1247, 7
        %s1251 = scalar_select %p1250, %s1247, 7
        %s1252 = smul.addr %s1249, 8
        %s1253 = sadd.s32 %s1251, %s1252
        %s1254 = smul.addr %s1253, 4
        %s1255 = scalar_lea.vmem %s4, %s1254
      $region48: #{cycle_generator_forward.12} parent=43 // pred_fallthru
        _
    $region44: #{cycle_generator_forward.12} parent=5 // pred_fallthru
      _
  $region6: #{cycle_generator_forward.12} parent=0 // loop_footer
    %s14 = sadd.s32 1, %s10
  $region7: #{cycle_generator_forward.12} parent=0 // loop_footer_branch
    %9 = sbr.rel target = $region3
  $region8: #{cycle_generator_forward.12} parent=0 // loop_exit
    _

// kernel: cycle_generator_forward.14
$region0: #{cycle_generator_forward.14}
  #allocation0 [shape = 'u32[]', space=smem, size = 0x4, offset = 0x4, fixed_abs, tag = 'smem constant byte address 0x4 - core index']
  #allocation1 [shape = 'u32[144,128]{1,0:T(1,128)}', space=vmem, size = 0x12000, scoped, tag = 'internal scratch']
  %s0 = inlined_call_operand.vmem [shape: bf16[2,32,128], index: 0, kind: input, shape index: {}, may-alias: {0,1}]
  %s1 = inlined_call_operand.vmem [shape: bf16[2,32,128], index: 1, kind: input, shape index: {}, may-alias: {0,1}]
  %s2 = inlined_call_operand.vmem [shape: bf16[7,128,64], index: 2, kind: input, shape index: {}]
  %s3 = inlined_call_operand.vmem [shape: f32[1,64], index: 3, kind: input, shape index: {}]
  %s4 = inlined_call_operand.vmem [shape: bf16[2,16,64], index: 4, kind: output, shape index: {}]
  %s5 = sld [smem:[#allocation0]]
  $region49: #{cycle_generator_forward.14} parent=0
    _
  %s7 = ssub.s32 1, %s5
  %s8 = scalar_select 0, %s7, %s5
  loop: start=0, step=1, limit=4
  $region2: #{cycle_generator_forward.14} parent=0 // loop_pre_header
    _
  $region3: #{cycle_generator_forward.14} parent=0 // loop_header
    %s10 = sphi 0, %s14
    %p11 = scmp.ge.s32.totalorder %s10, 4
    %s17 = sphi 0, %s29
    %s18 = sphi 0, %s25
    %s19 = sphi 0, %s17
    %s20 = sphi 0, %s18
    %s21 = sphi 0, %s19
    %s22 = sphi 0, %s20
    %s34 = sphi 0, %s36
    %s37 = sphi 0, %s34
    %s38 = sphi 0, %s37
    %s54 = sphi 0, %s38
    %s64 = sphi 0, %s66
    %s67 = sphi 0, %s64
    %s68 = sphi 0, %s67
    %s84 = sphi 0, %s68
    %s88 = sphi 0, %s88
    %s90 = sphi 0, %s88
    %s91 = sphi 0, %s90
    %s105 = sphi 0, %s91
    %s109 = sphi 0, %s109
    %s111 = sphi 0, %s109
    %s112 = sphi 0, %s111
    %s126 = sphi 0, %s112
    %s134 = sphi 0, %s136
    %s137 = sphi 0, %s134
    %s138 = sphi 0, %s137
    %s154 = sphi 0, %s138
  $region4: #{cycle_generator_forward.14} parent=0 // loop_header_branch
    %13 = sbr.rel (%p11) target = $region8
  $region5: #{cycle_generator_forward.14} parent=0 // loop_body
    %s15 = ssub.s32 %s10, 1
    %s16 = ssub.s32 %s10, 2
    %s23 = sadd.s32 1, %s18
    %p24 = scmp.ge.s32.totalorder %s23, 1
    %s25 = scalar_select %p24, 0, %s23
    %s26 = sadd.s32 1, %s17
    %s27 = scalar_select %p24, %s26, %s17
    %p28 = scmp.ge.s32.totalorder %s27, 2
    %s29 = scalar_select %p28, 0, %s27
    %s30 = ssub.s32 %s17, %s29
    %s31 = ssub.s32 %s18, %s25
    %s32 = sor.u32 %s30, %s31
    %p33 = scmp.eq.s32.totalorder %s32, 0
    %s35 = sadd.s32 %s34, 1
    %s36 = scalar_select %p33, %s34, %s35
    %p39 = pneg %p33
    %p40 = scmp.eq.s32.totalorder %s10, 1
    %p41 = por %p39, %p40
    %p42 = scmp.ne.s32.totalorder %s34, %s37
    %p43 = scmp.eq.s32.totalorder %s10, 0
    %p44 = por %p42, %p43
    %p45 = scmp.ne.s32.totalorder %s34, %s37
    %p46 = scmp.eq.s32.totalorder %s15, 1
    %p47 = por %p45, %p46
    %p48 = scmp.ne.s32.totalorder %s37, %s38
    %p49 = scmp.eq.s32.totalorder %s15, 0
    %p50 = por %p48, %p49
    %p51 = scmp.ne.s32.totalorder %s37, %s38
    %p52 = scmp.eq.s32.totalorder %s16, 1
    %p53 = por %p51, %p52
    %p55 = scmp.ne.s32.totalorder %s38, %s54
    %p56 = scmp.eq.s32.totalorder %s16, 0
    %p57 = por %p55, %p56
    %s58 = sadd.s32 %s18, 1
    %s59 = sadd.s32 %s25, 1
    %s60 = ssub.s32 %s17, %s29
    %s61 = ssub.s32 %s58, %s59
    %s62 = sor.u32 %s60, %s61
    %p63 = scmp.eq.s32.totalorder %s62, 0
    %s65 = sadd.s32 %s64, 1
    %s66 = scalar_select %p63, %s64, %s65
    %p69 = pneg %p63
    %p70 = scmp.eq.s32.totalorder %s10, 1
    %p71 = por %p69, %p70
    %p72 = scmp.ne.s32.totalorder %s64, %s67
    %p73 = scmp.eq.s32.totalorder %s10, 0
    %p74 = por %p72, %p73
    %p75 = scmp.ne.s32.totalorder %s64, %s67
    %p76 = scmp.eq.s32.totalorder %s15, 1
    %p77 = por %p75, %p76
    %p78 = scmp.ne.s32.totalorder %s67, %s68
    %p79 = scmp.eq.s32.totalorder %s15, 0
    %p80 = por %p78, %p79
    %p81 = scmp.ne.s32.totalorder %s67, %s68
    %p82 = scmp.eq.s32.totalorder %s16, 1
    %p83 = por %p81, %p82
    %p85 = scmp.ne.s32.totalorder %s68, %s84
    %p86 = scmp.eq.s32.totalorder %s16, 0
    %p87 = por %p85, %p86
    %s89 = sadd.s32 %s88, 1
    %p92 = scmp.eq.s32.totalorder %s10, 1
    %p93 = scmp.ne.s32.totalorder %s88, %s90
    %p94 = scmp.eq.s32.totalorder %s10, 0
    %p95 = por %p93, %p94
    %p96 = scmp.ne.s32.totalorder %s88, %s90
    %p97 = scmp.eq.s32.totalorder %s15, 1
    %p98 = por %p96, %p97
    %p99 = scmp.ne.s32.totalorder %s90, %s91
    %p100 = scmp.eq.s32.totalorder %s15, 0
    %p101 = por %p99, %p100
    %p102 = scmp.ne.s32.totalorder %s90, %s91
    %p103 = scmp.eq.s32.totalorder %s16, 1
    %p104 = por %p102, %p103
    %p106 = scmp.ne.s32.totalorder %s91, %s105
    %p107 = scmp.eq.s32.totalorder %s16, 0
    %p108 = por %p106, %p107
    %s110 = sadd.s32 %s109, 1
    %p113 = scmp.eq.s32.totalorder %s10, 1
    %p114 = scmp.ne.s32.totalorder %s109, %s111
    %p115 = scmp.eq.s32.totalorder %s10, 0
    %p116 = por %p114, %p115
    %p117 = scmp.ne.s32.totalorder %s109, %s111
    %p118 = scmp.eq.s32.totalorder %s15, 1
    %p119 = por %p117, %p118
    %p120 = scmp.ne.s32.totalorder %s111, %s112
    %p121 = scmp.eq.s32.totalorder %s15, 0
    %p122 = por %p120, %p121
    %p123 = scmp.ne.s32.totalorder %s111, %s112
    %p124 = scmp.eq.s32.totalorder %s16, 1
    %p125 = por %p123, %p124
    %p127 = scmp.ne.s32.totalorder %s112, %s126
    %p128 = scmp.eq.s32.totalorder %s16, 0
    %p129 = por %p127, %p128
    %s130 = ssub.s32 %s17, %s29
    %s131 = ssub.s32 %s18, %s25
    %s132 = sor.u32 %s130, %s131
    %p133 = scmp.eq.s32.totalorder %s132, 0
    %s135 = sadd.s32 %s134, 1
    %s136 = scalar_select %p133, %s134, %s135
    %p139 = pneg %p133
    %p140 = scmp.eq.s32.totalorder %s10, 1
    %p141 = por %p139, %p140
    %p142 = scmp.ne.s32.totalorder %s134, %s137
    %p143 = scmp.eq.s32.totalorder %s10, 0
    %p144 = por %p142, %p143
    %p145 = scmp.ne.s32.totalorder %s134, %s137
    %p146 = scmp.eq.s32.totalorder %s15, 1
    %p147 = por %p145, %p146
    %p148 = scmp.ne.s32.totalorder %s137, %s138
    %p149 = scmp.eq.s32.totalorder %s15, 0
    %p150 = por %p148, %p149
    %p151 = scmp.ne.s32.totalorder %s137, %s138
    %p152 = scmp.eq.s32.totalorder %s16, 1
    %p153 = por %p151, %p152
    %p155 = scmp.ne.s32.totalorder %s138, %s154
    %p156 = scmp.eq.s32.totalorder %s16, 0
    %p157 = por %p155, %p156
    %p158 = scmp.le.s32.totalorder 1, %s10
    %p159 = scmp.lt.s32.totalorder %s10, 3
    %p160 = pnand %p158, %p159
    %p161 = pneg %p160
    // Predicated region
    $region9: #{cycle_generator_forward.14} parent=5 // pred_check
      _
    $region10: #{cycle_generator_forward.14} parent=5 // pred_check_branch
      %163 = sbr.rel (%p160) target = $region12
    $region11: #{cycle_generator_forward.14} parent=5 // pred_region
      %s164 = ssub.s32 %s10, 1
      // Predicated region
      $region13: #{cycle_generator_forward.14} parent=11 // pred_check
        %p165 = pneg %p101
      $region14: #{cycle_generator_forward.14} parent=11 // pred_check_branch
        %167 = sbr.rel (%p165) target = $region16
      $region15: #{cycle_generator_forward.14} parent=11 // pred_region
        _
      $region16: #{cycle_generator_forward.14} parent=11 // pred_fallthru
        _
      // Predicated region
      $region17: #{cycle_generator_forward.14} parent=11 // pred_check
        %p168 = pneg %p122
      $region18: #{cycle_generator_forward.14} parent=11 // pred_check_branch
        %170 = sbr.rel (%p168) target = $region20
      $region19: #{cycle_generator_forward.14} parent=11 // pred_region
        _
      $region20: #{cycle_generator_forward.14} parent=11 // pred_fallthru
        _
    $region12: #{cycle_generator_forward.14} parent=5 // pred_fallthru
      _
    %p171 = scmp.lt.s32.totalorder %s10, 2
    // Predicated region
    $region21: #{cycle_generator_forward.14} parent=5 // pred_check
      %p172 = pneg %p171
    $region22: #{cycle_generator_forward.14} parent=5 // pred_check_branch
      %174 = sbr.rel (%p172) target = $region24
    $region23: #{cycle_generator_forward.14} parent=5 // pred_region
      // Predicated region
      $region25: #{cycle_generator_forward.14} parent=23 // pred_check
        %p175 = pneg %p44
      $region26: #{cycle_generator_forward.14} parent=23 // pred_check_branch
        %177 = sbr.rel (%p175) target = $region28
      $region27: #{cycle_generator_forward.14} parent=23 // pred_region
        %s178 = smul.u32 2, %s18
        %p179 = scmp.lt.s32.totalorder %s17, 1
        %s180 = scalar_select %p179, %s17, 1
        %p181 = scmp.lt.s32.totalorder %s178, 3
        %s182 = scalar_select %p181, %s178, 3
        %s183 = smul.addr %s180, 4
        %s184 = sadd.s32 %s182, %s183
        %s185 = smul.addr %s184, 4
        %s186 = scalar_lea.vmem %s0, %s185
        %s187 = smul.u32 2, %s18
      $region28: #{cycle_generator_forward.14} parent=23 // pred_fallthru
        _
      // Predicated region
      $region29: #{cycle_generator_forward.14} parent=23 // pred_check
        %p188 = pneg %p74
      $region30: #{cycle_generator_forward.14} parent=23 // pred_check_branch
        %190 = sbr.rel (%p188) target = $region32
      $region31: #{cycle_generator_forward.14} parent=23 // pred_region
        %s191 = sadd.s32 %s18, 1
        %s192 = smul.u32 2, %s191
        %p193 = scmp.lt.s32.totalorder %s17, 1
        %s194 = scalar_select %p193, %s17, 1
        %p195 = scmp.lt.s32.totalorder %s192, 3
        %s196 = scalar_select %p195, %s192, 3
        %s197 = smul.addr %s194, 4
        %s198 = sadd.s32 %s196, %s197
        %s199 = smul.addr %s198, 4
        %s200 = scalar_lea.vmem %s1, %s199
        %s201 = sadd.s32 %s18, 1
        %s202 = smul.u32 2, %s201
      $region32: #{cycle_generator_forward.14} parent=23 // pred_fallthru
        _
    $region24: #{cycle_generator_forward.14} parent=5 // pred_fallthru
      _
    %p203 = scmp.le.s32.totalorder 1, %s10
    %p204 = scmp.lt.s32.totalorder %s10, 3
    %p205 = pnand %p203, %p204
    %p206 = pneg %p205
    // Predicated region
    $region33: #{cycle_generator_forward.14} parent=5 // pred_check
      _
    $region34: #{cycle_generator_forward.14} parent=5 // pred_check_branch
      %208 = sbr.rel (%p205) target = $region36
    $region35: #{cycle_generator_forward.14} parent=5 // pred_region
      %s209 = ssub.s32 %s10, 1
      %s210 = smul.u32 2, %s20
      %p211 = scmp.lt.s32.totalorder %s19, 1
      %s212 = scalar_select %p211, %s19, 1
      %p213 = scmp.lt.s32.totalorder %s210, 3
      %s214 = scalar_select %p213, %s210, 3
      %s215 = smul.addr %s212, 4
      %s216 = sadd.s32 %s214, %s215
      %s217 = smul.addr %s216, 4
      %s218 = scalar_lea.vmem %s0, %s217
      %p219 = pneg %p50
      %p220 = pneg %p47
      %s221 = sadd.s32 %s20, 1
      %s222 = smul.u32 2, %s221
      %p223 = scmp.lt.s32.totalorder %s19, 1
      %s224 = scalar_select %p223, %s19, 1
      %p225 = scmp.lt.s32.totalorder %s222, 3
      %s226 = scalar_select %p225, %s222, 3
      %s227 = smul.addr %s224, 4
      %s228 = sadd.s32 %s226, %s227
      %s229 = smul.addr %s228, 4
      %s230 = scalar_lea.vmem %s1, %s229
      %p231 = pneg %p80
      %p232 = pneg %p77
      %p233 = pneg %p101
      %p234 = pneg %p98
      %p235 = pneg %p122
      %p236 = pneg %p119
      %p237 = pneg %p150
      %p238 = pneg %p147
      %s239 = smul.u32 2, %s20
      %p240 = scmp.lt.s32.totalorder %s19, 1
      %s241 = scalar_select %p240, %s19, 1
      %p242 = scmp.lt.s32.totalorder %s239, 1
      %s243 = scalar_select %p242, %s239, 1
      %s244 = smul.addr %s241, 2
      %s245 = sadd.s32 %s243, %s244
      %s246 = smul.addr %s245, 4
      %s247 = scalar_lea.vmem %s4, %s246
      %s248 = smul.u32 2, %s20
      %p249 = scmp.lt.s32.totalorder %s19, 1
      %s250 = scalar_select %p249, %s19, 1
      %p251 = scmp.lt.s32.totalorder %s248, 3
      %s252 = scalar_select %p251, %s248, 3
      %s253 = smul.addr %s250, 4
      %s254 = sadd.s32 %s252, %s253
      %s255 = smul.addr %s254, 4
      %s256 = scalar_lea.vmem %s0, %s255
      %s257 = smul.u32 2, %s20
      %s258 = sadd.s32 %s20, 1
      %s259 = smul.u32 2, %s258
      %p260 = scmp.lt.s32.totalorder %s19, 1
      %s261 = scalar_select %p260, %s19, 1
      %p262 = scmp.lt.s32.totalorder %s259, 3
      %s263 = scalar_select %p262, %s259, 3
      %s264 = smul.addr %s261, 4
      %s265 = sadd.s32 %s263, %s264
      %s266 = smul.addr %s265, 4
      %s267 = scalar_lea.vmem %s1, %s266
      %s268 = sadd.s32 %s20, 1
      %s269 = smul.u32 2, %s268
      %s270 = smul.u32 2, %s20
      %p271 = scmp.lt.s32.totalorder %s19, 1
      %s272 = scalar_select %p271, %s19, 1
      %p273 = scmp.lt.s32.totalorder %s270, 1
      %s274 = scalar_select %p273, %s270, 1
      %s275 = smul.addr %s272, 2
      %s276 = sadd.s32 %s274, %s275
      %s277 = smul.addr %s276, 4
      %s278 = scalar_lea.vmem %s4, %s277
      %s279 = smul.u32 2, %s20
      %v281 = vld [vmem:[%s256] sm:$0xf]
      %v282 = vld [vmem:[%s256 + $0x4] sm:$0xf]
      %v283 = vld [vmem:[%s267] sm:$0xf]
      %v284 = vld [vmem:[%s267 + $0x4] sm:$0xf]
      %v287 = vunpack.c.l.b16 %v281
      %v288 = vunpack.c.l.b16 %v282
      %v289 = vpack.c.b16 %v288, %v287
      %v293 = vunpack.c.l.b16 %v283
      %v294 = vunpack.c.l.b16 %v284
      %v295 = vpack.c.b16 %v294, %v293
      %v297 = vld [vmem:[%s2] sm:$0xf]
      %v298 = vld [vmem:[%s2 + $0x4] sm:$0xf]
      %v299 = vld [vmem:[%s2 + $0x8] sm:$0xf]
      %v300 = vld [vmem:[%s2 + $0xc] sm:$0xf]
      %v301 = vld [vmem:[%s2 + $0x10] sm:$0xf]
      %v302 = vld [vmem:[%s2 + $0x14] sm:$0xf]
      %v303 = vld [vmem:[%s2 + $0x18] sm:$0xf]
      %v304 = vld [vmem:[%s2 + $0x1c] sm:$0xf]
      %v305 = vld [vmem:[%s2 + $0x20] sm:$0xf]
      %v306 = vld [vmem:[%s2 + $0x24] sm:$0xf]
      %v307 = vld [vmem:[%s2 + $0x28] sm:$0xf]
      %v308 = vld [vmem:[%s2 + $0x2c] sm:$0xf]
      %v309 = vld [vmem:[%s2 + $0x30] sm:$0xf]
      %v310 = vld [vmem:[%s2 + $0x34] sm:$0xf]
      %v311 = vld [vmem:[%s2 + $0x38] sm:$0xf]
      %v312 = vld [vmem:[%s2 + $0x3c] sm:$0xf]
      %v329 = vunpack.c.l.b16 %v297
      %v330 = vunpack.c.l.b16 %v298
      %v331 = vunpack.c.l.b16 %v299
      %v332 = vunpack.c.l.b16 %v300
      %v333 = vunpack.c.l.b16 %v301
      %v334 = vunpack.c.l.b16 %v302
      %v335 = vunpack.c.l.b16 %v303
      %v336 = vunpack.c.l.b16 %v304
      %v337 = vunpack.c.l.b16 %v305
      %v338 = vunpack.c.l.b16 %v306
      %v339 = vunpack.c.l.b16 %v307
      %v340 = vunpack.c.l.b16 %v308
      %v341 = vunpack.c.l.b16 %v309
      %v342 = vunpack.c.l.b16 %v310
      %v343 = vunpack.c.l.b16 %v311
      %v344 = vunpack.c.l.b16 %v312
      %v345 = vpack.c.b16 %v330, %v329
      %v346 = vpack.c.b16 %v332, %v331
      %v347 = vpack.c.b16 %v334, %v333
      %v348 = vpack.c.b16 %v336, %v335
      %v349 = vpack.c.b16 %v338, %v337
      %v350 = vpack.c.b16 %v340, %v339
      %v351 = vpack.c.b16 %v342, %v341
      %v352 = vpack.c.b16 %v344, %v343
      %361 = vmatprep.subr.bf16.mxu0 0
      %362 = vmatpush1.bf16.msra.mxu0 %v345
      %363 = vmatprep.subr.bf16.mxu0 0
      %364 = vmatpush1.bf16.msra.mxu0 %v346
      %365 = vmatprep.subr.bf16.mxu0 0
      %366 = vmatpush1.bf16.msra.mxu0 %v347
      %367 = vmatprep.subr.bf16.mxu0 0
      %368 = vmatpush1.bf16.msra.mxu0 %v348
      %369 = vmatprep.subr.bf16.mxu0 0
      %370 = vmatpush1.bf16.msra.mxu0 %v349
      %371 = vmatprep.subr.bf16.mxu0 0
      %372 = vmatpush1.bf16.msra.mxu0 %v350
      %373 = vmatprep.subr.bf16.mxu0 0
      %374 = vmatpush1.bf16.msra.mxu0 %v351
      %375 = vmatprep.subr.bf16.mxu0 0
      %376 = vmatpush1.bf16.msra.mxu0 %v352
      %377 = vmatprep.subr.bf16.mxu0 0
      %378 = vmatpush1.bf16.msra.mxu0 0
      %379 = vmatprep.subr.bf16.mxu0 0
      %380 = vmatpush1.bf16.msra.mxu0 0
      %381 = vmatprep.subr.bf16.mxu0 0
      %382 = vmatpush1.bf16.msra.mxu0 0
      %383 = vmatprep.subr.bf16.mxu0 0
      %384 = vmatpush1.bf16.msra.mxu0 0
      %385 = vmatprep.subr.bf16.mxu0 0
      %386 = vmatpush1.bf16.msra.mxu0 0
      %387 = vmatprep.subr.bf16.mxu0 0
      %388 = vmatpush1.bf16.msra.mxu0 0
      %389 = vmatprep.subr.bf16.mxu0 0
      %390 = vmatpush1.bf16.msra.mxu0 0
      %391 = vmatprep.subr.bf16.mxu0 0
      %392 = vmatpush1.bf16.msra.mxu0 0
      %393 = vmatprep.mubr.bf16.mxu0 0
      %394 = vmatmul.mubr.bf16.gmra.mrb[0].mxu0 %v289
      %v395 = vpop.f32.mrb[0].mxu0
      %v396 = vadd.f32 0.0, %v395
      %v397 = vpop.f32.mrb[0].mxu0
      %v398 = vpop.f32.mrb[0].mxu0
      %v399 = vadd.f32 0.0, %v398
      %v400 = vpop.f32.mrb[0].mxu0
      %401 = vmatprep.mubr.bf16.mxu0 0
      %402 = vmatmul.mubr.bf16.gmra.mrb[0].mxu0 %v295
      %v403 = vpop.f32.mrb[0].mxu0
      %v404 = vpop.f32.mrb[0].mxu0
      %v405 = vpop.f32.mrb[0].mxu0
      %v406 = vpop.f32.mrb[0].mxu0
      %407 = vdwg.mxu0
      %v408 = vadd.f32 %v396, 0.0
      %v409 = vadd.f32 %v399, 0.0
      %s410 = scalar_lea.vmem %s2, 64
      %v411 = vld [vmem:[%s410] sm:$0xf]
      %v412 = vld [vmem:[%s410 + $0x4] sm:$0xf]
      %v413 = vld [vmem:[%s410 + $0x8] sm:$0xf]
      %v414 = vld [vmem:[%s410 + $0xc] sm:$0xf]
      %v415 = vld [vmem:[%s410 + $0x10] sm:$0xf]
      %v416 = vld [vmem:[%s410 + $0x14] sm:$0xf]
      %v417 = vld [vmem:[%s410 + $0x18] sm:$0xf]
      %v418 = vld [vmem:[%s410 + $0x1c] sm:$0xf]
      %v419 = vld [vmem:[%s410 + $0x20] sm:$0xf]
      %v420 = vld [vmem:[%s410 + $0x24] sm:$0xf]
      %v421 = vld [vmem:[%s410 + $0x28] sm:$0xf]
      %v422 = vld [vmem:[%s410 + $0x2c] sm:$0xf]
      %v423 = vld [vmem:[%s410 + $0x30] sm:$0xf]
      %v424 = vld [vmem:[%s410 + $0x34] sm:$0xf]
      %v425 = vld [vmem:[%s410 + $0x38] sm:$0xf]
      %v426 = vld [vmem:[%s410 + $0x3c] sm:$0xf]
      %v443 = vunpack.c.l.b16 %v411
      %v444 = vunpack.c.l.b16 %v412
      %v445 = vunpack.c.l.b16 %v413
      %v446 = vunpack.c.l.b16 %v414
      %v447 = vunpack.c.l.b16 %v415
      %v448 = vunpack.c.l.b16 %v416
      %v449 = vunpack.c.l.b16 %v417
      %v450 = vunpack.c.l.b16 %v418
      %v451 = vunpack.c.l.b16 %v419
      %v452 = vunpack.c.l.b16 %v420
      %v453 = vunpack.c.l.b16 %v421
      %v454 = vunpack.c.l.b16 %v422
      %v455 = vunpack.c.l.b16 %v423
      %v456 = vunpack.c.l.b16 %v424
      %v457 = vunpack.c.l.b16 %v425
      %v458 = vunpack.c.l.b16 %v426
      %v459 = vpack.c.b16 %v444, %v443
      %v460 = vpack.c.b16 %v446, %v445
      %v461 = vpack.c.b16 %v448, %v447
      %v462 = vpack.c.b16 %v450, %v449
      %v463 = vpack.c.b16 %v452, %v451
      %v464 = vpack.c.b16 %v454, %v453
      %v465 = vpack.c.b16 %v456, %v455
      %v466 = vpack.c.b16 %v458, %v457
      %475 = vmatprep.subr.bf16.mxu0 0
      %476 = vmatpush1.bf16.msra.mxu0 %v459
      %477 = vmatprep.subr.bf16.mxu0 0
      %478 = vmatpush1.bf16.msra.mxu0 %v460
      %479 = vmatprep.subr.bf16.mxu0 0
      %480 = vmatpush1.bf16.msra.mxu0 %v461
      %481 = vmatprep.subr.bf16.mxu0 0
      %482 = vmatpush1.bf16.msra.mxu0 %v462
      %483 = vmatprep.subr.bf16.mxu0 0
      %484 = vmatpush1.bf16.msra.mxu0 %v463
      %485 = vmatprep.subr.bf16.mxu0 0
      %486 = vmatpush1.bf16.msra.mxu0 %v464
      %487 = vmatprep.subr.bf16.mxu0 0
      %488 = vmatpush1.bf16.msra.mxu0 %v465
      %489 = vmatprep.subr.bf16.mxu0 0
      %490 = vmatpush1.bf16.msra.mxu0 %v466
      %491 = vmatprep.subr.bf16.mxu0 0
      %492 = vmatpush1.bf16.msra.mxu0 0
      %493 = vmatprep.subr.bf16.mxu0 0
      %494 = vmatpush1.bf16.msra.mxu0 0
      %495 = vmatprep.subr.bf16.mxu0 0
      %496 = vmatpush1.bf16.msra.mxu0 0
      %497 = vmatprep.subr.bf16.mxu0 0
      %498 = vmatpush1.bf16.msra.mxu0 0
      %499 = vmatprep.subr.bf16.mxu0 0
      %500 = vmatpush1.bf16.msra.mxu0 0
      %501 = vmatprep.subr.bf16.mxu0 0
      %502 = vmatpush1.bf16.msra.mxu0 0
      %503 = vmatprep.subr.bf16.mxu0 0
      %504 = vmatpush1.bf16.msra.mxu0 0
      %505 = vmatprep.subr.bf16.mxu0 0
      %506 = vmatpush1.bf16.msra.mxu0 0
      %507 = vmatprep.mubr.bf16.mxu0 0
      %508 = vmatmul.mubr.bf16.gmra.mrb[0].mxu0 %v289
      %v509 = vpop.f32.mrb[0].mxu0
      %v510 = vadd.f32 0.0, %v509
      %v511 = vpop.f32.mrb[0].mxu0
      %v512 = vpop.f32.mrb[0].mxu0
      %v513 = vadd.f32 0.0, %v512
      %v514 = vpop.f32.mrb[0].mxu0
      %515 = vmatprep.mubr.bf16.mxu0 0
      %516 = vmatmul.mubr.bf16.gmra.mrb[0].mxu0 %v295
      %v517 = vpop.f32.mrb[0].mxu0
      %v518 = vadd.f32 0.0, %v517
      %v519 = vpop.f32.mrb[0].mxu0
      %v520 = vpop.f32.mrb[0].mxu0
      %v521 = vpop.f32.mrb[0].mxu0
      %522 = vdwg.mxu0
      %vm526 = vcmask 1046528
      %v527 = vrot.slane %v510, 1
      %v528 = vrot.slane %v513, 1
      %v529 = vsel %vm526, %v527, %v528
      %v530 = vrot.slane %v518, 1
      %v531 = vsel %vm526, %v528, %v530
      %v534 = vadd.f32 %v408, %v529
      %v535 = vadd.f32 %v409, %v531
      %s536 = scalar_lea.vmem %s2, 128
      %v537 = vld [vmem:[%s536] sm:$0xf]
      %v538 = vld [vmem:[%s536 + $0x4] sm:$0xf]
      %v539 = vld [vmem:[%s536 + $0x8] sm:$0xf]
      %v540 = vld [vmem:[%s536 + $0xc] sm:$0xf]
      %v541 = vld [vmem:[%s536 + $0x10] sm:$0xf]
      %v542 = vld [vmem:[%s536 + $0x14] sm:$0xf]
      %v543 = vld [vmem:[%s536 + $0x18] sm:$0xf]
      %v544 = vld [vmem:[%s536 + $0x1c] sm:$0xf]
      %v545 = vld [vmem:[%s536 + $0x20] sm:$0xf]
      %v546 = vld [vmem:[%s536 + $0x24] sm:$0xf]
      %v547 = vld [vmem:[%s536 + $0x28] sm:$0xf]
      %v548 = vld [vmem:[%s536 + $0x2c] sm:$0xf]
      %v549 = vld [vmem:[%s536 + $0x30] sm:$0xf]
      %v550 = vld [vmem:[%s536 + $0x34] sm:$0xf]
      %v551 = vld [vmem:[%s536 + $0x38] sm:$0xf]
      %v552 = vld [vmem:[%s536 + $0x3c] sm:$0xf]
      %v569 = vunpack.c.l.b16 %v537
      %v570 = vunpack.c.l.b16 %v538
      %v571 = vunpack.c.l.b16 %v539
      %v572 = vunpack.c.l.b16 %v540
      %v573 = vunpack.c.l.b16 %v541
      %v574 = vunpack.c.l.b16 %v542
      %v575 = vunpack.c.l.b16 %v543
      %v576 = vunpack.c.l.b16 %v544
      %v577 = vunpack.c.l.b16 %v545
      %v578 = vunpack.c.l.b16 %v546
      %v579 = vunpack.c.l.b16 %v547
      %v580 = vunpack.c.l.b16 %v548
      %v581 = vunpack.c.l.b16 %v549
      %v582 = vunpack.c.l.b16 %v550
      %v583 = vunpack.c.l.b16 %v551
      %v584 = vunpack.c.l.b16 %v552
      %v585 = vpack.c.b16 %v570, %v569
      %v586 = vpack.c.b16 %v572, %v571
      %v587 = vpack.c.b16 %v574, %v573
      %v588 = vpack.c.b16 %v576, %v575
      %v589 = vpack.c.b16 %v578, %v577
      %v590 = vpack.c.b16 %v580, %v579
      %v591 = vpack.c.b16 %v582, %v581
      %v592 = vpack.c.b16 %v584, %v583
      %601 = vmatprep.subr.bf16.mxu0 0
      %602 = vmatpush1.bf16.msra.mxu0 %v585
      %603 = vmatprep.subr.bf16.mxu0 0
      %604 = vmatpush1.bf16.msra.mxu0 %v586
      %605 = vmatprep.subr.bf16.mxu0 0
      %606 = vmatpush1.bf16.msra.mxu0 %v587
      %607 = vmatprep.subr.bf16.mxu0 0
      %608 = vmatpush1.bf16.msra.mxu0 %v588
      %609 = vmatprep.subr.bf16.mxu0 0
      %610 = vmatpush1.bf16.msra.mxu0 %v589
      %611 = vmatprep.subr.bf16.mxu0 0
      %612 = vmatpush1.bf16.msra.mxu0 %v590
      %613 = vmatprep.subr.bf16.mxu0 0
      %614 = vmatpush1.bf16.msra.mxu0 %v591
      %615 = vmatprep.subr.bf16.mxu0 0
      %616 = vmatpush1.bf16.msra.mxu0 %v592
      %617 = vmatprep.subr.bf16.mxu0 0
      %618 = vmatpush1.bf16.msra.mxu0 0
      %619 = vmatprep.subr.bf16.mxu0 0
      %620 = vmatpush1.bf16.msra.mxu0 0
      %621 = vmatprep.subr.bf16.mxu0 0
      %622 = vmatpush1.bf16.msra.mxu0 0
      %623 = vmatprep.subr.bf16.mxu0 0
      %624 = vmatpush1.bf16.msra.mxu0 0
      %625 = vmatprep.subr.bf16.mxu0 0
      %626 = vmatpush1.bf16.msra.mxu0 0
      %627 = vmatprep.subr.bf16.mxu0 0
      %628 = vmatpush1.bf16.msra.mxu0 0
      %629 = vmatprep.subr.bf16.mxu0 0
      %630 = vmatpush1.bf16.msra.mxu0 0
      %631 = vmatprep.subr.bf16.mxu0 0
      %632 = vmatpush1.bf16.msra.mxu0 0
      %633 = vmatprep.mubr.bf16.mxu0 0
      %634 = vmatmul.mubr.bf16.gmra.mrb[0].mxu0 %v289
      %v635 = vpop.f32.mrb[0].mxu0
      %v636 = vadd.f32 0.0, %v635
      %v637 = vpop.f32.mrb[0].mxu0
      %v638 = vpop.f32.mrb[0].mxu0
      %v639 = vadd.f32 0.0, %v638
      %v640 = vpop.f32.mrb[0].mxu0
      %641 = vmatprep.mubr.bf16.mxu0 0
      %642 = vmatmul.mubr.bf16.gmra.mrb[0].mxu0 %v295
      %v643 = vpop.f32.mrb[0].mxu0
      %v644 = vadd.f32 0.0, %v643
      %v645 = vpop.f32.mrb[0].mxu0
      %v646 = vpop.f32.mrb[0].mxu0
      %v647 = vpop.f32.mrb[0].mxu0
      %648 = vdwg.mxu0
      %vm652 = vcmask 1045504
      %v653 = vrot.slane %v636, 2
      %v654 = vrot.slane %v639, 2
      %v655 = vsel %vm652, %v653, %v654
      %v656 = vrot.slane %v644, 2
      %v657 = vsel %vm652, %v654, %v656
      %v660 = vadd.f32 %v534, %v655
      %v661 = vadd.f32 %v535, %v657
      %s662 = scalar_lea.vmem %s2, 192
      %v663 = vld [vmem:[%s662] sm:$0xf]
      %v664 = vld [vmem:[%s662 + $0x4] sm:$0xf]
      %v665 = vld [vmem:[%s662 + $0x8] sm:$0xf]
      %v666 = vld [vmem:[%s662 + $0xc] sm:$0xf]
      %v667 = vld [vmem:[%s662 + $0x10] sm:$0xf]
      %v668 = vld [vmem:[%s662 + $0x14] sm:$0xf]
      %v669 = vld [vmem:[%s662 + $0x18] sm:$0xf]
      %v670 = vld [vmem:[%s662 + $0x1c] sm:$0xf]
      %v671 = vld [vmem:[%s662 + $0x20] sm:$0xf]
      %v672 = vld [vmem:[%s662 + $0x24] sm:$0xf]
      %v673 = vld [vmem:[%s662 + $0x28] sm:$0xf]
      %v674 = vld [vmem:[%s662 + $0x2c] sm:$0xf]
      %v675 = vld [vmem:[%s662 + $0x30] sm:$0xf]
      %v676 = vld [vmem:[%s662 + $0x34] sm:$0xf]
      %v677 = vld [vmem:[%s662 + $0x38] sm:$0xf]
      %v678 = vld [vmem:[%s662 + $0x3c] sm:$0xf]
      %v695 = vunpack.c.l.b16 %v663
      %v696 = vunpack.c.l.b16 %v664
      %v697 = vunpack.c.l.b16 %v665
      %v698 = vunpack.c.l.b16 %v666
      %v699 = vunpack.c.l.b16 %v667
      %v700 = vunpack.c.l.b16 %v668
      %v701 = vunpack.c.l.b16 %v669
      %v702 = vunpack.c.l.b16 %v670
      %v703 = vunpack.c.l.b16 %v671
      %v704 = vunpack.c.l.b16 %v672
      %v705 = vunpack.c.l.b16 %v673
      %v706 = vunpack.c.l.b16 %v674
      %v707 = vunpack.c.l.b16 %v675
      %v708 = vunpack.c.l.b16 %v676
      %v709 = vunpack.c.l.b16 %v677
      %v710 = vunpack.c.l.b16 %v678
      %v711 = vpack.c.b16 %v696, %v695
      %v712 = vpack.c.b16 %v698, %v697
      %v713 = vpack.c.b16 %v700, %v699
      %v714 = vpack.c.b16 %v702, %v701
      %v715 = vpack.c.b16 %v704, %v703
      %v716 = vpack.c.b16 %v706, %v705
      %v717 = vpack.c.b16 %v708, %v707
      %v718 = vpack.c.b16 %v710, %v709
      %727 = vmatprep.subr.bf16.mxu0 0
      %728 = vmatpush1.bf16.msra.mxu0 %v711
      %729 = vmatprep.subr.bf16.mxu0 0
      %730 = vmatpush1.bf16.msra.mxu0 %v712
      %731 = vmatprep.subr.bf16.mxu0 0
      %732 = vmatpush1.bf16.msra.mxu0 %v713
      %733 = vmatprep.subr.bf16.mxu0 0
      %734 = vmatpush1.bf16.msra.mxu0 %v714
      %735 = vmatprep.subr.bf16.mxu0 0
      %736 = vmatpush1.bf16.msra.mxu0 %v715
      %737 = vmatprep.subr.bf16.mxu0 0
      %738 = vmatpush1.bf16.msra.mxu0 %v716
      %739 = vmatprep.subr.bf16.mxu0 0
      %740 = vmatpush1.bf16.msra.mxu0 %v717
      %741 = vmatprep.subr.bf16.mxu0 0
      %742 = vmatpush1.bf16.msra.mxu0 %v718
      %743 = vmatprep.subr.bf16.mxu0 0
      %744 = vmatpush1.bf16.msra.mxu0 0
      %745 = vmatprep.subr.bf16.mxu0 0
      %746 = vmatpush1.bf16.msra.mxu0 0
      %747 = vmatprep.subr.bf16.mxu0 0
      %748 = vmatpush1.bf16.msra.mxu0 0
      %749 = vmatprep.subr.bf16.mxu0 0
      %750 = vmatpush1.bf16.msra.mxu0 0
      %751 = vmatprep.subr.bf16.mxu0 0
      %752 = vmatpush1.bf16.msra.mxu0 0
      %753 = vmatprep.subr.bf16.mxu0 0
      %754 = vmatpush1.bf16.msra.mxu0 0
      %755 = vmatprep.subr.bf16.mxu0 0
      %756 = vmatpush1.bf16.msra.mxu0 0
      %757 = vmatprep.subr.bf16.mxu0 0
      %758 = vmatpush1.bf16.msra.mxu0 0
      %759 = vmatprep.mubr.bf16.mxu0 0
      %760 = vmatmul.mubr.bf16.gmra.mrb[0].mxu0 %v289
      %v761 = vpop.f32.mrb[0].mxu0
      %v762 = vadd.f32 0.0, %v761
      %v763 = vpop.f32.mrb[0].mxu0
      %v764 = vpop.f32.mrb[0].mxu0
      %v765 = vadd.f32 0.0, %v764
      %v766 = vpop.f32.mrb[0].mxu0
      %767 = vmatprep.mubr.bf16.mxu0 0
      %768 = vmatmul.mubr.bf16.gmra.mrb[0].mxu0 %v295
      %v769 = vpop.f32.mrb[0].mxu0
      %v770 = vadd.f32 0.0, %v769
      %v771 = vpop.f32.mrb[0].mxu0
      %v772 = vpop.f32.mrb[0].mxu0
      %v773 = vpop.f32.mrb[0].mxu0
      %774 = vdwg.mxu0
      %vm778 = vcmask 1044480
      %v779 = vrot.slane %v762, 3
      %v780 = vrot.slane %v765, 3
      %v781 = vsel %vm778, %v779, %v780
      %v782 = vrot.slane %v770, 3
      %v783 = vsel %vm778, %v780, %v782
      %v786 = vadd.f32 %v660, %v781
      %v787 = vadd.f32 %v661, %v783
      %s788 = scalar_lea.vmem %s2, 256
      %v789 = vld [vmem:[%s788] sm:$0xf]
      %v790 = vld [vmem:[%s788 + $0x4] sm:$0xf]
      %v791 = vld [vmem:[%s788 + $0x8] sm:$0xf]
      %v792 = vld [vmem:[%s788 + $0xc] sm:$0xf]
      %v793 = vld [vmem:[%s788 + $0x10] sm:$0xf]
      %v794 = vld [vmem:[%s788 + $0x14] sm:$0xf]
      %v795 = vld [vmem:[%s788 + $0x18] sm:$0xf]
      %v796 = vld [vmem:[%s788 + $0x1c] sm:$0xf]
      %v797 = vld [vmem:[%s788 + $0x20] sm:$0xf]
      %v798 = vld [vmem:[%s788 + $0x24] sm:$0xf]
      %v799 = vld [vmem:[%s788 + $0x28] sm:$0xf]
      %v800 = vld [vmem:[%s788 + $0x2c] sm:$0xf]
      %v801 = vld [vmem:[%s788 + $0x30] sm:$0xf]
      %v802 = vld [vmem:[%s788 + $0x34] sm:$0xf]
      %v803 = vld [vmem:[%s788 + $0x38] sm:$0xf]
      %v804 = vld [vmem:[%s788 + $0x3c] sm:$0xf]
      %v821 = vunpack.c.l.b16 %v789
      %v822 = vunpack.c.l.b16 %v790
      %v823 = vunpack.c.l.b16 %v791
      %v824 = vunpack.c.l.b16 %v792
      %v825 = vunpack.c.l.b16 %v793
      %v826 = vunpack.c.l.b16 %v794
      %v827 = vunpack.c.l.b16 %v795
      %v828 = vunpack.c.l.b16 %v796
      %v829 = vunpack.c.l.b16 %v797
      %v830 = vunpack.c.l.b16 %v798
      %v831 = vunpack.c.l.b16 %v799
      %v832 = vunpack.c.l.b16 %v800
      %v833 = vunpack.c.l.b16 %v801
      %v834 = vunpack.c.l.b16 %v802
      %v835 = vunpack.c.l.b16 %v803
      %v836 = vunpack.c.l.b16 %v804
      %v837 = vpack.c.b16 %v822, %v821
      %v838 = vpack.c.b16 %v824, %v823
      %v839 = vpack.c.b16 %v826, %v825
      %v840 = vpack.c.b16 %v828, %v827
      %v841 = vpack.c.b16 %v830, %v829
      %v842 = vpack.c.b16 %v832, %v831
      %v843 = vpack.c.b16 %v834, %v833
      %v844 = vpack.c.b16 %v836, %v835
      %853 = vmatprep.subr.bf16.mxu0 0
      %854 = vmatpush1.bf16.msra.mxu0 %v837
      %855 = vmatprep.subr.bf16.mxu0 0
      %856 = vmatpush1.bf16.msra.mxu0 %v838
      %857 = vmatprep.subr.bf16.mxu0 0
      %858 = vmatpush1.bf16.msra.mxu0 %v839
      %859 = vmatprep.subr.bf16.mxu0 0
      %860 = vmatpush1.bf16.msra.mxu0 %v840
      %861 = vmatprep.subr.bf16.mxu0 0
      %862 = vmatpush1.bf16.msra.mxu0 %v841
      %863 = vmatprep.subr.bf16.mxu0 0
      %864 = vmatpush1.bf16.msra.mxu0 %v842
      %865 = vmatprep.subr.bf16.mxu0 0
      %866 = vmatpush1.bf16.msra.mxu0 %v843
      %867 = vmatprep.subr.bf16.mxu0 0
      %868 = vmatpush1.bf16.msra.mxu0 %v844
      %869 = vmatprep.subr.bf16.mxu0 0
      %870 = vmatpush1.bf16.msra.mxu0 0
      %871 = vmatprep.subr.bf16.mxu0 0
      %872 = vmatpush1.bf16.msra.mxu0 0
      %873 = vmatprep.subr.bf16.mxu0 0
      %874 = vmatpush1.bf16.msra.mxu0 0
      %875 = vmatprep.subr.bf16.mxu0 0
      %876 = vmatpush1.bf16.msra.mxu0 0
      %877 = vmatprep.subr.bf16.mxu0 0
      %878 = vmatpush1.bf16.msra.mxu0 0
      %879 = vmatprep.subr.bf16.mxu0 0
      %880 = vmatpush1.bf16.msra.mxu0 0
      %881 = vmatprep.subr.bf16.mxu0 0
      %882 = vmatpush1.bf16.msra.mxu0 0
      %883 = vmatprep.subr.bf16.mxu0 0
      %884 = vmatpush1.bf16.msra.mxu0 0
      %885 = vmatprep.mubr.bf16.mxu0 0
      %886 = vmatmul.mubr.bf16.gmra.mrb[0].mxu0 %v289
      %v887 = vpop.f32.mrb[0].mxu0
      %v888 = vadd.f32 0.0, %v887
      %v889 = vpop.f32.mrb[0].mxu0
      %v890 = vpop.f32.mrb[0].mxu0
      %v891 = vadd.f32 0.0, %v890
      %v892 = vpop.f32.mrb[0].mxu0
      %893 = vmatprep.mubr.bf16.mxu0 0
      %894 = vmatmul.mubr.bf16.gmra.mrb[0].mxu0 %v295
      %v895 = vpop.f32.mrb[0].mxu0
      %v896 = vadd.f32 0.0, %v895
      %v897 = vpop.f32.mrb[0].mxu0
      %v898 = vpop.f32.mrb[0].mxu0
      %v899 = vpop.f32.mrb[0].mxu0
      %900 = vdwg.mxu0
      %vm904 = vcmask 1043456
      %v905 = vrot.slane %v888, 4
      %v906 = vrot.slane %v891, 4
      %v907 = vsel %vm904, %v905, %v906
      %v908 = vrot.slane %v896, 4
      %v909 = vsel %vm904, %v906, %v908
      %v912 = vadd.f32 %v786, %v907
      %v913 = vadd.f32 %v787, %v909
      %s914 = scalar_lea.vmem %s2, 320
      %v915 = vld [vmem:[%s914] sm:$0xf]
      %v916 = vld [vmem:[%s914 + $0x4] sm:$0xf]
      %v917 = vld [vmem:[%s914 + $0x8] sm:$0xf]
      %v918 = vld [vmem:[%s914 + $0xc] sm:$0xf]
      %v919 = vld [vmem:[%s914 + $0x10] sm:$0xf]
      %v920 = vld [vmem:[%s914 + $0x14] sm:$0xf]
      %v921 = vld [vmem:[%s914 + $0x18] sm:$0xf]
      %v922 = vld [vmem:[%s914 + $0x1c] sm:$0xf]
      %v923 = vld [vmem:[%s914 + $0x20] sm:$0xf]
      %v924 = vld [vmem:[%s914 + $0x24] sm:$0xf]
      %v925 = vld [vmem:[%s914 + $0x28] sm:$0xf]
      %v926 = vld [vmem:[%s914 + $0x2c] sm:$0xf]
      %v927 = vld [vmem:[%s914 + $0x30] sm:$0xf]
      %v928 = vld [vmem:[%s914 + $0x34] sm:$0xf]
      %v929 = vld [vmem:[%s914 + $0x38] sm:$0xf]
      %v930 = vld [vmem:[%s914 + $0x3c] sm:$0xf]
      %v947 = vunpack.c.l.b16 %v915
      %v948 = vunpack.c.l.b16 %v916
      %v949 = vunpack.c.l.b16 %v917
      %v950 = vunpack.c.l.b16 %v918
      %v951 = vunpack.c.l.b16 %v919
      %v952 = vunpack.c.l.b16 %v920
      %v953 = vunpack.c.l.b16 %v921
      %v954 = vunpack.c.l.b16 %v922
      %v955 = vunpack.c.l.b16 %v923
      %v956 = vunpack.c.l.b16 %v924
      %v957 = vunpack.c.l.b16 %v925
      %v958 = vunpack.c.l.b16 %v926
      %v959 = vunpack.c.l.b16 %v927
      %v960 = vunpack.c.l.b16 %v928
      %v961 = vunpack.c.l.b16 %v929
      %v962 = vunpack.c.l.b16 %v930
      %v963 = vpack.c.b16 %v948, %v947
      %v964 = vpack.c.b16 %v950, %v949
      %v965 = vpack.c.b16 %v952, %v951
      %v966 = vpack.c.b16 %v954, %v953
      %v967 = vpack.c.b16 %v956, %v955
      %v968 = vpack.c.b16 %v958, %v957
      %v969 = vpack.c.b16 %v960, %v959
      %v970 = vpack.c.b16 %v962, %v961
      %979 = vmatprep.subr.bf16.mxu0 0
      %980 = vmatpush1.bf16.msra.mxu0 %v963
      %981 = vmatprep.subr.bf16.mxu0 0
      %982 = vmatpush1.bf16.msra.mxu0 %v964
      %983 = vmatprep.subr.bf16.mxu0 0
      %984 = vmatpush1.bf16.msra.mxu0 %v965
      %985 = vmatprep.subr.bf16.mxu0 0
      %986 = vmatpush1.bf16.msra.mxu0 %v966
      %987 = vmatprep.subr.bf16.mxu0 0
      %988 = vmatpush1.bf16.msra.mxu0 %v967
      %989 = vmatprep.subr.bf16.mxu0 0
      %990 = vmatpush1.bf16.msra.mxu0 %v968
      %991 = vmatprep.subr.bf16.mxu0 0
      %992 = vmatpush1.bf16.msra.mxu0 %v969
      %993 = vmatprep.subr.bf16.mxu0 0
      %994 = vmatpush1.bf16.msra.mxu0 %v970
      %995 = vmatprep.subr.bf16.mxu0 0
      %996 = vmatpush1.bf16.msra.mxu0 0
      %997 = vmatprep.subr.bf16.mxu0 0
      %998 = vmatpush1.bf16.msra.mxu0 0
      %999 = vmatprep.subr.bf16.mxu0 0
      %1000 = vmatpush1.bf16.msra.mxu0 0
      %1001 = vmatprep.subr.bf16.mxu0 0
      %1002 = vmatpush1.bf16.msra.mxu0 0
      %1003 = vmatprep.subr.bf16.mxu0 0
      %1004 = vmatpush1.bf16.msra.mxu0 0
      %1005 = vmatprep.subr.bf16.mxu0 0
      %1006 = vmatpush1.bf16.msra.mxu0 0
      %1007 = vmatprep.subr.bf16.mxu0 0
      %1008 = vmatpush1.bf16.msra.mxu0 0
      %1009 = vmatprep.subr.bf16.mxu0 0
      %1010 = vmatpush1.bf16.msra.mxu0 0
      %1011 = vmatprep.mubr.bf16.mxu0 0
      %1012 = vmatmul.mubr.bf16.gmra.mrb[0].mxu0 %v289
      %v1013 = vpop.f32.mrb[0].mxu0
      %v1014 = vadd.f32 0.0, %v1013
      %v1015 = vpop.f32.mrb[0].mxu0
      %v1016 = vpop.f32.mrb[0].mxu0
      %v1017 = vadd.f32 0.0, %v1016
      %v1018 = vpop.f32.mrb[0].mxu0
      %1019 = vmatprep.mubr.bf16.mxu0 0
      %1020 = vmatmul.mubr.bf16.gmra.mrb[0].mxu0 %v295
      %v1021 = vpop.f32.mrb[0].mxu0
      %v1022 = vadd.f32 0.0, %v1021
      %v1023 = vpop.f32.mrb[0].mxu0
      %v1024 = vpop.f32.mrb[0].mxu0
      %v1025 = vpop.f32.mrb[0].mxu0
      %1026 = vdwg.mxu0
      %vm1030 = vcmask 1042432
      %v1031 = vrot.slane %v1014, 5
      %v1032 = vrot.slane %v1017, 5
      %v1033 = vsel %vm1030, %v1031, %v1032
      %v1034 = vrot.slane %v1022, 5
      %v1035 = vsel %vm1030, %v1032, %v1034
      %v1038 = vadd.f32 %v912, %v1033
      %v1039 = vadd.f32 %v913, %v1035
      %s1040 = scalar_lea.vmem %s2, 384
      %v1041 = vld [vmem:[%s1040] sm:$0xf]
      %v1042 = vld [vmem:[%s1040 + $0x4] sm:$0xf]
      %v1043 = vld [vmem:[%s1040 + $0x8] sm:$0xf]
      %v1044 = vld [vmem:[%s1040 + $0xc] sm:$0xf]
      %v1045 = vld [vmem:[%s1040 + $0x10] sm:$0xf]
      %v1046 = vld [vmem:[%s1040 + $0x14] sm:$0xf]
      %v1047 = vld [vmem:[%s1040 + $0x18] sm:$0xf]
      %v1048 = vld [vmem:[%s1040 + $0x1c] sm:$0xf]
      %v1049 = vld [vmem:[%s1040 + $0x20] sm:$0xf]
      %v1050 = vld [vmem:[%s1040 + $0x24] sm:$0xf]
      %v1051 = vld [vmem:[%s1040 + $0x28] sm:$0xf]
      %v1052 = vld [vmem:[%s1040 + $0x2c] sm:$0xf]
      %v1053 = vld [vmem:[%s1040 + $0x30] sm:$0xf]
      %v1054 = vld [vmem:[%s1040 + $0x34] sm:$0xf]
      %v1055 = vld [vmem:[%s1040 + $0x38] sm:$0xf]
      %v1056 = vld [vmem:[%s1040 + $0x3c] sm:$0xf]
      %v1073 = vunpack.c.l.b16 %v1041
      %v1074 = vunpack.c.l.b16 %v1042
      %v1075 = vunpack.c.l.b16 %v1043
      %v1076 = vunpack.c.l.b16 %v1044
      %v1077 = vunpack.c.l.b16 %v1045
      %v1078 = vunpack.c.l.b16 %v1046
      %v1079 = vunpack.c.l.b16 %v1047
      %v1080 = vunpack.c.l.b16 %v1048
      %v1081 = vunpack.c.l.b16 %v1049
      %v1082 = vunpack.c.l.b16 %v1050
      %v1083 = vunpack.c.l.b16 %v1051
      %v1084 = vunpack.c.l.b16 %v1052
      %v1085 = vunpack.c.l.b16 %v1053
      %v1086 = vunpack.c.l.b16 %v1054
      %v1087 = vunpack.c.l.b16 %v1055
      %v1088 = vunpack.c.l.b16 %v1056
      %v1089 = vpack.c.b16 %v1074, %v1073
      %v1090 = vpack.c.b16 %v1076, %v1075
      %v1091 = vpack.c.b16 %v1078, %v1077
      %v1092 = vpack.c.b16 %v1080, %v1079
      %v1093 = vpack.c.b16 %v1082, %v1081
      %v1094 = vpack.c.b16 %v1084, %v1083
      %v1095 = vpack.c.b16 %v1086, %v1085
      %v1096 = vpack.c.b16 %v1088, %v1087
      %1105 = vmatprep.subr.bf16.mxu0 0
      %1106 = vmatpush1.bf16.msra.mxu0 %v1089
      %1107 = vmatprep.subr.bf16.mxu0 0
      %1108 = vmatpush1.bf16.msra.mxu0 %v1090
      %1109 = vmatprep.subr.bf16.mxu0 0
      %1110 = vmatpush1.bf16.msra.mxu0 %v1091
      %1111 = vmatprep.subr.bf16.mxu0 0
      %1112 = vmatpush1.bf16.msra.mxu0 %v1092
      %1113 = vmatprep.subr.bf16.mxu0 0
      %1114 = vmatpush1.bf16.msra.mxu0 %v1093
      %1115 = vmatprep.subr.bf16.mxu0 0
      %1116 = vmatpush1.bf16.msra.mxu0 %v1094
      %1117 = vmatprep.subr.bf16.mxu0 0
      %1118 = vmatpush1.bf16.msra.mxu0 %v1095
      %1119 = vmatprep.subr.bf16.mxu0 0
      %1120 = vmatpush1.bf16.msra.mxu0 %v1096
      %1121 = vmatprep.subr.bf16.mxu0 0
      %1122 = vmatpush1.bf16.msra.mxu0 0
      %1123 = vmatprep.subr.bf16.mxu0 0
      %1124 = vmatpush1.bf16.msra.mxu0 0
      %1125 = vmatprep.subr.bf16.mxu0 0
      %1126 = vmatpush1.bf16.msra.mxu0 0
      %1127 = vmatprep.subr.bf16.mxu0 0
      %1128 = vmatpush1.bf16.msra.mxu0 0
      %1129 = vmatprep.subr.bf16.mxu0 0
      %1130 = vmatpush1.bf16.msra.mxu0 0
      %1131 = vmatprep.subr.bf16.mxu0 0
      %1132 = vmatpush1.bf16.msra.mxu0 0
      %1133 = vmatprep.subr.bf16.mxu0 0
      %1134 = vmatpush1.bf16.msra.mxu0 0
      %1135 = vmatprep.subr.bf16.mxu0 0
      %1136 = vmatpush1.bf16.msra.mxu0 0
      %1137 = vmatprep.mubr.bf16.mxu0 0
      %1138 = vmatmul.mubr.bf16.gmra.mrb[0].mxu0 %v289
      %v1139 = vpop.f32.mrb[0].mxu0
      %v1140 = vadd.f32 0.0, %v1139
      %v1141 = vpop.f32.mrb[0].mxu0
      %v1142 = vpop.f32.mrb[0].mxu0
      %v1143 = vadd.f32 0.0, %v1142
      %v1144 = vpop.f32.mrb[0].mxu0
      %1145 = vmatprep.mubr.bf16.mxu0 0
      %1146 = vmatmul.mubr.bf16.gmra.mrb[0].mxu0 %v295
      %v1147 = vpop.f32.mrb[0].mxu0
      %v1148 = vadd.f32 0.0, %v1147
      %v1149 = vpop.f32.mrb[0].mxu0
      %v1150 = vpop.f32.mrb[0].mxu0
      %v1151 = vpop.f32.mrb[0].mxu0
      %1152 = vdwg.mxu0
      %vm1156 = vcmask 1041408
      %v1157 = vrot.slane %v1140, 6
      %v1158 = vrot.slane %v1143, 6
      %v1159 = vsel %vm1156, %v1157, %v1158
      %v1160 = vrot.slane %v1148, 6
      %v1161 = vsel %vm1156, %v1158, %v1160
      %v1164 = vadd.f32 %v1038, %v1159
      %v1165 = vadd.f32 %v1039, %v1161
      %v1166 = vld [vmem:[%s3] sm:$0x1]
      %v1168 = vlaneseq
      %v1169 = vshrl.u32 %v1168, 7
      %v1170 = vsub.s32 0, %v1169
      %v1171 = vrot.slane %v1166, %v1170
      %v1173 = vadd.f32 %v1164, %v1171
      %v1174 = vadd.f32 %v1165, %v1171
      %v1175 = vmax.f32 %v1173, 0.0
      %v1176 = vmax.f32 %v1174, 0.0
      %v1177 = vpack.c.bf16 %v1176, %v1175
      %v1179 = vunpack.c.l.b16 %v1177
      %v1180 = vunpack.c.h.b16 %v1177
      %v1181 = vpack.c.b16 %v1179, %v1179
      %v1182 = vpack.c.b16 %v1180, %v1180
      %vm1185 = vcmask 519168
      %1186 = vst.msk [vmem:[%s278] sm:$0xf] %vm1185, %v1181
      %1187 = vst.msk [vmem:[%s278 + $0x4] sm:$0xf] %vm1185, %v1182
      %s1188 = smul.u32 2, %s20
      %p1189 = scmp.lt.s32.totalorder %s19, 1
      %s1190 = scalar_select %p1189, %s19, 1
      %p1191 = scmp.lt.s32.totalorder %s1188, 1
      %s1192 = scalar_select %p1191, %s1188, 1
      %s1193 = smul.addr %s1190, 2
      %s1194 = sadd.s32 %s1192, %s1193
      %s1195 = smul.addr %s1194, 4
      %s1196 = scalar_lea.vmem %s4, %s1195
      // Predicated region
      $region37: #{cycle_generator_forward.14} parent=35 // pred_check
        %p1197 = pneg %p147
      $region38: #{cycle_generator_forward.14} parent=35 // pred_check_branch
        %1199 = sbr.rel (%p1197) target = $region40
      $region39: #{cycle_generator_forward.14} parent=35 // pred_region
        %s1200 = smul.u32 2, %s20
      $region40: #{cycle_generator_forward.14} parent=35 // pred_fallthru
        _
    $region36: #{cycle_generator_forward.14} parent=5 // pred_fallthru
      _
    %p1201 = scmp.le.s32.totalorder 2, %s10
    // Predicated region
    $region41: #{cycle_generator_forward.14} parent=5 // pred_check
      %p1202 = pneg %p1201
    $region42: #{cycle_generator_forward.14} parent=5 // pred_check_branch
      %1204 = sbr.rel (%p1202) target = $region44
    $region43: #{cycle_generator_forward.14} parent=5 // pred_region
      %s1205 = ssub.s32 %s10, 2
      // Predicated region
      $region45: #{cycle_generator_forward.14} parent=43 // pred_check
        %p1206 = pneg %p153
      $region46: #{cycle_generator_forward.14} parent=43 // pred_check_branch
        %1208 = sbr.rel (%p1206) target = $region48
      $region47: #{cycle_generator_forward.14} parent=43 // pred_region
        %s1209 = smul.u32 2, %s22
        %p1210 = scmp.lt.s32.totalorder %s21, 1
        %s1211 = scalar_select %p1210, %s21, 1
        %p1212 = scmp.lt.s32.totalorder %s1209, 1
        %s1213 = scalar_select %p1212, %s1209, 1
        %s1214 = smul.addr %s1211, 2
        %s1215 = sadd.s32 %s1213, %s1214
        %s1216 = smul.addr %s1215, 4
        %s1217 = scalar_lea.vmem %s4, %s1216
      $region48: #{cycle_generator_forward.14} parent=43 // pred_fallthru
        _
    $region44: #{cycle_generator_forward.14} parent=5 // pred_fallthru
      _
  $region6: #{cycle_generator_forward.14} parent=0 // loop_footer
    %s14 = sadd.s32 1, %s10
  $region7: #{cycle_generator_forward.14} parent=0 // loop_footer_branch
    %9 = sbr.rel target = $region3
  $region8: #{cycle_generator_forward.14} parent=0 // loop_exit
    _

// kernel: cycle_generator_forward.16
$region0: #{cycle_generator_forward.16}
  #allocation0 [shape = 'u32[]', space=smem, size = 0x4, offset = 0x4, fixed_abs, tag = 'smem constant byte address 0x4 - core index']
  #allocation1 [shape = 'u32[144,128]{1,0:T(1,128)}', space=vmem, size = 0x12000, scoped, tag = 'internal scratch']
  %s0 = inlined_call_operand.vmem [shape: bf16[2,32,128], index: 0, kind: input, shape index: {}, may-alias: {0,1}]
  %s1 = inlined_call_operand.vmem [shape: bf16[2,32,128], index: 1, kind: input, shape index: {}, may-alias: {0,1}]
  %s2 = inlined_call_operand.vmem [shape: bf16[3,128,128], index: 2, kind: input, shape index: {}]
  %s3 = inlined_call_operand.vmem [shape: f32[1,128], index: 3, kind: input, shape index: {}]
  %s4 = inlined_call_operand.vmem [shape: bf16[2,16,128], index: 4, kind: output, shape index: {}]
  %s5 = sld [smem:[#allocation0]]
  $region49: #{cycle_generator_forward.16} parent=0
    _
  %s7 = ssub.s32 1, %s5
  %s8 = scalar_select 0, %s7, %s5
  loop: start=0, step=1, limit=4
  $region2: #{cycle_generator_forward.16} parent=0 // loop_pre_header
    _
  $region3: #{cycle_generator_forward.16} parent=0 // loop_header
    %s10 = sphi 0, %s14
    %p11 = scmp.ge.s32.totalorder %s10, 4
    %s17 = sphi 0, %s29
    %s18 = sphi 0, %s25
    %s19 = sphi 0, %s17
    %s20 = sphi 0, %s18
    %s21 = sphi 0, %s19
    %s22 = sphi 0, %s20
    %s34 = sphi 0, %s36
    %s37 = sphi 0, %s34
    %s38 = sphi 0, %s37
    %s54 = sphi 0, %s38
    %s64 = sphi 0, %s66
    %s67 = sphi 0, %s64
    %s68 = sphi 0, %s67
    %s84 = sphi 0, %s68
    %s88 = sphi 0, %s88
    %s90 = sphi 0, %s88
    %s91 = sphi 0, %s90
    %s105 = sphi 0, %s91
    %s109 = sphi 0, %s109
    %s111 = sphi 0, %s109
    %s112 = sphi 0, %s111
    %s126 = sphi 0, %s112
    %s134 = sphi 0, %s136
    %s137 = sphi 0, %s134
    %s138 = sphi 0, %s137
    %s154 = sphi 0, %s138
  $region4: #{cycle_generator_forward.16} parent=0 // loop_header_branch
    %13 = sbr.rel (%p11) target = $region8
  $region5: #{cycle_generator_forward.16} parent=0 // loop_body
    %s15 = ssub.s32 %s10, 1
    %s16 = ssub.s32 %s10, 2
    %s23 = sadd.s32 1, %s18
    %p24 = scmp.ge.s32.totalorder %s23, 1
    %s25 = scalar_select %p24, 0, %s23
    %s26 = sadd.s32 1, %s17
    %s27 = scalar_select %p24, %s26, %s17
    %p28 = scmp.ge.s32.totalorder %s27, 2
    %s29 = scalar_select %p28, 0, %s27
    %s30 = ssub.s32 %s17, %s29
    %s31 = ssub.s32 %s18, %s25
    %s32 = sor.u32 %s30, %s31
    %p33 = scmp.eq.s32.totalorder %s32, 0
    %s35 = sadd.s32 %s34, 1
    %s36 = scalar_select %p33, %s34, %s35
    %p39 = pneg %p33
    %p40 = scmp.eq.s32.totalorder %s10, 1
    %p41 = por %p39, %p40
    %p42 = scmp.ne.s32.totalorder %s34, %s37
    %p43 = scmp.eq.s32.totalorder %s10, 0
    %p44 = por %p42, %p43
    %p45 = scmp.ne.s32.totalorder %s34, %s37
    %p46 = scmp.eq.s32.totalorder %s15, 1
    %p47 = por %p45, %p46
    %p48 = scmp.ne.s32.totalorder %s37, %s38
    %p49 = scmp.eq.s32.totalorder %s15, 0
    %p50 = por %p48, %p49
    %p51 = scmp.ne.s32.totalorder %s37, %s38
    %p52 = scmp.eq.s32.totalorder %s16, 1
    %p53 = por %p51, %p52
    %p55 = scmp.ne.s32.totalorder %s38, %s54
    %p56 = scmp.eq.s32.totalorder %s16, 0
    %p57 = por %p55, %p56
    %s58 = sadd.s32 %s18, 1
    %s59 = sadd.s32 %s25, 1
    %s60 = ssub.s32 %s17, %s29
    %s61 = ssub.s32 %s58, %s59
    %s62 = sor.u32 %s60, %s61
    %p63 = scmp.eq.s32.totalorder %s62, 0
    %s65 = sadd.s32 %s64, 1
    %s66 = scalar_select %p63, %s64, %s65
    %p69 = pneg %p63
    %p70 = scmp.eq.s32.totalorder %s10, 1
    %p71 = por %p69, %p70
    %p72 = scmp.ne.s32.totalorder %s64, %s67
    %p73 = scmp.eq.s32.totalorder %s10, 0
    %p74 = por %p72, %p73
    %p75 = scmp.ne.s32.totalorder %s64, %s67
    %p76 = scmp.eq.s32.totalorder %s15, 1
    %p77 = por %p75, %p76
    %p78 = scmp.ne.s32.totalorder %s67, %s68
    %p79 = scmp.eq.s32.totalorder %s15, 0
    %p80 = por %p78, %p79
    %p81 = scmp.ne.s32.totalorder %s67, %s68
    %p82 = scmp.eq.s32.totalorder %s16, 1
    %p83 = por %p81, %p82
    %p85 = scmp.ne.s32.totalorder %s68, %s84
    %p86 = scmp.eq.s32.totalorder %s16, 0
    %p87 = por %p85, %p86
    %s89 = sadd.s32 %s88, 1
    %p92 = scmp.eq.s32.totalorder %s10, 1
    %p93 = scmp.ne.s32.totalorder %s88, %s90
    %p94 = scmp.eq.s32.totalorder %s10, 0
    %p95 = por %p93, %p94
    %p96 = scmp.ne.s32.totalorder %s88, %s90
    %p97 = scmp.eq.s32.totalorder %s15, 1
    %p98 = por %p96, %p97
    %p99 = scmp.ne.s32.totalorder %s90, %s91
    %p100 = scmp.eq.s32.totalorder %s15, 0
    %p101 = por %p99, %p100
    %p102 = scmp.ne.s32.totalorder %s90, %s91
    %p103 = scmp.eq.s32.totalorder %s16, 1
    %p104 = por %p102, %p103
    %p106 = scmp.ne.s32.totalorder %s91, %s105
    %p107 = scmp.eq.s32.totalorder %s16, 0
    %p108 = por %p106, %p107
    %s110 = sadd.s32 %s109, 1
    %p113 = scmp.eq.s32.totalorder %s10, 1
    %p114 = scmp.ne.s32.totalorder %s109, %s111
    %p115 = scmp.eq.s32.totalorder %s10, 0
    %p116 = por %p114, %p115
    %p117 = scmp.ne.s32.totalorder %s109, %s111
    %p118 = scmp.eq.s32.totalorder %s15, 1
    %p119 = por %p117, %p118
    %p120 = scmp.ne.s32.totalorder %s111, %s112
    %p121 = scmp.eq.s32.totalorder %s15, 0
    %p122 = por %p120, %p121
    %p123 = scmp.ne.s32.totalorder %s111, %s112
    %p124 = scmp.eq.s32.totalorder %s16, 1
    %p125 = por %p123, %p124
    %p127 = scmp.ne.s32.totalorder %s112, %s126
    %p128 = scmp.eq.s32.totalorder %s16, 0
    %p129 = por %p127, %p128
    %s130 = ssub.s32 %s17, %s29
    %s131 = ssub.s32 %s18, %s25
    %s132 = sor.u32 %s130, %s131
    %p133 = scmp.eq.s32.totalorder %s132, 0
    %s135 = sadd.s32 %s134, 1
    %s136 = scalar_select %p133, %s134, %s135
    %p139 = pneg %p133
    %p140 = scmp.eq.s32.totalorder %s10, 1
    %p141 = por %p139, %p140
    %p142 = scmp.ne.s32.totalorder %s134, %s137
    %p143 = scmp.eq.s32.totalorder %s10, 0
    %p144 = por %p142, %p143
    %p145 = scmp.ne.s32.totalorder %s134, %s137
    %p146 = scmp.eq.s32.totalorder %s15, 1
    %p147 = por %p145, %p146
    %p148 = scmp.ne.s32.totalorder %s137, %s138
    %p149 = scmp.eq.s32.totalorder %s15, 0
    %p150 = por %p148, %p149
    %p151 = scmp.ne.s32.totalorder %s137, %s138
    %p152 = scmp.eq.s32.totalorder %s16, 1
    %p153 = por %p151, %p152
    %p155 = scmp.ne.s32.totalorder %s138, %s154
    %p156 = scmp.eq.s32.totalorder %s16, 0
    %p157 = por %p155, %p156
    %p158 = scmp.le.s32.totalorder 1, %s10
    %p159 = scmp.lt.s32.totalorder %s10, 3
    %p160 = pnand %p158, %p159
    %p161 = pneg %p160
    // Predicated region
    $region9: #{cycle_generator_forward.16} parent=5 // pred_check
      _
    $region10: #{cycle_generator_forward.16} parent=5 // pred_check_branch
      %163 = sbr.rel (%p160) target = $region12
    $region11: #{cycle_generator_forward.16} parent=5 // pred_region
      %s164 = ssub.s32 %s10, 1
      // Predicated region
      $region13: #{cycle_generator_forward.16} parent=11 // pred_check
        %p165 = pneg %p101
      $region14: #{cycle_generator_forward.16} parent=11 // pred_check_branch
        %167 = sbr.rel (%p165) target = $region16
      $region15: #{cycle_generator_forward.16} parent=11 // pred_region
        _
      $region16: #{cycle_generator_forward.16} parent=11 // pred_fallthru
        _
      // Predicated region
      $region17: #{cycle_generator_forward.16} parent=11 // pred_check
        %p168 = pneg %p122
      $region18: #{cycle_generator_forward.16} parent=11 // pred_check_branch
        %170 = sbr.rel (%p168) target = $region20
      $region19: #{cycle_generator_forward.16} parent=11 // pred_region
        _
      $region20: #{cycle_generator_forward.16} parent=11 // pred_fallthru
        _
    $region12: #{cycle_generator_forward.16} parent=5 // pred_fallthru
      _
    %p171 = scmp.lt.s32.totalorder %s10, 2
    // Predicated region
    $region21: #{cycle_generator_forward.16} parent=5 // pred_check
      %p172 = pneg %p171
    $region22: #{cycle_generator_forward.16} parent=5 // pred_check_branch
      %174 = sbr.rel (%p172) target = $region24
    $region23: #{cycle_generator_forward.16} parent=5 // pred_region
      // Predicated region
      $region25: #{cycle_generator_forward.16} parent=23 // pred_check
        %p175 = pneg %p44
      $region26: #{cycle_generator_forward.16} parent=23 // pred_check_branch
        %177 = sbr.rel (%p175) target = $region28
      $region27: #{cycle_generator_forward.16} parent=23 // pred_region
        %s178 = smul.u32 2, %s18
        %p179 = scmp.lt.s32.totalorder %s17, 1
        %s180 = scalar_select %p179, %s17, 1
        %p181 = scmp.lt.s32.totalorder %s178, 3
        %s182 = scalar_select %p181, %s178, 3
        %s183 = smul.addr %s180, 4
        %s184 = sadd.s32 %s182, %s183
        %s185 = smul.addr %s184, 4
        %s186 = scalar_lea.vmem %s0, %s185
        %s187 = smul.u32 2, %s18
      $region28: #{cycle_generator_forward.16} parent=23 // pred_fallthru
        _
      // Predicated region
      $region29: #{cycle_generator_forward.16} parent=23 // pred_check
        %p188 = pneg %p74
      $region30: #{cycle_generator_forward.16} parent=23 // pred_check_branch
        %190 = sbr.rel (%p188) target = $region32
      $region31: #{cycle_generator_forward.16} parent=23 // pred_region
        %s191 = sadd.s32 %s18, 1
        %s192 = smul.u32 2, %s191
        %p193 = scmp.lt.s32.totalorder %s17, 1
        %s194 = scalar_select %p193, %s17, 1
        %p195 = scmp.lt.s32.totalorder %s192, 3
        %s196 = scalar_select %p195, %s192, 3
        %s197 = smul.addr %s194, 4
        %s198 = sadd.s32 %s196, %s197
        %s199 = smul.addr %s198, 4
        %s200 = scalar_lea.vmem %s1, %s199
        %s201 = sadd.s32 %s18, 1
        %s202 = smul.u32 2, %s201
      $region32: #{cycle_generator_forward.16} parent=23 // pred_fallthru
        _
    $region24: #{cycle_generator_forward.16} parent=5 // pred_fallthru
      _
    %p203 = scmp.le.s32.totalorder 1, %s10
    %p204 = scmp.lt.s32.totalorder %s10, 3
    %p205 = pnand %p203, %p204
    %p206 = pneg %p205
    // Predicated region
    $region33: #{cycle_generator_forward.16} parent=5 // pred_check
      _
    $region34: #{cycle_generator_forward.16} parent=5 // pred_check_branch
      %208 = sbr.rel (%p205) target = $region36
    $region35: #{cycle_generator_forward.16} parent=5 // pred_region
      %s209 = ssub.s32 %s10, 1
      %s210 = smul.u32 2, %s20
      %p211 = scmp.lt.s32.totalorder %s19, 1
      %s212 = scalar_select %p211, %s19, 1
      %p213 = scmp.lt.s32.totalorder %s210, 3
      %s214 = scalar_select %p213, %s210, 3
      %s215 = smul.addr %s212, 4
      %s216 = sadd.s32 %s214, %s215
      %s217 = smul.addr %s216, 4
      %s218 = scalar_lea.vmem %s0, %s217
      %p219 = pneg %p50
      %p220 = pneg %p47
      %s221 = sadd.s32 %s20, 1
      %s222 = smul.u32 2, %s221
      %p223 = scmp.lt.s32.totalorder %s19, 1
      %s224 = scalar_select %p223, %s19, 1
      %p225 = scmp.lt.s32.totalorder %s222, 3
      %s226 = scalar_select %p225, %s222, 3
      %s227 = smul.addr %s224, 4
      %s228 = sadd.s32 %s226, %s227
      %s229 = smul.addr %s228, 4
      %s230 = scalar_lea.vmem %s1, %s229
      %p231 = pneg %p80
      %p232 = pneg %p77
      %p233 = pneg %p101
      %p234 = pneg %p98
      %p235 = pneg %p122
      %p236 = pneg %p119
      %p237 = pneg %p150
      %p238 = pneg %p147
      %s239 = smul.u32 2, %s20
      %p240 = scmp.lt.s32.totalorder %s19, 1
      %s241 = scalar_select %p240, %s19, 1
      %p242 = scmp.lt.s32.totalorder %s239, 1
      %s243 = scalar_select %p242, %s239, 1
      %s244 = smul.addr %s241, 2
      %s245 = sadd.s32 %s243, %s244
      %s246 = smul.addr %s245, 4
      %s247 = scalar_lea.vmem %s4, %s246
      %s248 = smul.u32 2, %s20
      %p249 = scmp.lt.s32.totalorder %s19, 1
      %s250 = scalar_select %p249, %s19, 1
      %p251 = scmp.lt.s32.totalorder %s248, 3
      %s252 = scalar_select %p251, %s248, 3
      %s253 = smul.addr %s250, 4
      %s254 = sadd.s32 %s252, %s253
      %s255 = smul.addr %s254, 4
      %s256 = scalar_lea.vmem %s0, %s255
      %s257 = smul.u32 2, %s20
      %s258 = sadd.s32 %s20, 1
      %s259 = smul.u32 2, %s258
      %p260 = scmp.lt.s32.totalorder %s19, 1
      %s261 = scalar_select %p260, %s19, 1
      %p262 = scmp.lt.s32.totalorder %s259, 3
      %s263 = scalar_select %p262, %s259, 3
      %s264 = smul.addr %s261, 4
      %s265 = sadd.s32 %s263, %s264
      %s266 = smul.addr %s265, 4
      %s267 = scalar_lea.vmem %s1, %s266
      %s268 = sadd.s32 %s20, 1
      %s269 = smul.u32 2, %s268
      %s270 = smul.u32 2, %s20
      %p271 = scmp.lt.s32.totalorder %s19, 1
      %s272 = scalar_select %p271, %s19, 1
      %p273 = scmp.lt.s32.totalorder %s270, 1
      %s274 = scalar_select %p273, %s270, 1
      %s275 = smul.addr %s272, 2
      %s276 = sadd.s32 %s274, %s275
      %s277 = smul.addr %s276, 4
      %s278 = scalar_lea.vmem %s4, %s277
      %s279 = smul.u32 2, %s20
      %v281 = vld [vmem:[%s256] sm:$0xf]
      %v282 = vld [vmem:[%s256 + $0x4] sm:$0xf]
      %v283 = vld [vmem:[%s267] sm:$0xf]
      %v284 = vld [vmem:[%s267 + $0x4] sm:$0xf]
      %v287 = vunpack.c.l.b16 %v281
      %v288 = vunpack.c.l.b16 %v282
      %v289 = vpack.c.b16 %v288, %v287
      %v293 = vunpack.c.l.b16 %v283
      %v294 = vunpack.c.l.b16 %v284
      %v295 = vpack.c.b16 %v294, %v293
      %v297 = vld [vmem:[%s2] sm:$0xf]
      %v298 = vld [vmem:[%s2 + $0x4] sm:$0xf]
      %v299 = vld [vmem:[%s2 + $0x8] sm:$0xf]
      %v300 = vld [vmem:[%s2 + $0xc] sm:$0xf]
      %v301 = vld [vmem:[%s2 + $0x10] sm:$0xf]
      %v302 = vld [vmem:[%s2 + $0x14] sm:$0xf]
      %v303 = vld [vmem:[%s2 + $0x18] sm:$0xf]
      %v304 = vld [vmem:[%s2 + $0x1c] sm:$0xf]
      %v305 = vld [vmem:[%s2 + $0x20] sm:$0xf]
      %v306 = vld [vmem:[%s2 + $0x24] sm:$0xf]
      %v307 = vld [vmem:[%s2 + $0x28] sm:$0xf]
      %v308 = vld [vmem:[%s2 + $0x2c] sm:$0xf]
      %v309 = vld [vmem:[%s2 + $0x30] sm:$0xf]
      %v310 = vld [vmem:[%s2 + $0x34] sm:$0xf]
      %v311 = vld [vmem:[%s2 + $0x38] sm:$0xf]
      %v312 = vld [vmem:[%s2 + $0x3c] sm:$0xf]
      %v329 = vunpack.c.l.b16 %v297
      %v330 = vunpack.c.l.b16 %v298
      %v331 = vunpack.c.l.b16 %v299
      %v332 = vunpack.c.l.b16 %v300
      %v333 = vunpack.c.l.b16 %v301
      %v334 = vunpack.c.l.b16 %v302
      %v335 = vunpack.c.l.b16 %v303
      %v336 = vunpack.c.l.b16 %v304
      %v337 = vunpack.c.l.b16 %v305
      %v338 = vunpack.c.l.b16 %v306
      %v339 = vunpack.c.l.b16 %v307
      %v340 = vunpack.c.l.b16 %v308
      %v341 = vunpack.c.l.b16 %v309
      %v342 = vunpack.c.l.b16 %v310
      %v343 = vunpack.c.l.b16 %v311
      %v344 = vunpack.c.l.b16 %v312
      %v345 = vpack.c.b16 %v330, %v329
      %v346 = vpack.c.b16 %v332, %v331
      %v347 = vpack.c.b16 %v334, %v333
      %v348 = vpack.c.b16 %v336, %v335
      %v349 = vpack.c.b16 %v338, %v337
      %v350 = vpack.c.b16 %v340, %v339
      %v351 = vpack.c.b16 %v342, %v341
      %v352 = vpack.c.b16 %v344, %v343
      %361 = vmatprep.subr.bf16.mxu0 0
      %362 = vmatpush1.bf16.msra.mxu0 %v345
      %363 = vmatprep.subr.bf16.mxu0 0
      %364 = vmatpush1.bf16.msra.mxu0 %v346
      %365 = vmatprep.subr.bf16.mxu0 0
      %366 = vmatpush1.bf16.msra.mxu0 %v347
      %367 = vmatprep.subr.bf16.mxu0 0
      %368 = vmatpush1.bf16.msra.mxu0 %v348
      %369 = vmatprep.subr.bf16.mxu0 0
      %370 = vmatpush1.bf16.msra.mxu0 %v349
      %371 = vmatprep.subr.bf16.mxu0 0
      %372 = vmatpush1.bf16.msra.mxu0 %v350
      %373 = vmatprep.subr.bf16.mxu0 0
      %374 = vmatpush1.bf16.msra.mxu0 %v351
      %375 = vmatprep.subr.bf16.mxu0 0
      %376 = vmatpush1.bf16.msra.mxu0 %v352
      %377 = vmatprep.subr.bf16.mxu0 0
      %378 = vmatpush1.bf16.msra.mxu0 0
      %379 = vmatprep.subr.bf16.mxu0 0
      %380 = vmatpush1.bf16.msra.mxu0 0
      %381 = vmatprep.subr.bf16.mxu0 0
      %382 = vmatpush1.bf16.msra.mxu0 0
      %383 = vmatprep.subr.bf16.mxu0 0
      %384 = vmatpush1.bf16.msra.mxu0 0
      %385 = vmatprep.subr.bf16.mxu0 0
      %386 = vmatpush1.bf16.msra.mxu0 0
      %387 = vmatprep.subr.bf16.mxu0 0
      %388 = vmatpush1.bf16.msra.mxu0 0
      %389 = vmatprep.subr.bf16.mxu0 0
      %390 = vmatpush1.bf16.msra.mxu0 0
      %391 = vmatprep.subr.bf16.mxu0 0
      %392 = vmatpush1.bf16.msra.mxu0 0
      %393 = vmatprep.mubr.bf16.mxu0 0
      %394 = vmatmul.mubr.bf16.gmra.mrb[0].mxu0 %v289
      %v395 = vpop.f32.mrb[0].mxu0
      %v396 = vadd.f32 0.0, %v395
      %v397 = vpop.f32.mrb[0].mxu0
      %v398 = vpop.f32.mrb[0].mxu0
      %v399 = vadd.f32 0.0, %v398
      %v400 = vpop.f32.mrb[0].mxu0
      %401 = vmatprep.mubr.bf16.mxu0 0
      %402 = vmatmul.mubr.bf16.gmra.mrb[0].mxu0 %v295
      %v403 = vpop.f32.mrb[0].mxu0
      %v404 = vpop.f32.mrb[0].mxu0
      %v405 = vpop.f32.mrb[0].mxu0
      %v406 = vpop.f32.mrb[0].mxu0
      %407 = vdwg.mxu0
      %v408 = vadd.f32 %v396, 0.0
      %v409 = vadd.f32 %v399, 0.0
      %s410 = scalar_lea.vmem %s2, 64
      %v411 = vld [vmem:[%s410] sm:$0xf]
      %v412 = vld [vmem:[%s410 + $0x4] sm:$0xf]
      %v413 = vld [vmem:[%s410 + $0x8] sm:$0xf]
      %v414 = vld [vmem:[%s410 + $0xc] sm:$0xf]
      %v415 = vld [vmem:[%s410 + $0x10] sm:$0xf]
      %v416 = vld [vmem:[%s410 + $0x14] sm:$0xf]
      %v417 = vld [vmem:[%s410 + $0x18] sm:$0xf]
      %v418 = vld [vmem:[%s410 + $0x1c] sm:$0xf]
      %v419 = vld [vmem:[%s410 + $0x20] sm:$0xf]
      %v420 = vld [vmem:[%s410 + $0x24] sm:$0xf]
      %v421 = vld [vmem:[%s410 + $0x28] sm:$0xf]
      %v422 = vld [vmem:[%s410 + $0x2c] sm:$0xf]
      %v423 = vld [vmem:[%s410 + $0x30] sm:$0xf]
      %v424 = vld [vmem:[%s410 + $0x34] sm:$0xf]
      %v425 = vld [vmem:[%s410 + $0x38] sm:$0xf]
      %v426 = vld [vmem:[%s410 + $0x3c] sm:$0xf]
      %v443 = vunpack.c.l.b16 %v411
      %v444 = vunpack.c.l.b16 %v412
      %v445 = vunpack.c.l.b16 %v413
      %v446 = vunpack.c.l.b16 %v414
      %v447 = vunpack.c.l.b16 %v415
      %v448 = vunpack.c.l.b16 %v416
      %v449 = vunpack.c.l.b16 %v417
      %v450 = vunpack.c.l.b16 %v418
      %v451 = vunpack.c.l.b16 %v419
      %v452 = vunpack.c.l.b16 %v420
      %v453 = vunpack.c.l.b16 %v421
      %v454 = vunpack.c.l.b16 %v422
      %v455 = vunpack.c.l.b16 %v423
      %v456 = vunpack.c.l.b16 %v424
      %v457 = vunpack.c.l.b16 %v425
      %v458 = vunpack.c.l.b16 %v426
      %v459 = vpack.c.b16 %v444, %v443
      %v460 = vpack.c.b16 %v446, %v445
      %v461 = vpack.c.b16 %v448, %v447
      %v462 = vpack.c.b16 %v450, %v449
      %v463 = vpack.c.b16 %v452, %v451
      %v464 = vpack.c.b16 %v454, %v453
      %v465 = vpack.c.b16 %v456, %v455
      %v466 = vpack.c.b16 %v458, %v457
      %475 = vmatprep.subr.bf16.mxu0 0
      %476 = vmatpush1.bf16.msra.mxu0 %v459
      %477 = vmatprep.subr.bf16.mxu0 0
      %478 = vmatpush1.bf16.msra.mxu0 %v460
      %479 = vmatprep.subr.bf16.mxu0 0
      %480 = vmatpush1.bf16.msra.mxu0 %v461
      %481 = vmatprep.subr.bf16.mxu0 0
      %482 = vmatpush1.bf16.msra.mxu0 %v462
      %483 = vmatprep.subr.bf16.mxu0 0
      %484 = vmatpush1.bf16.msra.mxu0 %v463
      %485 = vmatprep.subr.bf16.mxu0 0
      %486 = vmatpush1.bf16.msra.mxu0 %v464
      %487 = vmatprep.subr.bf16.mxu0 0
      %488 = vmatpush1.bf16.msra.mxu0 %v465
      %489 = vmatprep.subr.bf16.mxu0 0
      %490 = vmatpush1.bf16.msra.mxu0 %v466
      %491 = vmatprep.subr.bf16.mxu0 0
      %492 = vmatpush1.bf16.msra.mxu0 0
      %493 = vmatprep.subr.bf16.mxu0 0
      %494 = vmatpush1.bf16.msra.mxu0 0
      %495 = vmatprep.subr.bf16.mxu0 0
      %496 = vmatpush1.bf16.msra.mxu0 0
      %497 = vmatprep.subr.bf16.mxu0 0
      %498 = vmatpush1.bf16.msra.mxu0 0
      %499 = vmatprep.subr.bf16.mxu0 0
      %500 = vmatpush1.bf16.msra.mxu0 0
      %501 = vmatprep.subr.bf16.mxu0 0
      %502 = vmatpush1.bf16.msra.mxu0 0
      %503 = vmatprep.subr.bf16.mxu0 0
      %504 = vmatpush1.bf16.msra.mxu0 0
      %505 = vmatprep.subr.bf16.mxu0 0
      %506 = vmatpush1.bf16.msra.mxu0 0
      %507 = vmatprep.mubr.bf16.mxu0 0
      %508 = vmatmul.mubr.bf16.gmra.mrb[0].mxu0 %v289
      %v509 = vpop.f32.mrb[0].mxu0
      %v510 = vadd.f32 0.0, %v509
      %v511 = vpop.f32.mrb[0].mxu0
      %v512 = vpop.f32.mrb[0].mxu0
      %v513 = vadd.f32 0.0, %v512
      %v514 = vpop.f32.mrb[0].mxu0
      %515 = vmatprep.mubr.bf16.mxu0 0
      %516 = vmatmul.mubr.bf16.gmra.mrb[0].mxu0 %v295
      %v517 = vpop.f32.mrb[0].mxu0
      %v518 = vadd.f32 0.0, %v517
      %v519 = vpop.f32.mrb[0].mxu0
      %v520 = vpop.f32.mrb[0].mxu0
      %v521 = vpop.f32.mrb[0].mxu0
      %522 = vdwg.mxu0
      %vm526 = vcmask 1046528
      %v527 = vrot.slane %v510, 1
      %v528 = vrot.slane %v513, 1
      %v529 = vsel %vm526, %v527, %v528
      %v530 = vrot.slane %v518, 1
      %v531 = vsel %vm526, %v528, %v530
      %v534 = vadd.f32 %v408, %v529
      %v535 = vadd.f32 %v409, %v531
      %s536 = scalar_lea.vmem %s2, 128
      %v537 = vld [vmem:[%s536] sm:$0xf]
      %v538 = vld [vmem:[%s536 + $0x4] sm:$0xf]
      %v539 = vld [vmem:[%s536 + $0x8] sm:$0xf]
      %v540 = vld [vmem:[%s536 + $0xc] sm:$0xf]
      %v541 = vld [vmem:[%s536 + $0x10] sm:$0xf]
      %v542 = vld [vmem:[%s536 + $0x14] sm:$0xf]
      %v543 = vld [vmem:[%s536 + $0x18] sm:$0xf]
      %v544 = vld [vmem:[%s536 + $0x1c] sm:$0xf]
      %v545 = vld [vmem:[%s536 + $0x20] sm:$0xf]
      %v546 = vld [vmem:[%s536 + $0x24] sm:$0xf]
      %v547 = vld [vmem:[%s536 + $0x28] sm:$0xf]
      %v548 = vld [vmem:[%s536 + $0x2c] sm:$0xf]
      %v549 = vld [vmem:[%s536 + $0x30] sm:$0xf]
      %v550 = vld [vmem:[%s536 + $0x34] sm:$0xf]
      %v551 = vld [vmem:[%s536 + $0x38] sm:$0xf]
      %v552 = vld [vmem:[%s536 + $0x3c] sm:$0xf]
      %v569 = vunpack.c.l.b16 %v537
      %v570 = vunpack.c.l.b16 %v538
      %v571 = vunpack.c.l.b16 %v539
      %v572 = vunpack.c.l.b16 %v540
      %v573 = vunpack.c.l.b16 %v541
      %v574 = vunpack.c.l.b16 %v542
      %v575 = vunpack.c.l.b16 %v543
      %v576 = vunpack.c.l.b16 %v544
      %v577 = vunpack.c.l.b16 %v545
      %v578 = vunpack.c.l.b16 %v546
      %v579 = vunpack.c.l.b16 %v547
      %v580 = vunpack.c.l.b16 %v548
      %v581 = vunpack.c.l.b16 %v549
      %v582 = vunpack.c.l.b16 %v550
      %v583 = vunpack.c.l.b16 %v551
      %v584 = vunpack.c.l.b16 %v552
      %v585 = vpack.c.b16 %v570, %v569
      %v586 = vpack.c.b16 %v572, %v571
      %v587 = vpack.c.b16 %v574, %v573
      %v588 = vpack.c.b16 %v576, %v575
      %v589 = vpack.c.b16 %v578, %v577
      %v590 = vpack.c.b16 %v580, %v579
      %v591 = vpack.c.b16 %v582, %v581
      %v592 = vpack.c.b16 %v584, %v583
      %601 = vmatprep.subr.bf16.mxu0 0
      %602 = vmatpush1.bf16.msra.mxu0 %v585
      %603 = vmatprep.subr.bf16.mxu0 0
      %604 = vmatpush1.bf16.msra.mxu0 %v586
      %605 = vmatprep.subr.bf16.mxu0 0
      %606 = vmatpush1.bf16.msra.mxu0 %v587
      %607 = vmatprep.subr.bf16.mxu0 0
      %608 = vmatpush1.bf16.msra.mxu0 %v588
      %609 = vmatprep.subr.bf16.mxu0 0
      %610 = vmatpush1.bf16.msra.mxu0 %v589
      %611 = vmatprep.subr.bf16.mxu0 0
      %612 = vmatpush1.bf16.msra.mxu0 %v590
      %613 = vmatprep.subr.bf16.mxu0 0
      %614 = vmatpush1.bf16.msra.mxu0 %v591
      %615 = vmatprep.subr.bf16.mxu0 0
      %616 = vmatpush1.bf16.msra.mxu0 %v592
      %617 = vmatprep.subr.bf16.mxu0 0
      %618 = vmatpush1.bf16.msra.mxu0 0
      %619 = vmatprep.subr.bf16.mxu0 0
      %620 = vmatpush1.bf16.msra.mxu0 0
      %621 = vmatprep.subr.bf16.mxu0 0
      %622 = vmatpush1.bf16.msra.mxu0 0
      %623 = vmatprep.subr.bf16.mxu0 0
      %624 = vmatpush1.bf16.msra.mxu0 0
      %625 = vmatprep.subr.bf16.mxu0 0
      %626 = vmatpush1.bf16.msra.mxu0 0
      %627 = vmatprep.subr.bf16.mxu0 0
      %628 = vmatpush1.bf16.msra.mxu0 0
      %629 = vmatprep.subr.bf16.mxu0 0
      %630 = vmatpush1.bf16.msra.mxu0 0
      %631 = vmatprep.subr.bf16.mxu0 0
      %632 = vmatpush1.bf16.msra.mxu0 0
      %633 = vmatprep.mubr.bf16.mxu0 0
      %634 = vmatmul.mubr.bf16.gmra.mrb[0].mxu0 %v289
      %v635 = vpop.f32.mrb[0].mxu0
      %v636 = vadd.f32 0.0, %v635
      %v637 = vpop.f32.mrb[0].mxu0
      %v638 = vpop.f32.mrb[0].mxu0
      %v639 = vadd.f32 0.0, %v638
      %v640 = vpop.f32.mrb[0].mxu0
      %641 = vmatprep.mubr.bf16.mxu0 0
      %642 = vmatmul.mubr.bf16.gmra.mrb[0].mxu0 %v295
      %v643 = vpop.f32.mrb[0].mxu0
      %v644 = vadd.f32 0.0, %v643
      %v645 = vpop.f32.mrb[0].mxu0
      %v646 = vpop.f32.mrb[0].mxu0
      %v647 = vpop.f32.mrb[0].mxu0
      %648 = vdwg.mxu0
      %vm652 = vcmask 1045504
      %v653 = vrot.slane %v636, 2
      %v654 = vrot.slane %v639, 2
      %v655 = vsel %vm652, %v653, %v654
      %v656 = vrot.slane %v644, 2
      %v657 = vsel %vm652, %v654, %v656
      %v660 = vadd.f32 %v534, %v655
      %v661 = vadd.f32 %v535, %v657
      %v662 = vld [vmem:[%s3] sm:$0x1]
      %v664 = vlaneseq
      %v665 = vshrl.u32 %v664, 7
      %v666 = vsub.s32 0, %v665
      %v667 = vrot.slane %v662, %v666
      %v669 = vadd.f32 %v660, %v667
      %v670 = vadd.f32 %v661, %v667
      %v671 = vmax.f32 %v669, 0.0
      %v672 = vmax.f32 %v670, 0.0
      %v673 = vpack.c.bf16 %v672, %v671
      %v675 = vunpack.c.l.b16 %v673
      %v676 = vunpack.c.h.b16 %v673
      %v677 = vpack.c.b16 %v675, %v675
      %v678 = vpack.c.b16 %v676, %v676
      %681 = vst [vmem:[%s278] sm:$0xf] %v677
      %682 = vst [vmem:[%s278 + $0x4] sm:$0xf] %v678
      %s683 = smul.u32 2, %s20
      %p684 = scmp.lt.s32.totalorder %s19, 1
      %s685 = scalar_select %p684, %s19, 1
      %p686 = scmp.lt.s32.totalorder %s683, 1
      %s687 = scalar_select %p686, %s683, 1
      %s688 = smul.addr %s685, 2
      %s689 = sadd.s32 %s687, %s688
      %s690 = smul.addr %s689, 4
      %s691 = scalar_lea.vmem %s4, %s690
      // Predicated region
      $region37: #{cycle_generator_forward.16} parent=35 // pred_check
        %p692 = pneg %p147
      $region38: #{cycle_generator_forward.16} parent=35 // pred_check_branch
        %694 = sbr.rel (%p692) target = $region40
      $region39: #{cycle_generator_forward.16} parent=35 // pred_region
        %s695 = smul.u32 2, %s20
      $region40: #{cycle_generator_forward.16} parent=35 // pred_fallthru
        _
    $region36: #{cycle_generator_forward.16} parent=5 // pred_fallthru
      _
    %p696 = scmp.le.s32.totalorder 2, %s10
    // Predicated region
    $region41: #{cycle_generator_forward.16} parent=5 // pred_check
      %p697 = pneg %p696
    $region42: #{cycle_generator_forward.16} parent=5 // pred_check_branch
      %699 = sbr.rel (%p697) target = $region44
    $region43: #{cycle_generator_forward.16} parent=5 // pred_region
      %s700 = ssub.s32 %s10, 2
      // Predicated region
      $region45: #{cycle_generator_forward.16} parent=43 // pred_check
        %p701 = pneg %p153
      $region46: #{cycle_generator_forward.16} parent=43 // pred_check_branch
        %703 = sbr.rel (%p701) target = $region48
      $region47: #{cycle_generator_forward.16} parent=43 // pred_region
        %s704 = smul.u32 2, %s22
        %p705 = scmp.lt.s32.totalorder %s21, 1
        %s706 = scalar_select %p705, %s21, 1
        %p707 = scmp.lt.s32.totalorder %s704, 1
        %s708 = scalar_select %p707, %s704, 1
        %s709 = smul.addr %s706, 2
        %s710 = sadd.s32 %s708, %s709
        %s711 = smul.addr %s710, 4
        %s712 = scalar_lea.vmem %s4, %s711
      $region48: #{cycle_generator_forward.16} parent=43 // pred_fallthru
        _
    $region44: #{cycle_generator_forward.16} parent=5 // pred_fallthru
      _
  $region6: #{cycle_generator_forward.16} parent=0 // loop_footer
    %s14 = sadd.s32 1, %s10
  $region7: #{cycle_generator_forward.16} parent=0 // loop_footer_branch
    %9 = sbr.rel target = $region3
  $region8: #{cycle_generator_forward.16} parent=0 // loop_exit
    _

// kernel: cycle_generator_forward.17
$region0: #{cycle_generator_forward.17}
  #allocation0 [shape = 'u32[]', space=smem, size = 0x4, offset = 0x4, fixed_abs, tag = 'smem constant byte address 0x4 - core index']
  #allocation1 [shape = 'u32[144,128]{1,0:T(1,128)}', space=vmem, size = 0x12000, scoped, tag = 'internal scratch']
  %s0 = inlined_call_operand.vmem [shape: bf16[2,32,128], index: 0, kind: input, shape index: {}, may-alias: {0,1}]
  %s1 = inlined_call_operand.vmem [shape: bf16[2,32,128], index: 1, kind: input, shape index: {}, may-alias: {0,1}]
  %s2 = inlined_call_operand.vmem [shape: bf16[3,128,128], index: 2, kind: input, shape index: {}]
  %s3 = inlined_call_operand.vmem [shape: f32[1,128], index: 3, kind: input, shape index: {}]
  %s4 = inlined_call_operand.vmem [shape: bf16[2,16,128], index: 4, kind: input, shape index: {}]
  %s5 = inlined_call_operand.vmem [shape: bf16[2,16,128], index: 5, kind: output, shape index: {}]
  %s6 = sld [smem:[#allocation0]]
  $region53: #{cycle_generator_forward.17} parent=0
    _
  %s8 = ssub.s32 1, %s6
  %s9 = scalar_select 0, %s8, %s6
  loop: start=0, step=1, limit=4
  $region2: #{cycle_generator_forward.17} parent=0 // loop_pre_header
    _
  $region3: #{cycle_generator_forward.17} parent=0 // loop_header
    %s11 = sphi 0, %s15
    %p12 = scmp.ge.s32.totalorder %s11, 4
    %s18 = sphi 0, %s30
    %s19 = sphi 0, %s26
    %s20 = sphi 0, %s18
    %s21 = sphi 0, %s19
    %s22 = sphi 0, %s20
    %s23 = sphi 0, %s21
    %s35 = sphi 0, %s37
    %s38 = sphi 0, %s35
    %s39 = sphi 0, %s38
    %s55 = sphi 0, %s39
    %s65 = sphi 0, %s67
    %s68 = sphi 0, %s65
    %s69 = sphi 0, %s68
    %s85 = sphi 0, %s69
    %s89 = sphi 0, %s89
    %s91 = sphi 0, %s89
    %s92 = sphi 0, %s91
    %s106 = sphi 0, %s92
    %s110 = sphi 0, %s110
    %s112 = sphi 0, %s110
    %s113 = sphi 0, %s112
    %s127 = sphi 0, %s113
    %s135 = sphi 0, %s137
    %s138 = sphi 0, %s135
    %s139 = sphi 0, %s138
    %s155 = sphi 0, %s139
    %s163 = sphi 0, %s165
    %s166 = sphi 0, %s163
    %s167 = sphi 0, %s166
    %s183 = sphi 0, %s167
  $region4: #{cycle_generator_forward.17} parent=0 // loop_header_branch
    %14 = sbr.rel (%p12) target = $region8
  $region5: #{cycle_generator_forward.17} parent=0 // loop_body
    %s16 = ssub.s32 %s11, 1
    %s17 = ssub.s32 %s11, 2
    %s24 = sadd.s32 1, %s19
    %p25 = scmp.ge.s32.totalorder %s24, 1
    %s26 = scalar_select %p25, 0, %s24
    %s27 = sadd.s32 1, %s18
    %s28 = scalar_select %p25, %s27, %s18
    %p29 = scmp.ge.s32.totalorder %s28, 2
    %s30 = scalar_select %p29, 0, %s28
    %s31 = ssub.s32 %s18, %s30
    %s32 = ssub.s32 %s19, %s26
    %s33 = sor.u32 %s31, %s32
    %p34 = scmp.eq.s32.totalorder %s33, 0
    %s36 = sadd.s32 %s35, 1
    %s37 = scalar_select %p34, %s35, %s36
    %p40 = pneg %p34
    %p41 = scmp.eq.s32.totalorder %s11, 1
    %p42 = por %p40, %p41
    %p43 = scmp.ne.s32.totalorder %s35, %s38
    %p44 = scmp.eq.s32.totalorder %s11, 0
    %p45 = por %p43, %p44
    %p46 = scmp.ne.s32.totalorder %s35, %s38
    %p47 = scmp.eq.s32.totalorder %s16, 1
    %p48 = por %p46, %p47
    %p49 = scmp.ne.s32.totalorder %s38, %s39
    %p50 = scmp.eq.s32.totalorder %s16, 0
    %p51 = por %p49, %p50
    %p52 = scmp.ne.s32.totalorder %s38, %s39
    %p53 = scmp.eq.s32.totalorder %s17, 1
    %p54 = por %p52, %p53
    %p56 = scmp.ne.s32.totalorder %s39, %s55
    %p57 = scmp.eq.s32.totalorder %s17, 0
    %p58 = por %p56, %p57
    %s59 = sadd.s32 %s19, 1
    %s60 = sadd.s32 %s26, 1
    %s61 = ssub.s32 %s18, %s30
    %s62 = ssub.s32 %s59, %s60
    %s63 = sor.u32 %s61, %s62
    %p64 = scmp.eq.s32.totalorder %s63, 0
    %s66 = sadd.s32 %s65, 1
    %s67 = scalar_select %p64, %s65, %s66
    %p70 = pneg %p64
    %p71 = scmp.eq.s32.totalorder %s11, 1
    %p72 = por %p70, %p71
    %p73 = scmp.ne.s32.totalorder %s65, %s68
    %p74 = scmp.eq.s32.totalorder %s11, 0
    %p75 = por %p73, %p74
    %p76 = scmp.ne.s32.totalorder %s65, %s68
    %p77 = scmp.eq.s32.totalorder %s16, 1
    %p78 = por %p76, %p77
    %p79 = scmp.ne.s32.totalorder %s68, %s69
    %p80 = scmp.eq.s32.totalorder %s16, 0
    %p81 = por %p79, %p80
    %p82 = scmp.ne.s32.totalorder %s68, %s69
    %p83 = scmp.eq.s32.totalorder %s17, 1
    %p84 = por %p82, %p83
    %p86 = scmp.ne.s32.totalorder %s69, %s85
    %p87 = scmp.eq.s32.totalorder %s17, 0
    %p88 = por %p86, %p87
    %s90 = sadd.s32 %s89, 1
    %p93 = scmp.eq.s32.totalorder %s11, 1
    %p94 = scmp.ne.s32.totalorder %s89, %s91
    %p95 = scmp.eq.s32.totalorder %s11, 0
    %p96 = por %p94, %p95
    %p97 = scmp.ne.s32.totalorder %s89, %s91
    %p98 = scmp.eq.s32.totalorder %s16, 1
    %p99 = por %p97, %p98
    %p100 = scmp.ne.s32.totalorder %s91, %s92
    %p101 = scmp.eq.s32.totalorder %s16, 0
    %p102 = por %p100, %p101
    %p103 = scmp.ne.s32.totalorder %s91, %s92
    %p104 = scmp.eq.s32.totalorder %s17, 1
    %p105 = por %p103, %p104
    %p107 = scmp.ne.s32.totalorder %s92, %s106
    %p108 = scmp.eq.s32.totalorder %s17, 0
    %p109 = por %p107, %p108
    %s111 = sadd.s32 %s110, 1
    %p114 = scmp.eq.s32.totalorder %s11, 1
    %p115 = scmp.ne.s32.totalorder %s110, %s112
    %p116 = scmp.eq.s32.totalorder %s11, 0
    %p117 = por %p115, %p116
    %p118 = scmp.ne.s32.totalorder %s110, %s112
    %p119 = scmp.eq.s32.totalorder %s16, 1
    %p120 = por %p118, %p119
    %p121 = scmp.ne.s32.totalorder %s112, %s113
    %p122 = scmp.eq.s32.totalorder %s16, 0
    %p123 = por %p121, %p122
    %p124 = scmp.ne.s32.totalorder %s112, %s113
    %p125 = scmp.eq.s32.totalorder %s17, 1
    %p126 = por %p124, %p125
    %p128 = scmp.ne.s32.totalorder %s113, %s127
    %p129 = scmp.eq.s32.totalorder %s17, 0
    %p130 = por %p128, %p129
    %s131 = ssub.s32 %s18, %s30
    %s132 = ssub.s32 %s19, %s26
    %s133 = sor.u32 %s131, %s132
    %p134 = scmp.eq.s32.totalorder %s133, 0
    %s136 = sadd.s32 %s135, 1
    %s137 = scalar_select %p134, %s135, %s136
    %p140 = pneg %p134
    %p141 = scmp.eq.s32.totalorder %s11, 1
    %p142 = por %p140, %p141
    %p143 = scmp.ne.s32.totalorder %s135, %s138
    %p144 = scmp.eq.s32.totalorder %s11, 0
    %p145 = por %p143, %p144
    %p146 = scmp.ne.s32.totalorder %s135, %s138
    %p147 = scmp.eq.s32.totalorder %s16, 1
    %p148 = por %p146, %p147
    %p149 = scmp.ne.s32.totalorder %s138, %s139
    %p150 = scmp.eq.s32.totalorder %s16, 0
    %p151 = por %p149, %p150
    %p152 = scmp.ne.s32.totalorder %s138, %s139
    %p153 = scmp.eq.s32.totalorder %s17, 1
    %p154 = por %p152, %p153
    %p156 = scmp.ne.s32.totalorder %s139, %s155
    %p157 = scmp.eq.s32.totalorder %s17, 0
    %p158 = por %p156, %p157
    %s159 = ssub.s32 %s18, %s30
    %s160 = ssub.s32 %s19, %s26
    %s161 = sor.u32 %s159, %s160
    %p162 = scmp.eq.s32.totalorder %s161, 0
    %s164 = sadd.s32 %s163, 1
    %s165 = scalar_select %p162, %s163, %s164
    %p168 = pneg %p162
    %p169 = scmp.eq.s32.totalorder %s11, 1
    %p170 = por %p168, %p169
    %p171 = scmp.ne.s32.totalorder %s163, %s166
    %p172 = scmp.eq.s32.totalorder %s11, 0
    %p173 = por %p171, %p172
    %p174 = scmp.ne.s32.totalorder %s163, %s166
    %p175 = scmp.eq.s32.totalorder %s16, 1
    %p176 = por %p174, %p175
    %p177 = scmp.ne.s32.totalorder %s166, %s167
    %p178 = scmp.eq.s32.totalorder %s16, 0
    %p179 = por %p177, %p178
    %p180 = scmp.ne.s32.totalorder %s166, %s167
    %p181 = scmp.eq.s32.totalorder %s17, 1
    %p182 = por %p180, %p181
    %p184 = scmp.ne.s32.totalorder %s167, %s183
    %p185 = scmp.eq.s32.totalorder %s17, 0
    %p186 = por %p184, %p185
    %p187 = scmp.le.s32.totalorder 1, %s11
    %p188 = scmp.lt.s32.totalorder %s11, 3
    %p189 = pnand %p187, %p188
    %p190 = pneg %p189
    // Predicated region
    $region9: #{cycle_generator_forward.17} parent=5 // pred_check
      _
    $region10: #{cycle_generator_forward.17} parent=5 // pred_check_branch
      %192 = sbr.rel (%p189) target = $region12
    $region11: #{cycle_generator_forward.17} parent=5 // pred_region
      %s193 = ssub.s32 %s11, 1
      // Predicated region
      $region13: #{cycle_generator_forward.17} parent=11 // pred_check
        %p194 = pneg %p102
      $region14: #{cycle_generator_forward.17} parent=11 // pred_check_branch
        %196 = sbr.rel (%p194) target = $region16
      $region15: #{cycle_generator_forward.17} parent=11 // pred_region
        _
      $region16: #{cycle_generator_forward.17} parent=11 // pred_fallthru
        _
      // Predicated region
      $region17: #{cycle_generator_forward.17} parent=11 // pred_check
        %p197 = pneg %p123
      $region18: #{cycle_generator_forward.17} parent=11 // pred_check_branch
        %199 = sbr.rel (%p197) target = $region20
      $region19: #{cycle_generator_forward.17} parent=11 // pred_region
        _
      $region20: #{cycle_generator_forward.17} parent=11 // pred_fallthru
        _
    $region12: #{cycle_generator_forward.17} parent=5 // pred_fallthru
      _
    %p200 = scmp.lt.s32.totalorder %s11, 2
    // Predicated region
    $region21: #{cycle_generator_forward.17} parent=5 // pred_check
      %p201 = pneg %p200
    $region22: #{cycle_generator_forward.17} parent=5 // pred_check_branch
      %203 = sbr.rel (%p201) target = $region24
    $region23: #{cycle_generator_forward.17} parent=5 // pred_region
      // Predicated region
      $region25: #{cycle_generator_forward.17} parent=23 // pred_check
        %p204 = pneg %p45
      $region26: #{cycle_generator_forward.17} parent=23 // pred_check_branch
        %206 = sbr.rel (%p204) target = $region28
      $region27: #{cycle_generator_forward.17} parent=23 // pred_region
        %s207 = smul.u32 2, %s19
        %p208 = scmp.lt.s32.totalorder %s18, 1
        %s209 = scalar_select %p208, %s18, 1
        %p210 = scmp.lt.s32.totalorder %s207, 3
        %s211 = scalar_select %p210, %s207, 3
        %s212 = smul.addr %s209, 4
        %s213 = sadd.s32 %s211, %s212
        %s214 = smul.addr %s213, 4
        %s215 = scalar_lea.vmem %s0, %s214
        %s216 = smul.u32 2, %s19
      $region28: #{cycle_generator_forward.17} parent=23 // pred_fallthru
        _
      // Predicated region
      $region29: #{cycle_generator_forward.17} parent=23 // pred_check
        %p217 = pneg %p75
      $region30: #{cycle_generator_forward.17} parent=23 // pred_check_branch
        %219 = sbr.rel (%p217) target = $region32
      $region31: #{cycle_generator_forward.17} parent=23 // pred_region
        %s220 = sadd.s32 %s19, 1
        %s221 = smul.u32 2, %s220
        %p222 = scmp.lt.s32.totalorder %s18, 1
        %s223 = scalar_select %p222, %s18, 1
        %p224 = scmp.lt.s32.totalorder %s221, 3
        %s225 = scalar_select %p224, %s221, 3
        %s226 = smul.addr %s223, 4
        %s227 = sadd.s32 %s225, %s226
        %s228 = smul.addr %s227, 4
        %s229 = scalar_lea.vmem %s1, %s228
        %s230 = sadd.s32 %s19, 1
        %s231 = smul.u32 2, %s230
      $region32: #{cycle_generator_forward.17} parent=23 // pred_fallthru
        _
      // Predicated region
      $region33: #{cycle_generator_forward.17} parent=23 // pred_check
        %p232 = pneg %p145
      $region34: #{cycle_generator_forward.17} parent=23 // pred_check_branch
        %234 = sbr.rel (%p232) target = $region36
      $region35: #{cycle_generator_forward.17} parent=23 // pred_region
        %s235 = smul.u32 2, %s19
        %p236 = scmp.lt.s32.totalorder %s18, 1
        %s237 = scalar_select %p236, %s18, 1
        %p238 = scmp.lt.s32.totalorder %s235, 1
        %s239 = scalar_select %p238, %s235, 1
        %s240 = smul.addr %s237, 2
        %s241 = sadd.s32 %s239, %s240
        %s242 = smul.addr %s241, 4
        %s243 = scalar_lea.vmem %s4, %s242
        %s244 = smul.u32 2, %s19
      $region36: #{cycle_generator_forward.17} parent=23 // pred_fallthru
        _
    $region24: #{cycle_generator_forward.17} parent=5 // pred_fallthru
      _
    %p245 = scmp.le.s32.totalorder 1, %s11
    %p246 = scmp.lt.s32.totalorder %s11, 3
    %p247 = pnand %p245, %p246
    %p248 = pneg %p247
    // Predicated region
    $region37: #{cycle_generator_forward.17} parent=5 // pred_check
      _
    $region38: #{cycle_generator_forward.17} parent=5 // pred_check_branch
      %250 = sbr.rel (%p247) target = $region40
    $region39: #{cycle_generator_forward.17} parent=5 // pred_region
      %s251 = ssub.s32 %s11, 1
      %s252 = smul.u32 2, %s21
      %p253 = scmp.lt.s32.totalorder %s20, 1
      %s254 = scalar_select %p253, %s20, 1
      %p255 = scmp.lt.s32.totalorder %s252, 3
      %s256 = scalar_select %p255, %s252, 3
      %s257 = smul.addr %s254, 4
      %s258 = sadd.s32 %s256, %s257
      %s259 = smul.addr %s258, 4
      %s260 = scalar_lea.vmem %s0, %s259
      %p261 = pneg %p51
      %p262 = pneg %p48
      %s263 = sadd.s32 %s21, 1
      %s264 = smul.u32 2, %s263
      %p265 = scmp.lt.s32.totalorder %s20, 1
      %s266 = scalar_select %p265, %s20, 1
      %p267 = scmp.lt.s32.totalorder %s264, 3
      %s268 = scalar_select %p267, %s264, 3
      %s269 = smul.addr %s266, 4
      %s270 = sadd.s32 %s268, %s269
      %s271 = smul.addr %s270, 4
      %s272 = scalar_lea.vmem %s1, %s271
      %p273 = pneg %p81
      %p274 = pneg %p78
      %p275 = pneg %p102
      %p276 = pneg %p99
      %p277 = pneg %p123
      %p278 = pneg %p120
      %s279 = smul.u32 2, %s21
      %p280 = scmp.lt.s32.totalorder %s20, 1
      %s281 = scalar_select %p280, %s20, 1
      %p282 = scmp.lt.s32.totalorder %s279, 1
      %s283 = scalar_select %p282, %s279, 1
      %s284 = smul.addr %s281, 2
      %s285 = sadd.s32 %s283, %s284
      %s286 = smul.addr %s285, 4
      %s287 = scalar_lea.vmem %s4, %s286
      %p288 = pneg %p151
      %p289 = pneg %p148
      %p290 = pneg %p179
      %p291 = pneg %p176
      %s292 = smul.u32 2, %s21
      %p293 = scmp.lt.s32.totalorder %s20, 1
      %s294 = scalar_select %p293, %s20, 1
      %p295 = scmp.lt.s32.totalorder %s292, 1
      %s296 = scalar_select %p295, %s292, 1
      %s297 = smul.addr %s294, 2
      %s298 = sadd.s32 %s296, %s297
      %s299 = smul.addr %s298, 4
      %s300 = scalar_lea.vmem %s5, %s299
      %s301 = smul.u32 2, %s21
      %p302 = scmp.lt.s32.totalorder %s20, 1
      %s303 = scalar_select %p302, %s20, 1
      %p304 = scmp.lt.s32.totalorder %s301, 3
      %s305 = scalar_select %p304, %s301, 3
      %s306 = smul.addr %s303, 4
      %s307 = sadd.s32 %s305, %s306
      %s308 = smul.addr %s307, 4
      %s309 = scalar_lea.vmem %s0, %s308
      %s310 = smul.u32 2, %s21
      %s311 = sadd.s32 %s21, 1
      %s312 = smul.u32 2, %s311
      %p313 = scmp.lt.s32.totalorder %s20, 1
      %s314 = scalar_select %p313, %s20, 1
      %p315 = scmp.lt.s32.totalorder %s312, 3
      %s316 = scalar_select %p315, %s312, 3
      %s317 = smul.addr %s314, 4
      %s318 = sadd.s32 %s316, %s317
      %s319 = smul.addr %s318, 4
      %s320 = scalar_lea.vmem %s1, %s319
      %s321 = sadd.s32 %s21, 1
      %s322 = smul.u32 2, %s321
      %s323 = smul.u32 2, %s21
      %p324 = scmp.lt.s32.totalorder %s20, 1
      %s325 = scalar_select %p324, %s20, 1
      %p326 = scmp.lt.s32.totalorder %s323, 1
      %s327 = scalar_select %p326, %s323, 1
      %s328 = smul.addr %s325, 2
      %s329 = sadd.s32 %s327, %s328
      %s330 = smul.addr %s329, 4
      %s331 = scalar_lea.vmem %s4, %s330
      %s332 = smul.u32 2, %s21
      %s333 = smul.u32 2, %s21
      %p334 = scmp.lt.s32.totalorder %s20, 1
      %s335 = scalar_select %p334, %s20, 1
      %p336 = scmp.lt.s32.totalorder %s333, 1
      %s337 = scalar_select %p336, %s333, 1
      %s338 = smul.addr %s335, 2
      %s339 = sadd.s32 %s337, %s338
      %s340 = smul.addr %s339, 4
      %s341 = scalar_lea.vmem %s5, %s340
      %s342 = smul.u32 2, %s21
      %v344 = vld [vmem:[%s309] sm:$0xf]
      %v345 = vld [vmem:[%s309 + $0x4] sm:$0xf]
      %v346 = vld [vmem:[%s320] sm:$0xf]
      %v347 = vld [vmem:[%s320 + $0x4] sm:$0xf]
      %v350 = vunpack.c.l.b16 %v344
      %v351 = vunpack.c.l.b16 %v345
      %v352 = vpack.c.b16 %v351, %v350
      %v356 = vunpack.c.l.b16 %v346
      %v357 = vunpack.c.l.b16 %v347
      %v358 = vpack.c.b16 %v357, %v356
      %v360 = vld [vmem:[%s2] sm:$0xf]
      %v361 = vld [vmem:[%s2 + $0x4] sm:$0xf]
      %v362 = vld [vmem:[%s2 + $0x8] sm:$0xf]
      %v363 = vld [vmem:[%s2 + $0xc] sm:$0xf]
      %v364 = vld [vmem:[%s2 + $0x10] sm:$0xf]
      %v365 = vld [vmem:[%s2 + $0x14] sm:$0xf]
      %v366 = vld [vmem:[%s2 + $0x18] sm:$0xf]
      %v367 = vld [vmem:[%s2 + $0x1c] sm:$0xf]
      %v368 = vld [vmem:[%s2 + $0x20] sm:$0xf]
      %v369 = vld [vmem:[%s2 + $0x24] sm:$0xf]
      %v370 = vld [vmem:[%s2 + $0x28] sm:$0xf]
      %v371 = vld [vmem:[%s2 + $0x2c] sm:$0xf]
      %v372 = vld [vmem:[%s2 + $0x30] sm:$0xf]
      %v373 = vld [vmem:[%s2 + $0x34] sm:$0xf]
      %v374 = vld [vmem:[%s2 + $0x38] sm:$0xf]
      %v375 = vld [vmem:[%s2 + $0x3c] sm:$0xf]
      %v392 = vunpack.c.l.b16 %v360
      %v393 = vunpack.c.l.b16 %v361
      %v394 = vunpack.c.l.b16 %v362
      %v395 = vunpack.c.l.b16 %v363
      %v396 = vunpack.c.l.b16 %v364
      %v397 = vunpack.c.l.b16 %v365
      %v398 = vunpack.c.l.b16 %v366
      %v399 = vunpack.c.l.b16 %v367
      %v400 = vunpack.c.l.b16 %v368
      %v401 = vunpack.c.l.b16 %v369
      %v402 = vunpack.c.l.b16 %v370
      %v403 = vunpack.c.l.b16 %v371
      %v404 = vunpack.c.l.b16 %v372
      %v405 = vunpack.c.l.b16 %v373
      %v406 = vunpack.c.l.b16 %v374
      %v407 = vunpack.c.l.b16 %v375
      %v408 = vpack.c.b16 %v393, %v392
      %v409 = vpack.c.b16 %v395, %v394
      %v410 = vpack.c.b16 %v397, %v396
      %v411 = vpack.c.b16 %v399, %v398
      %v412 = vpack.c.b16 %v401, %v400
      %v413 = vpack.c.b16 %v403, %v402
      %v414 = vpack.c.b16 %v405, %v404
      %v415 = vpack.c.b16 %v407, %v406
      %424 = vmatprep.subr.bf16.mxu0 0
      %425 = vmatpush1.bf16.msra.mxu0 %v408
      %426 = vmatprep.subr.bf16.mxu0 0
      %427 = vmatpush1.bf16.msra.mxu0 %v409
      %428 = vmatprep.subr.bf16.mxu0 0
      %429 = vmatpush1.bf16.msra.mxu0 %v410
      %430 = vmatprep.subr.bf16.mxu0 0
      %431 = vmatpush1.bf16.msra.mxu0 %v411
      %432 = vmatprep.subr.bf16.mxu0 0
      %433 = vmatpush1.bf16.msra.mxu0 %v412
      %434 = vmatprep.subr.bf16.mxu0 0
      %435 = vmatpush1.bf16.msra.mxu0 %v413
      %436 = vmatprep.subr.bf16.mxu0 0
      %437 = vmatpush1.bf16.msra.mxu0 %v414
      %438 = vmatprep.subr.bf16.mxu0 0
      %439 = vmatpush1.bf16.msra.mxu0 %v415
      %440 = vmatprep.subr.bf16.mxu0 0
      %441 = vmatpush1.bf16.msra.mxu0 0
      %442 = vmatprep.subr.bf16.mxu0 0
      %443 = vmatpush1.bf16.msra.mxu0 0
      %444 = vmatprep.subr.bf16.mxu0 0
      %445 = vmatpush1.bf16.msra.mxu0 0
      %446 = vmatprep.subr.bf16.mxu0 0
      %447 = vmatpush1.bf16.msra.mxu0 0
      %448 = vmatprep.subr.bf16.mxu0 0
      %449 = vmatpush1.bf16.msra.mxu0 0
      %450 = vmatprep.subr.bf16.mxu0 0
      %451 = vmatpush1.bf16.msra.mxu0 0
      %452 = vmatprep.subr.bf16.mxu0 0
      %453 = vmatpush1.bf16.msra.mxu0 0
      %454 = vmatprep.subr.bf16.mxu0 0
      %455 = vmatpush1.bf16.msra.mxu0 0
      %456 = vmatprep.mubr.bf16.mxu0 0
      %457 = vmatmul.mubr.bf16.gmra.mrb[0].mxu0 %v352
      %v458 = vpop.f32.mrb[0].mxu0
      %v459 = vadd.f32 0.0, %v458
      %v460 = vpop.f32.mrb[0].mxu0
      %v461 = vpop.f32.mrb[0].mxu0
      %v462 = vadd.f32 0.0, %v461
      %v463 = vpop.f32.mrb[0].mxu0
      %464 = vmatprep.mubr.bf16.mxu0 0
      %465 = vmatmul.mubr.bf16.gmra.mrb[0].mxu0 %v358
      %v466 = vpop.f32.mrb[0].mxu0
      %v467 = vpop.f32.mrb[0].mxu0
      %v468 = vpop.f32.mrb[0].mxu0
      %v469 = vpop.f32.mrb[0].mxu0
      %470 = vdwg.mxu0
      %v471 = vadd.f32 %v459, 0.0
      %v472 = vadd.f32 %v462, 0.0
      %s473 = scalar_lea.vmem %s2, 64
      %v474 = vld [vmem:[%s473] sm:$0xf]
      %v475 = vld [vmem:[%s473 + $0x4] sm:$0xf]
      %v476 = vld [vmem:[%s473 + $0x8] sm:$0xf]
      %v477 = vld [vmem:[%s473 + $0xc] sm:$0xf]
      %v478 = vld [vmem:[%s473 + $0x10] sm:$0xf]
      %v479 = vld [vmem:[%s473 + $0x14] sm:$0xf]
      %v480 = vld [vmem:[%s473 + $0x18] sm:$0xf]
      %v481 = vld [vmem:[%s473 + $0x1c] sm:$0xf]
      %v482 = vld [vmem:[%s473 + $0x20] sm:$0xf]
      %v483 = vld [vmem:[%s473 + $0x24] sm:$0xf]
      %v484 = vld [vmem:[%s473 + $0x28] sm:$0xf]
      %v485 = vld [vmem:[%s473 + $0x2c] sm:$0xf]
      %v486 = vld [vmem:[%s473 + $0x30] sm:$0xf]
      %v487 = vld [vmem:[%s473 + $0x34] sm:$0xf]
      %v488 = vld [vmem:[%s473 + $0x38] sm:$0xf]
      %v489 = vld [vmem:[%s473 + $0x3c] sm:$0xf]
      %v506 = vunpack.c.l.b16 %v474
      %v507 = vunpack.c.l.b16 %v475
      %v508 = vunpack.c.l.b16 %v476
      %v509 = vunpack.c.l.b16 %v477
      %v510 = vunpack.c.l.b16 %v478
      %v511 = vunpack.c.l.b16 %v479
      %v512 = vunpack.c.l.b16 %v480
      %v513 = vunpack.c.l.b16 %v481
      %v514 = vunpack.c.l.b16 %v482
      %v515 = vunpack.c.l.b16 %v483
      %v516 = vunpack.c.l.b16 %v484
      %v517 = vunpack.c.l.b16 %v485
      %v518 = vunpack.c.l.b16 %v486
      %v519 = vunpack.c.l.b16 %v487
      %v520 = vunpack.c.l.b16 %v488
      %v521 = vunpack.c.l.b16 %v489
      %v522 = vpack.c.b16 %v507, %v506
      %v523 = vpack.c.b16 %v509, %v508
      %v524 = vpack.c.b16 %v511, %v510
      %v525 = vpack.c.b16 %v513, %v512
      %v526 = vpack.c.b16 %v515, %v514
      %v527 = vpack.c.b16 %v517, %v516
      %v528 = vpack.c.b16 %v519, %v518
      %v529 = vpack.c.b16 %v521, %v520
      %538 = vmatprep.subr.bf16.mxu0 0
      %539 = vmatpush1.bf16.msra.mxu0 %v522
      %540 = vmatprep.subr.bf16.mxu0 0
      %541 = vmatpush1.bf16.msra.mxu0 %v523
      %542 = vmatprep.subr.bf16.mxu0 0
      %543 = vmatpush1.bf16.msra.mxu0 %v524
      %544 = vmatprep.subr.bf16.mxu0 0
      %545 = vmatpush1.bf16.msra.mxu0 %v525
      %546 = vmatprep.subr.bf16.mxu0 0
      %547 = vmatpush1.bf16.msra.mxu0 %v526
      %548 = vmatprep.subr.bf16.mxu0 0
      %549 = vmatpush1.bf16.msra.mxu0 %v527
      %550 = vmatprep.subr.bf16.mxu0 0
      %551 = vmatpush1.bf16.msra.mxu0 %v528
      %552 = vmatprep.subr.bf16.mxu0 0
      %553 = vmatpush1.bf16.msra.mxu0 %v529
      %554 = vmatprep.subr.bf16.mxu0 0
      %555 = vmatpush1.bf16.msra.mxu0 0
      %556 = vmatprep.subr.bf16.mxu0 0
      %557 = vmatpush1.bf16.msra.mxu0 0
      %558 = vmatprep.subr.bf16.mxu0 0
      %559 = vmatpush1.bf16.msra.mxu0 0
      %560 = vmatprep.subr.bf16.mxu0 0
      %561 = vmatpush1.bf16.msra.mxu0 0
      %562 = vmatprep.subr.bf16.mxu0 0
      %563 = vmatpush1.bf16.msra.mxu0 0
      %564 = vmatprep.subr.bf16.mxu0 0
      %565 = vmatpush1.bf16.msra.mxu0 0
      %566 = vmatprep.subr.bf16.mxu0 0
      %567 = vmatpush1.bf16.msra.mxu0 0
      %568 = vmatprep.subr.bf16.mxu0 0
      %569 = vmatpush1.bf16.msra.mxu0 0
      %570 = vmatprep.mubr.bf16.mxu0 0
      %571 = vmatmul.mubr.bf16.gmra.mrb[0].mxu0 %v352
      %v572 = vpop.f32.mrb[0].mxu0
      %v573 = vadd.f32 0.0, %v572
      %v574 = vpop.f32.mrb[0].mxu0
      %v575 = vpop.f32.mrb[0].mxu0
      %v576 = vadd.f32 0.0, %v575
      %v577 = vpop.f32.mrb[0].mxu0
      %578 = vmatprep.mubr.bf16.mxu0 0
      %579 = vmatmul.mubr.bf16.gmra.mrb[0].mxu0 %v358
      %v580 = vpop.f32.mrb[0].mxu0
      %v581 = vadd.f32 0.0, %v580
      %v582 = vpop.f32.mrb[0].mxu0
      %v583 = vpop.f32.mrb[0].mxu0
      %v584 = vpop.f32.mrb[0].mxu0
      %585 = vdwg.mxu0
      %vm589 = vcmask 1046528
      %v590 = vrot.slane %v573, 1
      %v591 = vrot.slane %v576, 1
      %v592 = vsel %vm589, %v590, %v591
      %v593 = vrot.slane %v581, 1
      %v594 = vsel %vm589, %v591, %v593
      %v597 = vadd.f32 %v471, %v592
      %v598 = vadd.f32 %v472, %v594
      %s599 = scalar_lea.vmem %s2, 128
      %v600 = vld [vmem:[%s599] sm:$0xf]
      %v601 = vld [vmem:[%s599 + $0x4] sm:$0xf]
      %v602 = vld [vmem:[%s599 + $0x8] sm:$0xf]
      %v603 = vld [vmem:[%s599 + $0xc] sm:$0xf]
      %v604 = vld [vmem:[%s599 + $0x10] sm:$0xf]
      %v605 = vld [vmem:[%s599 + $0x14] sm:$0xf]
      %v606 = vld [vmem:[%s599 + $0x18] sm:$0xf]
      %v607 = vld [vmem:[%s599 + $0x1c] sm:$0xf]
      %v608 = vld [vmem:[%s599 + $0x20] sm:$0xf]
      %v609 = vld [vmem:[%s599 + $0x24] sm:$0xf]
      %v610 = vld [vmem:[%s599 + $0x28] sm:$0xf]
      %v611 = vld [vmem:[%s599 + $0x2c] sm:$0xf]
      %v612 = vld [vmem:[%s599 + $0x30] sm:$0xf]
      %v613 = vld [vmem:[%s599 + $0x34] sm:$0xf]
      %v614 = vld [vmem:[%s599 + $0x38] sm:$0xf]
      %v615 = vld [vmem:[%s599 + $0x3c] sm:$0xf]
      %v632 = vunpack.c.l.b16 %v600
      %v633 = vunpack.c.l.b16 %v601
      %v634 = vunpack.c.l.b16 %v602
      %v635 = vunpack.c.l.b16 %v603
      %v636 = vunpack.c.l.b16 %v604
      %v637 = vunpack.c.l.b16 %v605
      %v638 = vunpack.c.l.b16 %v606
      %v639 = vunpack.c.l.b16 %v607
      %v640 = vunpack.c.l.b16 %v608
      %v641 = vunpack.c.l.b16 %v609
      %v642 = vunpack.c.l.b16 %v610
      %v643 = vunpack.c.l.b16 %v611
      %v644 = vunpack.c.l.b16 %v612
      %v645 = vunpack.c.l.b16 %v613
      %v646 = vunpack.c.l.b16 %v614
      %v647 = vunpack.c.l.b16 %v615
      %v648 = vpack.c.b16 %v633, %v632
      %v649 = vpack.c.b16 %v635, %v634
      %v650 = vpack.c.b16 %v637, %v636
      %v651 = vpack.c.b16 %v639, %v638
      %v652 = vpack.c.b16 %v641, %v640
      %v653 = vpack.c.b16 %v643, %v642
      %v654 = vpack.c.b16 %v645, %v644
      %v655 = vpack.c.b16 %v647, %v646
      %664 = vmatprep.subr.bf16.mxu0 0
      %665 = vmatpush1.bf16.msra.mxu0 %v648
      %666 = vmatprep.subr.bf16.mxu0 0
      %667 = vmatpush1.bf16.msra.mxu0 %v649
      %668 = vmatprep.subr.bf16.mxu0 0
      %669 = vmatpush1.bf16.msra.mxu0 %v650
      %670 = vmatprep.subr.bf16.mxu0 0
      %671 = vmatpush1.bf16.msra.mxu0 %v651
      %672 = vmatprep.subr.bf16.mxu0 0
      %673 = vmatpush1.bf16.msra.mxu0 %v652
      %674 = vmatprep.subr.bf16.mxu0 0
      %675 = vmatpush1.bf16.msra.mxu0 %v653
      %676 = vmatprep.subr.bf16.mxu0 0
      %677 = vmatpush1.bf16.msra.mxu0 %v654
      %678 = vmatprep.subr.bf16.mxu0 0
      %679 = vmatpush1.bf16.msra.mxu0 %v655
      %680 = vmatprep.subr.bf16.mxu0 0
      %681 = vmatpush1.bf16.msra.mxu0 0
      %682 = vmatprep.subr.bf16.mxu0 0
      %683 = vmatpush1.bf16.msra.mxu0 0
      %684 = vmatprep.subr.bf16.mxu0 0
      %685 = vmatpush1.bf16.msra.mxu0 0
      %686 = vmatprep.subr.bf16.mxu0 0
      %687 = vmatpush1.bf16.msra.mxu0 0
      %688 = vmatprep.subr.bf16.mxu0 0
      %689 = vmatpush1.bf16.msra.mxu0 0
      %690 = vmatprep.subr.bf16.mxu0 0
      %691 = vmatpush1.bf16.msra.mxu0 0
      %692 = vmatprep.subr.bf16.mxu0 0
      %693 = vmatpush1.bf16.msra.mxu0 0
      %694 = vmatprep.subr.bf16.mxu0 0
      %695 = vmatpush1.bf16.msra.mxu0 0
      %696 = vmatprep.mubr.bf16.mxu0 0
      %697 = vmatmul.mubr.bf16.gmra.mrb[0].mxu0 %v352
      %v698 = vpop.f32.mrb[0].mxu0
      %v699 = vadd.f32 0.0, %v698
      %v700 = vpop.f32.mrb[0].mxu0
      %v701 = vpop.f32.mrb[0].mxu0
      %v702 = vadd.f32 0.0, %v701
      %v703 = vpop.f32.mrb[0].mxu0
      %704 = vmatprep.mubr.bf16.mxu0 0
      %705 = vmatmul.mubr.bf16.gmra.mrb[0].mxu0 %v358
      %v706 = vpop.f32.mrb[0].mxu0
      %v707 = vadd.f32 0.0, %v706
      %v708 = vpop.f32.mrb[0].mxu0
      %v709 = vpop.f32.mrb[0].mxu0
      %v710 = vpop.f32.mrb[0].mxu0
      %711 = vdwg.mxu0
      %vm715 = vcmask 1045504
      %v716 = vrot.slane %v699, 2
      %v717 = vrot.slane %v702, 2
      %v718 = vsel %vm715, %v716, %v717
      %v719 = vrot.slane %v707, 2
      %v720 = vsel %vm715, %v717, %v719
      %v723 = vadd.f32 %v597, %v718
      %v724 = vadd.f32 %v598, %v720
      %v725 = vld [vmem:[%s3] sm:$0x1]
      %v727 = vlaneseq
      %v728 = vshrl.u32 %v727, 7
      %v729 = vsub.s32 0, %v728
      %v730 = vrot.slane %v725, %v729
      %v732 = vadd.f32 %v723, %v730
      %v733 = vadd.f32 %v724, %v730
      %v734 = vld [vmem:[%s331] sm:$0xf]
      %v735 = vld [vmem:[%s331 + $0x4] sm:$0xf]
      %v736 = vunpack.c.l.bf16 %v734
      %v737 = vunpack.c.l.bf16 %v735
      %v738 = vadd.f32 %v732, %v736
      %v739 = vadd.f32 %v733, %v737
      %v740 = vpack.c.bf16 %v739, %v738
      %v742 = vunpack.c.l.b16 %v740
      %v743 = vunpack.c.h.b16 %v740
      %v744 = vpack.c.b16 %v742, %v742
      %v745 = vpack.c.b16 %v743, %v743
      %748 = vst [vmem:[%s341] sm:$0xf] %v744
      %749 = vst [vmem:[%s341 + $0x4] sm:$0xf] %v745
      %s750 = smul.u32 2, %s21
      %p751 = scmp.lt.s32.totalorder %s20, 1
      %s752 = scalar_select %p751, %s20, 1
      %p753 = scmp.lt.s32.totalorder %s750, 1
      %s754 = scalar_select %p753, %s750, 1
      %s755 = smul.addr %s752, 2
      %s756 = sadd.s32 %s754, %s755
      %s757 = smul.addr %s756, 4
      %s758 = scalar_lea.vmem %s5, %s757
      // Predicated region
      $region41: #{cycle_generator_forward.17} parent=39 // pred_check
        %p759 = pneg %p176
      $region42: #{cycle_generator_forward.17} parent=39 // pred_check_branch
        %761 = sbr.rel (%p759) target = $region44
      $region43: #{cycle_generator_forward.17} parent=39 // pred_region
        %s762 = smul.u32 2, %s21
      $region44: #{cycle_generator_forward.17} parent=39 // pred_fallthru
        _
    $region40: #{cycle_generator_forward.17} parent=5 // pred_fallthru
      _
    %p763 = scmp.le.s32.totalorder 2, %s11
    // Predicated region
    $region45: #{cycle_generator_forward.17} parent=5 // pred_check
      %p764 = pneg %p763
    $region46: #{cycle_generator_forward.17} parent=5 // pred_check_branch
      %766 = sbr.rel (%p764) target = $region48
    $region47: #{cycle_generator_forward.17} parent=5 // pred_region
      %s767 = ssub.s32 %s11, 2
      // Predicated region
      $region49: #{cycle_generator_forward.17} parent=47 // pred_check
        %p768 = pneg %p182
      $region50: #{cycle_generator_forward.17} parent=47 // pred_check_branch
        %770 = sbr.rel (%p768) target = $region52
      $region51: #{cycle_generator_forward.17} parent=47 // pred_region
        %s771 = smul.u32 2, %s23
        %p772 = scmp.lt.s32.totalorder %s22, 1
        %s773 = scalar_select %p772, %s22, 1
        %p774 = scmp.lt.s32.totalorder %s771, 1
        %s775 = scalar_select %p774, %s771, 1
        %s776 = smul.addr %s773, 2
        %s777 = sadd.s32 %s775, %s776
        %s778 = smul.addr %s777, 4
        %s779 = scalar_lea.vmem %s5, %s778
      $region52: #{cycle_generator_forward.17} parent=47 // pred_fallthru
        _
    $region48: #{cycle_generator_forward.17} parent=5 // pred_fallthru
      _
  $region6: #{cycle_generator_forward.17} parent=0 // loop_footer
    %s15 = sadd.s32 1, %s11
  $region7: #{cycle_generator_forward.17} parent=0 // loop_footer_branch
    %10 = sbr.rel target = $region3
  $region8: #{cycle_generator_forward.17} parent=0 // loop_exit
    _

// kernel: cycle_generator_forward.15
$region0: #{cycle_generator_forward.15}
  #allocation0 [shape = 'u32[]', space=smem, size = 0x4, offset = 0x4, fixed_abs, tag = 'smem constant byte address 0x4 - core index']
  #allocation1 [shape = 'u32[144,128]{1,0:T(1,128)}', space=vmem, size = 0x12000, scoped, tag = 'internal scratch']
  %s0 = inlined_call_operand.vmem [shape: bf16[2,32,256], index: 0, kind: input, shape index: {}, may-alias: {0,1}]
  %s1 = inlined_call_operand.vmem [shape: bf16[2,32,256], index: 1, kind: input, shape index: {}, may-alias: {0,1}]
  %s2 = inlined_call_operand.vmem [shape: bf16[7,256,128], index: 2, kind: input, shape index: {}]
  %s3 = inlined_call_operand.vmem [shape: f32[1,128], index: 3, kind: input, shape index: {}]
  %s4 = inlined_call_operand.vmem [shape: bf16[2,16,128], index: 4, kind: output, shape index: {}]
  %s5 = sld [smem:[#allocation0]]
  $region49: #{cycle_generator_forward.15} parent=0
    _
  %s7 = ssub.s32 1, %s5
  %s8 = scalar_select 0, %s7, %s5
  loop: start=0, step=1, limit=4
  $region2: #{cycle_generator_forward.15} parent=0 // loop_pre_header
    _
  $region3: #{cycle_generator_forward.15} parent=0 // loop_header
    %s10 = sphi 0, %s14
    %p11 = scmp.ge.s32.totalorder %s10, 4
    %s17 = sphi 0, %s29
    %s18 = sphi 0, %s25
    %s19 = sphi 0, %s17
    %s20 = sphi 0, %s18
    %s21 = sphi 0, %s19
    %s22 = sphi 0, %s20
    %s34 = sphi 0, %s36
    %s37 = sphi 0, %s34
    %s38 = sphi 0, %s37
    %s54 = sphi 0, %s38
    %s64 = sphi 0, %s66
    %s67 = sphi 0, %s64
    %s68 = sphi 0, %s67
    %s84 = sphi 0, %s68
    %s88 = sphi 0, %s88
    %s90 = sphi 0, %s88
    %s91 = sphi 0, %s90
    %s105 = sphi 0, %s91
    %s109 = sphi 0, %s109
    %s111 = sphi 0, %s109
    %s112 = sphi 0, %s111
    %s126 = sphi 0, %s112
    %s134 = sphi 0, %s136
    %s137 = sphi 0, %s134
    %s138 = sphi 0, %s137
    %s154 = sphi 0, %s138
  $region4: #{cycle_generator_forward.15} parent=0 // loop_header_branch
    %13 = sbr.rel (%p11) target = $region8
  $region5: #{cycle_generator_forward.15} parent=0 // loop_body
    %s15 = ssub.s32 %s10, 1
    %s16 = ssub.s32 %s10, 2
    %s23 = sadd.s32 1, %s18
    %p24 = scmp.ge.s32.totalorder %s23, 1
    %s25 = scalar_select %p24, 0, %s23
    %s26 = sadd.s32 1, %s17
    %s27 = scalar_select %p24, %s26, %s17
    %p28 = scmp.ge.s32.totalorder %s27, 2
    %s29 = scalar_select %p28, 0, %s27
    %s30 = ssub.s32 %s17, %s29
    %s31 = ssub.s32 %s18, %s25
    %s32 = sor.u32 %s30, %s31
    %p33 = scmp.eq.s32.totalorder %s32, 0
    %s35 = sadd.s32 %s34, 1
    %s36 = scalar_select %p33, %s34, %s35
    %p39 = pneg %p33
    %p40 = scmp.eq.s32.totalorder %s10, 1
    %p41 = por %p39, %p40
    %p42 = scmp.ne.s32.totalorder %s34, %s37
    %p43 = scmp.eq.s32.totalorder %s10, 0
    %p44 = por %p42, %p43
    %p45 = scmp.ne.s32.totalorder %s34, %s37
    %p46 = scmp.eq.s32.totalorder %s15, 1
    %p47 = por %p45, %p46
    %p48 = scmp.ne.s32.totalorder %s37, %s38
    %p49 = scmp.eq.s32.totalorder %s15, 0
    %p50 = por %p48, %p49
    %p51 = scmp.ne.s32.totalorder %s37, %s38
    %p52 = scmp.eq.s32.totalorder %s16, 1
    %p53 = por %p51, %p52
    %p55 = scmp.ne.s32.totalorder %s38, %s54
    %p56 = scmp.eq.s32.totalorder %s16, 0
    %p57 = por %p55, %p56
    %s58 = sadd.s32 %s18, 1
    %s59 = sadd.s32 %s25, 1
    %s60 = ssub.s32 %s17, %s29
    %s61 = ssub.s32 %s58, %s59
    %s62 = sor.u32 %s60, %s61
    %p63 = scmp.eq.s32.totalorder %s62, 0
    %s65 = sadd.s32 %s64, 1
    %s66 = scalar_select %p63, %s64, %s65
    %p69 = pneg %p63
    %p70 = scmp.eq.s32.totalorder %s10, 1
    %p71 = por %p69, %p70
    %p72 = scmp.ne.s32.totalorder %s64, %s67
    %p73 = scmp.eq.s32.totalorder %s10, 0
    %p74 = por %p72, %p73
    %p75 = scmp.ne.s32.totalorder %s64, %s67
    %p76 = scmp.eq.s32.totalorder %s15, 1
    %p77 = por %p75, %p76
    %p78 = scmp.ne.s32.totalorder %s67, %s68
    %p79 = scmp.eq.s32.totalorder %s15, 0
    %p80 = por %p78, %p79
    %p81 = scmp.ne.s32.totalorder %s67, %s68
    %p82 = scmp.eq.s32.totalorder %s16, 1
    %p83 = por %p81, %p82
    %p85 = scmp.ne.s32.totalorder %s68, %s84
    %p86 = scmp.eq.s32.totalorder %s16, 0
    %p87 = por %p85, %p86
    %s89 = sadd.s32 %s88, 1
    %p92 = scmp.eq.s32.totalorder %s10, 1
    %p93 = scmp.ne.s32.totalorder %s88, %s90
    %p94 = scmp.eq.s32.totalorder %s10, 0
    %p95 = por %p93, %p94
    %p96 = scmp.ne.s32.totalorder %s88, %s90
    %p97 = scmp.eq.s32.totalorder %s15, 1
    %p98 = por %p96, %p97
    %p99 = scmp.ne.s32.totalorder %s90, %s91
    %p100 = scmp.eq.s32.totalorder %s15, 0
    %p101 = por %p99, %p100
    %p102 = scmp.ne.s32.totalorder %s90, %s91
    %p103 = scmp.eq.s32.totalorder %s16, 1
    %p104 = por %p102, %p103
    %p106 = scmp.ne.s32.totalorder %s91, %s105
    %p107 = scmp.eq.s32.totalorder %s16, 0
    %p108 = por %p106, %p107
    %s110 = sadd.s32 %s109, 1
    %p113 = scmp.eq.s32.totalorder %s10, 1
    %p114 = scmp.ne.s32.totalorder %s109, %s111
    %p115 = scmp.eq.s32.totalorder %s10, 0
    %p116 = por %p114, %p115
    %p117 = scmp.ne.s32.totalorder %s109, %s111
    %p118 = scmp.eq.s32.totalorder %s15, 1
    %p119 = por %p117, %p118
    %p120 = scmp.ne.s32.totalorder %s111, %s112
    %p121 = scmp.eq.s32.totalorder %s15, 0
    %p122 = por %p120, %p121
    %p123 = scmp.ne.s32.totalorder %s111, %s112
    %p124 = scmp.eq.s32.totalorder %s16, 1
    %p125 = por %p123, %p124
    %p127 = scmp.ne.s32.totalorder %s112, %s126
    %p128 = scmp.eq.s32.totalorder %s16, 0
    %p129 = por %p127, %p128
    %s130 = ssub.s32 %s17, %s29
    %s131 = ssub.s32 %s18, %s25
    %s132 = sor.u32 %s130, %s131
    %p133 = scmp.eq.s32.totalorder %s132, 0
    %s135 = sadd.s32 %s134, 1
    %s136 = scalar_select %p133, %s134, %s135
    %p139 = pneg %p133
    %p140 = scmp.eq.s32.totalorder %s10, 1
    %p141 = por %p139, %p140
    %p142 = scmp.ne.s32.totalorder %s134, %s137
    %p143 = scmp.eq.s32.totalorder %s10, 0
    %p144 = por %p142, %p143
    %p145 = scmp.ne.s32.totalorder %s134, %s137
    %p146 = scmp.eq.s32.totalorder %s15, 1
    %p147 = por %p145, %p146
    %p148 = scmp.ne.s32.totalorder %s137, %s138
    %p149 = scmp.eq.s32.totalorder %s15, 0
    %p150 = por %p148, %p149
    %p151 = scmp.ne.s32.totalorder %s137, %s138
    %p152 = scmp.eq.s32.totalorder %s16, 1
    %p153 = por %p151, %p152
    %p155 = scmp.ne.s32.totalorder %s138, %s154
    %p156 = scmp.eq.s32.totalorder %s16, 0
    %p157 = por %p155, %p156
    %p158 = scmp.le.s32.totalorder 1, %s10
    %p159 = scmp.lt.s32.totalorder %s10, 3
    %p160 = pnand %p158, %p159
    %p161 = pneg %p160
    // Predicated region
    $region9: #{cycle_generator_forward.15} parent=5 // pred_check
      _
    $region10: #{cycle_generator_forward.15} parent=5 // pred_check_branch
      %163 = sbr.rel (%p160) target = $region12
    $region11: #{cycle_generator_forward.15} parent=5 // pred_region
      %s164 = ssub.s32 %s10, 1
      // Predicated region
      $region13: #{cycle_generator_forward.15} parent=11 // pred_check
        %p165 = pneg %p101
      $region14: #{cycle_generator_forward.15} parent=11 // pred_check_branch
        %167 = sbr.rel (%p165) target = $region16
      $region15: #{cycle_generator_forward.15} parent=11 // pred_region
        _
      $region16: #{cycle_generator_forward.15} parent=11 // pred_fallthru
        _
      // Predicated region
      $region17: #{cycle_generator_forward.15} parent=11 // pred_check
        %p168 = pneg %p122
      $region18: #{cycle_generator_forward.15} parent=11 // pred_check_branch
        %170 = sbr.rel (%p168) target = $region20
      $region19: #{cycle_generator_forward.15} parent=11 // pred_region
        _
      $region20: #{cycle_generator_forward.15} parent=11 // pred_fallthru
        _
    $region12: #{cycle_generator_forward.15} parent=5 // pred_fallthru
      _
    %p171 = scmp.lt.s32.totalorder %s10, 2
    // Predicated region
    $region21: #{cycle_generator_forward.15} parent=5 // pred_check
      %p172 = pneg %p171
    $region22: #{cycle_generator_forward.15} parent=5 // pred_check_branch
      %174 = sbr.rel (%p172) target = $region24
    $region23: #{cycle_generator_forward.15} parent=5 // pred_region
      // Predicated region
      $region25: #{cycle_generator_forward.15} parent=23 // pred_check
        %p175 = pneg %p44
      $region26: #{cycle_generator_forward.15} parent=23 // pred_check_branch
        %177 = sbr.rel (%p175) target = $region28
      $region27: #{cycle_generator_forward.15} parent=23 // pred_region
        %s178 = smul.u32 2, %s18
        %p179 = scmp.lt.s32.totalorder %s17, 1
        %s180 = scalar_select %p179, %s17, 1
        %p181 = scmp.lt.s32.totalorder %s178, 3
        %s182 = scalar_select %p181, %s178, 3
        %s183 = smul.addr %s182, 2
        %s184 = smul.addr %s180, 8
        %s185 = sadd.s32 %s183, %s184
        %s186 = smul.addr %s185, 4
        %s187 = scalar_lea.vmem %s0, %s186
        %s188 = smul.u32 2, %s18
      $region28: #{cycle_generator_forward.15} parent=23 // pred_fallthru
        _
      // Predicated region
      $region29: #{cycle_generator_forward.15} parent=23 // pred_check
        %p189 = pneg %p74
      $region30: #{cycle_generator_forward.15} parent=23 // pred_check_branch
        %191 = sbr.rel (%p189) target = $region32
      $region31: #{cycle_generator_forward.15} parent=23 // pred_region
        %s192 = sadd.s32 %s18, 1
        %s193 = smul.u32 2, %s192
        %p194 = scmp.lt.s32.totalorder %s17, 1
        %s195 = scalar_select %p194, %s17, 1
        %p196 = scmp.lt.s32.totalorder %s193, 3
        %s197 = scalar_select %p196, %s193, 3
        %s198 = smul.addr %s197, 2
        %s199 = smul.addr %s195, 8
        %s200 = sadd.s32 %s198, %s199
        %s201 = smul.addr %s200, 4
        %s202 = scalar_lea.vmem %s1, %s201
        %s203 = sadd.s32 %s18, 1
        %s204 = smul.u32 2, %s203
      $region32: #{cycle_generator_forward.15} parent=23 // pred_fallthru
        _
    $region24: #{cycle_generator_forward.15} parent=5 // pred_fallthru
      _
    %p205 = scmp.le.s32.totalorder 1, %s10
    %p206 = scmp.lt.s32.totalorder %s10, 3
    %p207 = pnand %p205, %p206
    %p208 = pneg %p207
    // Predicated region
    $region33: #{cycle_generator_forward.15} parent=5 // pred_check
      _
    $region34: #{cycle_generator_forward.15} parent=5 // pred_check_branch
      %210 = sbr.rel (%p207) target = $region36
    $region35: #{cycle_generator_forward.15} parent=5 // pred_region
      %s211 = ssub.s32 %s10, 1
      %s212 = smul.u32 2, %s20
      %p213 = scmp.lt.s32.totalorder %s19, 1
      %s214 = scalar_select %p213, %s19, 1
      %p215 = scmp.lt.s32.totalorder %s212, 3
      %s216 = scalar_select %p215, %s212, 3
      %s217 = smul.addr %s216, 2
      %s218 = smul.addr %s214, 8
      %s219 = sadd.s32 %s217, %s218
      %s220 = smul.addr %s219, 4
      %s221 = scalar_lea.vmem %s0, %s220
      %p222 = pneg %p50
      %p223 = pneg %p47
      %s224 = sadd.s32 %s20, 1
      %s225 = smul.u32 2, %s224
      %p226 = scmp.lt.s32.totalorder %s19, 1
      %s227 = scalar_select %p226, %s19, 1
      %p228 = scmp.lt.s32.totalorder %s225, 3
      %s229 = scalar_select %p228, %s225, 3
      %s230 = smul.addr %s229, 2
      %s231 = smul.addr %s227, 8
      %s232 = sadd.s32 %s230, %s231
      %s233 = smul.addr %s232, 4
      %s234 = scalar_lea.vmem %s1, %s233
      %p235 = pneg %p80
      %p236 = pneg %p77
      %p237 = pneg %p101
      %p238 = pneg %p98
      %p239 = pneg %p122
      %p240 = pneg %p119
      %p241 = pneg %p150
      %p242 = pneg %p147
      %s243 = smul.u32 2, %s20
      %p244 = scmp.lt.s32.totalorder %s19, 1
      %s245 = scalar_select %p244, %s19, 1
      %p246 = scmp.lt.s32.totalorder %s243, 1
      %s247 = scalar_select %p246, %s243, 1
      %s248 = smul.addr %s245, 2
      %s249 = sadd.s32 %s247, %s248
      %s250 = smul.addr %s249, 4
      %s251 = scalar_lea.vmem %s4, %s250
      %s252 = smul.u32 2, %s20
      %p253 = scmp.lt.s32.totalorder %s19, 1
      %s254 = scalar_select %p253, %s19, 1
      %p255 = scmp.lt.s32.totalorder %s252, 3
      %s256 = scalar_select %p255, %s252, 3
      %s257 = smul.addr %s256, 2
      %s258 = smul.addr %s254, 8
      %s259 = sadd.s32 %s257, %s258
      %s260 = smul.addr %s259, 4
      %s261 = scalar_lea.vmem %s0, %s260
      %s262 = smul.u32 2, %s20
      %s263 = sadd.s32 %s20, 1
      %s264 = smul.u32 2, %s263
      %p265 = scmp.lt.s32.totalorder %s19, 1
      %s266 = scalar_select %p265, %s19, 1
      %p267 = scmp.lt.s32.totalorder %s264, 3
      %s268 = scalar_select %p267, %s264, 3
      %s269 = smul.addr %s268, 2
      %s270 = smul.addr %s266, 8
      %s271 = sadd.s32 %s269, %s270
      %s272 = smul.addr %s271, 4
      %s273 = scalar_lea.vmem %s1, %s272
      %s274 = sadd.s32 %s20, 1
      %s275 = smul.u32 2, %s274
      %s276 = smul.u32 2, %s20
      %p277 = scmp.lt.s32.totalorder %s19, 1
      %s278 = scalar_select %p277, %s19, 1
      %p279 = scmp.lt.s32.totalorder %s276, 1
      %s280 = scalar_select %p279, %s276, 1
      %s281 = smul.addr %s278, 2
      %s282 = sadd.s32 %s280, %s281
      %s283 = smul.addr %s282, 4
      %s284 = scalar_lea.vmem %s4, %s283
      %s285 = smul.u32 2, %s20
      %v287 = vld [vmem:[%s261] sm:$0xff]
      %v288 = vld [vmem:[%s261 + $0x8] sm:$0xff]
      %v289 = vld [vmem:[%s273] sm:$0xff]
      %v290 = vld [vmem:[%s273 + $0x8] sm:$0xff]
      %v293 = vunpack.c.l.b16 %v287
      %v294 = vunpack.c.h.b16 %v287
      %v295 = vunpack.c.l.b16 %v288
      %v296 = vunpack.c.h.b16 %v288
      %v297 = vpack.c.b16 %v295, %v293
      %v298 = vpack.c.b16 %v296, %v294
      %v303 = vunpack.c.l.b16 %v289
      %v304 = vunpack.c.h.b16 %v289
      %v305 = vunpack.c.l.b16 %v290
      %v306 = vunpack.c.h.b16 %v290
      %v307 = vpack.c.b16 %v305, %v303
      %v308 = vpack.c.b16 %v306, %v304
      %v311 = vld [vmem:[%s2] sm:$0xf]
      %v312 = vld [vmem:[%s2 + $0x4] sm:$0xf]
      %v313 = vld [vmem:[%s2 + $0x8] sm:$0xf]
      %v314 = vld [vmem:[%s2 + $0xc] sm:$0xf]
      %v315 = vld [vmem:[%s2 + $0x10] sm:$0xf]
      %v316 = vld [vmem:[%s2 + $0x14] sm:$0xf]
      %v317 = vld [vmem:[%s2 + $0x18] sm:$0xf]
      %v318 = vld [vmem:[%s2 + $0x1c] sm:$0xf]
      %v319 = vld [vmem:[%s2 + $0x20] sm:$0xf]
      %v320 = vld [vmem:[%s2 + $0x24] sm:$0xf]
      %v321 = vld [vmem:[%s2 + $0x28] sm:$0xf]
      %v322 = vld [vmem:[%s2 + $0x2c] sm:$0xf]
      %v323 = vld [vmem:[%s2 + $0x30] sm:$0xf]
      %v324 = vld [vmem:[%s2 + $0x34] sm:$0xf]
      %v325 = vld [vmem:[%s2 + $0x38] sm:$0xf]
      %v326 = vld [vmem:[%s2 + $0x3c] sm:$0xf]
      %v327 = vld [vmem:[%s2 + $0x40] sm:$0xf]
      %v328 = vld [vmem:[%s2 + $0x44] sm:$0xf]
      %v329 = vld [vmem:[%s2 + $0x48] sm:$0xf]
      %v330 = vld [vmem:[%s2 + $0x4c] sm:$0xf]
      %v331 = vld [vmem:[%s2 + $0x50] sm:$0xf]
      %v332 = vld [vmem:[%s2 + $0x54] sm:$0xf]
      %v333 = vld [vmem:[%s2 + $0x58] sm:$0xf]
      %v334 = vld [vmem:[%s2 + $0x5c] sm:$0xf]
      %v335 = vld [vmem:[%s2 + $0x60] sm:$0xf]
      %v336 = vld [vmem:[%s2 + $0x64] sm:$0xf]
      %v337 = vld [vmem:[%s2 + $0x68] sm:$0xf]
      %v338 = vld [vmem:[%s2 + $0x6c] sm:$0xf]
      %v339 = vld [vmem:[%s2 + $0x70] sm:$0xf]
      %v340 = vld [vmem:[%s2 + $0x74] sm:$0xf]
      %v341 = vld [vmem:[%s2 + $0x78] sm:$0xf]
      %v342 = vld [vmem:[%s2 + $0x7c] sm:$0xf]
      %v375 = vunpack.c.l.b16 %v311
      %v376 = vunpack.c.l.b16 %v312
      %v377 = vunpack.c.l.b16 %v313
      %v378 = vunpack.c.l.b16 %v314
      %v379 = vunpack.c.l.b16 %v315
      %v380 = vunpack.c.l.b16 %v316
      %v381 = vunpack.c.l.b16 %v317
      %v382 = vunpack.c.l.b16 %v318
      %v383 = vunpack.c.l.b16 %v319
      %v384 = vunpack.c.l.b16 %v320
      %v385 = vunpack.c.l.b16 %v321
      %v386 = vunpack.c.l.b16 %v322
      %v387 = vunpack.c.l.b16 %v323
      %v388 = vunpack.c.l.b16 %v324
      %v389 = vunpack.c.l.b16 %v325
      %v390 = vunpack.c.l.b16 %v326
      %v391 = vunpack.c.l.b16 %v327
      %v392 = vunpack.c.l.b16 %v328
      %v393 = vunpack.c.l.b16 %v329
      %v394 = vunpack.c.l.b16 %v330
      %v395 = vunpack.c.l.b16 %v331
      %v396 = vunpack.c.l.b16 %v332
      %v397 = vunpack.c.l.b16 %v333
      %v398 = vunpack.c.l.b16 %v334
      %v399 = vunpack.c.l.b16 %v335
      %v400 = vunpack.c.l.b16 %v336
      %v401 = vunpack.c.l.b16 %v337
      %v402 = vunpack.c.l.b16 %v338
      %v403 = vunpack.c.l.b16 %v339
      %v404 = vunpack.c.l.b16 %v340
      %v405 = vunpack.c.l.b16 %v341
      %v406 = vunpack.c.l.b16 %v342
      %v407 = vpack.c.b16 %v376, %v375
      %v408 = vpack.c.b16 %v378, %v377
      %v409 = vpack.c.b16 %v380, %v379
      %v410 = vpack.c.b16 %v382, %v381
      %v411 = vpack.c.b16 %v384, %v383
      %v412 = vpack.c.b16 %v386, %v385
      %v413 = vpack.c.b16 %v388, %v387
      %v414 = vpack.c.b16 %v390, %v389
      %v415 = vpack.c.b16 %v392, %v391
      %v416 = vpack.c.b16 %v394, %v393
      %v417 = vpack.c.b16 %v396, %v395
      %v418 = vpack.c.b16 %v398, %v397
      %v419 = vpack.c.b16 %v400, %v399
      %v420 = vpack.c.b16 %v402, %v401
      %v421 = vpack.c.b16 %v404, %v403
      %v422 = vpack.c.b16 %v406, %v405
      %439 = vmatprep.subr.bf16.mxu0 0
      %440 = vmatpush1.bf16.msra.mxu0 %v407
      %441 = vmatprep.subr.bf16.mxu0 0
      %442 = vmatpush1.bf16.msra.mxu0 %v408
      %443 = vmatprep.subr.bf16.mxu0 0
      %444 = vmatpush1.bf16.msra.mxu0 %v409
      %445 = vmatprep.subr.bf16.mxu0 0
      %446 = vmatpush1.bf16.msra.mxu0 %v410
      %447 = vmatprep.subr.bf16.mxu0 0
      %448 = vmatpush1.bf16.msra.mxu0 %v411
      %449 = vmatprep.subr.bf16.mxu0 0
      %450 = vmatpush1.bf16.msra.mxu0 %v412
      %451 = vmatprep.subr.bf16.mxu0 0
      %452 = vmatpush1.bf16.msra.mxu0 %v413
      %453 = vmatprep.subr.bf16.mxu0 0
      %454 = vmatpush1.bf16.msra.mxu0 %v414
      %455 = vmatprep.subr.bf16.mxu0 0
      %456 = vmatpush1.bf16.msra.mxu0 %v415
      %457 = vmatprep.subr.bf16.mxu0 0
      %458 = vmatpush1.bf16.msra.mxu0 %v416
      %459 = vmatprep.subr.bf16.mxu0 0
      %460 = vmatpush1.bf16.msra.mxu0 %v417
      %461 = vmatprep.subr.bf16.mxu0 0
      %462 = vmatpush1.bf16.msra.mxu0 %v418
      %463 = vmatprep.subr.bf16.mxu0 0
      %464 = vmatpush1.bf16.msra.mxu0 %v419
      %465 = vmatprep.subr.bf16.mxu0 0
      %466 = vmatpush1.bf16.msra.mxu0 %v420
      %467 = vmatprep.subr.bf16.mxu0 0
      %468 = vmatpush1.bf16.msra.mxu0 %v421
      %469 = vmatprep.subr.bf16.mxu0 0
      %470 = vmatpush1.bf16.msra.mxu0 %v422
      %471 = vmatprep.mubr.bf16.mxu0 %v298
      %472 = vmatmul.mubr.bf16.gmra.mrb[0].mxu0 %v297
      %v473 = vpop.f32.mrb[0].mxu0
      %v474 = vadd.f32 0.0, %v473
      %v475 = vpop.f32.mrb[0].mxu0
      %v476 = vpop.f32.mrb[0].mxu0
      %v477 = vadd.f32 0.0, %v476
      %v478 = vpop.f32.mrb[0].mxu0
      %479 = vmatprep.mubr.bf16.mxu0 %v308
      %480 = vmatmul.mubr.bf16.gmra.mrb[0].mxu0 %v307
      %v481 = vpop.f32.mrb[0].mxu0
      %v482 = vpop.f32.mrb[0].mxu0
      %v483 = vpop.f32.mrb[0].mxu0
      %v484 = vpop.f32.mrb[0].mxu0
      %485 = vdwg.mxu0
      %v486 = vadd.f32 %v474, 0.0
      %v487 = vadd.f32 %v477, 0.0
      %s488 = scalar_lea.vmem %s2, 128
      %v489 = vld [vmem:[%s488] sm:$0xf]
      %v490 = vld [vmem:[%s488 + $0x4] sm:$0xf]
      %v491 = vld [vmem:[%s488 + $0x8] sm:$0xf]
      %v492 = vld [vmem:[%s488 + $0xc] sm:$0xf]
      %v493 = vld [vmem:[%s488 + $0x10] sm:$0xf]
      %v494 = vld [vmem:[%s488 + $0x14] sm:$0xf]
      %v495 = vld [vmem:[%s488 + $0x18] sm:$0xf]
      %v496 = vld [vmem:[%s488 + $0x1c] sm:$0xf]
      %v497 = vld [vmem:[%s488 + $0x20] sm:$0xf]
      %v498 = vld [vmem:[%s488 + $0x24] sm:$0xf]
      %v499 = vld [vmem:[%s488 + $0x28] sm:$0xf]
      %v500 = vld [vmem:[%s488 + $0x2c] sm:$0xf]
      %v501 = vld [vmem:[%s488 + $0x30] sm:$0xf]
      %v502 = vld [vmem:[%s488 + $0x34] sm:$0xf]
      %v503 = vld [vmem:[%s488 + $0x38] sm:$0xf]
      %v504 = vld [vmem:[%s488 + $0x3c] sm:$0xf]
      %v505 = vld [vmem:[%s488 + $0x40] sm:$0xf]
      %v506 = vld [vmem:[%s488 + $0x44] sm:$0xf]
      %v507 = vld [vmem:[%s488 + $0x48] sm:$0xf]
      %v508 = vld [vmem:[%s488 + $0x4c] sm:$0xf]
      %v509 = vld [vmem:[%s488 + $0x50] sm:$0xf]
      %v510 = vld [vmem:[%s488 + $0x54] sm:$0xf]
      %v511 = vld [vmem:[%s488 + $0x58] sm:$0xf]
      %v512 = vld [vmem:[%s488 + $0x5c] sm:$0xf]
      %v513 = vld [vmem:[%s488 + $0x60] sm:$0xf]
      %v514 = vld [vmem:[%s488 + $0x64] sm:$0xf]
      %v515 = vld [vmem:[%s488 + $0x68] sm:$0xf]
      %v516 = vld [vmem:[%s488 + $0x6c] sm:$0xf]
      %v517 = vld [vmem:[%s488 + $0x70] sm:$0xf]
      %v518 = vld [vmem:[%s488 + $0x74] sm:$0xf]
      %v519 = vld [vmem:[%s488 + $0x78] sm:$0xf]
      %v520 = vld [vmem:[%s488 + $0x7c] sm:$0xf]
      %v553 = vunpack.c.l.b16 %v489
      %v554 = vunpack.c.l.b16 %v490
      %v555 = vunpack.c.l.b16 %v491
      %v556 = vunpack.c.l.b16 %v492
      %v557 = vunpack.c.l.b16 %v493
      %v558 = vunpack.c.l.b16 %v494
      %v559 = vunpack.c.l.b16 %v495
      %v560 = vunpack.c.l.b16 %v496
      %v561 = vunpack.c.l.b16 %v497
      %v562 = vunpack.c.l.b16 %v498
      %v563 = vunpack.c.l.b16 %v499
      %v564 = vunpack.c.l.b16 %v500
      %v565 = vunpack.c.l.b16 %v501
      %v566 = vunpack.c.l.b16 %v502
      %v567 = vunpack.c.l.b16 %v503
      %v568 = vunpack.c.l.b16 %v504
      %v569 = vunpack.c.l.b16 %v505
      %v570 = vunpack.c.l.b16 %v506
      %v571 = vunpack.c.l.b16 %v507
      %v572 = vunpack.c.l.b16 %v508
      %v573 = vunpack.c.l.b16 %v509
      %v574 = vunpack.c.l.b16 %v510
      %v575 = vunpack.c.l.b16 %v511
      %v576 = vunpack.c.l.b16 %v512
      %v577 = vunpack.c.l.b16 %v513
      %v578 = vunpack.c.l.b16 %v514
      %v579 = vunpack.c.l.b16 %v515
      %v580 = vunpack.c.l.b16 %v516
      %v581 = vunpack.c.l.b16 %v517
      %v582 = vunpack.c.l.b16 %v518
      %v583 = vunpack.c.l.b16 %v519
      %v584 = vunpack.c.l.b16 %v520
      %v585 = vpack.c.b16 %v554, %v553
      %v586 = vpack.c.b16 %v556, %v555
      %v587 = vpack.c.b16 %v558, %v557
      %v588 = vpack.c.b16 %v560, %v559
      %v589 = vpack.c.b16 %v562, %v561
      %v590 = vpack.c.b16 %v564, %v563
      %v591 = vpack.c.b16 %v566, %v565
      %v592 = vpack.c.b16 %v568, %v567
      %v593 = vpack.c.b16 %v570, %v569
      %v594 = vpack.c.b16 %v572, %v571
      %v595 = vpack.c.b16 %v574, %v573
      %v596 = vpack.c.b16 %v576, %v575
      %v597 = vpack.c.b16 %v578, %v577
      %v598 = vpack.c.b16 %v580, %v579
      %v599 = vpack.c.b16 %v582, %v581
      %v600 = vpack.c.b16 %v584, %v583
      %617 = vmatprep.subr.bf16.mxu0 0
      %618 = vmatpush1.bf16.msra.mxu0 %v585
      %619 = vmatprep.subr.bf16.mxu0 0
      %620 = vmatpush1.bf16.msra.mxu0 %v586
      %621 = vmatprep.subr.bf16.mxu0 0
      %622 = vmatpush1.bf16.msra.mxu0 %v587
      %623 = vmatprep.subr.bf16.mxu0 0
      %624 = vmatpush1.bf16.msra.mxu0 %v588
      %625 = vmatprep.subr.bf16.mxu0 0
      %626 = vmatpush1.bf16.msra.mxu0 %v589
      %627 = vmatprep.subr.bf16.mxu0 0
      %628 = vmatpush1.bf16.msra.mxu0 %v590
      %629 = vmatprep.subr.bf16.mxu0 0
      %630 = vmatpush1.bf16.msra.mxu0 %v591
      %631 = vmatprep.subr.bf16.mxu0 0
      %632 = vmatpush1.bf16.msra.mxu0 %v592
      %633 = vmatprep.subr.bf16.mxu0 0
      %634 = vmatpush1.bf16.msra.mxu0 %v593
      %635 = vmatprep.subr.bf16.mxu0 0
      %636 = vmatpush1.bf16.msra.mxu0 %v594
      %637 = vmatprep.subr.bf16.mxu0 0
      %638 = vmatpush1.bf16.msra.mxu0 %v595
      %639 = vmatprep.subr.bf16.mxu0 0
      %640 = vmatpush1.bf16.msra.mxu0 %v596
      %641 = vmatprep.subr.bf16.mxu0 0
      %642 = vmatpush1.bf16.msra.mxu0 %v597
      %643 = vmatprep.subr.bf16.mxu0 0
      %644 = vmatpush1.bf16.msra.mxu0 %v598
      %645 = vmatprep.subr.bf16.mxu0 0
      %646 = vmatpush1.bf16.msra.mxu0 %v599
      %647 = vmatprep.subr.bf16.mxu0 0
      %648 = vmatpush1.bf16.msra.mxu0 %v600
      %649 = vmatprep.mubr.bf16.mxu0 %v298
      %650 = vmatmul.mubr.bf16.gmra.mrb[0].mxu0 %v297
      %v651 = vpop.f32.mrb[0].mxu0
      %v652 = vadd.f32 0.0, %v651
      %v653 = vpop.f32.mrb[0].mxu0
      %v654 = vpop.f32.mrb[0].mxu0
      %v655 = vadd.f32 0.0, %v654
      %v656 = vpop.f32.mrb[0].mxu0
      %657 = vmatprep.mubr.bf16.mxu0 %v308
      %658 = vmatmul.mubr.bf16.gmra.mrb[0].mxu0 %v307
      %v659 = vpop.f32.mrb[0].mxu0
      %v660 = vadd.f32 0.0, %v659
      %v661 = vpop.f32.mrb[0].mxu0
      %v662 = vpop.f32.mrb[0].mxu0
      %v663 = vpop.f32.mrb[0].mxu0
      %664 = vdwg.mxu0
      %vm668 = vcmask 1046528
      %v669 = vrot.slane %v652, 1
      %v670 = vrot.slane %v655, 1
      %v671 = vsel %vm668, %v669, %v670
      %v672 = vrot.slane %v660, 1
      %v673 = vsel %vm668, %v670, %v672
      %v676 = vadd.f32 %v486, %v671
      %v677 = vadd.f32 %v487, %v673
      %s678 = scalar_lea.vmem %s2, 256
      %v679 = vld [vmem:[%s678] sm:$0xf]
      %v680 = vld [vmem:[%s678 + $0x4] sm:$0xf]
      %v681 = vld [vmem:[%s678 + $0x8] sm:$0xf]
      %v682 = vld [vmem:[%s678 + $0xc] sm:$0xf]
      %v683 = vld [vmem:[%s678 + $0x10] sm:$0xf]
      %v684 = vld [vmem:[%s678 + $0x14] sm:$0xf]
      %v685 = vld [vmem:[%s678 + $0x18] sm:$0xf]
      %v686 = vld [vmem:[%s678 + $0x1c] sm:$0xf]
      %v687 = vld [vmem:[%s678 + $0x20] sm:$0xf]
      %v688 = vld [vmem:[%s678 + $0x24] sm:$0xf]
      %v689 = vld [vmem:[%s678 + $0x28] sm:$0xf]
      %v690 = vld [vmem:[%s678 + $0x2c] sm:$0xf]
      %v691 = vld [vmem:[%s678 + $0x30] sm:$0xf]
      %v692 = vld [vmem:[%s678 + $0x34] sm:$0xf]
      %v693 = vld [vmem:[%s678 + $0x38] sm:$0xf]
      %v694 = vld [vmem:[%s678 + $0x3c] sm:$0xf]
      %v695 = vld [vmem:[%s678 + $0x40] sm:$0xf]
      %v696 = vld [vmem:[%s678 + $0x44] sm:$0xf]
      %v697 = vld [vmem:[%s678 + $0x48] sm:$0xf]
      %v698 = vld [vmem:[%s678 + $0x4c] sm:$0xf]
      %v699 = vld [vmem:[%s678 + $0x50] sm:$0xf]
      %v700 = vld [vmem:[%s678 + $0x54] sm:$0xf]
      %v701 = vld [vmem:[%s678 + $0x58] sm:$0xf]
      %v702 = vld [vmem:[%s678 + $0x5c] sm:$0xf]
      %v703 = vld [vmem:[%s678 + $0x60] sm:$0xf]
      %v704 = vld [vmem:[%s678 + $0x64] sm:$0xf]
      %v705 = vld [vmem:[%s678 + $0x68] sm:$0xf]
      %v706 = vld [vmem:[%s678 + $0x6c] sm:$0xf]
      %v707 = vld [vmem:[%s678 + $0x70] sm:$0xf]
      %v708 = vld [vmem:[%s678 + $0x74] sm:$0xf]
      %v709 = vld [vmem:[%s678 + $0x78] sm:$0xf]
      %v710 = vld [vmem:[%s678 + $0x7c] sm:$0xf]
      %v743 = vunpack.c.l.b16 %v679
      %v744 = vunpack.c.l.b16 %v680
      %v745 = vunpack.c.l.b16 %v681
      %v746 = vunpack.c.l.b16 %v682
      %v747 = vunpack.c.l.b16 %v683
      %v748 = vunpack.c.l.b16 %v684
      %v749 = vunpack.c.l.b16 %v685
      %v750 = vunpack.c.l.b16 %v686
      %v751 = vunpack.c.l.b16 %v687
      %v752 = vunpack.c.l.b16 %v688
      %v753 = vunpack.c.l.b16 %v689
      %v754 = vunpack.c.l.b16 %v690
      %v755 = vunpack.c.l.b16 %v691
      %v756 = vunpack.c.l.b16 %v692
      %v757 = vunpack.c.l.b16 %v693
      %v758 = vunpack.c.l.b16 %v694
      %v759 = vunpack.c.l.b16 %v695
      %v760 = vunpack.c.l.b16 %v696
      %v761 = vunpack.c.l.b16 %v697
      %v762 = vunpack.c.l.b16 %v698
      %v763 = vunpack.c.l.b16 %v699
      %v764 = vunpack.c.l.b16 %v700
      %v765 = vunpack.c.l.b16 %v701
      %v766 = vunpack.c.l.b16 %v702
      %v767 = vunpack.c.l.b16 %v703
      %v768 = vunpack.c.l.b16 %v704
      %v769 = vunpack.c.l.b16 %v705
      %v770 = vunpack.c.l.b16 %v706
      %v771 = vunpack.c.l.b16 %v707
      %v772 = vunpack.c.l.b16 %v708
      %v773 = vunpack.c.l.b16 %v709
      %v774 = vunpack.c.l.b16 %v710
      %v775 = vpack.c.b16 %v744, %v743
      %v776 = vpack.c.b16 %v746, %v745
      %v777 = vpack.c.b16 %v748, %v747
      %v778 = vpack.c.b16 %v750, %v749
      %v779 = vpack.c.b16 %v752, %v751
      %v780 = vpack.c.b16 %v754, %v753
      %v781 = vpack.c.b16 %v756, %v755
      %v782 = vpack.c.b16 %v758, %v757
      %v783 = vpack.c.b16 %v760, %v759
      %v784 = vpack.c.b16 %v762, %v761
      %v785 = vpack.c.b16 %v764, %v763
      %v786 = vpack.c.b16 %v766, %v765
      %v787 = vpack.c.b16 %v768, %v767
      %v788 = vpack.c.b16 %v770, %v769
      %v789 = vpack.c.b16 %v772, %v771
      %v790 = vpack.c.b16 %v774, %v773
      %807 = vmatprep.subr.bf16.mxu0 0
      %808 = vmatpush1.bf16.msra.mxu0 %v775
      %809 = vmatprep.subr.bf16.mxu0 0
      %810 = vmatpush1.bf16.msra.mxu0 %v776
      %811 = vmatprep.subr.bf16.mxu0 0
      %812 = vmatpush1.bf16.msra.mxu0 %v777
      %813 = vmatprep.subr.bf16.mxu0 0
      %814 = vmatpush1.bf16.msra.mxu0 %v778
      %815 = vmatprep.subr.bf16.mxu0 0
      %816 = vmatpush1.bf16.msra.mxu0 %v779
      %817 = vmatprep.subr.bf16.mxu0 0
      %818 = vmatpush1.bf16.msra.mxu0 %v780
      %819 = vmatprep.subr.bf16.mxu0 0
      %820 = vmatpush1.bf16.msra.mxu0 %v781
      %821 = vmatprep.subr.bf16.mxu0 0
      %822 = vmatpush1.bf16.msra.mxu0 %v782
      %823 = vmatprep.subr.bf16.mxu0 0
      %824 = vmatpush1.bf16.msra.mxu0 %v783
      %825 = vmatprep.subr.bf16.mxu0 0
      %826 = vmatpush1.bf16.msra.mxu0 %v784
      %827 = vmatprep.subr.bf16.mxu0 0
      %828 = vmatpush1.bf16.msra.mxu0 %v785
      %829 = vmatprep.subr.bf16.mxu0 0
      %830 = vmatpush1.bf16.msra.mxu0 %v786
      %831 = vmatprep.subr.bf16.mxu0 0
      %832 = vmatpush1.bf16.msra.mxu0 %v787
      %833 = vmatprep.subr.bf16.mxu0 0
      %834 = vmatpush1.bf16.msra.mxu0 %v788
      %835 = vmatprep.subr.bf16.mxu0 0
      %836 = vmatpush1.bf16.msra.mxu0 %v789
      %837 = vmatprep.subr.bf16.mxu0 0
      %838 = vmatpush1.bf16.msra.mxu0 %v790
      %839 = vmatprep.mubr.bf16.mxu0 %v298
      %840 = vmatmul.mubr.bf16.gmra.mrb[0].mxu0 %v297
      %v841 = vpop.f32.mrb[0].mxu0
      %v842 = vadd.f32 0.0, %v841
      %v843 = vpop.f32.mrb[0].mxu0
      %v844 = vpop.f32.mrb[0].mxu0
      %v845 = vadd.f32 0.0, %v844
      %v846 = vpop.f32.mrb[0].mxu0
      %847 = vmatprep.mubr.bf16.mxu0 %v308
      %848 = vmatmul.mubr.bf16.gmra.mrb[0].mxu0 %v307
      %v849 = vpop.f32.mrb[0].mxu0
      %v850 = vadd.f32 0.0, %v849
      %v851 = vpop.f32.mrb[0].mxu0
      %v852 = vpop.f32.mrb[0].mxu0
      %v853 = vpop.f32.mrb[0].mxu0
      %854 = vdwg.mxu0
      %vm858 = vcmask 1045504
      %v859 = vrot.slane %v842, 2
      %v860 = vrot.slane %v845, 2
      %v861 = vsel %vm858, %v859, %v860
      %v862 = vrot.slane %v850, 2
      %v863 = vsel %vm858, %v860, %v862
      %v866 = vadd.f32 %v676, %v861
      %v867 = vadd.f32 %v677, %v863
      %s868 = scalar_lea.vmem %s2, 384
      %v869 = vld [vmem:[%s868] sm:$0xf]
      %v870 = vld [vmem:[%s868 + $0x4] sm:$0xf]
      %v871 = vld [vmem:[%s868 + $0x8] sm:$0xf]
      %v872 = vld [vmem:[%s868 + $0xc] sm:$0xf]
      %v873 = vld [vmem:[%s868 + $0x10] sm:$0xf]
      %v874 = vld [vmem:[%s868 + $0x14] sm:$0xf]
      %v875 = vld [vmem:[%s868 + $0x18] sm:$0xf]
      %v876 = vld [vmem:[%s868 + $0x1c] sm:$0xf]
      %v877 = vld [vmem:[%s868 + $0x20] sm:$0xf]
      %v878 = vld [vmem:[%s868 + $0x24] sm:$0xf]
      %v879 = vld [vmem:[%s868 + $0x28] sm:$0xf]
      %v880 = vld [vmem:[%s868 + $0x2c] sm:$0xf]
      %v881 = vld [vmem:[%s868 + $0x30] sm:$0xf]
      %v882 = vld [vmem:[%s868 + $0x34] sm:$0xf]
      %v883 = vld [vmem:[%s868 + $0x38] sm:$0xf]
      %v884 = vld [vmem:[%s868 + $0x3c] sm:$0xf]
      %v885 = vld [vmem:[%s868 + $0x40] sm:$0xf]
      %v886 = vld [vmem:[%s868 + $0x44] sm:$0xf]
      %v887 = vld [vmem:[%s868 + $0x48] sm:$0xf]
      %v888 = vld [vmem:[%s868 + $0x4c] sm:$0xf]
      %v889 = vld [vmem:[%s868 + $0x50] sm:$0xf]
      %v890 = vld [vmem:[%s868 + $0x54] sm:$0xf]
      %v891 = vld [vmem:[%s868 + $0x58] sm:$0xf]
      %v892 = vld [vmem:[%s868 + $0x5c] sm:$0xf]
      %v893 = vld [vmem:[%s868 + $0x60] sm:$0xf]
      %v894 = vld [vmem:[%s868 + $0x64] sm:$0xf]
      %v895 = vld [vmem:[%s868 + $0x68] sm:$0xf]
      %v896 = vld [vmem:[%s868 + $0x6c] sm:$0xf]
      %v897 = vld [vmem:[%s868 + $0x70] sm:$0xf]
      %v898 = vld [vmem:[%s868 + $0x74] sm:$0xf]
      %v899 = vld [vmem:[%s868 + $0x78] sm:$0xf]
      %v900 = vld [vmem:[%s868 + $0x7c] sm:$0xf]
      %v933 = vunpack.c.l.b16 %v869
      %v934 = vunpack.c.l.b16 %v870
      %v935 = vunpack.c.l.b16 %v871
      %v936 = vunpack.c.l.b16 %v872
      %v937 = vunpack.c.l.b16 %v873
      %v938 = vunpack.c.l.b16 %v874
      %v939 = vunpack.c.l.b16 %v875
      %v940 = vunpack.c.l.b16 %v876
      %v941 = vunpack.c.l.b16 %v877
      %v942 = vunpack.c.l.b16 %v878
      %v943 = vunpack.c.l.b16 %v879
      %v944 = vunpack.c.l.b16 %v880
      %v945 = vunpack.c.l.b16 %v881
      %v946 = vunpack.c.l.b16 %v882
      %v947 = vunpack.c.l.b16 %v883
      %v948 = vunpack.c.l.b16 %v884
      %v949 = vunpack.c.l.b16 %v885
      %v950 = vunpack.c.l.b16 %v886
      %v951 = vunpack.c.l.b16 %v887
      %v952 = vunpack.c.l.b16 %v888
      %v953 = vunpack.c.l.b16 %v889
      %v954 = vunpack.c.l.b16 %v890
      %v955 = vunpack.c.l.b16 %v891
      %v956 = vunpack.c.l.b16 %v892
      %v957 = vunpack.c.l.b16 %v893
      %v958 = vunpack.c.l.b16 %v894
      %v959 = vunpack.c.l.b16 %v895
      %v960 = vunpack.c.l.b16 %v896
      %v961 = vunpack.c.l.b16 %v897
      %v962 = vunpack.c.l.b16 %v898
      %v963 = vunpack.c.l.b16 %v899
      %v964 = vunpack.c.l.b16 %v900
      %v965 = vpack.c.b16 %v934, %v933
      %v966 = vpack.c.b16 %v936, %v935
      %v967 = vpack.c.b16 %v938, %v937
      %v968 = vpack.c.b16 %v940, %v939
      %v969 = vpack.c.b16 %v942, %v941
      %v970 = vpack.c.b16 %v944, %v943
      %v971 = vpack.c.b16 %v946, %v945
      %v972 = vpack.c.b16 %v948, %v947
      %v973 = vpack.c.b16 %v950, %v949
      %v974 = vpack.c.b16 %v952, %v951
      %v975 = vpack.c.b16 %v954, %v953
      %v976 = vpack.c.b16 %v956, %v955
      %v977 = vpack.c.b16 %v958, %v957
      %v978 = vpack.c.b16 %v960, %v959
      %v979 = vpack.c.b16 %v962, %v961
      %v980 = vpack.c.b16 %v964, %v963
      %997 = vmatprep.subr.bf16.mxu0 0
      %998 = vmatpush1.bf16.msra.mxu0 %v965
      %999 = vmatprep.subr.bf16.mxu0 0
      %1000 = vmatpush1.bf16.msra.mxu0 %v966
      %1001 = vmatprep.subr.bf16.mxu0 0
      %1002 = vmatpush1.bf16.msra.mxu0 %v967
      %1003 = vmatprep.subr.bf16.mxu0 0
      %1004 = vmatpush1.bf16.msra.mxu0 %v968
      %1005 = vmatprep.subr.bf16.mxu0 0
      %1006 = vmatpush1.bf16.msra.mxu0 %v969
      %1007 = vmatprep.subr.bf16.mxu0 0
      %1008 = vmatpush1.bf16.msra.mxu0 %v970
      %1009 = vmatprep.subr.bf16.mxu0 0
      %1010 = vmatpush1.bf16.msra.mxu0 %v971
      %1011 = vmatprep.subr.bf16.mxu0 0
      %1012 = vmatpush1.bf16.msra.mxu0 %v972
      %1013 = vmatprep.subr.bf16.mxu0 0
      %1014 = vmatpush1.bf16.msra.mxu0 %v973
      %1015 = vmatprep.subr.bf16.mxu0 0
      %1016 = vmatpush1.bf16.msra.mxu0 %v974
      %1017 = vmatprep.subr.bf16.mxu0 0
      %1018 = vmatpush1.bf16.msra.mxu0 %v975
      %1019 = vmatprep.subr.bf16.mxu0 0
      %1020 = vmatpush1.bf16.msra.mxu0 %v976
      %1021 = vmatprep.subr.bf16.mxu0 0
      %1022 = vmatpush1.bf16.msra.mxu0 %v977
      %1023 = vmatprep.subr.bf16.mxu0 0
      %1024 = vmatpush1.bf16.msra.mxu0 %v978
      %1025 = vmatprep.subr.bf16.mxu0 0
      %1026 = vmatpush1.bf16.msra.mxu0 %v979
      %1027 = vmatprep.subr.bf16.mxu0 0
      %1028 = vmatpush1.bf16.msra.mxu0 %v980
      %1029 = vmatprep.mubr.bf16.mxu0 %v298
      %1030 = vmatmul.mubr.bf16.gmra.mrb[0].mxu0 %v297
      %v1031 = vpop.f32.mrb[0].mxu0
      %v1032 = vadd.f32 0.0, %v1031
      %v1033 = vpop.f32.mrb[0].mxu0
      %v1034 = vpop.f32.mrb[0].mxu0
      %v1035 = vadd.f32 0.0, %v1034
      %v1036 = vpop.f32.mrb[0].mxu0
      %1037 = vmatprep.mubr.bf16.mxu0 %v308
      %1038 = vmatmul.mubr.bf16.gmra.mrb[0].mxu0 %v307
      %v1039 = vpop.f32.mrb[0].mxu0
      %v1040 = vadd.f32 0.0, %v1039
      %v1041 = vpop.f32.mrb[0].mxu0
      %v1042 = vpop.f32.mrb[0].mxu0
      %v1043 = vpop.f32.mrb[0].mxu0
      %1044 = vdwg.mxu0
      %vm1048 = vcmask 1044480
      %v1049 = vrot.slane %v1032, 3
      %v1050 = vrot.slane %v1035, 3
      %v1051 = vsel %vm1048, %v1049, %v1050
      %v1052 = vrot.slane %v1040, 3
      %v1053 = vsel %vm1048, %v1050, %v1052
      %v1056 = vadd.f32 %v866, %v1051
      %v1057 = vadd.f32 %v867, %v1053
      %s1058 = scalar_lea.vmem %s2, 512
      %v1059 = vld [vmem:[%s1058] sm:$0xf]
      %v1060 = vld [vmem:[%s1058 + $0x4] sm:$0xf]
      %v1061 = vld [vmem:[%s1058 + $0x8] sm:$0xf]
      %v1062 = vld [vmem:[%s1058 + $0xc] sm:$0xf]
      %v1063 = vld [vmem:[%s1058 + $0x10] sm:$0xf]
      %v1064 = vld [vmem:[%s1058 + $0x14] sm:$0xf]
      %v1065 = vld [vmem:[%s1058 + $0x18] sm:$0xf]
      %v1066 = vld [vmem:[%s1058 + $0x1c] sm:$0xf]
      %v1067 = vld [vmem:[%s1058 + $0x20] sm:$0xf]
      %v1068 = vld [vmem:[%s1058 + $0x24] sm:$0xf]
      %v1069 = vld [vmem:[%s1058 + $0x28] sm:$0xf]
      %v1070 = vld [vmem:[%s1058 + $0x2c] sm:$0xf]
      %v1071 = vld [vmem:[%s1058 + $0x30] sm:$0xf]
      %v1072 = vld [vmem:[%s1058 + $0x34] sm:$0xf]
      %v1073 = vld [vmem:[%s1058 + $0x38] sm:$0xf]
      %v1074 = vld [vmem:[%s1058 + $0x3c] sm:$0xf]
      %v1075 = vld [vmem:[%s1058 + $0x40] sm:$0xf]
      %v1076 = vld [vmem:[%s1058 + $0x44] sm:$0xf]
      %v1077 = vld [vmem:[%s1058 + $0x48] sm:$0xf]
      %v1078 = vld [vmem:[%s1058 + $0x4c] sm:$0xf]
      %v1079 = vld [vmem:[%s1058 + $0x50] sm:$0xf]
      %v1080 = vld [vmem:[%s1058 + $0x54] sm:$0xf]
      %v1081 = vld [vmem:[%s1058 + $0x58] sm:$0xf]
      %v1082 = vld [vmem:[%s1058 + $0x5c] sm:$0xf]
      %v1083 = vld [vmem:[%s1058 + $0x60] sm:$0xf]
      %v1084 = vld [vmem:[%s1058 + $0x64] sm:$0xf]
      %v1085 = vld [vmem:[%s1058 + $0x68] sm:$0xf]
      %v1086 = vld [vmem:[%s1058 + $0x6c] sm:$0xf]
      %v1087 = vld [vmem:[%s1058 + $0x70] sm:$0xf]
      %v1088 = vld [vmem:[%s1058 + $0x74] sm:$0xf]
      %v1089 = vld [vmem:[%s1058 + $0x78] sm:$0xf]
      %v1090 = vld [vmem:[%s1058 + $0x7c] sm:$0xf]
      %v1123 = vunpack.c.l.b16 %v1059
      %v1124 = vunpack.c.l.b16 %v1060
      %v1125 = vunpack.c.l.b16 %v1061
      %v1126 = vunpack.c.l.b16 %v1062
      %v1127 = vunpack.c.l.b16 %v1063
      %v1128 = vunpack.c.l.b16 %v1064
      %v1129 = vunpack.c.l.b16 %v1065
      %v1130 = vunpack.c.l.b16 %v1066
      %v1131 = vunpack.c.l.b16 %v1067
      %v1132 = vunpack.c.l.b16 %v1068
      %v1133 = vunpack.c.l.b16 %v1069
      %v1134 = vunpack.c.l.b16 %v1070
      %v1135 = vunpack.c.l.b16 %v1071
      %v1136 = vunpack.c.l.b16 %v1072
      %v1137 = vunpack.c.l.b16 %v1073
      %v1138 = vunpack.c.l.b16 %v1074
      %v1139 = vunpack.c.l.b16 %v1075
      %v1140 = vunpack.c.l.b16 %v1076
      %v1141 = vunpack.c.l.b16 %v1077
      %v1142 = vunpack.c.l.b16 %v1078
      %v1143 = vunpack.c.l.b16 %v1079
      %v1144 = vunpack.c.l.b16 %v1080
      %v1145 = vunpack.c.l.b16 %v1081
      %v1146 = vunpack.c.l.b16 %v1082
      %v1147 = vunpack.c.l.b16 %v1083
      %v1148 = vunpack.c.l.b16 %v1084
      %v1149 = vunpack.c.l.b16 %v1085
      %v1150 = vunpack.c.l.b16 %v1086
      %v1151 = vunpack.c.l.b16 %v1087
      %v1152 = vunpack.c.l.b16 %v1088
      %v1153 = vunpack.c.l.b16 %v1089
      %v1154 = vunpack.c.l.b16 %v1090
      %v1155 = vpack.c.b16 %v1124, %v1123
      %v1156 = vpack.c.b16 %v1126, %v1125
      %v1157 = vpack.c.b16 %v1128, %v1127
      %v1158 = vpack.c.b16 %v1130, %v1129
      %v1159 = vpack.c.b16 %v1132, %v1131
      %v1160 = vpack.c.b16 %v1134, %v1133
      %v1161 = vpack.c.b16 %v1136, %v1135
      %v1162 = vpack.c.b16 %v1138, %v1137
      %v1163 = vpack.c.b16 %v1140, %v1139
      %v1164 = vpack.c.b16 %v1142, %v1141
      %v1165 = vpack.c.b16 %v1144, %v1143
      %v1166 = vpack.c.b16 %v1146, %v1145
      %v1167 = vpack.c.b16 %v1148, %v1147
      %v1168 = vpack.c.b16 %v1150, %v1149
      %v1169 = vpack.c.b16 %v1152, %v1151
      %v1170 = vpack.c.b16 %v1154, %v1153
      %1187 = vmatprep.subr.bf16.mxu0 0
      %1188 = vmatpush1.bf16.msra.mxu0 %v1155
      %1189 = vmatprep.subr.bf16.mxu0 0
      %1190 = vmatpush1.bf16.msra.mxu0 %v1156
      %1191 = vmatprep.subr.bf16.mxu0 0
      %1192 = vmatpush1.bf16.msra.mxu0 %v1157
      %1193 = vmatprep.subr.bf16.mxu0 0
      %1194 = vmatpush1.bf16.msra.mxu0 %v1158
      %1195 = vmatprep.subr.bf16.mxu0 0
      %1196 = vmatpush1.bf16.msra.mxu0 %v1159
      %1197 = vmatprep.subr.bf16.mxu0 0
      %1198 = vmatpush1.bf16.msra.mxu0 %v1160
      %1199 = vmatprep.subr.bf16.mxu0 0
      %1200 = vmatpush1.bf16.msra.mxu0 %v1161
      %1201 = vmatprep.subr.bf16.mxu0 0
      %1202 = vmatpush1.bf16.msra.mxu0 %v1162
      %1203 = vmatprep.subr.bf16.mxu0 0
      %1204 = vmatpush1.bf16.msra.mxu0 %v1163
      %1205 = vmatprep.subr.bf16.mxu0 0
      %1206 = vmatpush1.bf16.msra.mxu0 %v1164
      %1207 = vmatprep.subr.bf16.mxu0 0
      %1208 = vmatpush1.bf16.msra.mxu0 %v1165
      %1209 = vmatprep.subr.bf16.mxu0 0
      %1210 = vmatpush1.bf16.msra.mxu0 %v1166
      %1211 = vmatprep.subr.bf16.mxu0 0
      %1212 = vmatpush1.bf16.msra.mxu0 %v1167
      %1213 = vmatprep.subr.bf16.mxu0 0
      %1214 = vmatpush1.bf16.msra.mxu0 %v1168
      %1215 = vmatprep.subr.bf16.mxu0 0
      %1216 = vmatpush1.bf16.msra.mxu0 %v1169
      %1217 = vmatprep.subr.bf16.mxu0 0
      %1218 = vmatpush1.bf16.msra.mxu0 %v1170
      %1219 = vmatprep.mubr.bf16.mxu0 %v298
      %1220 = vmatmul.mubr.bf16.gmra.mrb[0].mxu0 %v297
      %v1221 = vpop.f32.mrb[0].mxu0
      %v1222 = vadd.f32 0.0, %v1221
      %v1223 = vpop.f32.mrb[0].mxu0
      %v1224 = vpop.f32.mrb[0].mxu0
      %v1225 = vadd.f32 0.0, %v1224
      %v1226 = vpop.f32.mrb[0].mxu0
      %1227 = vmatprep.mubr.bf16.mxu0 %v308
      %1228 = vmatmul.mubr.bf16.gmra.mrb[0].mxu0 %v307
      %v1229 = vpop.f32.mrb[0].mxu0
      %v1230 = vadd.f32 0.0, %v1229
      %v1231 = vpop.f32.mrb[0].mxu0
      %v1232 = vpop.f32.mrb[0].mxu0
      %v1233 = vpop.f32.mrb[0].mxu0
      %1234 = vdwg.mxu0
      %vm1238 = vcmask 1043456
      %v1239 = vrot.slane %v1222, 4
      %v1240 = vrot.slane %v1225, 4
      %v1241 = vsel %vm1238, %v1239, %v1240
      %v1242 = vrot.slane %v1230, 4
      %v1243 = vsel %vm1238, %v1240, %v1242
      %v1246 = vadd.f32 %v1056, %v1241
      %v1247 = vadd.f32 %v1057, %v1243
      %s1248 = scalar_lea.vmem %s2, 640
      %v1249 = vld [vmem:[%s1248] sm:$0xf]
      %v1250 = vld [vmem:[%s1248 + $0x4] sm:$0xf]
      %v1251 = vld [vmem:[%s1248 + $0x8] sm:$0xf]
      %v1252 = vld [vmem:[%s1248 + $0xc] sm:$0xf]
      %v1253 = vld [vmem:[%s1248 + $0x10] sm:$0xf]
      %v1254 = vld [vmem:[%s1248 + $0x14] sm:$0xf]
      %v1255 = vld [vmem:[%s1248 + $0x18] sm:$0xf]
      %v1256 = vld [vmem:[%s1248 + $0x1c] sm:$0xf]
      %v1257 = vld [vmem:[%s1248 + $0x20] sm:$0xf]
      %v1258 = vld [vmem:[%s1248 + $0x24] sm:$0xf]
      %v1259 = vld [vmem:[%s1248 + $0x28] sm:$0xf]
      %v1260 = vld [vmem:[%s1248 + $0x2c] sm:$0xf]
      %v1261 = vld [vmem:[%s1248 + $0x30] sm:$0xf]
      %v1262 = vld [vmem:[%s1248 + $0x34] sm:$0xf]
      %v1263 = vld [vmem:[%s1248 + $0x38] sm:$0xf]
      %v1264 = vld [vmem:[%s1248 + $0x3c] sm:$0xf]
      %v1265 = vld [vmem:[%s1248 + $0x40] sm:$0xf]
      %v1266 = vld [vmem:[%s1248 + $0x44] sm:$0xf]
      %v1267 = vld [vmem:[%s1248 + $0x48] sm:$0xf]
      %v1268 = vld [vmem:[%s1248 + $0x4c] sm:$0xf]
      %v1269 = vld [vmem:[%s1248 + $0x50] sm:$0xf]
      %v1270 = vld [vmem:[%s1248 + $0x54] sm:$0xf]
      %v1271 = vld [vmem:[%s1248 + $0x58] sm:$0xf]
      %v1272 = vld [vmem:[%s1248 + $0x5c] sm:$0xf]
      %v1273 = vld [vmem:[%s1248 + $0x60] sm:$0xf]
      %v1274 = vld [vmem:[%s1248 + $0x64] sm:$0xf]
      %v1275 = vld [vmem:[%s1248 + $0x68] sm:$0xf]
      %v1276 = vld [vmem:[%s1248 + $0x6c] sm:$0xf]
      %v1277 = vld [vmem:[%s1248 + $0x70] sm:$0xf]
      %v1278 = vld [vmem:[%s1248 + $0x74] sm:$0xf]
      %v1279 = vld [vmem:[%s1248 + $0x78] sm:$0xf]
      %v1280 = vld [vmem:[%s1248 + $0x7c] sm:$0xf]
      %v1313 = vunpack.c.l.b16 %v1249
      %v1314 = vunpack.c.l.b16 %v1250
      %v1315 = vunpack.c.l.b16 %v1251
      %v1316 = vunpack.c.l.b16 %v1252
      %v1317 = vunpack.c.l.b16 %v1253
      %v1318 = vunpack.c.l.b16 %v1254
      %v1319 = vunpack.c.l.b16 %v1255
      %v1320 = vunpack.c.l.b16 %v1256
      %v1321 = vunpack.c.l.b16 %v1257
      %v1322 = vunpack.c.l.b16 %v1258
      %v1323 = vunpack.c.l.b16 %v1259
      %v1324 = vunpack.c.l.b16 %v1260
      %v1325 = vunpack.c.l.b16 %v1261
      %v1326 = vunpack.c.l.b16 %v1262
      %v1327 = vunpack.c.l.b16 %v1263
      %v1328 = vunpack.c.l.b16 %v1264
      %v1329 = vunpack.c.l.b16 %v1265
      %v1330 = vunpack.c.l.b16 %v1266
      %v1331 = vunpack.c.l.b16 %v1267
      %v1332 = vunpack.c.l.b16 %v1268
      %v1333 = vunpack.c.l.b16 %v1269
      %v1334 = vunpack.c.l.b16 %v1270
      %v1335 = vunpack.c.l.b16 %v1271
      %v1336 = vunpack.c.l.b16 %v1272
      %v1337 = vunpack.c.l.b16 %v1273
      %v1338 = vunpack.c.l.b16 %v1274
      %v1339 = vunpack.c.l.b16 %v1275
      %v1340 = vunpack.c.l.b16 %v1276
      %v1341 = vunpack.c.l.b16 %v1277
      %v1342 = vunpack.c.l.b16 %v1278
      %v1343 = vunpack.c.l.b16 %v1279
      %v1344 = vunpack.c.l.b16 %v1280
      %v1345 = vpack.c.b16 %v1314, %v1313
      %v1346 = vpack.c.b16 %v1316, %v1315
      %v1347 = vpack.c.b16 %v1318, %v1317
      %v1348 = vpack.c.b16 %v1320, %v1319
      %v1349 = vpack.c.b16 %v1322, %v1321
      %v1350 = vpack.c.b16 %v1324, %v1323
      %v1351 = vpack.c.b16 %v1326, %v1325
      %v1352 = vpack.c.b16 %v1328, %v1327
      %v1353 = vpack.c.b16 %v1330, %v1329
      %v1354 = vpack.c.b16 %v1332, %v1331
      %v1355 = vpack.c.b16 %v1334, %v1333
      %v1356 = vpack.c.b16 %v1336, %v1335
      %v1357 = vpack.c.b16 %v1338, %v1337
      %v1358 = vpack.c.b16 %v1340, %v1339
      %v1359 = vpack.c.b16 %v1342, %v1341
      %v1360 = vpack.c.b16 %v1344, %v1343
      %1377 = vmatprep.subr.bf16.mxu0 0
      %1378 = vmatpush1.bf16.msra.mxu0 %v1345
      %1379 = vmatprep.subr.bf16.mxu0 0
      %1380 = vmatpush1.bf16.msra.mxu0 %v1346
      %1381 = vmatprep.subr.bf16.mxu0 0
      %1382 = vmatpush1.bf16.msra.mxu0 %v1347
      %1383 = vmatprep.subr.bf16.mxu0 0
      %1384 = vmatpush1.bf16.msra.mxu0 %v1348
      %1385 = vmatprep.subr.bf16.mxu0 0
      %1386 = vmatpush1.bf16.msra.mxu0 %v1349
      %1387 = vmatprep.subr.bf16.mxu0 0
      %1388 = vmatpush1.bf16.msra.mxu0 %v1350
      %1389 = vmatprep.subr.bf16.mxu0 0
      %1390 = vmatpush1.bf16.msra.mxu0 %v1351
      %1391 = vmatprep.subr.bf16.mxu0 0
      %1392 = vmatpush1.bf16.msra.mxu0 %v1352
      %1393 = vmatprep.subr.bf16.mxu0 0
      %1394 = vmatpush1.bf16.msra.mxu0 %v1353
      %1395 = vmatprep.subr.bf16.mxu0 0
      %1396 = vmatpush1.bf16.msra.mxu0 %v1354
      %1397 = vmatprep.subr.bf16.mxu0 0
      %1398 = vmatpush1.bf16.msra.mxu0 %v1355
      %1399 = vmatprep.subr.bf16.mxu0 0
      %1400 = vmatpush1.bf16.msra.mxu0 %v1356
      %1401 = vmatprep.subr.bf16.mxu0 0
      %1402 = vmatpush1.bf16.msra.mxu0 %v1357
      %1403 = vmatprep.subr.bf16.mxu0 0
      %1404 = vmatpush1.bf16.msra.mxu0 %v1358
      %1405 = vmatprep.subr.bf16.mxu0 0
      %1406 = vmatpush1.bf16.msra.mxu0 %v1359
      %1407 = vmatprep.subr.bf16.mxu0 0
      %1408 = vmatpush1.bf16.msra.mxu0 %v1360
      %1409 = vmatprep.mubr.bf16.mxu0 %v298
      %1410 = vmatmul.mubr.bf16.gmra.mrb[0].mxu0 %v297
      %v1411 = vpop.f32.mrb[0].mxu0
      %v1412 = vadd.f32 0.0, %v1411
      %v1413 = vpop.f32.mrb[0].mxu0
      %v1414 = vpop.f32.mrb[0].mxu0
      %v1415 = vadd.f32 0.0, %v1414
      %v1416 = vpop.f32.mrb[0].mxu0
      %1417 = vmatprep.mubr.bf16.mxu0 %v308
      %1418 = vmatmul.mubr.bf16.gmra.mrb[0].mxu0 %v307
      %v1419 = vpop.f32.mrb[0].mxu0
      %v1420 = vadd.f32 0.0, %v1419
      %v1421 = vpop.f32.mrb[0].mxu0
      %v1422 = vpop.f32.mrb[0].mxu0
      %v1423 = vpop.f32.mrb[0].mxu0
      %1424 = vdwg.mxu0
      %vm1428 = vcmask 1042432
      %v1429 = vrot.slane %v1412, 5
      %v1430 = vrot.slane %v1415, 5
      %v1431 = vsel %vm1428, %v1429, %v1430
      %v1432 = vrot.slane %v1420, 5
      %v1433 = vsel %vm1428, %v1430, %v1432
      %v1436 = vadd.f32 %v1246, %v1431
      %v1437 = vadd.f32 %v1247, %v1433
      %s1438 = scalar_lea.vmem %s2, 768
      %v1439 = vld [vmem:[%s1438] sm:$0xf]
      %v1440 = vld [vmem:[%s1438 + $0x4] sm:$0xf]
      %v1441 = vld [vmem:[%s1438 + $0x8] sm:$0xf]
      %v1442 = vld [vmem:[%s1438 + $0xc] sm:$0xf]
      %v1443 = vld [vmem:[%s1438 + $0x10] sm:$0xf]
      %v1444 = vld [vmem:[%s1438 + $0x14] sm:$0xf]
      %v1445 = vld [vmem:[%s1438 + $0x18] sm:$0xf]
      %v1446 = vld [vmem:[%s1438 + $0x1c] sm:$0xf]
      %v1447 = vld [vmem:[%s1438 + $0x20] sm:$0xf]
      %v1448 = vld [vmem:[%s1438 + $0x24] sm:$0xf]
      %v1449 = vld [vmem:[%s1438 + $0x28] sm:$0xf]
      %v1450 = vld [vmem:[%s1438 + $0x2c] sm:$0xf]
      %v1451 = vld [vmem:[%s1438 + $0x30] sm:$0xf]
      %v1452 = vld [vmem:[%s1438 + $0x34] sm:$0xf]
      %v1453 = vld [vmem:[%s1438 + $0x38] sm:$0xf]
      %v1454 = vld [vmem:[%s1438 + $0x3c] sm:$0xf]
      %v1455 = vld [vmem:[%s1438 + $0x40] sm:$0xf]
      %v1456 = vld [vmem:[%s1438 + $0x44] sm:$0xf]
      %v1457 = vld [vmem:[%s1438 + $0x48] sm:$0xf]
      %v1458 = vld [vmem:[%s1438 + $0x4c] sm:$0xf]
      %v1459 = vld [vmem:[%s1438 + $0x50] sm:$0xf]
      %v1460 = vld [vmem:[%s1438 + $0x54] sm:$0xf]
      %v1461 = vld [vmem:[%s1438 + $0x58] sm:$0xf]
      %v1462 = vld [vmem:[%s1438 + $0x5c] sm:$0xf]
      %v1463 = vld [vmem:[%s1438 + $0x60] sm:$0xf]
      %v1464 = vld [vmem:[%s1438 + $0x64] sm:$0xf]
      %v1465 = vld [vmem:[%s1438 + $0x68] sm:$0xf]
      %v1466 = vld [vmem:[%s1438 + $0x6c] sm:$0xf]
      %v1467 = vld [vmem:[%s1438 + $0x70] sm:$0xf]
      %v1468 = vld [vmem:[%s1438 + $0x74] sm:$0xf]
      %v1469 = vld [vmem:[%s1438 + $0x78] sm:$0xf]
      %v1470 = vld [vmem:[%s1438 + $0x7c] sm:$0xf]
      %v1503 = vunpack.c.l.b16 %v1439
      %v1504 = vunpack.c.l.b16 %v1440
      %v1505 = vunpack.c.l.b16 %v1441
      %v1506 = vunpack.c.l.b16 %v1442
      %v1507 = vunpack.c.l.b16 %v1443
      %v1508 = vunpack.c.l.b16 %v1444
      %v1509 = vunpack.c.l.b16 %v1445
      %v1510 = vunpack.c.l.b16 %v1446
      %v1511 = vunpack.c.l.b16 %v1447
      %v1512 = vunpack.c.l.b16 %v1448
      %v1513 = vunpack.c.l.b16 %v1449
      %v1514 = vunpack.c.l.b16 %v1450
      %v1515 = vunpack.c.l.b16 %v1451
      %v1516 = vunpack.c.l.b16 %v1452
      %v1517 = vunpack.c.l.b16 %v1453
      %v1518 = vunpack.c.l.b16 %v1454
      %v1519 = vunpack.c.l.b16 %v1455
      %v1520 = vunpack.c.l.b16 %v1456
      %v1521 = vunpack.c.l.b16 %v1457
      %v1522 = vunpack.c.l.b16 %v1458
      %v1523 = vunpack.c.l.b16 %v1459
      %v1524 = vunpack.c.l.b16 %v1460
      %v1525 = vunpack.c.l.b16 %v1461
      %v1526 = vunpack.c.l.b16 %v1462
      %v1527 = vunpack.c.l.b16 %v1463
      %v1528 = vunpack.c.l.b16 %v1464
      %v1529 = vunpack.c.l.b16 %v1465
      %v1530 = vunpack.c.l.b16 %v1466
      %v1531 = vunpack.c.l.b16 %v1467
      %v1532 = vunpack.c.l.b16 %v1468
      %v1533 = vunpack.c.l.b16 %v1469
      %v1534 = vunpack.c.l.b16 %v1470
      %v1535 = vpack.c.b16 %v1504, %v1503
      %v1536 = vpack.c.b16 %v1506, %v1505
      %v1537 = vpack.c.b16 %v1508, %v1507
      %v1538 = vpack.c.b16 %v1510, %v1509
      %v1539 = vpack.c.b16 %v1512, %v1511
      %v1540 = vpack.c.b16 %v1514, %v1513
      %v1541 = vpack.c.b16 %v1516, %v1515
      %v1542 = vpack.c.b16 %v1518, %v1517
      %v1543 = vpack.c.b16 %v1520, %v1519
      %v1544 = vpack.c.b16 %v1522, %v1521
      %v1545 = vpack.c.b16 %v1524, %v1523
      %v1546 = vpack.c.b16 %v1526, %v1525
      %v1547 = vpack.c.b16 %v1528, %v1527
      %v1548 = vpack.c.b16 %v1530, %v1529
      %v1549 = vpack.c.b16 %v1532, %v1531
      %v1550 = vpack.c.b16 %v1534, %v1533
      %1567 = vmatprep.subr.bf16.mxu0 0
      %1568 = vmatpush1.bf16.msra.mxu0 %v1535
      %1569 = vmatprep.subr.bf16.mxu0 0
      %1570 = vmatpush1.bf16.msra.mxu0 %v1536
      %1571 = vmatprep.subr.bf16.mxu0 0
      %1572 = vmatpush1.bf16.msra.mxu0 %v1537
      %1573 = vmatprep.subr.bf16.mxu0 0
      %1574 = vmatpush1.bf16.msra.mxu0 %v1538
      %1575 = vmatprep.subr.bf16.mxu0 0
      %1576 = vmatpush1.bf16.msra.mxu0 %v1539
      %1577 = vmatprep.subr.bf16.mxu0 0
      %1578 = vmatpush1.bf16.msra.mxu0 %v1540
      %1579 = vmatprep.subr.bf16.mxu0 0
      %1580 = vmatpush1.bf16.msra.mxu0 %v1541
      %1581 = vmatprep.subr.bf16.mxu0 0
      %1582 = vmatpush1.bf16.msra.mxu0 %v1542
      %1583 = vmatprep.subr.bf16.mxu0 0
      %1584 = vmatpush1.bf16.msra.mxu0 %v1543
      %1585 = vmatprep.subr.bf16.mxu0 0
      %1586 = vmatpush1.bf16.msra.mxu0 %v1544
      %1587 = vmatprep.subr.bf16.mxu0 0
      %1588 = vmatpush1.bf16.msra.mxu0 %v1545
      %1589 = vmatprep.subr.bf16.mxu0 0
      %1590 = vmatpush1.bf16.msra.mxu0 %v1546
      %1591 = vmatprep.subr.bf16.mxu0 0
      %1592 = vmatpush1.bf16.msra.mxu0 %v1547
      %1593 = vmatprep.subr.bf16.mxu0 0
      %1594 = vmatpush1.bf16.msra.mxu0 %v1548
      %1595 = vmatprep.subr.bf16.mxu0 0
      %1596 = vmatpush1.bf16.msra.mxu0 %v1549
      %1597 = vmatprep.subr.bf16.mxu0 0
      %1598 = vmatpush1.bf16.msra.mxu0 %v1550
      %1599 = vmatprep.mubr.bf16.mxu0 %v298
      %1600 = vmatmul.mubr.bf16.gmra.mrb[0].mxu0 %v297
      %v1601 = vpop.f32.mrb[0].mxu0
      %v1602 = vadd.f32 0.0, %v1601
      %v1603 = vpop.f32.mrb[0].mxu0
      %v1604 = vpop.f32.mrb[0].mxu0
      %v1605 = vadd.f32 0.0, %v1604
      %v1606 = vpop.f32.mrb[0].mxu0
      %1607 = vmatprep.mubr.bf16.mxu0 %v308
      %1608 = vmatmul.mubr.bf16.gmra.mrb[0].mxu0 %v307
      %v1609 = vpop.f32.mrb[0].mxu0
      %v1610 = vadd.f32 0.0, %v1609
      %v1611 = vpop.f32.mrb[0].mxu0
      %v1612 = vpop.f32.mrb[0].mxu0
      %v1613 = vpop.f32.mrb[0].mxu0
      %1614 = vdwg.mxu0
      %vm1618 = vcmask 1041408
      %v1619 = vrot.slane %v1602, 6
      %v1620 = vrot.slane %v1605, 6
      %v1621 = vsel %vm1618, %v1619, %v1620
      %v1622 = vrot.slane %v1610, 6
      %v1623 = vsel %vm1618, %v1620, %v1622
      %v1626 = vadd.f32 %v1436, %v1621
      %v1627 = vadd.f32 %v1437, %v1623
      %v1628 = vld [vmem:[%s3] sm:$0x1]
      %v1630 = vlaneseq
      %v1631 = vshrl.u32 %v1630, 7
      %v1632 = vsub.s32 0, %v1631
      %v1633 = vrot.slane %v1628, %v1632
      %v1635 = vadd.f32 %v1626, %v1633
      %v1636 = vadd.f32 %v1627, %v1633
      %v1637 = vmax.f32 %v1635, 0.0
      %v1638 = vmax.f32 %v1636, 0.0
      %v1639 = vpack.c.bf16 %v1638, %v1637
      %v1641 = vunpack.c.l.b16 %v1639
      %v1642 = vunpack.c.h.b16 %v1639
      %v1643 = vpack.c.b16 %v1641, %v1641
      %v1644 = vpack.c.b16 %v1642, %v1642
      %1647 = vst [vmem:[%s284] sm:$0xf] %v1643
      %1648 = vst [vmem:[%s284 + $0x4] sm:$0xf] %v1644
      %s1649 = smul.u32 2, %s20
      %p1650 = scmp.lt.s32.totalorder %s19, 1
      %s1651 = scalar_select %p1650, %s19, 1
      %p1652 = scmp.lt.s32.totalorder %s1649, 1
      %s1653 = scalar_select %p1652, %s1649, 1
      %s1654 = smul.addr %s1651, 2
      %s1655 = sadd.s32 %s1653, %s1654
      %s1656 = smul.addr %s1655, 4
      %s1657 = scalar_lea.vmem %s4, %s1656
      // Predicated region
      $region37: #{cycle_generator_forward.15} parent=35 // pred_check
        %p1658 = pneg %p147
      $region38: #{cycle_generator_forward.15} parent=35 // pred_check_branch
        %1660 = sbr.rel (%p1658) target = $region40
      $region39: #{cycle_generator_forward.15} parent=35 // pred_region
        %s1661 = smul.u32 2, %s20
      $region40: #{cycle_generator_forward.15} parent=35 // pred_fallthru
        _
    $region36: #{cycle_generator_forward.15} parent=5 // pred_fallthru
      _
    %p1662 = scmp.le.s32.totalorder 2, %s10
    // Predicated region
    $region41: #{cycle_generator_forward.15} parent=5 // pred_check
      %p1663 = pneg %p1662
    $region42: #{cycle_generator_forward.15} parent=5 // pred_check_branch
      %1665 = sbr.rel (%p1663) target = $region44
    $region43: #{cycle_generator_forward.15} parent=5 // pred_region
      %s1666 = ssub.s32 %s10, 2
      // Predicated region
      $region45: #{cycle_generator_forward.15} parent=43 // pred_check
        %p1667 = pneg %p153
      $region46: #{cycle_generator_forward.15} parent=43 // pred_check_branch
        %1669 = sbr.rel (%p1667) target = $region48
      $region47: #{cycle_generator_forward.15} parent=43 // pred_region
        %s1670 = smul.u32 2, %s22
        %p1671 = scmp.lt.s32.totalorder %s21, 1
        %s1672 = scalar_select %p1671, %s21, 1
        %p1673 = scmp.lt.s32.totalorder %s1670, 1
        %s1674 = scalar_select %p1673, %s1670, 1
        %s1675 = smul.addr %s1672, 2
        %s1676 = sadd.s32 %s1674, %s1675
        %s1677 = smul.addr %s1676, 4
        %s1678 = scalar_lea.vmem %s4, %s1677
      $region48: #{cycle_generator_forward.15} parent=43 // pred_fallthru
        _
    $region44: #{cycle_generator_forward.15} parent=5 // pred_fallthru
      _
  $region6: #{cycle_generator_forward.15} parent=0 // loop_footer
    %s14 = sadd.s32 1, %s10
  $region7: #{cycle_generator_forward.15} parent=0 // loop_footer_branch
    %9 = sbr.rel target = $region3
  $region8: #{cycle_generator_forward.15} parent=0 // loop_exit
    _

// kernel: cycle_generator_forward.20
$region0: #{cycle_generator_forward.20}
  #allocation0 [shape = 'u32[]', space=smem, size = 0x4, offset = 0x4, fixed_abs, tag = 'smem constant byte address 0x4 - core index']
  #allocation1 [shape = 'u32[144,128]{1,0:T(1,128)}', space=vmem, size = 0x12000, scoped, tag = 'internal scratch']
  %s0 = inlined_call_operand.vmem [shape: bf16[2,32,128], index: 0, kind: input, shape index: {}, may-alias: {0,1}]
  %s1 = inlined_call_operand.vmem [shape: bf16[2,32,128], index: 1, kind: input, shape index: {}, may-alias: {0,1}]
  %s2 = inlined_call_operand.vmem [shape: bf16[7,128,256], index: 2, kind: input, shape index: {}]
  %s3 = inlined_call_operand.vmem [shape: f32[1,256], index: 3, kind: input, shape index: {}]
  %s4 = inlined_call_operand.vmem [shape: bf16[2,16,256], index: 4, kind: output, shape index: {}]
  %s5 = sld [smem:[#allocation0]]
  $region49: #{cycle_generator_forward.20} parent=0
    _
  %s7 = ssub.s32 1, %s5
  %s8 = scalar_select 0, %s7, %s5
  loop: start=0, step=1, limit=4
  $region2: #{cycle_generator_forward.20} parent=0 // loop_pre_header
    _
  $region3: #{cycle_generator_forward.20} parent=0 // loop_header
    %s10 = sphi 0, %s14
    %p11 = scmp.ge.s32.totalorder %s10, 4
    %s17 = sphi 0, %s29
    %s18 = sphi 0, %s25
    %s19 = sphi 0, %s17
    %s20 = sphi 0, %s18
    %s21 = sphi 0, %s19
    %s22 = sphi 0, %s20
    %s34 = sphi 0, %s36
    %s37 = sphi 0, %s34
    %s38 = sphi 0, %s37
    %s54 = sphi 0, %s38
    %s64 = sphi 0, %s66
    %s67 = sphi 0, %s64
    %s68 = sphi 0, %s67
    %s84 = sphi 0, %s68
    %s88 = sphi 0, %s88
    %s90 = sphi 0, %s88
    %s91 = sphi 0, %s90
    %s105 = sphi 0, %s91
    %s109 = sphi 0, %s109
    %s111 = sphi 0, %s109
    %s112 = sphi 0, %s111
    %s126 = sphi 0, %s112
    %s134 = sphi 0, %s136
    %s137 = sphi 0, %s134
    %s138 = sphi 0, %s137
    %s154 = sphi 0, %s138
  $region4: #{cycle_generator_forward.20} parent=0 // loop_header_branch
    %13 = sbr.rel (%p11) target = $region8
  $region5: #{cycle_generator_forward.20} parent=0 // loop_body
    %s15 = ssub.s32 %s10, 1
    %s16 = ssub.s32 %s10, 2
    %s23 = sadd.s32 1, %s18
    %p24 = scmp.ge.s32.totalorder %s23, 1
    %s25 = scalar_select %p24, 0, %s23
    %s26 = sadd.s32 1, %s17
    %s27 = scalar_select %p24, %s26, %s17
    %p28 = scmp.ge.s32.totalorder %s27, 2
    %s29 = scalar_select %p28, 0, %s27
    %s30 = ssub.s32 %s17, %s29
    %s31 = ssub.s32 %s18, %s25
    %s32 = sor.u32 %s30, %s31
    %p33 = scmp.eq.s32.totalorder %s32, 0
    %s35 = sadd.s32 %s34, 1
    %s36 = scalar_select %p33, %s34, %s35
    %p39 = pneg %p33
    %p40 = scmp.eq.s32.totalorder %s10, 1
    %p41 = por %p39, %p40
    %p42 = scmp.ne.s32.totalorder %s34, %s37
    %p43 = scmp.eq.s32.totalorder %s10, 0
    %p44 = por %p42, %p43
    %p45 = scmp.ne.s32.totalorder %s34, %s37
    %p46 = scmp.eq.s32.totalorder %s15, 1
    %p47 = por %p45, %p46
    %p48 = scmp.ne.s32.totalorder %s37, %s38
    %p49 = scmp.eq.s32.totalorder %s15, 0
    %p50 = por %p48, %p49
    %p51 = scmp.ne.s32.totalorder %s37, %s38
    %p52 = scmp.eq.s32.totalorder %s16, 1
    %p53 = por %p51, %p52
    %p55 = scmp.ne.s32.totalorder %s38, %s54
    %p56 = scmp.eq.s32.totalorder %s16, 0
    %p57 = por %p55, %p56
    %s58 = sadd.s32 %s18, 1
    %s59 = sadd.s32 %s25, 1
    %s60 = ssub.s32 %s17, %s29
    %s61 = ssub.s32 %s58, %s59
    %s62 = sor.u32 %s60, %s61
    %p63 = scmp.eq.s32.totalorder %s62, 0
    %s65 = sadd.s32 %s64, 1
    %s66 = scalar_select %p63, %s64, %s65
    %p69 = pneg %p63
    %p70 = scmp.eq.s32.totalorder %s10, 1
    %p71 = por %p69, %p70
    %p72 = scmp.ne.s32.totalorder %s64, %s67
    %p73 = scmp.eq.s32.totalorder %s10, 0
    %p74 = por %p72, %p73
    %p75 = scmp.ne.s32.totalorder %s64, %s67
    %p76 = scmp.eq.s32.totalorder %s15, 1
    %p77 = por %p75, %p76
    %p78 = scmp.ne.s32.totalorder %s67, %s68
    %p79 = scmp.eq.s32.totalorder %s15, 0
    %p80 = por %p78, %p79
    %p81 = scmp.ne.s32.totalorder %s67, %s68
    %p82 = scmp.eq.s32.totalorder %s16, 1
    %p83 = por %p81, %p82
    %p85 = scmp.ne.s32.totalorder %s68, %s84
    %p86 = scmp.eq.s32.totalorder %s16, 0
    %p87 = por %p85, %p86
    %s89 = sadd.s32 %s88, 1
    %p92 = scmp.eq.s32.totalorder %s10, 1
    %p93 = scmp.ne.s32.totalorder %s88, %s90
    %p94 = scmp.eq.s32.totalorder %s10, 0
    %p95 = por %p93, %p94
    %p96 = scmp.ne.s32.totalorder %s88, %s90
    %p97 = scmp.eq.s32.totalorder %s15, 1
    %p98 = por %p96, %p97
    %p99 = scmp.ne.s32.totalorder %s90, %s91
    %p100 = scmp.eq.s32.totalorder %s15, 0
    %p101 = por %p99, %p100
    %p102 = scmp.ne.s32.totalorder %s90, %s91
    %p103 = scmp.eq.s32.totalorder %s16, 1
    %p104 = por %p102, %p103
    %p106 = scmp.ne.s32.totalorder %s91, %s105
    %p107 = scmp.eq.s32.totalorder %s16, 0
    %p108 = por %p106, %p107
    %s110 = sadd.s32 %s109, 1
    %p113 = scmp.eq.s32.totalorder %s10, 1
    %p114 = scmp.ne.s32.totalorder %s109, %s111
    %p115 = scmp.eq.s32.totalorder %s10, 0
    %p116 = por %p114, %p115
    %p117 = scmp.ne.s32.totalorder %s109, %s111
    %p118 = scmp.eq.s32.totalorder %s15, 1
    %p119 = por %p117, %p118
    %p120 = scmp.ne.s32.totalorder %s111, %s112
    %p121 = scmp.eq.s32.totalorder %s15, 0
    %p122 = por %p120, %p121
    %p123 = scmp.ne.s32.totalorder %s111, %s112
    %p124 = scmp.eq.s32.totalorder %s16, 1
    %p125 = por %p123, %p124
    %p127 = scmp.ne.s32.totalorder %s112, %s126
    %p128 = scmp.eq.s32.totalorder %s16, 0
    %p129 = por %p127, %p128
    %s130 = ssub.s32 %s17, %s29
    %s131 = ssub.s32 %s18, %s25
    %s132 = sor.u32 %s130, %s131
    %p133 = scmp.eq.s32.totalorder %s132, 0
    %s135 = sadd.s32 %s134, 1
    %s136 = scalar_select %p133, %s134, %s135
    %p139 = pneg %p133
    %p140 = scmp.eq.s32.totalorder %s10, 1
    %p141 = por %p139, %p140
    %p142 = scmp.ne.s32.totalorder %s134, %s137
    %p143 = scmp.eq.s32.totalorder %s10, 0
    %p144 = por %p142, %p143
    %p145 = scmp.ne.s32.totalorder %s134, %s137
    %p146 = scmp.eq.s32.totalorder %s15, 1
    %p147 = por %p145, %p146
    %p148 = scmp.ne.s32.totalorder %s137, %s138
    %p149 = scmp.eq.s32.totalorder %s15, 0
    %p150 = por %p148, %p149
    %p151 = scmp.ne.s32.totalorder %s137, %s138
    %p152 = scmp.eq.s32.totalorder %s16, 1
    %p153 = por %p151, %p152
    %p155 = scmp.ne.s32.totalorder %s138, %s154
    %p156 = scmp.eq.s32.totalorder %s16, 0
    %p157 = por %p155, %p156
    %p158 = scmp.le.s32.totalorder 1, %s10
    %p159 = scmp.lt.s32.totalorder %s10, 3
    %p160 = pnand %p158, %p159
    %p161 = pneg %p160
    // Predicated region
    $region9: #{cycle_generator_forward.20} parent=5 // pred_check
      _
    $region10: #{cycle_generator_forward.20} parent=5 // pred_check_branch
      %163 = sbr.rel (%p160) target = $region12
    $region11: #{cycle_generator_forward.20} parent=5 // pred_region
      %s164 = ssub.s32 %s10, 1
      // Predicated region
      $region13: #{cycle_generator_forward.20} parent=11 // pred_check
        %p165 = pneg %p101
      $region14: #{cycle_generator_forward.20} parent=11 // pred_check_branch
        %167 = sbr.rel (%p165) target = $region16
      $region15: #{cycle_generator_forward.20} parent=11 // pred_region
        _
      $region16: #{cycle_generator_forward.20} parent=11 // pred_fallthru
        _
      // Predicated region
      $region17: #{cycle_generator_forward.20} parent=11 // pred_check
        %p168 = pneg %p122
      $region18: #{cycle_generator_forward.20} parent=11 // pred_check_branch
        %170 = sbr.rel (%p168) target = $region20
      $region19: #{cycle_generator_forward.20} parent=11 // pred_region
        _
      $region20: #{cycle_generator_forward.20} parent=11 // pred_fallthru
        _
    $region12: #{cycle_generator_forward.20} parent=5 // pred_fallthru
      _
    %p171 = scmp.lt.s32.totalorder %s10, 2
    // Predicated region
    $region21: #{cycle_generator_forward.20} parent=5 // pred_check
      %p172 = pneg %p171
    $region22: #{cycle_generator_forward.20} parent=5 // pred_check_branch
      %174 = sbr.rel (%p172) target = $region24
    $region23: #{cycle_generator_forward.20} parent=5 // pred_region
      // Predicated region
      $region25: #{cycle_generator_forward.20} parent=23 // pred_check
        %p175 = pneg %p44
      $region26: #{cycle_generator_forward.20} parent=23 // pred_check_branch
        %177 = sbr.rel (%p175) target = $region28
      $region27: #{cycle_generator_forward.20} parent=23 // pred_region
        %s178 = smul.u32 2, %s18
        %p179 = scmp.lt.s32.totalorder %s17, 1
        %s180 = scalar_select %p179, %s17, 1
        %p181 = scmp.lt.s32.totalorder %s178, 3
        %s182 = scalar_select %p181, %s178, 3
        %s183 = smul.addr %s180, 4
        %s184 = sadd.s32 %s182, %s183
        %s185 = smul.addr %s184, 4
        %s186 = scalar_lea.vmem %s0, %s185
        %s187 = smul.u32 2, %s18
      $region28: #{cycle_generator_forward.20} parent=23 // pred_fallthru
        _
      // Predicated region
      $region29: #{cycle_generator_forward.20} parent=23 // pred_check
        %p188 = pneg %p74
      $region30: #{cycle_generator_forward.20} parent=23 // pred_check_branch
        %190 = sbr.rel (%p188) target = $region32
      $region31: #{cycle_generator_forward.20} parent=23 // pred_region
        %s191 = sadd.s32 %s18, 1
        %s192 = smul.u32 2, %s191
        %p193 = scmp.lt.s32.totalorder %s17, 1
        %s194 = scalar_select %p193, %s17, 1
        %p195 = scmp.lt.s32.totalorder %s192, 3
        %s196 = scalar_select %p195, %s192, 3
        %s197 = smul.addr %s194, 4
        %s198 = sadd.s32 %s196, %s197
        %s199 = smul.addr %s198, 4
        %s200 = scalar_lea.vmem %s1, %s199
        %s201 = sadd.s32 %s18, 1
        %s202 = smul.u32 2, %s201
      $region32: #{cycle_generator_forward.20} parent=23 // pred_fallthru
        _
    $region24: #{cycle_generator_forward.20} parent=5 // pred_fallthru
      _
    %p203 = scmp.le.s32.totalorder 1, %s10
    %p204 = scmp.lt.s32.totalorder %s10, 3
    %p205 = pnand %p203, %p204
    %p206 = pneg %p205
    // Predicated region
    $region33: #{cycle_generator_forward.20} parent=5 // pred_check
      _
    $region34: #{cycle_generator_forward.20} parent=5 // pred_check_branch
      %208 = sbr.rel (%p205) target = $region36
    $region35: #{cycle_generator_forward.20} parent=5 // pred_region
      %s209 = ssub.s32 %s10, 1
      %s210 = smul.u32 2, %s20
      %p211 = scmp.lt.s32.totalorder %s19, 1
      %s212 = scalar_select %p211, %s19, 1
      %p213 = scmp.lt.s32.totalorder %s210, 3
      %s214 = scalar_select %p213, %s210, 3
      %s215 = smul.addr %s212, 4
      %s216 = sadd.s32 %s214, %s215
      %s217 = smul.addr %s216, 4
      %s218 = scalar_lea.vmem %s0, %s217
      %p219 = pneg %p50
      %p220 = pneg %p47
      %s221 = sadd.s32 %s20, 1
      %s222 = smul.u32 2, %s221
      %p223 = scmp.lt.s32.totalorder %s19, 1
      %s224 = scalar_select %p223, %s19, 1
      %p225 = scmp.lt.s32.totalorder %s222, 3
      %s226 = scalar_select %p225, %s222, 3
      %s227 = smul.addr %s224, 4
      %s228 = sadd.s32 %s226, %s227
      %s229 = smul.addr %s228, 4
      %s230 = scalar_lea.vmem %s1, %s229
      %p231 = pneg %p80
      %p232 = pneg %p77
      %p233 = pneg %p101
      %p234 = pneg %p98
      %p235 = pneg %p122
      %p236 = pneg %p119
      %p237 = pneg %p150
      %p238 = pneg %p147
      %s239 = smul.u32 2, %s20
      %p240 = scmp.lt.s32.totalorder %s19, 1
      %s241 = scalar_select %p240, %s19, 1
      %p242 = scmp.lt.s32.totalorder %s239, 1
      %s243 = scalar_select %p242, %s239, 1
      %s244 = smul.addr %s243, 2
      %s245 = smul.addr %s241, 4
      %s246 = sadd.s32 %s244, %s245
      %s247 = smul.addr %s246, 4
      %s248 = scalar_lea.vmem %s4, %s247
      %s249 = smul.u32 2, %s20
      %p250 = scmp.lt.s32.totalorder %s19, 1
      %s251 = scalar_select %p250, %s19, 1
      %p252 = scmp.lt.s32.totalorder %s249, 3
      %s253 = scalar_select %p252, %s249, 3
      %s254 = smul.addr %s251, 4
      %s255 = sadd.s32 %s253, %s254
      %s256 = smul.addr %s255, 4
      %s257 = scalar_lea.vmem %s0, %s256
      %s258 = smul.u32 2, %s20
      %s259 = sadd.s32 %s20, 1
      %s260 = smul.u32 2, %s259
      %p261 = scmp.lt.s32.totalorder %s19, 1
      %s262 = scalar_select %p261, %s19, 1
      %p263 = scmp.lt.s32.totalorder %s260, 3
      %s264 = scalar_select %p263, %s260, 3
      %s265 = smul.addr %s262, 4
      %s266 = sadd.s32 %s264, %s265
      %s267 = smul.addr %s266, 4
      %s268 = scalar_lea.vmem %s1, %s267
      %s269 = sadd.s32 %s20, 1
      %s270 = smul.u32 2, %s269
      %s271 = smul.u32 2, %s20
      %p272 = scmp.lt.s32.totalorder %s19, 1
      %s273 = scalar_select %p272, %s19, 1
      %p274 = scmp.lt.s32.totalorder %s271, 1
      %s275 = scalar_select %p274, %s271, 1
      %s276 = smul.addr %s275, 2
      %s277 = smul.addr %s273, 4
      %s278 = sadd.s32 %s276, %s277
      %s279 = smul.addr %s278, 4
      %s280 = scalar_lea.vmem %s4, %s279
      %s281 = smul.u32 2, %s20
      %v283 = vld [vmem:[%s257] sm:$0xf]
      %v284 = vld [vmem:[%s257 + $0x4] sm:$0xf]
      %v285 = vld [vmem:[%s268] sm:$0xf]
      %v286 = vld [vmem:[%s268 + $0x4] sm:$0xf]
      %v289 = vunpack.c.l.b16 %v283
      %v290 = vunpack.c.l.b16 %v284
      %v291 = vpack.c.b16 %v290, %v289
      %v295 = vunpack.c.l.b16 %v285
      %v296 = vunpack.c.l.b16 %v286
      %v297 = vpack.c.b16 %v296, %v295
      %v299 = vld [vmem:[%s2] sm:$0xff]
      %v300 = vld [vmem:[%s2 + $0x8] sm:$0xff]
      %v301 = vld [vmem:[%s2 + $0x10] sm:$0xff]
      %v302 = vld [vmem:[%s2 + $0x18] sm:$0xff]
      %v303 = vld [vmem:[%s2 + $0x20] sm:$0xff]
      %v304 = vld [vmem:[%s2 + $0x28] sm:$0xff]
      %v305 = vld [vmem:[%s2 + $0x30] sm:$0xff]
      %v306 = vld [vmem:[%s2 + $0x38] sm:$0xff]
      %v307 = vld [vmem:[%s2 + $0x40] sm:$0xff]
      %v308 = vld [vmem:[%s2 + $0x48] sm:$0xff]
      %v309 = vld [vmem:[%s2 + $0x50] sm:$0xff]
      %v310 = vld [vmem:[%s2 + $0x58] sm:$0xff]
      %v311 = vld [vmem:[%s2 + $0x60] sm:$0xff]
      %v312 = vld [vmem:[%s2 + $0x68] sm:$0xff]
      %v313 = vld [vmem:[%s2 + $0x70] sm:$0xff]
      %v314 = vld [vmem:[%s2 + $0x78] sm:$0xff]
      %v331 = vunpack.c.l.b16 %v299
      %v332 = vunpack.c.h.b16 %v299
      %v333 = vunpack.c.l.b16 %v300
      %v334 = vunpack.c.h.b16 %v300
      %v335 = vunpack.c.l.b16 %v301
      %v336 = vunpack.c.h.b16 %v301
      %v337 = vunpack.c.l.b16 %v302
      %v338 = vunpack.c.h.b16 %v302
      %v339 = vunpack.c.l.b16 %v303
      %v340 = vunpack.c.h.b16 %v303
      %v341 = vunpack.c.l.b16 %v304
      %v342 = vunpack.c.h.b16 %v304
      %v343 = vunpack.c.l.b16 %v305
      %v344 = vunpack.c.h.b16 %v305
      %v345 = vunpack.c.l.b16 %v306
      %v346 = vunpack.c.h.b16 %v306
      %v347 = vunpack.c.l.b16 %v307
      %v348 = vunpack.c.h.b16 %v307
      %v349 = vunpack.c.l.b16 %v308
      %v350 = vunpack.c.h.b16 %v308
      %v351 = vunpack.c.l.b16 %v309
      %v352 = vunpack.c.h.b16 %v309
      %v353 = vunpack.c.l.b16 %v310
      %v354 = vunpack.c.h.b16 %v310
      %v355 = vunpack.c.l.b16 %v311
      %v356 = vunpack.c.h.b16 %v311
      %v357 = vunpack.c.l.b16 %v312
      %v358 = vunpack.c.h.b16 %v312
      %v359 = vunpack.c.l.b16 %v313
      %v360 = vunpack.c.h.b16 %v313
      %v361 = vunpack.c.l.b16 %v314
      %v362 = vunpack.c.h.b16 %v314
      %v363 = vpack.c.b16 %v333, %v331
      %v364 = vpack.c.b16 %v334, %v332
      %v365 = vpack.c.b16 %v337, %v335
      %v366 = vpack.c.b16 %v338, %v336
      %v367 = vpack.c.b16 %v341, %v339
      %v368 = vpack.c.b16 %v342, %v340
      %v369 = vpack.c.b16 %v345, %v343
      %v370 = vpack.c.b16 %v346, %v344
      %v371 = vpack.c.b16 %v349, %v347
      %v372 = vpack.c.b16 %v350, %v348
      %v373 = vpack.c.b16 %v353, %v351
      %v374 = vpack.c.b16 %v354, %v352
      %v375 = vpack.c.b16 %v357, %v355
      %v376 = vpack.c.b16 %v358, %v356
      %v377 = vpack.c.b16 %v361, %v359
      %v378 = vpack.c.b16 %v362, %v360
      %395 = vmatprep.subr.bf16.mxu0 %v364
      %396 = vmatpush1.bf16.msra.mxu0 %v363
      %397 = vmatprep.subr.bf16.mxu0 %v366
      %398 = vmatpush1.bf16.msra.mxu0 %v365
      %399 = vmatprep.subr.bf16.mxu0 %v368
      %400 = vmatpush1.bf16.msra.mxu0 %v367
      %401 = vmatprep.subr.bf16.mxu0 %v370
      %402 = vmatpush1.bf16.msra.mxu0 %v369
      %403 = vmatprep.subr.bf16.mxu0 %v372
      %404 = vmatpush1.bf16.msra.mxu0 %v371
      %405 = vmatprep.subr.bf16.mxu0 %v374
      %406 = vmatpush1.bf16.msra.mxu0 %v373
      %407 = vmatprep.subr.bf16.mxu0 %v376
      %408 = vmatpush1.bf16.msra.mxu0 %v375
      %409 = vmatprep.subr.bf16.mxu0 %v378
      %410 = vmatpush1.bf16.msra.mxu0 %v377
      %411 = vmatprep.subr.bf16.mxu0 0
      %412 = vmatpush1.bf16.msra.mxu0 0
      %413 = vmatprep.subr.bf16.mxu0 0
      %414 = vmatpush1.bf16.msra.mxu0 0
      %415 = vmatprep.subr.bf16.mxu0 0
      %416 = vmatpush1.bf16.msra.mxu0 0
      %417 = vmatprep.subr.bf16.mxu0 0
      %418 = vmatpush1.bf16.msra.mxu0 0
      %419 = vmatprep.subr.bf16.mxu0 0
      %420 = vmatpush1.bf16.msra.mxu0 0
      %421 = vmatprep.subr.bf16.mxu0 0
      %422 = vmatpush1.bf16.msra.mxu0 0
      %423 = vmatprep.subr.bf16.mxu0 0
      %424 = vmatpush1.bf16.msra.mxu0 0
      %425 = vmatprep.subr.bf16.mxu0 0
      %426 = vmatpush1.bf16.msra.mxu0 0
      %427 = vmatprep.mubr.bf16.mxu0 0
      %428 = vmatmul.mubr.bf16.gmra.mrb[0].mxu0 %v291
      %v429 = vpop.f32.mrb[0].mxu0
      %v430 = vadd.f32 0.0, %v429
      %v431 = vpop.f32.mrb[0].mxu0
      %v432 = vadd.f32 0.0, %v431
      %v433 = vpop.f32.mrb[0].mxu0
      %v434 = vadd.f32 0.0, %v433
      %v435 = vpop.f32.mrb[0].mxu0
      %v436 = vadd.f32 0.0, %v435
      %437 = vmatprep.mubr.bf16.mxu0 0
      %438 = vmatmul.mubr.bf16.gmra.mrb[0].mxu0 %v297
      %v439 = vpop.f32.mrb[0].mxu0
      %v440 = vpop.f32.mrb[0].mxu0
      %v441 = vpop.f32.mrb[0].mxu0
      %v442 = vpop.f32.mrb[0].mxu0
      %443 = vdwg.mxu0
      %v444 = vadd.f32 %v430, 0.0
      %v445 = vadd.f32 %v432, 0.0
      %v446 = vadd.f32 %v434, 0.0
      %v447 = vadd.f32 %v436, 0.0
      %s448 = scalar_lea.vmem %s2, 128
      %v449 = vld [vmem:[%s448] sm:$0xff]
      %v450 = vld [vmem:[%s448 + $0x8] sm:$0xff]
      %v451 = vld [vmem:[%s448 + $0x10] sm:$0xff]
      %v452 = vld [vmem:[%s448 + $0x18] sm:$0xff]
      %v453 = vld [vmem:[%s448 + $0x20] sm:$0xff]
      %v454 = vld [vmem:[%s448 + $0x28] sm:$0xff]
      %v455 = vld [vmem:[%s448 + $0x30] sm:$0xff]
      %v456 = vld [vmem:[%s448 + $0x38] sm:$0xff]
      %v457 = vld [vmem:[%s448 + $0x40] sm:$0xff]
      %v458 = vld [vmem:[%s448 + $0x48] sm:$0xff]
      %v459 = vld [vmem:[%s448 + $0x50] sm:$0xff]
      %v460 = vld [vmem:[%s448 + $0x58] sm:$0xff]
      %v461 = vld [vmem:[%s448 + $0x60] sm:$0xff]
      %v462 = vld [vmem:[%s448 + $0x68] sm:$0xff]
      %v463 = vld [vmem:[%s448 + $0x70] sm:$0xff]
      %v464 = vld [vmem:[%s448 + $0x78] sm:$0xff]
      %v481 = vunpack.c.l.b16 %v449
      %v482 = vunpack.c.h.b16 %v449
      %v483 = vunpack.c.l.b16 %v450
      %v484 = vunpack.c.h.b16 %v450
      %v485 = vunpack.c.l.b16 %v451
      %v486 = vunpack.c.h.b16 %v451
      %v487 = vunpack.c.l.b16 %v452
      %v488 = vunpack.c.h.b16 %v452
      %v489 = vunpack.c.l.b16 %v453
      %v490 = vunpack.c.h.b16 %v453
      %v491 = vunpack.c.l.b16 %v454
      %v492 = vunpack.c.h.b16 %v454
      %v493 = vunpack.c.l.b16 %v455
      %v494 = vunpack.c.h.b16 %v455
      %v495 = vunpack.c.l.b16 %v456
      %v496 = vunpack.c.h.b16 %v456
      %v497 = vunpack.c.l.b16 %v457
      %v498 = vunpack.c.h.b16 %v457
      %v499 = vunpack.c.l.b16 %v458
      %v500 = vunpack.c.h.b16 %v458
      %v501 = vunpack.c.l.b16 %v459
      %v502 = vunpack.c.h.b16 %v459
      %v503 = vunpack.c.l.b16 %v460
      %v504 = vunpack.c.h.b16 %v460
      %v505 = vunpack.c.l.b16 %v461
      %v506 = vunpack.c.h.b16 %v461
      %v507 = vunpack.c.l.b16 %v462
      %v508 = vunpack.c.h.b16 %v462
      %v509 = vunpack.c.l.b16 %v463
      %v510 = vunpack.c.h.b16 %v463
      %v511 = vunpack.c.l.b16 %v464
      %v512 = vunpack.c.h.b16 %v464
      %v513 = vpack.c.b16 %v483, %v481
      %v514 = vpack.c.b16 %v484, %v482
      %v515 = vpack.c.b16 %v487, %v485
      %v516 = vpack.c.b16 %v488, %v486
      %v517 = vpack.c.b16 %v491, %v489
      %v518 = vpack.c.b16 %v492, %v490
      %v519 = vpack.c.b16 %v495, %v493
      %v520 = vpack.c.b16 %v496, %v494
      %v521 = vpack.c.b16 %v499, %v497
      %v522 = vpack.c.b16 %v500, %v498
      %v523 = vpack.c.b16 %v503, %v501
      %v524 = vpack.c.b16 %v504, %v502
      %v525 = vpack.c.b16 %v507, %v505
      %v526 = vpack.c.b16 %v508, %v506
      %v527 = vpack.c.b16 %v511, %v509
      %v528 = vpack.c.b16 %v512, %v510
      %545 = vmatprep.subr.bf16.mxu0 %v514
      %546 = vmatpush1.bf16.msra.mxu0 %v513
      %547 = vmatprep.subr.bf16.mxu0 %v516
      %548 = vmatpush1.bf16.msra.mxu0 %v515
      %549 = vmatprep.subr.bf16.mxu0 %v518
      %550 = vmatpush1.bf16.msra.mxu0 %v517
      %551 = vmatprep.subr.bf16.mxu0 %v520
      %552 = vmatpush1.bf16.msra.mxu0 %v519
      %553 = vmatprep.subr.bf16.mxu0 %v522
      %554 = vmatpush1.bf16.msra.mxu0 %v521
      %555 = vmatprep.subr.bf16.mxu0 %v524
      %556 = vmatpush1.bf16.msra.mxu0 %v523
      %557 = vmatprep.subr.bf16.mxu0 %v526
      %558 = vmatpush1.bf16.msra.mxu0 %v525
      %559 = vmatprep.subr.bf16.mxu0 %v528
      %560 = vmatpush1.bf16.msra.mxu0 %v527
      %561 = vmatprep.subr.bf16.mxu0 0
      %562 = vmatpush1.bf16.msra.mxu0 0
      %563 = vmatprep.subr.bf16.mxu0 0
      %564 = vmatpush1.bf16.msra.mxu0 0
      %565 = vmatprep.subr.bf16.mxu0 0
      %566 = vmatpush1.bf16.msra.mxu0 0
      %567 = vmatprep.subr.bf16.mxu0 0
      %568 = vmatpush1.bf16.msra.mxu0 0
      %569 = vmatprep.subr.bf16.mxu0 0
      %570 = vmatpush1.bf16.msra.mxu0 0
      %571 = vmatprep.subr.bf16.mxu0 0
      %572 = vmatpush1.bf16.msra.mxu0 0
      %573 = vmatprep.subr.bf16.mxu0 0
      %574 = vmatpush1.bf16.msra.mxu0 0
      %575 = vmatprep.subr.bf16.mxu0 0
      %576 = vmatpush1.bf16.msra.mxu0 0
      %577 = vmatprep.mubr.bf16.mxu0 0
      %578 = vmatmul.mubr.bf16.gmra.mrb[0].mxu0 %v291
      %v579 = vpop.f32.mrb[0].mxu0
      %v580 = vadd.f32 0.0, %v579
      %v581 = vpop.f32.mrb[0].mxu0
      %v582 = vadd.f32 0.0, %v581
      %v583 = vpop.f32.mrb[0].mxu0
      %v584 = vadd.f32 0.0, %v583
      %v585 = vpop.f32.mrb[0].mxu0
      %v586 = vadd.f32 0.0, %v585
      %587 = vmatprep.mubr.bf16.mxu0 0
      %588 = vmatmul.mubr.bf16.gmra.mrb[0].mxu0 %v297
      %v589 = vpop.f32.mrb[0].mxu0
      %v590 = vadd.f32 0.0, %v589
      %v591 = vpop.f32.mrb[0].mxu0
      %v592 = vadd.f32 0.0, %v591
      %v593 = vpop.f32.mrb[0].mxu0
      %v594 = vpop.f32.mrb[0].mxu0
      %595 = vdwg.mxu0
      %vm602 = vcmask 1046528
      %v603 = vrot.slane %v580, 1
      %v604 = vrot.slane %v584, 1
      %v605 = vsel %vm602, %v603, %v604
      %v606 = vrot.slane %v582, 1
      %v607 = vrot.slane %v586, 1
      %v608 = vsel %vm602, %v606, %v607
      %v609 = vrot.slane %v590, 1
      %v610 = vsel %vm602, %v604, %v609
      %v611 = vrot.slane %v592, 1
      %v612 = vsel %vm602, %v607, %v611
      %v617 = vadd.f32 %v444, %v605
      %v618 = vadd.f32 %v445, %v608
      %v619 = vadd.f32 %v446, %v610
      %v620 = vadd.f32 %v447, %v612
      %s621 = scalar_lea.vmem %s2, 256
      %v622 = vld [vmem:[%s621] sm:$0xff]
      %v623 = vld [vmem:[%s621 + $0x8] sm:$0xff]
      %v624 = vld [vmem:[%s621 + $0x10] sm:$0xff]
      %v625 = vld [vmem:[%s621 + $0x18] sm:$0xff]
      %v626 = vld [vmem:[%s621 + $0x20] sm:$0xff]
      %v627 = vld [vmem:[%s621 + $0x28] sm:$0xff]
      %v628 = vld [vmem:[%s621 + $0x30] sm:$0xff]
      %v629 = vld [vmem:[%s621 + $0x38] sm:$0xff]
      %v630 = vld [vmem:[%s621 + $0x40] sm:$0xff]
      %v631 = vld [vmem:[%s621 + $0x48] sm:$0xff]
      %v632 = vld [vmem:[%s621 + $0x50] sm:$0xff]
      %v633 = vld [vmem:[%s621 + $0x58] sm:$0xff]
      %v634 = vld [vmem:[%s621 + $0x60] sm:$0xff]
      %v635 = vld [vmem:[%s621 + $0x68] sm:$0xff]
      %v636 = vld [vmem:[%s621 + $0x70] sm:$0xff]
      %v637 = vld [vmem:[%s621 + $0x78] sm:$0xff]
      %v654 = vunpack.c.l.b16 %v622
      %v655 = vunpack.c.h.b16 %v622
      %v656 = vunpack.c.l.b16 %v623
      %v657 = vunpack.c.h.b16 %v623
      %v658 = vunpack.c.l.b16 %v624
      %v659 = vunpack.c.h.b16 %v624
      %v660 = vunpack.c.l.b16 %v625
      %v661 = vunpack.c.h.b16 %v625
      %v662 = vunpack.c.l.b16 %v626
      %v663 = vunpack.c.h.b16 %v626
      %v664 = vunpack.c.l.b16 %v627
      %v665 = vunpack.c.h.b16 %v627
      %v666 = vunpack.c.l.b16 %v628
      %v667 = vunpack.c.h.b16 %v628
      %v668 = vunpack.c.l.b16 %v629
      %v669 = vunpack.c.h.b16 %v629
      %v670 = vunpack.c.l.b16 %v630
      %v671 = vunpack.c.h.b16 %v630
      %v672 = vunpack.c.l.b16 %v631
      %v673 = vunpack.c.h.b16 %v631
      %v674 = vunpack.c.l.b16 %v632
      %v675 = vunpack.c.h.b16 %v632
      %v676 = vunpack.c.l.b16 %v633
      %v677 = vunpack.c.h.b16 %v633
      %v678 = vunpack.c.l.b16 %v634
      %v679 = vunpack.c.h.b16 %v634
      %v680 = vunpack.c.l.b16 %v635
      %v681 = vunpack.c.h.b16 %v635
      %v682 = vunpack.c.l.b16 %v636
      %v683 = vunpack.c.h.b16 %v636
      %v684 = vunpack.c.l.b16 %v637
      %v685 = vunpack.c.h.b16 %v637
      %v686 = vpack.c.b16 %v656, %v654
      %v687 = vpack.c.b16 %v657, %v655
      %v688 = vpack.c.b16 %v660, %v658
      %v689 = vpack.c.b16 %v661, %v659
      %v690 = vpack.c.b16 %v664, %v662
      %v691 = vpack.c.b16 %v665, %v663
      %v692 = vpack.c.b16 %v668, %v666
      %v693 = vpack.c.b16 %v669, %v667
      %v694 = vpack.c.b16 %v672, %v670
      %v695 = vpack.c.b16 %v673, %v671
      %v696 = vpack.c.b16 %v676, %v674
      %v697 = vpack.c.b16 %v677, %v675
      %v698 = vpack.c.b16 %v680, %v678
      %v699 = vpack.c.b16 %v681, %v679
      %v700 = vpack.c.b16 %v684, %v682
      %v701 = vpack.c.b16 %v685, %v683
      %718 = vmatprep.subr.bf16.mxu0 %v687
      %719 = vmatpush1.bf16.msra.mxu0 %v686
      %720 = vmatprep.subr.bf16.mxu0 %v689
      %721 = vmatpush1.bf16.msra.mxu0 %v688
      %722 = vmatprep.subr.bf16.mxu0 %v691
      %723 = vmatpush1.bf16.msra.mxu0 %v690
      %724 = vmatprep.subr.bf16.mxu0 %v693
      %725 = vmatpush1.bf16.msra.mxu0 %v692
      %726 = vmatprep.subr.bf16.mxu0 %v695
      %727 = vmatpush1.bf16.msra.mxu0 %v694
      %728 = vmatprep.subr.bf16.mxu0 %v697
      %729 = vmatpush1.bf16.msra.mxu0 %v696
      %730 = vmatprep.subr.bf16.mxu0 %v699
      %731 = vmatpush1.bf16.msra.mxu0 %v698
      %732 = vmatprep.subr.bf16.mxu0 %v701
      %733 = vmatpush1.bf16.msra.mxu0 %v700
      %734 = vmatprep.subr.bf16.mxu0 0
      %735 = vmatpush1.bf16.msra.mxu0 0
      %736 = vmatprep.subr.bf16.mxu0 0
      %737 = vmatpush1.bf16.msra.mxu0 0
      %738 = vmatprep.subr.bf16.mxu0 0
      %739 = vmatpush1.bf16.msra.mxu0 0
      %740 = vmatprep.subr.bf16.mxu0 0
      %741 = vmatpush1.bf16.msra.mxu0 0
      %742 = vmatprep.subr.bf16.mxu0 0
      %743 = vmatpush1.bf16.msra.mxu0 0
      %744 = vmatprep.subr.bf16.mxu0 0
      %745 = vmatpush1.bf16.msra.mxu0 0
      %746 = vmatprep.subr.bf16.mxu0 0
      %747 = vmatpush1.bf16.msra.mxu0 0
      %748 = vmatprep.subr.bf16.mxu0 0
      %749 = vmatpush1.bf16.msra.mxu0 0
      %750 = vmatprep.mubr.bf16.mxu0 0
      %751 = vmatmul.mubr.bf16.gmra.mrb[0].mxu0 %v291
      %v752 = vpop.f32.mrb[0].mxu0
      %v753 = vadd.f32 0.0, %v752
      %v754 = vpop.f32.mrb[0].mxu0
      %v755 = vadd.f32 0.0, %v754
      %v756 = vpop.f32.mrb[0].mxu0
      %v757 = vadd.f32 0.0, %v756
      %v758 = vpop.f32.mrb[0].mxu0
      %v759 = vadd.f32 0.0, %v758
      %760 = vmatprep.mubr.bf16.mxu0 0
      %761 = vmatmul.mubr.bf16.gmra.mrb[0].mxu0 %v297
      %v762 = vpop.f32.mrb[0].mxu0
      %v763 = vadd.f32 0.0, %v762
      %v764 = vpop.f32.mrb[0].mxu0
      %v765 = vadd.f32 0.0, %v764
      %v766 = vpop.f32.mrb[0].mxu0
      %v767 = vpop.f32.mrb[0].mxu0
      %768 = vdwg.mxu0
      %vm775 = vcmask 1045504
      %v776 = vrot.slane %v753, 2
      %v777 = vrot.slane %v757, 2
      %v778 = vsel %vm775, %v776, %v777
      %v779 = vrot.slane %v755, 2
      %v780 = vrot.slane %v759, 2
      %v781 = vsel %vm775, %v779, %v780
      %v782 = vrot.slane %v763, 2
      %v783 = vsel %vm775, %v777, %v782
      %v784 = vrot.slane %v765, 2
      %v785 = vsel %vm775, %v780, %v784
      %v790 = vadd.f32 %v617, %v778
      %v791 = vadd.f32 %v618, %v781
      %v792 = vadd.f32 %v619, %v783
      %v793 = vadd.f32 %v620, %v785
      %s794 = scalar_lea.vmem %s2, 384
      %v795 = vld [vmem:[%s794] sm:$0xff]
      %v796 = vld [vmem:[%s794 + $0x8] sm:$0xff]
      %v797 = vld [vmem:[%s794 + $0x10] sm:$0xff]
      %v798 = vld [vmem:[%s794 + $0x18] sm:$0xff]
      %v799 = vld [vmem:[%s794 + $0x20] sm:$0xff]
      %v800 = vld [vmem:[%s794 + $0x28] sm:$0xff]
      %v801 = vld [vmem:[%s794 + $0x30] sm:$0xff]
      %v802 = vld [vmem:[%s794 + $0x38] sm:$0xff]
      %v803 = vld [vmem:[%s794 + $0x40] sm:$0xff]
      %v804 = vld [vmem:[%s794 + $0x48] sm:$0xff]
      %v805 = vld [vmem:[%s794 + $0x50] sm:$0xff]
      %v806 = vld [vmem:[%s794 + $0x58] sm:$0xff]
      %v807 = vld [vmem:[%s794 + $0x60] sm:$0xff]
      %v808 = vld [vmem:[%s794 + $0x68] sm:$0xff]
      %v809 = vld [vmem:[%s794 + $0x70] sm:$0xff]
      %v810 = vld [vmem:[%s794 + $0x78] sm:$0xff]
      %v827 = vunpack.c.l.b16 %v795
      %v828 = vunpack.c.h.b16 %v795
      %v829 = vunpack.c.l.b16 %v796
      %v830 = vunpack.c.h.b16 %v796
      %v831 = vunpack.c.l.b16 %v797
      %v832 = vunpack.c.h.b16 %v797
      %v833 = vunpack.c.l.b16 %v798
      %v834 = vunpack.c.h.b16 %v798
      %v835 = vunpack.c.l.b16 %v799
      %v836 = vunpack.c.h.b16 %v799
      %v837 = vunpack.c.l.b16 %v800
      %v838 = vunpack.c.h.b16 %v800
      %v839 = vunpack.c.l.b16 %v801
      %v840 = vunpack.c.h.b16 %v801
      %v841 = vunpack.c.l.b16 %v802
      %v842 = vunpack.c.h.b16 %v802
      %v843 = vunpack.c.l.b16 %v803
      %v844 = vunpack.c.h.b16 %v803
      %v845 = vunpack.c.l.b16 %v804
      %v846 = vunpack.c.h.b16 %v804
      %v847 = vunpack.c.l.b16 %v805
      %v848 = vunpack.c.h.b16 %v805
      %v849 = vunpack.c.l.b16 %v806
      %v850 = vunpack.c.h.b16 %v806
      %v851 = vunpack.c.l.b16 %v807
      %v852 = vunpack.c.h.b16 %v807
      %v853 = vunpack.c.l.b16 %v808
      %v854 = vunpack.c.h.b16 %v808
      %v855 = vunpack.c.l.b16 %v809
      %v856 = vunpack.c.h.b16 %v809
      %v857 = vunpack.c.l.b16 %v810
      %v858 = vunpack.c.h.b16 %v810
      %v859 = vpack.c.b16 %v829, %v827
      %v860 = vpack.c.b16 %v830, %v828
      %v861 = vpack.c.b16 %v833, %v831
      %v862 = vpack.c.b16 %v834, %v832
      %v863 = vpack.c.b16 %v837, %v835
      %v864 = vpack.c.b16 %v838, %v836
      %v865 = vpack.c.b16 %v841, %v839
      %v866 = vpack.c.b16 %v842, %v840
      %v867 = vpack.c.b16 %v845, %v843
      %v868 = vpack.c.b16 %v846, %v844
      %v869 = vpack.c.b16 %v849, %v847
      %v870 = vpack.c.b16 %v850, %v848
      %v871 = vpack.c.b16 %v853, %v851
      %v872 = vpack.c.b16 %v854, %v852
      %v873 = vpack.c.b16 %v857, %v855
      %v874 = vpack.c.b16 %v858, %v856
      %891 = vmatprep.subr.bf16.mxu0 %v860
      %892 = vmatpush1.bf16.msra.mxu0 %v859
      %893 = vmatprep.subr.bf16.mxu0 %v862
      %894 = vmatpush1.bf16.msra.mxu0 %v861
      %895 = vmatprep.subr.bf16.mxu0 %v864
      %896 = vmatpush1.bf16.msra.mxu0 %v863
      %897 = vmatprep.subr.bf16.mxu0 %v866
      %898 = vmatpush1.bf16.msra.mxu0 %v865
      %899 = vmatprep.subr.bf16.mxu0 %v868
      %900 = vmatpush1.bf16.msra.mxu0 %v867
      %901 = vmatprep.subr.bf16.mxu0 %v870
      %902 = vmatpush1.bf16.msra.mxu0 %v869
      %903 = vmatprep.subr.bf16.mxu0 %v872
      %904 = vmatpush1.bf16.msra.mxu0 %v871
      %905 = vmatprep.subr.bf16.mxu0 %v874
      %906 = vmatpush1.bf16.msra.mxu0 %v873
      %907 = vmatprep.subr.bf16.mxu0 0
      %908 = vmatpush1.bf16.msra.mxu0 0
      %909 = vmatprep.subr.bf16.mxu0 0
      %910 = vmatpush1.bf16.msra.mxu0 0
      %911 = vmatprep.subr.bf16.mxu0 0
      %912 = vmatpush1.bf16.msra.mxu0 0
      %913 = vmatprep.subr.bf16.mxu0 0
      %914 = vmatpush1.bf16.msra.mxu0 0
      %915 = vmatprep.subr.bf16.mxu0 0
      %916 = vmatpush1.bf16.msra.mxu0 0
      %917 = vmatprep.subr.bf16.mxu0 0
      %918 = vmatpush1.bf16.msra.mxu0 0
      %919 = vmatprep.subr.bf16.mxu0 0
      %920 = vmatpush1.bf16.msra.mxu0 0
      %921 = vmatprep.subr.bf16.mxu0 0
      %922 = vmatpush1.bf16.msra.mxu0 0
      %923 = vmatprep.mubr.bf16.mxu0 0
      %924 = vmatmul.mubr.bf16.gmra.mrb[0].mxu0 %v291
      %v925 = vpop.f32.mrb[0].mxu0
      %v926 = vadd.f32 0.0, %v925
      %v927 = vpop.f32.mrb[0].mxu0
      %v928 = vadd.f32 0.0, %v927
      %v929 = vpop.f32.mrb[0].mxu0
      %v930 = vadd.f32 0.0, %v929
      %v931 = vpop.f32.mrb[0].mxu0
      %v932 = vadd.f32 0.0, %v931
      %933 = vmatprep.mubr.bf16.mxu0 0
      %934 = vmatmul.mubr.bf16.gmra.mrb[0].mxu0 %v297
      %v935 = vpop.f32.mrb[0].mxu0
      %v936 = vadd.f32 0.0, %v935
      %v937 = vpop.f32.mrb[0].mxu0
      %v938 = vadd.f32 0.0, %v937
      %v939 = vpop.f32.mrb[0].mxu0
      %v940 = vpop.f32.mrb[0].mxu0
      %941 = vdwg.mxu0
      %vm948 = vcmask 1044480
      %v949 = vrot.slane %v926, 3
      %v950 = vrot.slane %v930, 3
      %v951 = vsel %vm948, %v949, %v950
      %v952 = vrot.slane %v928, 3
      %v953 = vrot.slane %v932, 3
      %v954 = vsel %vm948, %v952, %v953
      %v955 = vrot.slane %v936, 3
      %v956 = vsel %vm948, %v950, %v955
      %v957 = vrot.slane %v938, 3
      %v958 = vsel %vm948, %v953, %v957
      %v963 = vadd.f32 %v790, %v951
      %v964 = vadd.f32 %v791, %v954
      %v965 = vadd.f32 %v792, %v956
      %v966 = vadd.f32 %v793, %v958
      %s967 = scalar_lea.vmem %s2, 512
      %v968 = vld [vmem:[%s967] sm:$0xff]
      %v969 = vld [vmem:[%s967 + $0x8] sm:$0xff]
      %v970 = vld [vmem:[%s967 + $0x10] sm:$0xff]
      %v971 = vld [vmem:[%s967 + $0x18] sm:$0xff]
      %v972 = vld [vmem:[%s967 + $0x20] sm:$0xff]
      %v973 = vld [vmem:[%s967 + $0x28] sm:$0xff]
      %v974 = vld [vmem:[%s967 + $0x30] sm:$0xff]
      %v975 = vld [vmem:[%s967 + $0x38] sm:$0xff]
      %v976 = vld [vmem:[%s967 + $0x40] sm:$0xff]
      %v977 = vld [vmem:[%s967 + $0x48] sm:$0xff]
      %v978 = vld [vmem:[%s967 + $0x50] sm:$0xff]
      %v979 = vld [vmem:[%s967 + $0x58] sm:$0xff]
      %v980 = vld [vmem:[%s967 + $0x60] sm:$0xff]
      %v981 = vld [vmem:[%s967 + $0x68] sm:$0xff]
      %v982 = vld [vmem:[%s967 + $0x70] sm:$0xff]
      %v983 = vld [vmem:[%s967 + $0x78] sm:$0xff]
      %v1000 = vunpack.c.l.b16 %v968
      %v1001 = vunpack.c.h.b16 %v968
      %v1002 = vunpack.c.l.b16 %v969
      %v1003 = vunpack.c.h.b16 %v969
      %v1004 = vunpack.c.l.b16 %v970
      %v1005 = vunpack.c.h.b16 %v970
      %v1006 = vunpack.c.l.b16 %v971
      %v1007 = vunpack.c.h.b16 %v971
      %v1008 = vunpack.c.l.b16 %v972
      %v1009 = vunpack.c.h.b16 %v972
      %v1010 = vunpack.c.l.b16 %v973
      %v1011 = vunpack.c.h.b16 %v973
      %v1012 = vunpack.c.l.b16 %v974
      %v1013 = vunpack.c.h.b16 %v974
      %v1014 = vunpack.c.l.b16 %v975
      %v1015 = vunpack.c.h.b16 %v975
      %v1016 = vunpack.c.l.b16 %v976
      %v1017 = vunpack.c.h.b16 %v976
      %v1018 = vunpack.c.l.b16 %v977
      %v1019 = vunpack.c.h.b16 %v977
      %v1020 = vunpack.c.l.b16 %v978
      %v1021 = vunpack.c.h.b16 %v978
      %v1022 = vunpack.c.l.b16 %v979
      %v1023 = vunpack.c.h.b16 %v979
      %v1024 = vunpack.c.l.b16 %v980
      %v1025 = vunpack.c.h.b16 %v980
      %v1026 = vunpack.c.l.b16 %v981
      %v1027 = vunpack.c.h.b16 %v981
      %v1028 = vunpack.c.l.b16 %v982
      %v1029 = vunpack.c.h.b16 %v982
      %v1030 = vunpack.c.l.b16 %v983
      %v1031 = vunpack.c.h.b16 %v983
      %v1032 = vpack.c.b16 %v1002, %v1000
      %v1033 = vpack.c.b16 %v1003, %v1001
      %v1034 = vpack.c.b16 %v1006, %v1004
      %v1035 = vpack.c.b16 %v1007, %v1005
      %v1036 = vpack.c.b16 %v1010, %v1008
      %v1037 = vpack.c.b16 %v1011, %v1009
      %v1038 = vpack.c.b16 %v1014, %v1012
      %v1039 = vpack.c.b16 %v1015, %v1013
      %v1040 = vpack.c.b16 %v1018, %v1016
      %v1041 = vpack.c.b16 %v1019, %v1017
      %v1042 = vpack.c.b16 %v1022, %v1020
      %v1043 = vpack.c.b16 %v1023, %v1021
      %v1044 = vpack.c.b16 %v1026, %v1024
      %v1045 = vpack.c.b16 %v1027, %v1025
      %v1046 = vpack.c.b16 %v1030, %v1028
      %v1047 = vpack.c.b16 %v1031, %v1029
      %1064 = vmatprep.subr.bf16.mxu0 %v1033
      %1065 = vmatpush1.bf16.msra.mxu0 %v1032
      %1066 = vmatprep.subr.bf16.mxu0 %v1035
      %1067 = vmatpush1.bf16.msra.mxu0 %v1034
      %1068 = vmatprep.subr.bf16.mxu0 %v1037
      %1069 = vmatpush1.bf16.msra.mxu0 %v1036
      %1070 = vmatprep.subr.bf16.mxu0 %v1039
      %1071 = vmatpush1.bf16.msra.mxu0 %v1038
      %1072 = vmatprep.subr.bf16.mxu0 %v1041
      %1073 = vmatpush1.bf16.msra.mxu0 %v1040
      %1074 = vmatprep.subr.bf16.mxu0 %v1043
      %1075 = vmatpush1.bf16.msra.mxu0 %v1042
      %1076 = vmatprep.subr.bf16.mxu0 %v1045
      %1077 = vmatpush1.bf16.msra.mxu0 %v1044
      %1078 = vmatprep.subr.bf16.mxu0 %v1047
      %1079 = vmatpush1.bf16.msra.mxu0 %v1046
      %1080 = vmatprep.subr.bf16.mxu0 0
      %1081 = vmatpush1.bf16.msra.mxu0 0
      %1082 = vmatprep.subr.bf16.mxu0 0
      %1083 = vmatpush1.bf16.msra.mxu0 0
      %1084 = vmatprep.subr.bf16.mxu0 0
      %1085 = vmatpush1.bf16.msra.mxu0 0
      %1086 = vmatprep.subr.bf16.mxu0 0
      %1087 = vmatpush1.bf16.msra.mxu0 0
      %1088 = vmatprep.subr.bf16.mxu0 0
      %1089 = vmatpush1.bf16.msra.mxu0 0
      %1090 = vmatprep.subr.bf16.mxu0 0
      %1091 = vmatpush1.bf16.msra.mxu0 0
      %1092 = vmatprep.subr.bf16.mxu0 0
      %1093 = vmatpush1.bf16.msra.mxu0 0
      %1094 = vmatprep.subr.bf16.mxu0 0
      %1095 = vmatpush1.bf16.msra.mxu0 0
      %1096 = vmatprep.mubr.bf16.mxu0 0
      %1097 = vmatmul.mubr.bf16.gmra.mrb[0].mxu0 %v291
      %v1098 = vpop.f32.mrb[0].mxu0
      %v1099 = vadd.f32 0.0, %v1098
      %v1100 = vpop.f32.mrb[0].mxu0
      %v1101 = vadd.f32 0.0, %v1100
      %v1102 = vpop.f32.mrb[0].mxu0
      %v1103 = vadd.f32 0.0, %v1102
      %v1104 = vpop.f32.mrb[0].mxu0
      %v1105 = vadd.f32 0.0, %v1104
      %1106 = vmatprep.mubr.bf16.mxu0 0
      %1107 = vmatmul.mubr.bf16.gmra.mrb[0].mxu0 %v297
      %v1108 = vpop.f32.mrb[0].mxu0
      %v1109 = vadd.f32 0.0, %v1108
      %v1110 = vpop.f32.mrb[0].mxu0
      %v1111 = vadd.f32 0.0, %v1110
      %v1112 = vpop.f32.mrb[0].mxu0
      %v1113 = vpop.f32.mrb[0].mxu0
      %1114 = vdwg.mxu0
      %vm1121 = vcmask 1043456
      %v1122 = vrot.slane %v1099, 4
      %v1123 = vrot.slane %v1103, 4
      %v1124 = vsel %vm1121, %v1122, %v1123
      %v1125 = vrot.slane %v1101, 4
      %v1126 = vrot.slane %v1105, 4
      %v1127 = vsel %vm1121, %v1125, %v1126
      %v1128 = vrot.slane %v1109, 4
      %v1129 = vsel %vm1121, %v1123, %v1128
      %v1130 = vrot.slane %v1111, 4
      %v1131 = vsel %vm1121, %v1126, %v1130
      %v1136 = vadd.f32 %v963, %v1124
      %v1137 = vadd.f32 %v964, %v1127
      %v1138 = vadd.f32 %v965, %v1129
      %v1139 = vadd.f32 %v966, %v1131
      %s1140 = scalar_lea.vmem %s2, 640
      %v1141 = vld [vmem:[%s1140] sm:$0xff]
      %v1142 = vld [vmem:[%s1140 + $0x8] sm:$0xff]
      %v1143 = vld [vmem:[%s1140 + $0x10] sm:$0xff]
      %v1144 = vld [vmem:[%s1140 + $0x18] sm:$0xff]
      %v1145 = vld [vmem:[%s1140 + $0x20] sm:$0xff]
      %v1146 = vld [vmem:[%s1140 + $0x28] sm:$0xff]
      %v1147 = vld [vmem:[%s1140 + $0x30] sm:$0xff]
      %v1148 = vld [vmem:[%s1140 + $0x38] sm:$0xff]
      %v1149 = vld [vmem:[%s1140 + $0x40] sm:$0xff]
      %v1150 = vld [vmem:[%s1140 + $0x48] sm:$0xff]
      %v1151 = vld [vmem:[%s1140 + $0x50] sm:$0xff]
      %v1152 = vld [vmem:[%s1140 + $0x58] sm:$0xff]
      %v1153 = vld [vmem:[%s1140 + $0x60] sm:$0xff]
      %v1154 = vld [vmem:[%s1140 + $0x68] sm:$0xff]
      %v1155 = vld [vmem:[%s1140 + $0x70] sm:$0xff]
      %v1156 = vld [vmem:[%s1140 + $0x78] sm:$0xff]
      %v1173 = vunpack.c.l.b16 %v1141
      %v1174 = vunpack.c.h.b16 %v1141
      %v1175 = vunpack.c.l.b16 %v1142
      %v1176 = vunpack.c.h.b16 %v1142
      %v1177 = vunpack.c.l.b16 %v1143
      %v1178 = vunpack.c.h.b16 %v1143
      %v1179 = vunpack.c.l.b16 %v1144
      %v1180 = vunpack.c.h.b16 %v1144
      %v1181 = vunpack.c.l.b16 %v1145
      %v1182 = vunpack.c.h.b16 %v1145
      %v1183 = vunpack.c.l.b16 %v1146
      %v1184 = vunpack.c.h.b16 %v1146
      %v1185 = vunpack.c.l.b16 %v1147
      %v1186 = vunpack.c.h.b16 %v1147
      %v1187 = vunpack.c.l.b16 %v1148
      %v1188 = vunpack.c.h.b16 %v1148
      %v1189 = vunpack.c.l.b16 %v1149
      %v1190 = vunpack.c.h.b16 %v1149
      %v1191 = vunpack.c.l.b16 %v1150
      %v1192 = vunpack.c.h.b16 %v1150
      %v1193 = vunpack.c.l.b16 %v1151
      %v1194 = vunpack.c.h.b16 %v1151
      %v1195 = vunpack.c.l.b16 %v1152
      %v1196 = vunpack.c.h.b16 %v1152
      %v1197 = vunpack.c.l.b16 %v1153
      %v1198 = vunpack.c.h.b16 %v1153
      %v1199 = vunpack.c.l.b16 %v1154
      %v1200 = vunpack.c.h.b16 %v1154
      %v1201 = vunpack.c.l.b16 %v1155
      %v1202 = vunpack.c.h.b16 %v1155
      %v1203 = vunpack.c.l.b16 %v1156
      %v1204 = vunpack.c.h.b16 %v1156
      %v1205 = vpack.c.b16 %v1175, %v1173
      %v1206 = vpack.c.b16 %v1176, %v1174
      %v1207 = vpack.c.b16 %v1179, %v1177
      %v1208 = vpack.c.b16 %v1180, %v1178
      %v1209 = vpack.c.b16 %v1183, %v1181
      %v1210 = vpack.c.b16 %v1184, %v1182
      %v1211 = vpack.c.b16 %v1187, %v1185
      %v1212 = vpack.c.b16 %v1188, %v1186
      %v1213 = vpack.c.b16 %v1191, %v1189
      %v1214 = vpack.c.b16 %v1192, %v1190
      %v1215 = vpack.c.b16 %v1195, %v1193
      %v1216 = vpack.c.b16 %v1196, %v1194
      %v1217 = vpack.c.b16 %v1199, %v1197
      %v1218 = vpack.c.b16 %v1200, %v1198
      %v1219 = vpack.c.b16 %v1203, %v1201
      %v1220 = vpack.c.b16 %v1204, %v1202
      %1237 = vmatprep.subr.bf16.mxu0 %v1206
      %1238 = vmatpush1.bf16.msra.mxu0 %v1205
      %1239 = vmatprep.subr.bf16.mxu0 %v1208
      %1240 = vmatpush1.bf16.msra.mxu0 %v1207
      %1241 = vmatprep.subr.bf16.mxu0 %v1210
      %1242 = vmatpush1.bf16.msra.mxu0 %v1209
      %1243 = vmatprep.subr.bf16.mxu0 %v1212
      %1244 = vmatpush1.bf16.msra.mxu0 %v1211
      %1245 = vmatprep.subr.bf16.mxu0 %v1214
      %1246 = vmatpush1.bf16.msra.mxu0 %v1213
      %1247 = vmatprep.subr.bf16.mxu0 %v1216
      %1248 = vmatpush1.bf16.msra.mxu0 %v1215
      %1249 = vmatprep.subr.bf16.mxu0 %v1218
      %1250 = vmatpush1.bf16.msra.mxu0 %v1217
      %1251 = vmatprep.subr.bf16.mxu0 %v1220
      %1252 = vmatpush1.bf16.msra.mxu0 %v1219
      %1253 = vmatprep.subr.bf16.mxu0 0
      %1254 = vmatpush1.bf16.msra.mxu0 0
      %1255 = vmatprep.subr.bf16.mxu0 0
      %1256 = vmatpush1.bf16.msra.mxu0 0
      %1257 = vmatprep.subr.bf16.mxu0 0
      %1258 = vmatpush1.bf16.msra.mxu0 0
      %1259 = vmatprep.subr.bf16.mxu0 0
      %1260 = vmatpush1.bf16.msra.mxu0 0
      %1261 = vmatprep.subr.bf16.mxu0 0
      %1262 = vmatpush1.bf16.msra.mxu0 0
      %1263 = vmatprep.subr.bf16.mxu0 0
      %1264 = vmatpush1.bf16.msra.mxu0 0
      %1265 = vmatprep.subr.bf16.mxu0 0
      %1266 = vmatpush1.bf16.msra.mxu0 0
      %1267 = vmatprep.subr.bf16.mxu0 0
      %1268 = vmatpush1.bf16.msra.mxu0 0
      %1269 = vmatprep.mubr.bf16.mxu0 0
      %1270 = vmatmul.mubr.bf16.gmra.mrb[0].mxu0 %v291
      %v1271 = vpop.f32.mrb[0].mxu0
      %v1272 = vadd.f32 0.0, %v1271
      %v1273 = vpop.f32.mrb[0].mxu0
      %v1274 = vadd.f32 0.0, %v1273
      %v1275 = vpop.f32.mrb[0].mxu0
      %v1276 = vadd.f32 0.0, %v1275
      %v1277 = vpop.f32.mrb[0].mxu0
      %v1278 = vadd.f32 0.0, %v1277
      %1279 = vmatprep.mubr.bf16.mxu0 0
      %1280 = vmatmul.mubr.bf16.gmra.mrb[0].mxu0 %v297
      %v1281 = vpop.f32.mrb[0].mxu0
      %v1282 = vadd.f32 0.0, %v1281
      %v1283 = vpop.f32.mrb[0].mxu0
      %v1284 = vadd.f32 0.0, %v1283
      %v1285 = vpop.f32.mrb[0].mxu0
      %v1286 = vpop.f32.mrb[0].mxu0
      %1287 = vdwg.mxu0
      %vm1294 = vcmask 1042432
      %v1295 = vrot.slane %v1272, 5
      %v1296 = vrot.slane %v1276, 5
      %v1297 = vsel %vm1294, %v1295, %v1296
      %v1298 = vrot.slane %v1274, 5
      %v1299 = vrot.slane %v1278, 5
      %v1300 = vsel %vm1294, %v1298, %v1299
      %v1301 = vrot.slane %v1282, 5
      %v1302 = vsel %vm1294, %v1296, %v1301
      %v1303 = vrot.slane %v1284, 5
      %v1304 = vsel %vm1294, %v1299, %v1303
      %v1309 = vadd.f32 %v1136, %v1297
      %v1310 = vadd.f32 %v1137, %v1300
      %v1311 = vadd.f32 %v1138, %v1302
      %v1312 = vadd.f32 %v1139, %v1304
      %s1313 = scalar_lea.vmem %s2, 768
      %v1314 = vld [vmem:[%s1313] sm:$0xff]
      %v1315 = vld [vmem:[%s1313 + $0x8] sm:$0xff]
      %v1316 = vld [vmem:[%s1313 + $0x10] sm:$0xff]
      %v1317 = vld [vmem:[%s1313 + $0x18] sm:$0xff]
      %v1318 = vld [vmem:[%s1313 + $0x20] sm:$0xff]
      %v1319 = vld [vmem:[%s1313 + $0x28] sm:$0xff]
      %v1320 = vld [vmem:[%s1313 + $0x30] sm:$0xff]
      %v1321 = vld [vmem:[%s1313 + $0x38] sm:$0xff]
      %v1322 = vld [vmem:[%s1313 + $0x40] sm:$0xff]
      %v1323 = vld [vmem:[%s1313 + $0x48] sm:$0xff]
      %v1324 = vld [vmem:[%s1313 + $0x50] sm:$0xff]
      %v1325 = vld [vmem:[%s1313 + $0x58] sm:$0xff]
      %v1326 = vld [vmem:[%s1313 + $0x60] sm:$0xff]
      %v1327 = vld [vmem:[%s1313 + $0x68] sm:$0xff]
      %v1328 = vld [vmem:[%s1313 + $0x70] sm:$0xff]
      %v1329 = vld [vmem:[%s1313 + $0x78] sm:$0xff]
      %v1346 = vunpack.c.l.b16 %v1314
      %v1347 = vunpack.c.h.b16 %v1314
      %v1348 = vunpack.c.l.b16 %v1315
      %v1349 = vunpack.c.h.b16 %v1315
      %v1350 = vunpack.c.l.b16 %v1316
      %v1351 = vunpack.c.h.b16 %v1316
      %v1352 = vunpack.c.l.b16 %v1317
      %v1353 = vunpack.c.h.b16 %v1317
      %v1354 = vunpack.c.l.b16 %v1318
      %v1355 = vunpack.c.h.b16 %v1318
      %v1356 = vunpack.c.l.b16 %v1319
      %v1357 = vunpack.c.h.b16 %v1319
      %v1358 = vunpack.c.l.b16 %v1320
      %v1359 = vunpack.c.h.b16 %v1320
      %v1360 = vunpack.c.l.b16 %v1321
      %v1361 = vunpack.c.h.b16 %v1321
      %v1362 = vunpack.c.l.b16 %v1322
      %v1363 = vunpack.c.h.b16 %v1322
      %v1364 = vunpack.c.l.b16 %v1323
      %v1365 = vunpack.c.h.b16 %v1323
      %v1366 = vunpack.c.l.b16 %v1324
      %v1367 = vunpack.c.h.b16 %v1324
      %v1368 = vunpack.c.l.b16 %v1325
      %v1369 = vunpack.c.h.b16 %v1325
      %v1370 = vunpack.c.l.b16 %v1326
      %v1371 = vunpack.c.h.b16 %v1326
      %v1372 = vunpack.c.l.b16 %v1327
      %v1373 = vunpack.c.h.b16 %v1327
      %v1374 = vunpack.c.l.b16 %v1328
      %v1375 = vunpack.c.h.b16 %v1328
      %v1376 = vunpack.c.l.b16 %v1329
      %v1377 = vunpack.c.h.b16 %v1329
      %v1378 = vpack.c.b16 %v1348, %v1346
      %v1379 = vpack.c.b16 %v1349, %v1347
      %v1380 = vpack.c.b16 %v1352, %v1350
      %v1381 = vpack.c.b16 %v1353, %v1351
      %v1382 = vpack.c.b16 %v1356, %v1354
      %v1383 = vpack.c.b16 %v1357, %v1355
      %v1384 = vpack.c.b16 %v1360, %v1358
      %v1385 = vpack.c.b16 %v1361, %v1359
      %v1386 = vpack.c.b16 %v1364, %v1362
      %v1387 = vpack.c.b16 %v1365, %v1363
      %v1388 = vpack.c.b16 %v1368, %v1366
      %v1389 = vpack.c.b16 %v1369, %v1367
      %v1390 = vpack.c.b16 %v1372, %v1370
      %v1391 = vpack.c.b16 %v1373, %v1371
      %v1392 = vpack.c.b16 %v1376, %v1374
      %v1393 = vpack.c.b16 %v1377, %v1375
      %1410 = vmatprep.subr.bf16.mxu0 %v1379
      %1411 = vmatpush1.bf16.msra.mxu0 %v1378
      %1412 = vmatprep.subr.bf16.mxu0 %v1381
      %1413 = vmatpush1.bf16.msra.mxu0 %v1380
      %1414 = vmatprep.subr.bf16.mxu0 %v1383
      %1415 = vmatpush1.bf16.msra.mxu0 %v1382
      %1416 = vmatprep.subr.bf16.mxu0 %v1385
      %1417 = vmatpush1.bf16.msra.mxu0 %v1384
      %1418 = vmatprep.subr.bf16.mxu0 %v1387
      %1419 = vmatpush1.bf16.msra.mxu0 %v1386
      %1420 = vmatprep.subr.bf16.mxu0 %v1389
      %1421 = vmatpush1.bf16.msra.mxu0 %v1388
      %1422 = vmatprep.subr.bf16.mxu0 %v1391
      %1423 = vmatpush1.bf16.msra.mxu0 %v1390
      %1424 = vmatprep.subr.bf16.mxu0 %v1393
      %1425 = vmatpush1.bf16.msra.mxu0 %v1392
      %1426 = vmatprep.subr.bf16.mxu0 0
      %1427 = vmatpush1.bf16.msra.mxu0 0
      %1428 = vmatprep.subr.bf16.mxu0 0
      %1429 = vmatpush1.bf16.msra.mxu0 0
      %1430 = vmatprep.subr.bf16.mxu0 0
      %1431 = vmatpush1.bf16.msra.mxu0 0
      %1432 = vmatprep.subr.bf16.mxu0 0
      %1433 = vmatpush1.bf16.msra.mxu0 0
      %1434 = vmatprep.subr.bf16.mxu0 0
      %1435 = vmatpush1.bf16.msra.mxu0 0
      %1436 = vmatprep.subr.bf16.mxu0 0
      %1437 = vmatpush1.bf16.msra.mxu0 0
      %1438 = vmatprep.subr.bf16.mxu0 0
      %1439 = vmatpush1.bf16.msra.mxu0 0
      %1440 = vmatprep.subr.bf16.mxu0 0
      %1441 = vmatpush1.bf16.msra.mxu0 0
      %1442 = vmatprep.mubr.bf16.mxu0 0
      %1443 = vmatmul.mubr.bf16.gmra.mrb[0].mxu0 %v291
      %v1444 = vpop.f32.mrb[0].mxu0
      %v1445 = vadd.f32 0.0, %v1444
      %v1446 = vpop.f32.mrb[0].mxu0
      %v1447 = vadd.f32 0.0, %v1446
      %v1448 = vpop.f32.mrb[0].mxu0
      %v1449 = vadd.f32 0.0, %v1448
      %v1450 = vpop.f32.mrb[0].mxu0
      %v1451 = vadd.f32 0.0, %v1450
      %1452 = vmatprep.mubr.bf16.mxu0 0
      %1453 = vmatmul.mubr.bf16.gmra.mrb[0].mxu0 %v297
      %v1454 = vpop.f32.mrb[0].mxu0
      %v1455 = vadd.f32 0.0, %v1454
      %v1456 = vpop.f32.mrb[0].mxu0
      %v1457 = vadd.f32 0.0, %v1456
      %v1458 = vpop.f32.mrb[0].mxu0
      %v1459 = vpop.f32.mrb[0].mxu0
      %1460 = vdwg.mxu0
      %vm1467 = vcmask 1041408
      %v1468 = vrot.slane %v1445, 6
      %v1469 = vrot.slane %v1449, 6
      %v1470 = vsel %vm1467, %v1468, %v1469
      %v1471 = vrot.slane %v1447, 6
      %v1472 = vrot.slane %v1451, 6
      %v1473 = vsel %vm1467, %v1471, %v1472
      %v1474 = vrot.slane %v1455, 6
      %v1475 = vsel %vm1467, %v1469, %v1474
      %v1476 = vrot.slane %v1457, 6
      %v1477 = vsel %vm1467, %v1472, %v1476
      %v1482 = vadd.f32 %v1309, %v1470
      %v1483 = vadd.f32 %v1310, %v1473
      %v1484 = vadd.f32 %v1311, %v1475
      %v1485 = vadd.f32 %v1312, %v1477
      %v1486 = vld [vmem:[%s3] sm:$0x3]
      %v1488 = vlaneseq
      %v1489 = vshrl.u32 %v1488, 7
      %v1490 = vsub.s32 0, %v1489
      %v1491 = vrot.slane %v1486, %v1490
      %v1492 = vlaneseq
      %v1493 = vshrl.u32 %v1492, 7
      %v1494 = vsub.s32 1, %v1493
      %v1495 = vrot.slane %v1486, %v1494
      %v1498 = vadd.f32 %v1482, %v1491
      %v1499 = vadd.f32 %v1483, %v1495
      %v1500 = vadd.f32 %v1484, %v1491
      %v1501 = vadd.f32 %v1485, %v1495
      %v1502 = vmax.f32 %v1498, 0.0
      %v1503 = vmax.f32 %v1499, 0.0
      %v1504 = vmax.f32 %v1500, 0.0
      %v1505 = vmax.f32 %v1501, 0.0
      %v1506 = vpack.c.bf16 %v1504, %v1502
      %v1507 = vpack.c.bf16 %v1505, %v1503
      %v1510 = vunpack.c.l.b16 %v1506
      %v1511 = vunpack.c.l.b16 %v1507
      %v1512 = vunpack.c.h.b16 %v1506
      %v1513 = vunpack.c.h.b16 %v1507
      %v1514 = vpack.c.b16 %v1511, %v1510
      %v1515 = vpack.c.b16 %v1513, %v1512
      %1518 = vst [vmem:[%s280] sm:$0xff] %v1514
      %1519 = vst [vmem:[%s280 + $0x8] sm:$0xff] %v1515
      %s1520 = smul.u32 2, %s20
      %p1521 = scmp.lt.s32.totalorder %s19, 1
      %s1522 = scalar_select %p1521, %s19, 1
      %p1523 = scmp.lt.s32.totalorder %s1520, 1
      %s1524 = scalar_select %p1523, %s1520, 1
      %s1525 = smul.addr %s1524, 2
      %s1526 = smul.addr %s1522, 4
      %s1527 = sadd.s32 %s1525, %s1526
      %s1528 = smul.addr %s1527, 4
      %s1529 = scalar_lea.vmem %s4, %s1528
      // Predicated region
      $region37: #{cycle_generator_forward.20} parent=35 // pred_check
        %p1530 = pneg %p147
      $region38: #{cycle_generator_forward.20} parent=35 // pred_check_branch
        %1532 = sbr.rel (%p1530) target = $region40
      $region39: #{cycle_generator_forward.20} parent=35 // pred_region
        %s1533 = smul.u32 2, %s20
      $region40: #{cycle_generator_forward.20} parent=35 // pred_fallthru
        _
    $region36: #{cycle_generator_forward.20} parent=5 // pred_fallthru
      _
    %p1534 = scmp.le.s32.totalorder 2, %s10
    // Predicated region
    $region41: #{cycle_generator_forward.20} parent=5 // pred_check
      %p1535 = pneg %p1534
    $region42: #{cycle_generator_forward.20} parent=5 // pred_check_branch
      %1537 = sbr.rel (%p1535) target = $region44
    $region43: #{cycle_generator_forward.20} parent=5 // pred_region
      %s1538 = ssub.s32 %s10, 2
      // Predicated region
      $region45: #{cycle_generator_forward.20} parent=43 // pred_check
        %p1539 = pneg %p153
      $region46: #{cycle_generator_forward.20} parent=43 // pred_check_branch
        %1541 = sbr.rel (%p1539) target = $region48
      $region47: #{cycle_generator_forward.20} parent=43 // pred_region
        %s1542 = smul.u32 2, %s22
        %p1543 = scmp.lt.s32.totalorder %s21, 1
        %s1544 = scalar_select %p1543, %s21, 1
        %p1545 = scmp.lt.s32.totalorder %s1542, 1
        %s1546 = scalar_select %p1545, %s1542, 1
        %s1547 = smul.addr %s1546, 2
        %s1548 = smul.addr %s1544, 4
        %s1549 = sadd.s32 %s1547, %s1548
        %s1550 = smul.addr %s1549, 4
        %s1551 = scalar_lea.vmem %s4, %s1550
      $region48: #{cycle_generator_forward.20} parent=43 // pred_fallthru
        _
    $region44: #{cycle_generator_forward.20} parent=5 // pred_fallthru
      _
  $region6: #{cycle_generator_forward.20} parent=0 // loop_footer
    %s14 = sadd.s32 1, %s10
  $region7: #{cycle_generator_forward.20} parent=0 // loop_footer_branch
    %9 = sbr.rel target = $region3
  $region8: #{cycle_generator_forward.20} parent=0 // loop_exit
    _

// kernel: cycle_generator_forward.21
$region0: #{cycle_generator_forward.21}
  #allocation0 [shape = 'u32[]', space=smem, size = 0x4, offset = 0x4, fixed_abs, tag = 'smem constant byte address 0x4 - core index']
  #allocation1 [shape = 'u32[144,128]{1,0:T(1,128)}', space=vmem, size = 0x12000, scoped, tag = 'internal scratch']
  %s0 = inlined_call_operand.vmem [shape: bf16[2,32,64], index: 0, kind: input, shape index: {}, may-alias: {0,1}]
  %s1 = inlined_call_operand.vmem [shape: bf16[2,32,64], index: 1, kind: input, shape index: {}, may-alias: {0,1}]
  %s2 = inlined_call_operand.vmem [shape: bf16[7,64,128], index: 2, kind: input, shape index: {}]
  %s3 = inlined_call_operand.vmem [shape: f32[1,128], index: 3, kind: input, shape index: {}]
  %s4 = inlined_call_operand.vmem [shape: bf16[2,16,128], index: 4, kind: output, shape index: {}]
  %s5 = sld [smem:[#allocation0]]
  $region49: #{cycle_generator_forward.21} parent=0
    _
  %s7 = ssub.s32 1, %s5
  %s8 = scalar_select 0, %s7, %s5
  loop: start=0, step=1, limit=4
  $region2: #{cycle_generator_forward.21} parent=0 // loop_pre_header
    _
  $region3: #{cycle_generator_forward.21} parent=0 // loop_header
    %s10 = sphi 0, %s14
    %p11 = scmp.ge.s32.totalorder %s10, 4
    %s17 = sphi 0, %s29
    %s18 = sphi 0, %s25
    %s19 = sphi 0, %s17
    %s20 = sphi 0, %s18
    %s21 = sphi 0, %s19
    %s22 = sphi 0, %s20
    %s34 = sphi 0, %s36
    %s37 = sphi 0, %s34
    %s38 = sphi 0, %s37
    %s54 = sphi 0, %s38
    %s64 = sphi 0, %s66
    %s67 = sphi 0, %s64
    %s68 = sphi 0, %s67
    %s84 = sphi 0, %s68
    %s88 = sphi 0, %s88
    %s90 = sphi 0, %s88
    %s91 = sphi 0, %s90
    %s105 = sphi 0, %s91
    %s109 = sphi 0, %s109
    %s111 = sphi 0, %s109
    %s112 = sphi 0, %s111
    %s126 = sphi 0, %s112
    %s134 = sphi 0, %s136
    %s137 = sphi 0, %s134
    %s138 = sphi 0, %s137
    %s154 = sphi 0, %s138
  $region4: #{cycle_generator_forward.21} parent=0 // loop_header_branch
    %13 = sbr.rel (%p11) target = $region8
  $region5: #{cycle_generator_forward.21} parent=0 // loop_body
    %s15 = ssub.s32 %s10, 1
    %s16 = ssub.s32 %s10, 2
    %s23 = sadd.s32 1, %s18
    %p24 = scmp.ge.s32.totalorder %s23, 1
    %s25 = scalar_select %p24, 0, %s23
    %s26 = sadd.s32 1, %s17
    %s27 = scalar_select %p24, %s26, %s17
    %p28 = scmp.ge.s32.totalorder %s27, 2
    %s29 = scalar_select %p28, 0, %s27
    %s30 = ssub.s32 %s17, %s29
    %s31 = ssub.s32 %s18, %s25
    %s32 = sor.u32 %s30, %s31
    %p33 = scmp.eq.s32.totalorder %s32, 0
    %s35 = sadd.s32 %s34, 1
    %s36 = scalar_select %p33, %s34, %s35
    %p39 = pneg %p33
    %p40 = scmp.eq.s32.totalorder %s10, 1
    %p41 = por %p39, %p40
    %p42 = scmp.ne.s32.totalorder %s34, %s37
    %p43 = scmp.eq.s32.totalorder %s10, 0
    %p44 = por %p42, %p43
    %p45 = scmp.ne.s32.totalorder %s34, %s37
    %p46 = scmp.eq.s32.totalorder %s15, 1
    %p47 = por %p45, %p46
    %p48 = scmp.ne.s32.totalorder %s37, %s38
    %p49 = scmp.eq.s32.totalorder %s15, 0
    %p50 = por %p48, %p49
    %p51 = scmp.ne.s32.totalorder %s37, %s38
    %p52 = scmp.eq.s32.totalorder %s16, 1
    %p53 = por %p51, %p52
    %p55 = scmp.ne.s32.totalorder %s38, %s54
    %p56 = scmp.eq.s32.totalorder %s16, 0
    %p57 = por %p55, %p56
    %s58 = sadd.s32 %s18, 1
    %s59 = sadd.s32 %s25, 1
    %s60 = ssub.s32 %s17, %s29
    %s61 = ssub.s32 %s58, %s59
    %s62 = sor.u32 %s60, %s61
    %p63 = scmp.eq.s32.totalorder %s62, 0
    %s65 = sadd.s32 %s64, 1
    %s66 = scalar_select %p63, %s64, %s65
    %p69 = pneg %p63
    %p70 = scmp.eq.s32.totalorder %s10, 1
    %p71 = por %p69, %p70
    %p72 = scmp.ne.s32.totalorder %s64, %s67
    %p73 = scmp.eq.s32.totalorder %s10, 0
    %p74 = por %p72, %p73
    %p75 = scmp.ne.s32.totalorder %s64, %s67
    %p76 = scmp.eq.s32.totalorder %s15, 1
    %p77 = por %p75, %p76
    %p78 = scmp.ne.s32.totalorder %s67, %s68
    %p79 = scmp.eq.s32.totalorder %s15, 0
    %p80 = por %p78, %p79
    %p81 = scmp.ne.s32.totalorder %s67, %s68
    %p82 = scmp.eq.s32.totalorder %s16, 1
    %p83 = por %p81, %p82
    %p85 = scmp.ne.s32.totalorder %s68, %s84
    %p86 = scmp.eq.s32.totalorder %s16, 0
    %p87 = por %p85, %p86
    %s89 = sadd.s32 %s88, 1
    %p92 = scmp.eq.s32.totalorder %s10, 1
    %p93 = scmp.ne.s32.totalorder %s88, %s90
    %p94 = scmp.eq.s32.totalorder %s10, 0
    %p95 = por %p93, %p94
    %p96 = scmp.ne.s32.totalorder %s88, %s90
    %p97 = scmp.eq.s32.totalorder %s15, 1
    %p98 = por %p96, %p97
    %p99 = scmp.ne.s32.totalorder %s90, %s91
    %p100 = scmp.eq.s32.totalorder %s15, 0
    %p101 = por %p99, %p100
    %p102 = scmp.ne.s32.totalorder %s90, %s91
    %p103 = scmp.eq.s32.totalorder %s16, 1
    %p104 = por %p102, %p103
    %p106 = scmp.ne.s32.totalorder %s91, %s105
    %p107 = scmp.eq.s32.totalorder %s16, 0
    %p108 = por %p106, %p107
    %s110 = sadd.s32 %s109, 1
    %p113 = scmp.eq.s32.totalorder %s10, 1
    %p114 = scmp.ne.s32.totalorder %s109, %s111
    %p115 = scmp.eq.s32.totalorder %s10, 0
    %p116 = por %p114, %p115
    %p117 = scmp.ne.s32.totalorder %s109, %s111
    %p118 = scmp.eq.s32.totalorder %s15, 1
    %p119 = por %p117, %p118
    %p120 = scmp.ne.s32.totalorder %s111, %s112
    %p121 = scmp.eq.s32.totalorder %s15, 0
    %p122 = por %p120, %p121
    %p123 = scmp.ne.s32.totalorder %s111, %s112
    %p124 = scmp.eq.s32.totalorder %s16, 1
    %p125 = por %p123, %p124
    %p127 = scmp.ne.s32.totalorder %s112, %s126
    %p128 = scmp.eq.s32.totalorder %s16, 0
    %p129 = por %p127, %p128
    %s130 = ssub.s32 %s17, %s29
    %s131 = ssub.s32 %s18, %s25
    %s132 = sor.u32 %s130, %s131
    %p133 = scmp.eq.s32.totalorder %s132, 0
    %s135 = sadd.s32 %s134, 1
    %s136 = scalar_select %p133, %s134, %s135
    %p139 = pneg %p133
    %p140 = scmp.eq.s32.totalorder %s10, 1
    %p141 = por %p139, %p140
    %p142 = scmp.ne.s32.totalorder %s134, %s137
    %p143 = scmp.eq.s32.totalorder %s10, 0
    %p144 = por %p142, %p143
    %p145 = scmp.ne.s32.totalorder %s134, %s137
    %p146 = scmp.eq.s32.totalorder %s15, 1
    %p147 = por %p145, %p146
    %p148 = scmp.ne.s32.totalorder %s137, %s138
    %p149 = scmp.eq.s32.totalorder %s15, 0
    %p150 = por %p148, %p149
    %p151 = scmp.ne.s32.totalorder %s137, %s138
    %p152 = scmp.eq.s32.totalorder %s16, 1
    %p153 = por %p151, %p152
    %p155 = scmp.ne.s32.totalorder %s138, %s154
    %p156 = scmp.eq.s32.totalorder %s16, 0
    %p157 = por %p155, %p156
    %p158 = scmp.le.s32.totalorder 1, %s10
    %p159 = scmp.lt.s32.totalorder %s10, 3
    %p160 = pnand %p158, %p159
    %p161 = pneg %p160
    // Predicated region
    $region9: #{cycle_generator_forward.21} parent=5 // pred_check
      _
    $region10: #{cycle_generator_forward.21} parent=5 // pred_check_branch
      %163 = sbr.rel (%p160) target = $region12
    $region11: #{cycle_generator_forward.21} parent=5 // pred_region
      %s164 = ssub.s32 %s10, 1
      // Predicated region
      $region13: #{cycle_generator_forward.21} parent=11 // pred_check
        %p165 = pneg %p101
      $region14: #{cycle_generator_forward.21} parent=11 // pred_check_branch
        %167 = sbr.rel (%p165) target = $region16
      $region15: #{cycle_generator_forward.21} parent=11 // pred_region
        _
      $region16: #{cycle_generator_forward.21} parent=11 // pred_fallthru
        _
      // Predicated region
      $region17: #{cycle_generator_forward.21} parent=11 // pred_check
        %p168 = pneg %p122
      $region18: #{cycle_generator_forward.21} parent=11 // pred_check_branch
        %170 = sbr.rel (%p168) target = $region20
      $region19: #{cycle_generator_forward.21} parent=11 // pred_region
        _
      $region20: #{cycle_generator_forward.21} parent=11 // pred_fallthru
        _
    $region12: #{cycle_generator_forward.21} parent=5 // pred_fallthru
      _
    %p171 = scmp.lt.s32.totalorder %s10, 2
    // Predicated region
    $region21: #{cycle_generator_forward.21} parent=5 // pred_check
      %p172 = pneg %p171
    $region22: #{cycle_generator_forward.21} parent=5 // pred_check_branch
      %174 = sbr.rel (%p172) target = $region24
    $region23: #{cycle_generator_forward.21} parent=5 // pred_region
      // Predicated region
      $region25: #{cycle_generator_forward.21} parent=23 // pred_check
        %p175 = pneg %p44
      $region26: #{cycle_generator_forward.21} parent=23 // pred_check_branch
        %177 = sbr.rel (%p175) target = $region28
      $region27: #{cycle_generator_forward.21} parent=23 // pred_region
        %s178 = smul.u32 2, %s18
        %p179 = scmp.lt.s32.totalorder %s17, 1
        %s180 = scalar_select %p179, %s17, 1
        %p181 = scmp.lt.s32.totalorder %s178, 3
        %s182 = scalar_select %p181, %s178, 3
        %s183 = smul.addr %s180, 4
        %s184 = sadd.s32 %s182, %s183
        %s185 = smul.addr %s184, 4
        %s186 = scalar_lea.vmem %s0, %s185
        %s187 = smul.u32 2, %s18
      $region28: #{cycle_generator_forward.21} parent=23 // pred_fallthru
        _
      // Predicated region
      $region29: #{cycle_generator_forward.21} parent=23 // pred_check
        %p188 = pneg %p74
      $region30: #{cycle_generator_forward.21} parent=23 // pred_check_branch
        %190 = sbr.rel (%p188) target = $region32
      $region31: #{cycle_generator_forward.21} parent=23 // pred_region
        %s191 = sadd.s32 %s18, 1
        %s192 = smul.u32 2, %s191
        %p193 = scmp.lt.s32.totalorder %s17, 1
        %s194 = scalar_select %p193, %s17, 1
        %p195 = scmp.lt.s32.totalorder %s192, 3
        %s196 = scalar_select %p195, %s192, 3
        %s197 = smul.addr %s194, 4
        %s198 = sadd.s32 %s196, %s197
        %s199 = smul.addr %s198, 4
        %s200 = scalar_lea.vmem %s1, %s199
        %s201 = sadd.s32 %s18, 1
        %s202 = smul.u32 2, %s201
      $region32: #{cycle_generator_forward.21} parent=23 // pred_fallthru
        _
    $region24: #{cycle_generator_forward.21} parent=5 // pred_fallthru
      _
    %p203 = scmp.le.s32.totalorder 1, %s10
    %p204 = scmp.lt.s32.totalorder %s10, 3
    %p205 = pnand %p203, %p204
    %p206 = pneg %p205
    // Predicated region
    $region33: #{cycle_generator_forward.21} parent=5 // pred_check
      _
    $region34: #{cycle_generator_forward.21} parent=5 // pred_check_branch
      %208 = sbr.rel (%p205) target = $region36
    $region35: #{cycle_generator_forward.21} parent=5 // pred_region
      %s209 = ssub.s32 %s10, 1
      %s210 = smul.u32 2, %s20
      %p211 = scmp.lt.s32.totalorder %s19, 1
      %s212 = scalar_select %p211, %s19, 1
      %p213 = scmp.lt.s32.totalorder %s210, 3
      %s214 = scalar_select %p213, %s210, 3
      %s215 = smul.addr %s212, 4
      %s216 = sadd.s32 %s214, %s215
      %s217 = smul.addr %s216, 4
      %s218 = scalar_lea.vmem %s0, %s217
      %p219 = pneg %p50
      %p220 = pneg %p47
      %s221 = sadd.s32 %s20, 1
      %s222 = smul.u32 2, %s221
      %p223 = scmp.lt.s32.totalorder %s19, 1
      %s224 = scalar_select %p223, %s19, 1
      %p225 = scmp.lt.s32.totalorder %s222, 3
      %s226 = scalar_select %p225, %s222, 3
      %s227 = smul.addr %s224, 4
      %s228 = sadd.s32 %s226, %s227
      %s229 = smul.addr %s228, 4
      %s230 = scalar_lea.vmem %s1, %s229
      %p231 = pneg %p80
      %p232 = pneg %p77
      %p233 = pneg %p101
      %p234 = pneg %p98
      %p235 = pneg %p122
      %p236 = pneg %p119
      %p237 = pneg %p150
      %p238 = pneg %p147
      %s239 = smul.u32 2, %s20
      %p240 = scmp.lt.s32.totalorder %s19, 1
      %s241 = scalar_select %p240, %s19, 1
      %p242 = scmp.lt.s32.totalorder %s239, 1
      %s243 = scalar_select %p242, %s239, 1
      %s244 = smul.addr %s241, 2
      %s245 = sadd.s32 %s243, %s244
      %s246 = smul.addr %s245, 4
      %s247 = scalar_lea.vmem %s4, %s246
      %s248 = smul.u32 2, %s20
      %p249 = scmp.lt.s32.totalorder %s19, 1
      %s250 = scalar_select %p249, %s19, 1
      %p251 = scmp.lt.s32.totalorder %s248, 3
      %s252 = scalar_select %p251, %s248, 3
      %s253 = smul.addr %s250, 4
      %s254 = sadd.s32 %s252, %s253
      %s255 = smul.addr %s254, 4
      %s256 = scalar_lea.vmem %s0, %s255
      %s257 = smul.u32 2, %s20
      %s258 = sadd.s32 %s20, 1
      %s259 = smul.u32 2, %s258
      %p260 = scmp.lt.s32.totalorder %s19, 1
      %s261 = scalar_select %p260, %s19, 1
      %p262 = scmp.lt.s32.totalorder %s259, 3
      %s263 = scalar_select %p262, %s259, 3
      %s264 = smul.addr %s261, 4
      %s265 = sadd.s32 %s263, %s264
      %s266 = smul.addr %s265, 4
      %s267 = scalar_lea.vmem %s1, %s266
      %s268 = sadd.s32 %s20, 1
      %s269 = smul.u32 2, %s268
      %s270 = smul.u32 2, %s20
      %p271 = scmp.lt.s32.totalorder %s19, 1
      %s272 = scalar_select %p271, %s19, 1
      %p273 = scmp.lt.s32.totalorder %s270, 1
      %s274 = scalar_select %p273, %s270, 1
      %s275 = smul.addr %s272, 2
      %s276 = sadd.s32 %s274, %s275
      %s277 = smul.addr %s276, 4
      %s278 = scalar_lea.vmem %s4, %s277
      %s279 = smul.u32 2, %s20
      %v281 = vld [vmem:[%s256] sm:$0xf]
      %v282 = vld [vmem:[%s256 + $0x4] sm:$0xf]
      %v283 = vld [vmem:[%s267] sm:$0xf]
      %v284 = vld [vmem:[%s267 + $0x4] sm:$0xf]
      %v287 = vunpack.c.l.b16 %v281
      %v288 = vunpack.c.l.b16 %v282
      %v289 = vpack.c.b16 %v288, %v287
      %v292 = vunpack.c.l.b16 %v283
      %v293 = vunpack.c.l.b16 %v284
      %v294 = vpack.c.b16 %v293, %v292
      %v295 = vld [vmem:[%s2] sm:$0xf]
      %v296 = vld [vmem:[%s2 + $0x4] sm:$0xf]
      %v297 = vld [vmem:[%s2 + $0x8] sm:$0xf]
      %v298 = vld [vmem:[%s2 + $0xc] sm:$0xf]
      %v299 = vld [vmem:[%s2 + $0x10] sm:$0xf]
      %v300 = vld [vmem:[%s2 + $0x14] sm:$0xf]
      %v301 = vld [vmem:[%s2 + $0x18] sm:$0xf]
      %v302 = vld [vmem:[%s2 + $0x1c] sm:$0xf]
      %v311 = vunpack.c.l.b16 %v295
      %v312 = vunpack.c.l.b16 %v296
      %v313 = vunpack.c.l.b16 %v297
      %v314 = vunpack.c.l.b16 %v298
      %v315 = vunpack.c.l.b16 %v299
      %v316 = vunpack.c.l.b16 %v300
      %v317 = vunpack.c.l.b16 %v301
      %v318 = vunpack.c.l.b16 %v302
      %v319 = vpack.c.b16 %v312, %v311
      %v320 = vpack.c.b16 %v314, %v313
      %v321 = vpack.c.b16 %v316, %v315
      %v322 = vpack.c.b16 %v318, %v317
      %vm327 = vcmask 523264
      %v329 = vsel %vm327, %v289, 0
      %v332 = vsel %vm327, %v294, 0
      %334 = vmatprep.subr.bf16.mxu0 0
      %335 = vmatpush1.bf16.msra.mxu0 %v319
      %336 = vmatprep.subr.bf16.mxu0 0
      %337 = vmatpush1.bf16.msra.mxu0 %v320
      %338 = vmatprep.subr.bf16.mxu0 0
      %339 = vmatpush1.bf16.msra.mxu0 %v321
      %340 = vmatprep.subr.bf16.mxu0 0
      %341 = vmatpush1.bf16.msra.mxu0 %v322
      %342 = vmatprep.subr.bf16.mxu0 0
      %343 = vmatpush1.bf16.msra.mxu0 0
      %344 = vmatprep.subr.bf16.mxu0 0
      %345 = vmatpush1.bf16.msra.mxu0 0
      %346 = vmatprep.subr.bf16.mxu0 0
      %347 = vmatpush1.bf16.msra.mxu0 0
      %348 = vmatprep.subr.bf16.mxu0 0
      %349 = vmatpush1.bf16.msra.mxu0 0
      %350 = vmatprep.subr.bf16.mxu0 0
      %351 = vmatpush1.bf16.msra.mxu0 0
      %352 = vmatprep.subr.bf16.mxu0 0
      %353 = vmatpush1.bf16.msra.mxu0 0
      %354 = vmatprep.subr.bf16.mxu0 0
      %355 = vmatpush1.bf16.msra.mxu0 0
      %356 = vmatprep.subr.bf16.mxu0 0
      %357 = vmatpush1.bf16.msra.mxu0 0
      %358 = vmatprep.subr.bf16.mxu0 0
      %359 = vmatpush1.bf16.msra.mxu0 0
      %360 = vmatprep.subr.bf16.mxu0 0
      %361 = vmatpush1.bf16.msra.mxu0 0
      %362 = vmatprep.subr.bf16.mxu0 0
      %363 = vmatpush1.bf16.msra.mxu0 0
      %364 = vmatprep.subr.bf16.mxu0 0
      %365 = vmatpush1.bf16.msra.mxu0 0
      %366 = vmatprep.mubr.bf16.mxu0 0
      %367 = vmatmul.mubr.bf16.gmra.mrb[0].mxu0 %v329
      %v368 = vpop.f32.mrb[0].mxu0
      %v369 = vadd.f32 0.0, %v368
      %v370 = vpop.f32.mrb[0].mxu0
      %v371 = vpop.f32.mrb[0].mxu0
      %v372 = vadd.f32 0.0, %v371
      %v373 = vpop.f32.mrb[0].mxu0
      %374 = vmatprep.mubr.bf16.mxu0 0
      %375 = vmatmul.mubr.bf16.gmra.mrb[0].mxu0 %v332
      %v376 = vpop.f32.mrb[0].mxu0
      %v377 = vpop.f32.mrb[0].mxu0
      %v378 = vpop.f32.mrb[0].mxu0
      %v379 = vpop.f32.mrb[0].mxu0
      %380 = vdwg.mxu0
      %v381 = vadd.f32 %v369, 0.0
      %v382 = vadd.f32 %v372, 0.0
      %s383 = scalar_lea.vmem %s2, 32
      %v384 = vld [vmem:[%s383] sm:$0xf]
      %v385 = vld [vmem:[%s383 + $0x4] sm:$0xf]
      %v386 = vld [vmem:[%s383 + $0x8] sm:$0xf]
      %v387 = vld [vmem:[%s383 + $0xc] sm:$0xf]
      %v388 = vld [vmem:[%s383 + $0x10] sm:$0xf]
      %v389 = vld [vmem:[%s383 + $0x14] sm:$0xf]
      %v390 = vld [vmem:[%s383 + $0x18] sm:$0xf]
      %v391 = vld [vmem:[%s383 + $0x1c] sm:$0xf]
      %v400 = vunpack.c.l.b16 %v384
      %v401 = vunpack.c.l.b16 %v385
      %v402 = vunpack.c.l.b16 %v386
      %v403 = vunpack.c.l.b16 %v387
      %v404 = vunpack.c.l.b16 %v388
      %v405 = vunpack.c.l.b16 %v389
      %v406 = vunpack.c.l.b16 %v390
      %v407 = vunpack.c.l.b16 %v391
      %v408 = vpack.c.b16 %v401, %v400
      %v409 = vpack.c.b16 %v403, %v402
      %v410 = vpack.c.b16 %v405, %v404
      %v411 = vpack.c.b16 %v407, %v406
      %416 = vmatprep.subr.bf16.mxu0 0
      %417 = vmatpush1.bf16.msra.mxu0 %v408
      %418 = vmatprep.subr.bf16.mxu0 0
      %419 = vmatpush1.bf16.msra.mxu0 %v409
      %420 = vmatprep.subr.bf16.mxu0 0
      %421 = vmatpush1.bf16.msra.mxu0 %v410
      %422 = vmatprep.subr.bf16.mxu0 0
      %423 = vmatpush1.bf16.msra.mxu0 %v411
      %424 = vmatprep.subr.bf16.mxu0 0
      %425 = vmatpush1.bf16.msra.mxu0 0
      %426 = vmatprep.subr.bf16.mxu0 0
      %427 = vmatpush1.bf16.msra.mxu0 0
      %428 = vmatprep.subr.bf16.mxu0 0
      %429 = vmatpush1.bf16.msra.mxu0 0
      %430 = vmatprep.subr.bf16.mxu0 0
      %431 = vmatpush1.bf16.msra.mxu0 0
      %432 = vmatprep.subr.bf16.mxu0 0
      %433 = vmatpush1.bf16.msra.mxu0 0
      %434 = vmatprep.subr.bf16.mxu0 0
      %435 = vmatpush1.bf16.msra.mxu0 0
      %436 = vmatprep.subr.bf16.mxu0 0
      %437 = vmatpush1.bf16.msra.mxu0 0
      %438 = vmatprep.subr.bf16.mxu0 0
      %439 = vmatpush1.bf16.msra.mxu0 0
      %440 = vmatprep.subr.bf16.mxu0 0
      %441 = vmatpush1.bf16.msra.mxu0 0
      %442 = vmatprep.subr.bf16.mxu0 0
      %443 = vmatpush1.bf16.msra.mxu0 0
      %444 = vmatprep.subr.bf16.mxu0 0
      %445 = vmatpush1.bf16.msra.mxu0 0
      %446 = vmatprep.subr.bf16.mxu0 0
      %447 = vmatpush1.bf16.msra.mxu0 0
      %448 = vmatprep.mubr.bf16.mxu0 0
      %449 = vmatmul.mubr.bf16.gmra.mrb[0].mxu0 %v329
      %v450 = vpop.f32.mrb[0].mxu0
      %v451 = vadd.f32 0.0, %v450
      %v452 = vpop.f32.mrb[0].mxu0
      %v453 = vpop.f32.mrb[0].mxu0
      %v454 = vadd.f32 0.0, %v453
      %v455 = vpop.f32.mrb[0].mxu0
      %456 = vmatprep.mubr.bf16.mxu0 0
      %457 = vmatmul.mubr.bf16.gmra.mrb[0].mxu0 %v332
      %v458 = vpop.f32.mrb[0].mxu0
      %v459 = vadd.f32 0.0, %v458
      %v460 = vpop.f32.mrb[0].mxu0
      %v461 = vpop.f32.mrb[0].mxu0
      %v462 = vpop.f32.mrb[0].mxu0
      %463 = vdwg.mxu0
      %vm467 = vcmask 1046528
      %v468 = vrot.slane %v451, 1
      %v469 = vrot.slane %v454, 1
      %v470 = vsel %vm467, %v468, %v469
      %v471 = vrot.slane %v459, 1
      %v472 = vsel %vm467, %v469, %v471
      %v475 = vadd.f32 %v381, %v470
      %v476 = vadd.f32 %v382, %v472
      %s477 = scalar_lea.vmem %s2, 64
      %v478 = vld [vmem:[%s477] sm:$0xf]
      %v479 = vld [vmem:[%s477 + $0x4] sm:$0xf]
      %v480 = vld [vmem:[%s477 + $0x8] sm:$0xf]
      %v481 = vld [vmem:[%s477 + $0xc] sm:$0xf]
      %v482 = vld [vmem:[%s477 + $0x10] sm:$0xf]
      %v483 = vld [vmem:[%s477 + $0x14] sm:$0xf]
      %v484 = vld [vmem:[%s477 + $0x18] sm:$0xf]
      %v485 = vld [vmem:[%s477 + $0x1c] sm:$0xf]
      %v494 = vunpack.c.l.b16 %v478
      %v495 = vunpack.c.l.b16 %v479
      %v496 = vunpack.c.l.b16 %v480
      %v497 = vunpack.c.l.b16 %v481
      %v498 = vunpack.c.l.b16 %v482
      %v499 = vunpack.c.l.b16 %v483
      %v500 = vunpack.c.l.b16 %v484
      %v501 = vunpack.c.l.b16 %v485
      %v502 = vpack.c.b16 %v495, %v494
      %v503 = vpack.c.b16 %v497, %v496
      %v504 = vpack.c.b16 %v499, %v498
      %v505 = vpack.c.b16 %v501, %v500
      %510 = vmatprep.subr.bf16.mxu0 0
      %511 = vmatpush1.bf16.msra.mxu0 %v502
      %512 = vmatprep.subr.bf16.mxu0 0
      %513 = vmatpush1.bf16.msra.mxu0 %v503
      %514 = vmatprep.subr.bf16.mxu0 0
      %515 = vmatpush1.bf16.msra.mxu0 %v504
      %516 = vmatprep.subr.bf16.mxu0 0
      %517 = vmatpush1.bf16.msra.mxu0 %v505
      %518 = vmatprep.subr.bf16.mxu0 0
      %519 = vmatpush1.bf16.msra.mxu0 0
      %520 = vmatprep.subr.bf16.mxu0 0
      %521 = vmatpush1.bf16.msra.mxu0 0
      %522 = vmatprep.subr.bf16.mxu0 0
      %523 = vmatpush1.bf16.msra.mxu0 0
      %524 = vmatprep.subr.bf16.mxu0 0
      %525 = vmatpush1.bf16.msra.mxu0 0
      %526 = vmatprep.subr.bf16.mxu0 0
      %527 = vmatpush1.bf16.msra.mxu0 0
      %528 = vmatprep.subr.bf16.mxu0 0
      %529 = vmatpush1.bf16.msra.mxu0 0
      %530 = vmatprep.subr.bf16.mxu0 0
      %531 = vmatpush1.bf16.msra.mxu0 0
      %532 = vmatprep.subr.bf16.mxu0 0
      %533 = vmatpush1.bf16.msra.mxu0 0
      %534 = vmatprep.subr.bf16.mxu0 0
      %535 = vmatpush1.bf16.msra.mxu0 0
      %536 = vmatprep.subr.bf16.mxu0 0
      %537 = vmatpush1.bf16.msra.mxu0 0
      %538 = vmatprep.subr.bf16.mxu0 0
      %539 = vmatpush1.bf16.msra.mxu0 0
      %540 = vmatprep.subr.bf16.mxu0 0
      %541 = vmatpush1.bf16.msra.mxu0 0
      %542 = vmatprep.mubr.bf16.mxu0 0
      %543 = vmatmul.mubr.bf16.gmra.mrb[0].mxu0 %v329
      %v544 = vpop.f32.mrb[0].mxu0
      %v545 = vadd.f32 0.0, %v544
      %v546 = vpop.f32.mrb[0].mxu0
      %v547 = vpop.f32.mrb[0].mxu0
      %v548 = vadd.f32 0.0, %v547
      %v549 = vpop.f32.mrb[0].mxu0
      %550 = vmatprep.mubr.bf16.mxu0 0
      %551 = vmatmul.mubr.bf16.gmra.mrb[0].mxu0 %v332
      %v552 = vpop.f32.mrb[0].mxu0
      %v553 = vadd.f32 0.0, %v552
      %v554 = vpop.f32.mrb[0].mxu0
      %v555 = vpop.f32.mrb[0].mxu0
      %v556 = vpop.f32.mrb[0].mxu0
      %557 = vdwg.mxu0
      %vm561 = vcmask 1045504
      %v562 = vrot.slane %v545, 2
      %v563 = vrot.slane %v548, 2
      %v564 = vsel %vm561, %v562, %v563
      %v565 = vrot.slane %v553, 2
      %v566 = vsel %vm561, %v563, %v565
      %v569 = vadd.f32 %v475, %v564
      %v570 = vadd.f32 %v476, %v566
      %s571 = scalar_lea.vmem %s2, 96
      %v572 = vld [vmem:[%s571] sm:$0xf]
      %v573 = vld [vmem:[%s571 + $0x4] sm:$0xf]
      %v574 = vld [vmem:[%s571 + $0x8] sm:$0xf]
      %v575 = vld [vmem:[%s571 + $0xc] sm:$0xf]
      %v576 = vld [vmem:[%s571 + $0x10] sm:$0xf]
      %v577 = vld [vmem:[%s571 + $0x14] sm:$0xf]
      %v578 = vld [vmem:[%s571 + $0x18] sm:$0xf]
      %v579 = vld [vmem:[%s571 + $0x1c] sm:$0xf]
      %v588 = vunpack.c.l.b16 %v572
      %v589 = vunpack.c.l.b16 %v573
      %v590 = vunpack.c.l.b16 %v574
      %v591 = vunpack.c.l.b16 %v575
      %v592 = vunpack.c.l.b16 %v576
      %v593 = vunpack.c.l.b16 %v577
      %v594 = vunpack.c.l.b16 %v578
      %v595 = vunpack.c.l.b16 %v579
      %v596 = vpack.c.b16 %v589, %v588
      %v597 = vpack.c.b16 %v591, %v590
      %v598 = vpack.c.b16 %v593, %v592
      %v599 = vpack.c.b16 %v595, %v594
      %604 = vmatprep.subr.bf16.mxu0 0
      %605 = vmatpush1.bf16.msra.mxu0 %v596
      %606 = vmatprep.subr.bf16.mxu0 0
      %607 = vmatpush1.bf16.msra.mxu0 %v597
      %608 = vmatprep.subr.bf16.mxu0 0
      %609 = vmatpush1.bf16.msra.mxu0 %v598
      %610 = vmatprep.subr.bf16.mxu0 0
      %611 = vmatpush1.bf16.msra.mxu0 %v599
      %612 = vmatprep.subr.bf16.mxu0 0
      %613 = vmatpush1.bf16.msra.mxu0 0
      %614 = vmatprep.subr.bf16.mxu0 0
      %615 = vmatpush1.bf16.msra.mxu0 0
      %616 = vmatprep.subr.bf16.mxu0 0
      %617 = vmatpush1.bf16.msra.mxu0 0
      %618 = vmatprep.subr.bf16.mxu0 0
      %619 = vmatpush1.bf16.msra.mxu0 0
      %620 = vmatprep.subr.bf16.mxu0 0
      %621 = vmatpush1.bf16.msra.mxu0 0
      %622 = vmatprep.subr.bf16.mxu0 0
      %623 = vmatpush1.bf16.msra.mxu0 0
      %624 = vmatprep.subr.bf16.mxu0 0
      %625 = vmatpush1.bf16.msra.mxu0 0
      %626 = vmatprep.subr.bf16.mxu0 0
      %627 = vmatpush1.bf16.msra.mxu0 0
      %628 = vmatprep.subr.bf16.mxu0 0
      %629 = vmatpush1.bf16.msra.mxu0 0
      %630 = vmatprep.subr.bf16.mxu0 0
      %631 = vmatpush1.bf16.msra.mxu0 0
      %632 = vmatprep.subr.bf16.mxu0 0
      %633 = vmatpush1.bf16.msra.mxu0 0
      %634 = vmatprep.subr.bf16.mxu0 0
      %635 = vmatpush1.bf16.msra.mxu0 0
      %636 = vmatprep.mubr.bf16.mxu0 0
      %637 = vmatmul.mubr.bf16.gmra.mrb[0].mxu0 %v329
      %v638 = vpop.f32.mrb[0].mxu0
      %v639 = vadd.f32 0.0, %v638
      %v640 = vpop.f32.mrb[0].mxu0
      %v641 = vpop.f32.mrb[0].mxu0
      %v642 = vadd.f32 0.0, %v641
      %v643 = vpop.f32.mrb[0].mxu0
      %644 = vmatprep.mubr.bf16.mxu0 0
      %645 = vmatmul.mubr.bf16.gmra.mrb[0].mxu0 %v332
      %v646 = vpop.f32.mrb[0].mxu0
      %v647 = vadd.f32 0.0, %v646
      %v648 = vpop.f32.mrb[0].mxu0
      %v649 = vpop.f32.mrb[0].mxu0
      %v650 = vpop.f32.mrb[0].mxu0
      %651 = vdwg.mxu0
      %vm655 = vcmask 1044480
      %v656 = vrot.slane %v639, 3
      %v657 = vrot.slane %v642, 3
      %v658 = vsel %vm655, %v656, %v657
      %v659 = vrot.slane %v647, 3
      %v660 = vsel %vm655, %v657, %v659
      %v663 = vadd.f32 %v569, %v658
      %v664 = vadd.f32 %v570, %v660
      %s665 = scalar_lea.vmem %s2, 128
      %v666 = vld [vmem:[%s665] sm:$0xf]
      %v667 = vld [vmem:[%s665 + $0x4] sm:$0xf]
      %v668 = vld [vmem:[%s665 + $0x8] sm:$0xf]
      %v669 = vld [vmem:[%s665 + $0xc] sm:$0xf]
      %v670 = vld [vmem:[%s665 + $0x10] sm:$0xf]
      %v671 = vld [vmem:[%s665 + $0x14] sm:$0xf]
      %v672 = vld [vmem:[%s665 + $0x18] sm:$0xf]
      %v673 = vld [vmem:[%s665 + $0x1c] sm:$0xf]
      %v682 = vunpack.c.l.b16 %v666
      %v683 = vunpack.c.l.b16 %v667
      %v684 = vunpack.c.l.b16 %v668
      %v685 = vunpack.c.l.b16 %v669
      %v686 = vunpack.c.l.b16 %v670
      %v687 = vunpack.c.l.b16 %v671
      %v688 = vunpack.c.l.b16 %v672
      %v689 = vunpack.c.l.b16 %v673
      %v690 = vpack.c.b16 %v683, %v682
      %v691 = vpack.c.b16 %v685, %v684
      %v692 = vpack.c.b16 %v687, %v686
      %v693 = vpack.c.b16 %v689, %v688
      %698 = vmatprep.subr.bf16.mxu0 0
      %699 = vmatpush1.bf16.msra.mxu0 %v690
      %700 = vmatprep.subr.bf16.mxu0 0
      %701 = vmatpush1.bf16.msra.mxu0 %v691
      %702 = vmatprep.subr.bf16.mxu0 0
      %703 = vmatpush1.bf16.msra.mxu0 %v692
      %704 = vmatprep.subr.bf16.mxu0 0
      %705 = vmatpush1.bf16.msra.mxu0 %v693
      %706 = vmatprep.subr.bf16.mxu0 0
      %707 = vmatpush1.bf16.msra.mxu0 0
      %708 = vmatprep.subr.bf16.mxu0 0
      %709 = vmatpush1.bf16.msra.mxu0 0
      %710 = vmatprep.subr.bf16.mxu0 0
      %711 = vmatpush1.bf16.msra.mxu0 0
      %712 = vmatprep.subr.bf16.mxu0 0
      %713 = vmatpush1.bf16.msra.mxu0 0
      %714 = vmatprep.subr.bf16.mxu0 0
      %715 = vmatpush1.bf16.msra.mxu0 0
      %716 = vmatprep.subr.bf16.mxu0 0
      %717 = vmatpush1.bf16.msra.mxu0 0
      %718 = vmatprep.subr.bf16.mxu0 0
      %719 = vmatpush1.bf16.msra.mxu0 0
      %720 = vmatprep.subr.bf16.mxu0 0
      %721 = vmatpush1.bf16.msra.mxu0 0
      %722 = vmatprep.subr.bf16.mxu0 0
      %723 = vmatpush1.bf16.msra.mxu0 0
      %724 = vmatprep.subr.bf16.mxu0 0
      %725 = vmatpush1.bf16.msra.mxu0 0
      %726 = vmatprep.subr.bf16.mxu0 0
      %727 = vmatpush1.bf16.msra.mxu0 0
      %728 = vmatprep.subr.bf16.mxu0 0
      %729 = vmatpush1.bf16.msra.mxu0 0
      %730 = vmatprep.mubr.bf16.mxu0 0
      %731 = vmatmul.mubr.bf16.gmra.mrb[0].mxu0 %v329
      %v732 = vpop.f32.mrb[0].mxu0
      %v733 = vadd.f32 0.0, %v732
      %v734 = vpop.f32.mrb[0].mxu0
      %v735 = vpop.f32.mrb[0].mxu0
      %v736 = vadd.f32 0.0, %v735
      %v737 = vpop.f32.mrb[0].mxu0
      %738 = vmatprep.mubr.bf16.mxu0 0
      %739 = vmatmul.mubr.bf16.gmra.mrb[0].mxu0 %v332
      %v740 = vpop.f32.mrb[0].mxu0
      %v741 = vadd.f32 0.0, %v740
      %v742 = vpop.f32.mrb[0].mxu0
      %v743 = vpop.f32.mrb[0].mxu0
      %v744 = vpop.f32.mrb[0].mxu0
      %745 = vdwg.mxu0
      %vm749 = vcmask 1043456
      %v750 = vrot.slane %v733, 4
      %v751 = vrot.slane %v736, 4
      %v752 = vsel %vm749, %v750, %v751
      %v753 = vrot.slane %v741, 4
      %v754 = vsel %vm749, %v751, %v753
      %v757 = vadd.f32 %v663, %v752
      %v758 = vadd.f32 %v664, %v754
      %s759 = scalar_lea.vmem %s2, 160
      %v760 = vld [vmem:[%s759] sm:$0xf]
      %v761 = vld [vmem:[%s759 + $0x4] sm:$0xf]
      %v762 = vld [vmem:[%s759 + $0x8] sm:$0xf]
      %v763 = vld [vmem:[%s759 + $0xc] sm:$0xf]
      %v764 = vld [vmem:[%s759 + $0x10] sm:$0xf]
      %v765 = vld [vmem:[%s759 + $0x14] sm:$0xf]
      %v766 = vld [vmem:[%s759 + $0x18] sm:$0xf]
      %v767 = vld [vmem:[%s759 + $0x1c] sm:$0xf]
      %v776 = vunpack.c.l.b16 %v760
      %v777 = vunpack.c.l.b16 %v761
      %v778 = vunpack.c.l.b16 %v762
      %v779 = vunpack.c.l.b16 %v763
      %v780 = vunpack.c.l.b16 %v764
      %v781 = vunpack.c.l.b16 %v765
      %v782 = vunpack.c.l.b16 %v766
      %v783 = vunpack.c.l.b16 %v767
      %v784 = vpack.c.b16 %v777, %v776
      %v785 = vpack.c.b16 %v779, %v778
      %v786 = vpack.c.b16 %v781, %v780
      %v787 = vpack.c.b16 %v783, %v782
      %792 = vmatprep.subr.bf16.mxu0 0
      %793 = vmatpush1.bf16.msra.mxu0 %v784
      %794 = vmatprep.subr.bf16.mxu0 0
      %795 = vmatpush1.bf16.msra.mxu0 %v785
      %796 = vmatprep.subr.bf16.mxu0 0
      %797 = vmatpush1.bf16.msra.mxu0 %v786
      %798 = vmatprep.subr.bf16.mxu0 0
      %799 = vmatpush1.bf16.msra.mxu0 %v787
      %800 = vmatprep.subr.bf16.mxu0 0
      %801 = vmatpush1.bf16.msra.mxu0 0
      %802 = vmatprep.subr.bf16.mxu0 0
      %803 = vmatpush1.bf16.msra.mxu0 0
      %804 = vmatprep.subr.bf16.mxu0 0
      %805 = vmatpush1.bf16.msra.mxu0 0
      %806 = vmatprep.subr.bf16.mxu0 0
      %807 = vmatpush1.bf16.msra.mxu0 0
      %808 = vmatprep.subr.bf16.mxu0 0
      %809 = vmatpush1.bf16.msra.mxu0 0
      %810 = vmatprep.subr.bf16.mxu0 0
      %811 = vmatpush1.bf16.msra.mxu0 0
      %812 = vmatprep.subr.bf16.mxu0 0
      %813 = vmatpush1.bf16.msra.mxu0 0
      %814 = vmatprep.subr.bf16.mxu0 0
      %815 = vmatpush1.bf16.msra.mxu0 0
      %816 = vmatprep.subr.bf16.mxu0 0
      %817 = vmatpush1.bf16.msra.mxu0 0
      %818 = vmatprep.subr.bf16.mxu0 0
      %819 = vmatpush1.bf16.msra.mxu0 0
      %820 = vmatprep.subr.bf16.mxu0 0
      %821 = vmatpush1.bf16.msra.mxu0 0
      %822 = vmatprep.subr.bf16.mxu0 0
      %823 = vmatpush1.bf16.msra.mxu0 0
      %824 = vmatprep.mubr.bf16.mxu0 0
      %825 = vmatmul.mubr.bf16.gmra.mrb[0].mxu0 %v329
      %v826 = vpop.f32.mrb[0].mxu0
      %v827 = vadd.f32 0.0, %v826
      %v828 = vpop.f32.mrb[0].mxu0
      %v829 = vpop.f32.mrb[0].mxu0
      %v830 = vadd.f32 0.0, %v829
      %v831 = vpop.f32.mrb[0].mxu0
      %832 = vmatprep.mubr.bf16.mxu0 0
      %833 = vmatmul.mubr.bf16.gmra.mrb[0].mxu0 %v332
      %v834 = vpop.f32.mrb[0].mxu0
      %v835 = vadd.f32 0.0, %v834
      %v836 = vpop.f32.mrb[0].mxu0
      %v837 = vpop.f32.mrb[0].mxu0
      %v838 = vpop.f32.mrb[0].mxu0
      %839 = vdwg.mxu0
      %vm843 = vcmask 1042432
      %v844 = vrot.slane %v827, 5
      %v845 = vrot.slane %v830, 5
      %v846 = vsel %vm843, %v844, %v845
      %v847 = vrot.slane %v835, 5
      %v848 = vsel %vm843, %v845, %v847
      %v851 = vadd.f32 %v757, %v846
      %v852 = vadd.f32 %v758, %v848
      %s853 = scalar_lea.vmem %s2, 192
      %v854 = vld [vmem:[%s853] sm:$0xf]
      %v855 = vld [vmem:[%s853 + $0x4] sm:$0xf]
      %v856 = vld [vmem:[%s853 + $0x8] sm:$0xf]
      %v857 = vld [vmem:[%s853 + $0xc] sm:$0xf]
      %v858 = vld [vmem:[%s853 + $0x10] sm:$0xf]
      %v859 = vld [vmem:[%s853 + $0x14] sm:$0xf]
      %v860 = vld [vmem:[%s853 + $0x18] sm:$0xf]
      %v861 = vld [vmem:[%s853 + $0x1c] sm:$0xf]
      %v870 = vunpack.c.l.b16 %v854
      %v871 = vunpack.c.l.b16 %v855
      %v872 = vunpack.c.l.b16 %v856
      %v873 = vunpack.c.l.b16 %v857
      %v874 = vunpack.c.l.b16 %v858
      %v875 = vunpack.c.l.b16 %v859
      %v876 = vunpack.c.l.b16 %v860
      %v877 = vunpack.c.l.b16 %v861
      %v878 = vpack.c.b16 %v871, %v870
      %v879 = vpack.c.b16 %v873, %v872
      %v880 = vpack.c.b16 %v875, %v874
      %v881 = vpack.c.b16 %v877, %v876
      %886 = vmatprep.subr.bf16.mxu0 0
      %887 = vmatpush1.bf16.msra.mxu0 %v878
      %888 = vmatprep.subr.bf16.mxu0 0
      %889 = vmatpush1.bf16.msra.mxu0 %v879
      %890 = vmatprep.subr.bf16.mxu0 0
      %891 = vmatpush1.bf16.msra.mxu0 %v880
      %892 = vmatprep.subr.bf16.mxu0 0
      %893 = vmatpush1.bf16.msra.mxu0 %v881
      %894 = vmatprep.subr.bf16.mxu0 0
      %895 = vmatpush1.bf16.msra.mxu0 0
      %896 = vmatprep.subr.bf16.mxu0 0
      %897 = vmatpush1.bf16.msra.mxu0 0
      %898 = vmatprep.subr.bf16.mxu0 0
      %899 = vmatpush1.bf16.msra.mxu0 0
      %900 = vmatprep.subr.bf16.mxu0 0
      %901 = vmatpush1.bf16.msra.mxu0 0
      %902 = vmatprep.subr.bf16.mxu0 0
      %903 = vmatpush1.bf16.msra.mxu0 0
      %904 = vmatprep.subr.bf16.mxu0 0
      %905 = vmatpush1.bf16.msra.mxu0 0
      %906 = vmatprep.subr.bf16.mxu0 0
      %907 = vmatpush1.bf16.msra.mxu0 0
      %908 = vmatprep.subr.bf16.mxu0 0
      %909 = vmatpush1.bf16.msra.mxu0 0
      %910 = vmatprep.subr.bf16.mxu0 0
      %911 = vmatpush1.bf16.msra.mxu0 0
      %912 = vmatprep.subr.bf16.mxu0 0
      %913 = vmatpush1.bf16.msra.mxu0 0
      %914 = vmatprep.subr.bf16.mxu0 0
      %915 = vmatpush1.bf16.msra.mxu0 0
      %916 = vmatprep.subr.bf16.mxu0 0
      %917 = vmatpush1.bf16.msra.mxu0 0
      %918 = vmatprep.mubr.bf16.mxu0 0
      %919 = vmatmul.mubr.bf16.gmra.mrb[0].mxu0 %v329
      %v920 = vpop.f32.mrb[0].mxu0
      %v921 = vadd.f32 0.0, %v920
      %v922 = vpop.f32.mrb[0].mxu0
      %v923 = vpop.f32.mrb[0].mxu0
      %v924 = vadd.f32 0.0, %v923
      %v925 = vpop.f32.mrb[0].mxu0
      %926 = vmatprep.mubr.bf16.mxu0 0
      %927 = vmatmul.mubr.bf16.gmra.mrb[0].mxu0 %v332
      %v928 = vpop.f32.mrb[0].mxu0
      %v929 = vadd.f32 0.0, %v928
      %v930 = vpop.f32.mrb[0].mxu0
      %v931 = vpop.f32.mrb[0].mxu0
      %v932 = vpop.f32.mrb[0].mxu0
      %933 = vdwg.mxu0
      %vm937 = vcmask 1041408
      %v938 = vrot.slane %v921, 6
      %v939 = vrot.slane %v924, 6
      %v940 = vsel %vm937, %v938, %v939
      %v941 = vrot.slane %v929, 6
      %v942 = vsel %vm937, %v939, %v941
      %v945 = vadd.f32 %v851, %v940
      %v946 = vadd.f32 %v852, %v942
      %v947 = vld [vmem:[%s3] sm:$0x1]
      %v949 = vlaneseq
      %v950 = vshrl.u32 %v949, 7
      %v951 = vsub.s32 0, %v950
      %v952 = vrot.slane %v947, %v951
      %v954 = vadd.f32 %v945, %v952
      %v955 = vadd.f32 %v946, %v952
      %v956 = vmax.f32 %v954, 0.0
      %v957 = vmax.f32 %v955, 0.0
      %v958 = vpack.c.bf16 %v957, %v956
      %v960 = vunpack.c.l.b16 %v958
      %v961 = vunpack.c.h.b16 %v958
      %v962 = vpack.c.b16 %v960, %v960
      %v963 = vpack.c.b16 %v961, %v961
      %966 = vst [vmem:[%s278] sm:$0xf] %v962
      %967 = vst [vmem:[%s278 + $0x4] sm:$0xf] %v963
      %s968 = smul.u32 2, %s20
      %p969 = scmp.lt.s32.totalorder %s19, 1
      %s970 = scalar_select %p969, %s19, 1
      %p971 = scmp.lt.s32.totalorder %s968, 1
      %s972 = scalar_select %p971, %s968, 1
      %s973 = smul.addr %s970, 2
      %s974 = sadd.s32 %s972, %s973
      %s975 = smul.addr %s974, 4
      %s976 = scalar_lea.vmem %s4, %s975
      // Predicated region
      $region37: #{cycle_generator_forward.21} parent=35 // pred_check
        %p977 = pneg %p147
      $region38: #{cycle_generator_forward.21} parent=35 // pred_check_branch
        %979 = sbr.rel (%p977) target = $region40
      $region39: #{cycle_generator_forward.21} parent=35 // pred_region
        %s980 = smul.u32 2, %s20
      $region40: #{cycle_generator_forward.21} parent=35 // pred_fallthru
        _
    $region36: #{cycle_generator_forward.21} parent=5 // pred_fallthru
      _
    %p981 = scmp.le.s32.totalorder 2, %s10
    // Predicated region
    $region41: #{cycle_generator_forward.21} parent=5 // pred_check
      %p982 = pneg %p981
    $region42: #{cycle_generator_forward.21} parent=5 // pred_check_branch
      %984 = sbr.rel (%p982) target = $region44
    $region43: #{cycle_generator_forward.21} parent=5 // pred_region
      %s985 = ssub.s32 %s10, 2
      // Predicated region
      $region45: #{cycle_generator_forward.21} parent=43 // pred_check
        %p986 = pneg %p153
      $region46: #{cycle_generator_forward.21} parent=43 // pred_check_branch
        %988 = sbr.rel (%p986) target = $region48
      $region47: #{cycle_generator_forward.21} parent=43 // pred_region
        %s989 = smul.u32 2, %s22
        %p990 = scmp.lt.s32.totalorder %s21, 1
        %s991 = scalar_select %p990, %s21, 1
        %p992 = scmp.lt.s32.totalorder %s989, 1
        %s993 = scalar_select %p992, %s989, 1
        %s994 = smul.addr %s991, 2
        %s995 = sadd.s32 %s993, %s994
        %s996 = smul.addr %s995, 4
        %s997 = scalar_lea.vmem %s4, %s996
      $region48: #{cycle_generator_forward.21} parent=43 // pred_fallthru
        _
    $region44: #{cycle_generator_forward.21} parent=5 // pred_fallthru
      _
  $region6: #{cycle_generator_forward.21} parent=0 // loop_footer
    %s14 = sadd.s32 1, %s10
  $region7: #{cycle_generator_forward.21} parent=0 // loop_footer_branch
    %9 = sbr.rel target = $region3
  $region8: #{cycle_generator_forward.21} parent=0 // loop_exit
    _

// kernel: cycle_generator_forward.23
$region0: #{cycle_generator_forward.23}
  #allocation0 [shape = 'u32[]', space=smem, size = 0x4, offset = 0x4, fixed_abs, tag = 'smem constant byte address 0x4 - core index']
  #allocation1 [shape = 'u32[144,128]{1,0:T(1,128)}', space=vmem, size = 0x12000, scoped, tag = 'internal scratch']
  %s0 = inlined_call_operand.vmem [shape: bf16[2,80,8], index: 0, kind: input, shape index: {}, may-alias: {0,1}]
  %s1 = inlined_call_operand.vmem [shape: bf16[2,80,8], index: 1, kind: input, shape index: {}, may-alias: {0,1}]
  %s2 = inlined_call_operand.vmem [shape: bf16[7,8,4], index: 2, kind: input, shape index: {}]
  %s3 = inlined_call_operand.vmem [shape: f32[1,4], index: 3, kind: input, shape index: {}]
  %s4 = inlined_call_operand.vmem [shape: f32[2,64,4], index: 4, kind: output, shape index: {}]
  %s5 = sld [smem:[#allocation0]]
  $region49: #{cycle_generator_forward.23} parent=0
    _
  %s7 = ssub.s32 1, %s5
  %s8 = scalar_select 0, %s7, %s5
  loop: start=0, step=1, limit=4
  $region2: #{cycle_generator_forward.23} parent=0 // loop_pre_header
    _
  $region3: #{cycle_generator_forward.23} parent=0 // loop_header
    %s10 = sphi 0, %s14
    %p11 = scmp.ge.s32.totalorder %s10, 4
    %s17 = sphi 0, %s29
    %s18 = sphi 0, %s25
    %s19 = sphi 0, %s17
    %s20 = sphi 0, %s18
    %s21 = sphi 0, %s19
    %s22 = sphi 0, %s20
    %s34 = sphi 0, %s36
    %s37 = sphi 0, %s34
    %s38 = sphi 0, %s37
    %s54 = sphi 0, %s38
    %s66 = sphi 0, %s68
    %s69 = sphi 0, %s66
    %s70 = sphi 0, %s69
    %s86 = sphi 0, %s70
    %s90 = sphi 0, %s90
    %s92 = sphi 0, %s90
    %s93 = sphi 0, %s92
    %s107 = sphi 0, %s93
    %s111 = sphi 0, %s111
    %s113 = sphi 0, %s111
    %s114 = sphi 0, %s113
    %s128 = sphi 0, %s114
    %s136 = sphi 0, %s138
    %s139 = sphi 0, %s136
    %s140 = sphi 0, %s139
    %s156 = sphi 0, %s140
  $region4: #{cycle_generator_forward.23} parent=0 // loop_header_branch
    %13 = sbr.rel (%p11) target = $region8
  $region5: #{cycle_generator_forward.23} parent=0 // loop_body
    %s15 = ssub.s32 %s10, 1
    %s16 = ssub.s32 %s10, 2
    %s23 = sadd.s32 1, %s18
    %p24 = scmp.ge.s32.totalorder %s23, 1
    %s25 = scalar_select %p24, 0, %s23
    %s26 = sadd.s32 1, %s17
    %s27 = scalar_select %p24, %s26, %s17
    %p28 = scmp.ge.s32.totalorder %s27, 2
    %s29 = scalar_select %p28, 0, %s27
    %s30 = ssub.s32 %s17, %s29
    %s31 = ssub.s32 %s18, %s25
    %s32 = sor.u32 %s30, %s31
    %p33 = scmp.eq.s32.totalorder %s32, 0
    %s35 = sadd.s32 %s34, 1
    %s36 = scalar_select %p33, %s34, %s35
    %p39 = pneg %p33
    %p40 = scmp.eq.s32.totalorder %s10, 1
    %p41 = por %p39, %p40
    %p42 = scmp.ne.s32.totalorder %s34, %s37
    %p43 = scmp.eq.s32.totalorder %s10, 0
    %p44 = por %p42, %p43
    %p45 = scmp.ne.s32.totalorder %s34, %s37
    %p46 = scmp.eq.s32.totalorder %s15, 1
    %p47 = por %p45, %p46
    %p48 = scmp.ne.s32.totalorder %s37, %s38
    %p49 = scmp.eq.s32.totalorder %s15, 0
    %p50 = por %p48, %p49
    %p51 = scmp.ne.s32.totalorder %s37, %s38
    %p52 = scmp.eq.s32.totalorder %s16, 1
    %p53 = por %p51, %p52
    %p55 = scmp.ne.s32.totalorder %s38, %s54
    %p56 = scmp.eq.s32.totalorder %s16, 0
    %p57 = por %p55, %p56
    %s58 = sadd.s32 %s18, 1
    %s59 = smul.u32 %s58, 4
    %s60 = sadd.s32 %s25, 1
    %s61 = smul.u32 %s60, 4
    %s62 = ssub.s32 %s17, %s29
    %s63 = ssub.s32 %s59, %s61
    %s64 = sor.u32 %s62, %s63
    %p65 = scmp.eq.s32.totalorder %s64, 0
    %s67 = sadd.s32 %s66, 1
    %s68 = scalar_select %p65, %s66, %s67
    %p71 = pneg %p65
    %p72 = scmp.eq.s32.totalorder %s10, 1
    %p73 = por %p71, %p72
    %p74 = scmp.ne.s32.totalorder %s66, %s69
    %p75 = scmp.eq.s32.totalorder %s10, 0
    %p76 = por %p74, %p75
    %p77 = scmp.ne.s32.totalorder %s66, %s69
    %p78 = scmp.eq.s32.totalorder %s15, 1
    %p79 = por %p77, %p78
    %p80 = scmp.ne.s32.totalorder %s69, %s70
    %p81 = scmp.eq.s32.totalorder %s15, 0
    %p82 = por %p80, %p81
    %p83 = scmp.ne.s32.totalorder %s69, %s70
    %p84 = scmp.eq.s32.totalorder %s16, 1
    %p85 = por %p83, %p84
    %p87 = scmp.ne.s32.totalorder %s70, %s86
    %p88 = scmp.eq.s32.totalorder %s16, 0
    %p89 = por %p87, %p88
    %s91 = sadd.s32 %s90, 1
    %p94 = scmp.eq.s32.totalorder %s10, 1
    %p95 = scmp.ne.s32.totalorder %s90, %s92
    %p96 = scmp.eq.s32.totalorder %s10, 0
    %p97 = por %p95, %p96
    %p98 = scmp.ne.s32.totalorder %s90, %s92
    %p99 = scmp.eq.s32.totalorder %s15, 1
    %p100 = por %p98, %p99
    %p101 = scmp.ne.s32.totalorder %s92, %s93
    %p102 = scmp.eq.s32.totalorder %s15, 0
    %p103 = por %p101, %p102
    %p104 = scmp.ne.s32.totalorder %s92, %s93
    %p105 = scmp.eq.s32.totalorder %s16, 1
    %p106 = por %p104, %p105
    %p108 = scmp.ne.s32.totalorder %s93, %s107
    %p109 = scmp.eq.s32.totalorder %s16, 0
    %p110 = por %p108, %p109
    %s112 = sadd.s32 %s111, 1
    %p115 = scmp.eq.s32.totalorder %s10, 1
    %p116 = scmp.ne.s32.totalorder %s111, %s113
    %p117 = scmp.eq.s32.totalorder %s10, 0
    %p118 = por %p116, %p117
    %p119 = scmp.ne.s32.totalorder %s111, %s113
    %p120 = scmp.eq.s32.totalorder %s15, 1
    %p121 = por %p119, %p120
    %p122 = scmp.ne.s32.totalorder %s113, %s114
    %p123 = scmp.eq.s32.totalorder %s15, 0
    %p124 = por %p122, %p123
    %p125 = scmp.ne.s32.totalorder %s113, %s114
    %p126 = scmp.eq.s32.totalorder %s16, 1
    %p127 = por %p125, %p126
    %p129 = scmp.ne.s32.totalorder %s114, %s128
    %p130 = scmp.eq.s32.totalorder %s16, 0
    %p131 = por %p129, %p130
    %s132 = ssub.s32 %s17, %s29
    %s133 = ssub.s32 %s18, %s25
    %s134 = sor.u32 %s132, %s133
    %p135 = scmp.eq.s32.totalorder %s134, 0
    %s137 = sadd.s32 %s136, 1
    %s138 = scalar_select %p135, %s136, %s137
    %p141 = pneg %p135
    %p142 = scmp.eq.s32.totalorder %s10, 1
    %p143 = por %p141, %p142
    %p144 = scmp.ne.s32.totalorder %s136, %s139
    %p145 = scmp.eq.s32.totalorder %s10, 0
    %p146 = por %p144, %p145
    %p147 = scmp.ne.s32.totalorder %s136, %s139
    %p148 = scmp.eq.s32.totalorder %s15, 1
    %p149 = por %p147, %p148
    %p150 = scmp.ne.s32.totalorder %s139, %s140
    %p151 = scmp.eq.s32.totalorder %s15, 0
    %p152 = por %p150, %p151
    %p153 = scmp.ne.s32.totalorder %s139, %s140
    %p154 = scmp.eq.s32.totalorder %s16, 1
    %p155 = por %p153, %p154
    %p157 = scmp.ne.s32.totalorder %s140, %s156
    %p158 = scmp.eq.s32.totalorder %s16, 0
    %p159 = por %p157, %p158
    %p160 = scmp.le.s32.totalorder 1, %s10
    %p161 = scmp.lt.s32.totalorder %s10, 3
    %p162 = pnand %p160, %p161
    %p163 = pneg %p162
    // Predicated region
    $region9: #{cycle_generator_forward.23} parent=5 // pred_check
      _
    $region10: #{cycle_generator_forward.23} parent=5 // pred_check_branch
      %165 = sbr.rel (%p162) target = $region12
    $region11: #{cycle_generator_forward.23} parent=5 // pred_region
      %s166 = ssub.s32 %s10, 1
      // Predicated region
      $region13: #{cycle_generator_forward.23} parent=11 // pred_check
        %p167 = pneg %p103
      $region14: #{cycle_generator_forward.23} parent=11 // pred_check_branch
        %169 = sbr.rel (%p167) target = $region16
      $region15: #{cycle_generator_forward.23} parent=11 // pred_region
        _
      $region16: #{cycle_generator_forward.23} parent=11 // pred_fallthru
        _
      // Predicated region
      $region17: #{cycle_generator_forward.23} parent=11 // pred_check
        %p170 = pneg %p124
      $region18: #{cycle_generator_forward.23} parent=11 // pred_check_branch
        %172 = sbr.rel (%p170) target = $region20
      $region19: #{cycle_generator_forward.23} parent=11 // pred_region
        _
      $region20: #{cycle_generator_forward.23} parent=11 // pred_fallthru
        _
    $region12: #{cycle_generator_forward.23} parent=5 // pred_fallthru
      _
    %p173 = scmp.lt.s32.totalorder %s10, 2
    // Predicated region
    $region21: #{cycle_generator_forward.23} parent=5 // pred_check
      %p174 = pneg %p173
    $region22: #{cycle_generator_forward.23} parent=5 // pred_check_branch
      %176 = sbr.rel (%p174) target = $region24
    $region23: #{cycle_generator_forward.23} parent=5 // pred_region
      // Predicated region
      $region25: #{cycle_generator_forward.23} parent=23 // pred_check
        %p177 = pneg %p44
      $region26: #{cycle_generator_forward.23} parent=23 // pred_check_branch
        %179 = sbr.rel (%p177) target = $region28
      $region27: #{cycle_generator_forward.23} parent=23 // pred_region
        %s180 = smul.u32 8, %s18
        %s181 = ssub.s32 10, %s180
        %p182 = scmp.lt.s32.totalorder %s181, 8
        %s183 = scalar_select %p182, %s181, 8
        %s184 = smul.u32 64, %s183
        %p185 = scmp.lt.s32.totalorder %s17, 1
        %s186 = scalar_select %p185, %s17, 1
        %p187 = scmp.lt.s32.totalorder %s180, 9
        %s188 = scalar_select %p187, %s180, 9
        %s189 = smul.addr %s186, 10
        %s190 = sadd.s32 %s188, %s189
        %s191 = smul.addr %s190, 4
        %s192 = scalar_lea.vmem %s0, %s191
        %s193 = smul.u32 8, %s18
        %s194 = ssub.s32 10, %s193
        %p195 = scmp.lt.s32.totalorder %s194, 8
        %s196 = scalar_select %p195, %s194, 8
        %s197 = smul.u32 64, %s196
      $region28: #{cycle_generator_forward.23} parent=23 // pred_fallthru
        _
      // Predicated region
      $region29: #{cycle_generator_forward.23} parent=23 // pred_check
        %p198 = pneg %p76
      $region30: #{cycle_generator_forward.23} parent=23 // pred_check_branch
        %200 = sbr.rel (%p198) target = $region32
      $region31: #{cycle_generator_forward.23} parent=23 // pred_region
        %s201 = sadd.s32 %s18, 1
        %s202 = smul.u32 %s201, 4
        %s203 = smul.u32 2, %s202
        %p204 = scmp.lt.s32.totalorder %s17, 1
        %s205 = scalar_select %p204, %s17, 1
        %p206 = scmp.lt.s32.totalorder %s203, 9
        %s207 = scalar_select %p206, %s203, 9
        %s208 = smul.addr %s205, 10
        %s209 = sadd.s32 %s207, %s208
        %s210 = smul.addr %s209, 4
        %s211 = scalar_lea.vmem %s1, %s210
        %s212 = sadd.s32 %s18, 1
        %s213 = smul.u32 %s212, 4
        %s214 = smul.u32 2, %s213
      $region32: #{cycle_generator_forward.23} parent=23 // pred_fallthru
        _
    $region24: #{cycle_generator_forward.23} parent=5 // pred_fallthru
      _
    %p215 = scmp.le.s32.totalorder 1, %s10
    %p216 = scmp.lt.s32.totalorder %s10, 3
    %p217 = pnand %p215, %p216
    %p218 = pneg %p217
    // Predicated region
    $region33: #{cycle_generator_forward.23} parent=5 // pred_check
      _
    $region34: #{cycle_generator_forward.23} parent=5 // pred_check_branch
      %220 = sbr.rel (%p217) target = $region36
    $region35: #{cycle_generator_forward.23} parent=5 // pred_region
      %s221 = ssub.s32 %s10, 1
      %s222 = smul.u32 8, %s20
      %s223 = ssub.s32 10, %s222
      %p224 = scmp.lt.s32.totalorder %s223, 8
      %s225 = scalar_select %p224, %s223, 8
      %s226 = smul.u32 64, %s225
      %p227 = scmp.lt.s32.totalorder %s19, 1
      %s228 = scalar_select %p227, %s19, 1
      %p229 = scmp.lt.s32.totalorder %s222, 9
      %s230 = scalar_select %p229, %s222, 9
      %s231 = smul.addr %s228, 10
      %s232 = sadd.s32 %s230, %s231
      %s233 = smul.addr %s232, 4
      %s234 = scalar_lea.vmem %s0, %s233
      %p235 = pneg %p50
      %p236 = pneg %p47
      %s237 = sadd.s32 %s20, 1
      %s238 = smul.u32 %s237, 4
      %s239 = smul.u32 2, %s238
      %p240 = scmp.lt.s32.totalorder %s19, 1
      %s241 = scalar_select %p240, %s19, 1
      %p242 = scmp.lt.s32.totalorder %s239, 9
      %s243 = scalar_select %p242, %s239, 9
      %s244 = smul.addr %s241, 10
      %s245 = sadd.s32 %s243, %s244
      %s246 = smul.addr %s245, 4
      %s247 = scalar_lea.vmem %s1, %s246
      %p248 = pneg %p82
      %p249 = pneg %p79
      %p250 = pneg %p103
      %p251 = pneg %p100
      %p252 = pneg %p124
      %p253 = pneg %p121
      %p254 = pneg %p152
      %p255 = pneg %p149
      %s256 = smul.u32 8, %s20
      %p257 = scmp.lt.s32.totalorder %s19, 1
      %s258 = scalar_select %p257, %s19, 1
      %p259 = scmp.lt.s32.totalorder %s256, 7
      %s260 = scalar_select %p259, %s256, 7
      %s261 = smul.addr %s258, 8
      %s262 = sadd.s32 %s260, %s261
      %s263 = smul.addr %s262, 8
      %s264 = scalar_lea.vmem %s4, %s263
      %s265 = smul.u32 8, %s20
      %s266 = ssub.s32 10, %s265
      %p267 = scmp.lt.s32.totalorder %s266, 8
      %s268 = scalar_select %p267, %s266, 8
      %s269 = smul.u32 64, %s268
      %p270 = scmp.lt.s32.totalorder %s19, 1
      %s271 = scalar_select %p270, %s19, 1
      %p272 = scmp.lt.s32.totalorder %s265, 9
      %s273 = scalar_select %p272, %s265, 9
      %s274 = smul.addr %s271, 10
      %s275 = sadd.s32 %s273, %s274
      %s276 = smul.addr %s275, 4
      %s277 = scalar_lea.vmem %s0, %s276
      %s278 = smul.u32 8, %s20
      %s279 = ssub.s32 10, %s278
      %p280 = scmp.lt.s32.totalorder %s279, 8
      %s281 = scalar_select %p280, %s279, 8
      %s282 = smul.u32 64, %s281
      %s283 = sadd.s32 %s20, 1
      %s284 = smul.u32 %s283, 4
      %s285 = smul.u32 2, %s284
      %p286 = scmp.lt.s32.totalorder %s19, 1
      %s287 = scalar_select %p286, %s19, 1
      %p288 = scmp.lt.s32.totalorder %s285, 9
      %s289 = scalar_select %p288, %s285, 9
      %s290 = smul.addr %s287, 10
      %s291 = sadd.s32 %s289, %s290
      %s292 = smul.addr %s291, 4
      %s293 = scalar_lea.vmem %s1, %s292
      %s294 = sadd.s32 %s20, 1
      %s295 = smul.u32 %s294, 4
      %s296 = smul.u32 2, %s295
      %s297 = smul.u32 8, %s20
      %p298 = scmp.lt.s32.totalorder %s19, 1
      %s299 = scalar_select %p298, %s19, 1
      %p300 = scmp.lt.s32.totalorder %s297, 7
      %s301 = scalar_select %p300, %s297, 7
      %s302 = smul.addr %s299, 8
      %s303 = sadd.s32 %s301, %s302
      %s304 = smul.addr %s303, 8
      %s305 = scalar_lea.vmem %s4, %s304
      %s306 = smul.u32 8, %s20
      %v308 = vld [vmem:[%s277] sm:$0xf]
      %v309 = vld [vmem:[%s277 + $0x4] sm:$0xf]
      %v310 = vld [vmem:[%s277 + $0x8] sm:$0xf]
      %v311 = vld [vmem:[%s277 + $0xc] sm:$0xf]
      %v312 = vld [vmem:[%s277 + $0x10] sm:$0xf]
      %v313 = vld [vmem:[%s277 + $0x14] sm:$0xf]
      %v314 = vld [vmem:[%s277 + $0x18] sm:$0xf]
      %v315 = vld [vmem:[%s277 + $0x1c] sm:$0xf]
      %v316 = vld [vmem:[%s293] sm:$0xf]
      %v317 = vld [vmem:[%s293 + $0x4] sm:$0xf]
      %v326 = vunpack.c.l.b16 %v308
      %v327 = vunpack.c.l.b16 %v309
      %v328 = vunpack.c.l.b16 %v310
      %v329 = vunpack.c.l.b16 %v311
      %v330 = vunpack.c.l.b16 %v312
      %v331 = vunpack.c.l.b16 %v313
      %v332 = vunpack.c.l.b16 %v314
      %v333 = vunpack.c.l.b16 %v315
      %v334 = vpack.c.b16 %v327, %v326
      %v335 = vpack.c.b16 %v329, %v328
      %v336 = vpack.c.b16 %v331, %v330
      %v337 = vpack.c.b16 %v333, %v332
      %v340 = vunpack.c.l.b16 %v316
      %v341 = vunpack.c.l.b16 %v317
      %v342 = vpack.c.b16 %v341, %v340
      %v343 = vld [vmem:[%s2] sm:$0xf]
      %vm344 = vcmask 64512
      %v346 = vsel %vm344, %v334, 0
      %v349 = vsel %vm344, %v335, 0
      %v352 = vsel %vm344, %v336, 0
      %v355 = vsel %vm344, %v337, 0
      %v358 = vsel %vm344, %v342, 0
      %vm360 = vcmask 1043456
      %v362 = vsel %vm360, %v343, 0
      %364 = vmatprep.subr.bf16.mxu0 0
      %365 = vmatpush1.bf16.msra.mxu0 %v362
      %366 = vmatprep.subr.bf16.mxu0 0
      %367 = vmatpush1.bf16.msra.mxu0 0
      %368 = vmatprep.subr.bf16.mxu0 0
      %369 = vmatpush1.bf16.msra.mxu0 0
      %370 = vmatprep.subr.bf16.mxu0 0
      %371 = vmatpush1.bf16.msra.mxu0 0
      %372 = vmatprep.subr.bf16.mxu0 0
      %373 = vmatpush1.bf16.msra.mxu0 0
      %374 = vmatprep.subr.bf16.mxu0 0
      %375 = vmatpush1.bf16.msra.mxu0 0
      %376 = vmatprep.subr.bf16.mxu0 0
      %377 = vmatpush1.bf16.msra.mxu0 0
      %378 = vmatprep.subr.bf16.mxu0 0
      %379 = vmatpush1.bf16.msra.mxu0 0
      %380 = vmatprep.subr.bf16.mxu0 0
      %381 = vmatpush1.bf16.msra.mxu0 0
      %382 = vmatprep.subr.bf16.mxu0 0
      %383 = vmatpush1.bf16.msra.mxu0 0
      %384 = vmatprep.subr.bf16.mxu0 0
      %385 = vmatpush1.bf16.msra.mxu0 0
      %386 = vmatprep.subr.bf16.mxu0 0
      %387 = vmatpush1.bf16.msra.mxu0 0
      %388 = vmatprep.subr.bf16.mxu0 0
      %389 = vmatpush1.bf16.msra.mxu0 0
      %390 = vmatprep.subr.bf16.mxu0 0
      %391 = vmatpush1.bf16.msra.mxu0 0
      %392 = vmatprep.subr.bf16.mxu0 0
      %393 = vmatpush1.bf16.msra.mxu0 0
      %394 = vmatprep.subr.bf16.mxu0 0
      %395 = vmatpush1.bf16.msra.mxu0 0
      %396 = vmatprep.mubr.bf16.mxu0 0
      %397 = vmatmul.mubr.bf16.gmra.mrb[0].mxu0 %v346
      %v398 = vpop.f32.mrb[0].mxu0
      %v399 = vadd.f32 0.0, %v398
      %v400 = vpop.f32.mrb[0].mxu0
      %v401 = vpop.f32.mrb[0].mxu0
      %v402 = vadd.f32 0.0, %v401
      %v403 = vpop.f32.mrb[0].mxu0
      %404 = vmatprep.mubr.bf16.mxu0 0
      %405 = vmatmul.mubr.bf16.gmra.mrb[0].mxu0 %v349
      %v406 = vpop.f32.mrb[0].mxu0
      %v407 = vadd.f32 0.0, %v406
      %v408 = vpop.f32.mrb[0].mxu0
      %v409 = vpop.f32.mrb[0].mxu0
      %v410 = vadd.f32 0.0, %v409
      %v411 = vpop.f32.mrb[0].mxu0
      %412 = vmatprep.mubr.bf16.mxu0 0
      %413 = vmatmul.mubr.bf16.gmra.mrb[0].mxu0 %v352
      %v414 = vpop.f32.mrb[0].mxu0
      %v415 = vadd.f32 0.0, %v414
      %v416 = vpop.f32.mrb[0].mxu0
      %v417 = vpop.f32.mrb[0].mxu0
      %v418 = vadd.f32 0.0, %v417
      %v419 = vpop.f32.mrb[0].mxu0
      %420 = vmatprep.mubr.bf16.mxu0 0
      %421 = vmatmul.mubr.bf16.gmra.mrb[0].mxu0 %v355
      %v422 = vpop.f32.mrb[0].mxu0
      %v423 = vadd.f32 0.0, %v422
      %v424 = vpop.f32.mrb[0].mxu0
      %v425 = vpop.f32.mrb[0].mxu0
      %v426 = vadd.f32 0.0, %v425
      %v427 = vpop.f32.mrb[0].mxu0
      %428 = vmatprep.mubr.bf16.mxu0 0
      %429 = vmatmul.mubr.bf16.gmra.mrb[0].mxu0 %v358
      %v430 = vpop.f32.mrb[0].mxu0
      %v431 = vpop.f32.mrb[0].mxu0
      %v432 = vpop.f32.mrb[0].mxu0
      %v433 = vpop.f32.mrb[0].mxu0
      %434 = vdwg.mxu0
      %v435 = vadd.f32 %v399, 0.0
      %v436 = vadd.f32 %v402, 0.0
      %v437 = vadd.f32 %v407, 0.0
      %v438 = vadd.f32 %v410, 0.0
      %v439 = vadd.f32 %v415, 0.0
      %v440 = vadd.f32 %v418, 0.0
      %v441 = vadd.f32 %v423, 0.0
      %v442 = vadd.f32 %v426, 0.0
      %s443 = scalar_lea.vmem %s2, 4
      %v444 = vld [vmem:[%s443] sm:$0xf]
      %v446 = vsel %vm360, %v444, 0
      %448 = vmatprep.subr.bf16.mxu0 0
      %449 = vmatpush1.bf16.msra.mxu0 %v446
      %450 = vmatprep.subr.bf16.mxu0 0
      %451 = vmatpush1.bf16.msra.mxu0 0
      %452 = vmatprep.subr.bf16.mxu0 0
      %453 = vmatpush1.bf16.msra.mxu0 0
      %454 = vmatprep.subr.bf16.mxu0 0
      %455 = vmatpush1.bf16.msra.mxu0 0
      %456 = vmatprep.subr.bf16.mxu0 0
      %457 = vmatpush1.bf16.msra.mxu0 0
      %458 = vmatprep.subr.bf16.mxu0 0
      %459 = vmatpush1.bf16.msra.mxu0 0
      %460 = vmatprep.subr.bf16.mxu0 0
      %461 = vmatpush1.bf16.msra.mxu0 0
      %462 = vmatprep.subr.bf16.mxu0 0
      %463 = vmatpush1.bf16.msra.mxu0 0
      %464 = vmatprep.subr.bf16.mxu0 0
      %465 = vmatpush1.bf16.msra.mxu0 0
      %466 = vmatprep.subr.bf16.mxu0 0
      %467 = vmatpush1.bf16.msra.mxu0 0
      %468 = vmatprep.subr.bf16.mxu0 0
      %469 = vmatpush1.bf16.msra.mxu0 0
      %470 = vmatprep.subr.bf16.mxu0 0
      %471 = vmatpush1.bf16.msra.mxu0 0
      %472 = vmatprep.subr.bf16.mxu0 0
      %473 = vmatpush1.bf16.msra.mxu0 0
      %474 = vmatprep.subr.bf16.mxu0 0
      %475 = vmatpush1.bf16.msra.mxu0 0
      %476 = vmatprep.subr.bf16.mxu0 0
      %477 = vmatpush1.bf16.msra.mxu0 0
      %478 = vmatprep.subr.bf16.mxu0 0
      %479 = vmatpush1.bf16.msra.mxu0 0
      %480 = vmatprep.mubr.bf16.mxu0 0
      %481 = vmatmul.mubr.bf16.gmra.mrb[0].mxu0 %v346
      %v482 = vpop.f32.mrb[0].mxu0
      %v483 = vadd.f32 0.0, %v482
      %v484 = vpop.f32.mrb[0].mxu0
      %v485 = vpop.f32.mrb[0].mxu0
      %v486 = vadd.f32 0.0, %v485
      %v487 = vpop.f32.mrb[0].mxu0
      %488 = vmatprep.mubr.bf16.mxu0 0
      %489 = vmatmul.mubr.bf16.gmra.mrb[0].mxu0 %v349
      %v490 = vpop.f32.mrb[0].mxu0
      %v491 = vadd.f32 0.0, %v490
      %v492 = vpop.f32.mrb[0].mxu0
      %v493 = vpop.f32.mrb[0].mxu0
      %v494 = vadd.f32 0.0, %v493
      %v495 = vpop.f32.mrb[0].mxu0
      %496 = vmatprep.mubr.bf16.mxu0 0
      %497 = vmatmul.mubr.bf16.gmra.mrb[0].mxu0 %v352
      %v498 = vpop.f32.mrb[0].mxu0
      %v499 = vadd.f32 0.0, %v498
      %v500 = vpop.f32.mrb[0].mxu0
      %v501 = vpop.f32.mrb[0].mxu0
      %v502 = vadd.f32 0.0, %v501
      %v503 = vpop.f32.mrb[0].mxu0
      %504 = vmatprep.mubr.bf16.mxu0 0
      %505 = vmatmul.mubr.bf16.gmra.mrb[0].mxu0 %v355
      %v506 = vpop.f32.mrb[0].mxu0
      %v507 = vadd.f32 0.0, %v506
      %v508 = vpop.f32.mrb[0].mxu0
      %v509 = vpop.f32.mrb[0].mxu0
      %v510 = vadd.f32 0.0, %v509
      %v511 = vpop.f32.mrb[0].mxu0
      %512 = vmatprep.mubr.bf16.mxu0 0
      %513 = vmatmul.mubr.bf16.gmra.mrb[0].mxu0 %v358
      %v514 = vpop.f32.mrb[0].mxu0
      %v515 = vadd.f32 0.0, %v514
      %v516 = vpop.f32.mrb[0].mxu0
      %v517 = vpop.f32.mrb[0].mxu0
      %v518 = vpop.f32.mrb[0].mxu0
      %519 = vdwg.mxu0
      %vm529 = vcmask 1046528
      %v530 = vrot.slane %v483, 1
      %v531 = vrot.slane %v486, 1
      %v532 = vsel %vm529, %v530, %v531
      %v533 = vrot.slane %v491, 1
      %v534 = vsel %vm529, %v531, %v533
      %v535 = vrot.slane %v494, 1
      %v536 = vsel %vm529, %v533, %v535
      %v537 = vrot.slane %v499, 1
      %v538 = vsel %vm529, %v535, %v537
      %v539 = vrot.slane %v502, 1
      %v540 = vsel %vm529, %v537, %v539
      %v541 = vrot.slane %v507, 1
      %v542 = vsel %vm529, %v539, %v541
      %v543 = vrot.slane %v510, 1
      %v544 = vsel %vm529, %v541, %v543
      %v545 = vrot.slane %v515, 1
      %v546 = vsel %vm529, %v543, %v545
      %v555 = vadd.f32 %v435, %v532
      %v556 = vadd.f32 %v436, %v534
      %v557 = vadd.f32 %v437, %v536
      %v558 = vadd.f32 %v438, %v538
      %v559 = vadd.f32 %v439, %v540
      %v560 = vadd.f32 %v440, %v542
      %v561 = vadd.f32 %v441, %v544
      %v562 = vadd.f32 %v442, %v546
      %s563 = scalar_lea.vmem %s2, 8
      %v564 = vld [vmem:[%s563] sm:$0xf]
      %v566 = vsel %vm360, %v564, 0
      %568 = vmatprep.subr.bf16.mxu0 0
      %569 = vmatpush1.bf16.msra.mxu0 %v566
      %570 = vmatprep.subr.bf16.mxu0 0
      %571 = vmatpush1.bf16.msra.mxu0 0
      %572 = vmatprep.subr.bf16.mxu0 0
      %573 = vmatpush1.bf16.msra.mxu0 0
      %574 = vmatprep.subr.bf16.mxu0 0
      %575 = vmatpush1.bf16.msra.mxu0 0
      %576 = vmatprep.subr.bf16.mxu0 0
      %577 = vmatpush1.bf16.msra.mxu0 0
      %578 = vmatprep.subr.bf16.mxu0 0
      %579 = vmatpush1.bf16.msra.mxu0 0
      %580 = vmatprep.subr.bf16.mxu0 0
      %581 = vmatpush1.bf16.msra.mxu0 0
      %582 = vmatprep.subr.bf16.mxu0 0
      %583 = vmatpush1.bf16.msra.mxu0 0
      %584 = vmatprep.subr.bf16.mxu0 0
      %585 = vmatpush1.bf16.msra.mxu0 0
      %586 = vmatprep.subr.bf16.mxu0 0
      %587 = vmatpush1.bf16.msra.mxu0 0
      %588 = vmatprep.subr.bf16.mxu0 0
      %589 = vmatpush1.bf16.msra.mxu0 0
      %590 = vmatprep.subr.bf16.mxu0 0
      %591 = vmatpush1.bf16.msra.mxu0 0
      %592 = vmatprep.subr.bf16.mxu0 0
      %593 = vmatpush1.bf16.msra.mxu0 0
      %594 = vmatprep.subr.bf16.mxu0 0
      %595 = vmatpush1.bf16.msra.mxu0 0
      %596 = vmatprep.subr.bf16.mxu0 0
      %597 = vmatpush1.bf16.msra.mxu0 0
      %598 = vmatprep.subr.bf16.mxu0 0
      %599 = vmatpush1.bf16.msra.mxu0 0
      %600 = vmatprep.mubr.bf16.mxu0 0
      %601 = vmatmul.mubr.bf16.gmra.mrb[0].mxu0 %v346
      %v602 = vpop.f32.mrb[0].mxu0
      %v603 = vadd.f32 0.0, %v602
      %v604 = vpop.f32.mrb[0].mxu0
      %v605 = vpop.f32.mrb[0].mxu0
      %v606 = vadd.f32 0.0, %v605
      %v607 = vpop.f32.mrb[0].mxu0
      %608 = vmatprep.mubr.bf16.mxu0 0
      %609 = vmatmul.mubr.bf16.gmra.mrb[0].mxu0 %v349
      %v610 = vpop.f32.mrb[0].mxu0
      %v611 = vadd.f32 0.0, %v610
      %v612 = vpop.f32.mrb[0].mxu0
      %v613 = vpop.f32.mrb[0].mxu0
      %v614 = vadd.f32 0.0, %v613
      %v615 = vpop.f32.mrb[0].mxu0
      %616 = vmatprep.mubr.bf16.mxu0 0
      %617 = vmatmul.mubr.bf16.gmra.mrb[0].mxu0 %v352
      %v618 = vpop.f32.mrb[0].mxu0
      %v619 = vadd.f32 0.0, %v618
      %v620 = vpop.f32.mrb[0].mxu0
      %v621 = vpop.f32.mrb[0].mxu0
      %v622 = vadd.f32 0.0, %v621
      %v623 = vpop.f32.mrb[0].mxu0
      %624 = vmatprep.mubr.bf16.mxu0 0
      %625 = vmatmul.mubr.bf16.gmra.mrb[0].mxu0 %v355
      %v626 = vpop.f32.mrb[0].mxu0
      %v627 = vadd.f32 0.0, %v626
      %v628 = vpop.f32.mrb[0].mxu0
      %v629 = vpop.f32.mrb[0].mxu0
      %v630 = vadd.f32 0.0, %v629
      %v631 = vpop.f32.mrb[0].mxu0
      %632 = vmatprep.mubr.bf16.mxu0 0
      %633 = vmatmul.mubr.bf16.gmra.mrb[0].mxu0 %v358
      %v634 = vpop.f32.mrb[0].mxu0
      %v635 = vadd.f32 0.0, %v634
      %v636 = vpop.f32.mrb[0].mxu0
      %v637 = vpop.f32.mrb[0].mxu0
      %v638 = vpop.f32.mrb[0].mxu0
      %639 = vdwg.mxu0
      %vm649 = vcmask 1045504
      %v650 = vrot.slane %v603, 2
      %v651 = vrot.slane %v606, 2
      %v652 = vsel %vm649, %v650, %v651
      %v653 = vrot.slane %v611, 2
      %v654 = vsel %vm649, %v651, %v653
      %v655 = vrot.slane %v614, 2
      %v656 = vsel %vm649, %v653, %v655
      %v657 = vrot.slane %v619, 2
      %v658 = vsel %vm649, %v655, %v657
      %v659 = vrot.slane %v622, 2
      %v660 = vsel %vm649, %v657, %v659
      %v661 = vrot.slane %v627, 2
      %v662 = vsel %vm649, %v659, %v661
      %v663 = vrot.slane %v630, 2
      %v664 = vsel %vm649, %v661, %v663
      %v665 = vrot.slane %v635, 2
      %v666 = vsel %vm649, %v663, %v665
      %v675 = vadd.f32 %v555, %v652
      %v676 = vadd.f32 %v556, %v654
      %v677 = vadd.f32 %v557, %v656
      %v678 = vadd.f32 %v558, %v658
      %v679 = vadd.f32 %v559, %v660
      %v680 = vadd.f32 %v560, %v662
      %v681 = vadd.f32 %v561, %v664
      %v682 = vadd.f32 %v562, %v666
      %s683 = scalar_lea.vmem %s2, 12
      %v684 = vld [vmem:[%s683] sm:$0xf]
      %v686 = vsel %vm360, %v684, 0
      %688 = vmatprep.subr.bf16.mxu0 0
      %689 = vmatpush1.bf16.msra.mxu0 %v686
      %690 = vmatprep.subr.bf16.mxu0 0
      %691 = vmatpush1.bf16.msra.mxu0 0
      %692 = vmatprep.subr.bf16.mxu0 0
      %693 = vmatpush1.bf16.msra.mxu0 0
      %694 = vmatprep.subr.bf16.mxu0 0
      %695 = vmatpush1.bf16.msra.mxu0 0
      %696 = vmatprep.subr.bf16.mxu0 0
      %697 = vmatpush1.bf16.msra.mxu0 0
      %698 = vmatprep.subr.bf16.mxu0 0
      %699 = vmatpush1.bf16.msra.mxu0 0
      %700 = vmatprep.subr.bf16.mxu0 0
      %701 = vmatpush1.bf16.msra.mxu0 0
      %702 = vmatprep.subr.bf16.mxu0 0
      %703 = vmatpush1.bf16.msra.mxu0 0
      %704 = vmatprep.subr.bf16.mxu0 0
      %705 = vmatpush1.bf16.msra.mxu0 0
      %706 = vmatprep.subr.bf16.mxu0 0
      %707 = vmatpush1.bf16.msra.mxu0 0
      %708 = vmatprep.subr.bf16.mxu0 0
      %709 = vmatpush1.bf16.msra.mxu0 0
      %710 = vmatprep.subr.bf16.mxu0 0
      %711 = vmatpush1.bf16.msra.mxu0 0
      %712 = vmatprep.subr.bf16.mxu0 0
      %713 = vmatpush1.bf16.msra.mxu0 0
      %714 = vmatprep.subr.bf16.mxu0 0
      %715 = vmatpush1.bf16.msra.mxu0 0
      %716 = vmatprep.subr.bf16.mxu0 0
      %717 = vmatpush1.bf16.msra.mxu0 0
      %718 = vmatprep.subr.bf16.mxu0 0
      %719 = vmatpush1.bf16.msra.mxu0 0
      %720 = vmatprep.mubr.bf16.mxu0 0
      %721 = vmatmul.mubr.bf16.gmra.mrb[0].mxu0 %v346
      %v722 = vpop.f32.mrb[0].mxu0
      %v723 = vadd.f32 0.0, %v722
      %v724 = vpop.f32.mrb[0].mxu0
      %v725 = vpop.f32.mrb[0].mxu0
      %v726 = vadd.f32 0.0, %v725
      %v727 = vpop.f32.mrb[0].mxu0
      %728 = vmatprep.mubr.bf16.mxu0 0
      %729 = vmatmul.mubr.bf16.gmra.mrb[0].mxu0 %v349
      %v730 = vpop.f32.mrb[0].mxu0
      %v731 = vadd.f32 0.0, %v730
      %v732 = vpop.f32.mrb[0].mxu0
      %v733 = vpop.f32.mrb[0].mxu0
      %v734 = vadd.f32 0.0, %v733
      %v735 = vpop.f32.mrb[0].mxu0
      %736 = vmatprep.mubr.bf16.mxu0 0
      %737 = vmatmul.mubr.bf16.gmra.mrb[0].mxu0 %v352
      %v738 = vpop.f32.mrb[0].mxu0
      %v739 = vadd.f32 0.0, %v738
      %v740 = vpop.f32.mrb[0].mxu0
      %v741 = vpop.f32.mrb[0].mxu0
      %v742 = vadd.f32 0.0, %v741
      %v743 = vpop.f32.mrb[0].mxu0
      %744 = vmatprep.mubr.bf16.mxu0 0
      %745 = vmatmul.mubr.bf16.gmra.mrb[0].mxu0 %v355
      %v746 = vpop.f32.mrb[0].mxu0
      %v747 = vadd.f32 0.0, %v746
      %v748 = vpop.f32.mrb[0].mxu0
      %v749 = vpop.f32.mrb[0].mxu0
      %v750 = vadd.f32 0.0, %v749
      %v751 = vpop.f32.mrb[0].mxu0
      %752 = vmatprep.mubr.bf16.mxu0 0
      %753 = vmatmul.mubr.bf16.gmra.mrb[0].mxu0 %v358
      %v754 = vpop.f32.mrb[0].mxu0
      %v755 = vadd.f32 0.0, %v754
      %v756 = vpop.f32.mrb[0].mxu0
      %v757 = vpop.f32.mrb[0].mxu0
      %v758 = vpop.f32.mrb[0].mxu0
      %759 = vdwg.mxu0
      %vm769 = vcmask 1044480
      %v770 = vrot.slane %v723, 3
      %v771 = vrot.slane %v726, 3
      %v772 = vsel %vm769, %v770, %v771
      %v773 = vrot.slane %v731, 3
      %v774 = vsel %vm769, %v771, %v773
      %v775 = vrot.slane %v734, 3
      %v776 = vsel %vm769, %v773, %v775
      %v777 = vrot.slane %v739, 3
      %v778 = vsel %vm769, %v775, %v777
      %v779 = vrot.slane %v742, 3
      %v780 = vsel %vm769, %v777, %v779
      %v781 = vrot.slane %v747, 3
      %v782 = vsel %vm769, %v779, %v781
      %v783 = vrot.slane %v750, 3
      %v784 = vsel %vm769, %v781, %v783
      %v785 = vrot.slane %v755, 3
      %v786 = vsel %vm769, %v783, %v785
      %v795 = vadd.f32 %v675, %v772
      %v796 = vadd.f32 %v676, %v774
      %v797 = vadd.f32 %v677, %v776
      %v798 = vadd.f32 %v678, %v778
      %v799 = vadd.f32 %v679, %v780
      %v800 = vadd.f32 %v680, %v782
      %v801 = vadd.f32 %v681, %v784
      %v802 = vadd.f32 %v682, %v786
      %s803 = scalar_lea.vmem %s2, 16
      %v804 = vld [vmem:[%s803] sm:$0xf]
      %v806 = vsel %vm360, %v804, 0
      %808 = vmatprep.subr.bf16.mxu0 0
      %809 = vmatpush1.bf16.msra.mxu0 %v806
      %810 = vmatprep.subr.bf16.mxu0 0
      %811 = vmatpush1.bf16.msra.mxu0 0
      %812 = vmatprep.subr.bf16.mxu0 0
      %813 = vmatpush1.bf16.msra.mxu0 0
      %814 = vmatprep.subr.bf16.mxu0 0
      %815 = vmatpush1.bf16.msra.mxu0 0
      %816 = vmatprep.subr.bf16.mxu0 0
      %817 = vmatpush1.bf16.msra.mxu0 0
      %818 = vmatprep.subr.bf16.mxu0 0
      %819 = vmatpush1.bf16.msra.mxu0 0
      %820 = vmatprep.subr.bf16.mxu0 0
      %821 = vmatpush1.bf16.msra.mxu0 0
      %822 = vmatprep.subr.bf16.mxu0 0
      %823 = vmatpush1.bf16.msra.mxu0 0
      %824 = vmatprep.subr.bf16.mxu0 0
      %825 = vmatpush1.bf16.msra.mxu0 0
      %826 = vmatprep.subr.bf16.mxu0 0
      %827 = vmatpush1.bf16.msra.mxu0 0
      %828 = vmatprep.subr.bf16.mxu0 0
      %829 = vmatpush1.bf16.msra.mxu0 0
      %830 = vmatprep.subr.bf16.mxu0 0
      %831 = vmatpush1.bf16.msra.mxu0 0
      %832 = vmatprep.subr.bf16.mxu0 0
      %833 = vmatpush1.bf16.msra.mxu0 0
      %834 = vmatprep.subr.bf16.mxu0 0
      %835 = vmatpush1.bf16.msra.mxu0 0
      %836 = vmatprep.subr.bf16.mxu0 0
      %837 = vmatpush1.bf16.msra.mxu0 0
      %838 = vmatprep.subr.bf16.mxu0 0
      %839 = vmatpush1.bf16.msra.mxu0 0
      %840 = vmatprep.mubr.bf16.mxu0 0
      %841 = vmatmul.mubr.bf16.gmra.mrb[0].mxu0 %v346
      %v842 = vpop.f32.mrb[0].mxu0
      %v843 = vadd.f32 0.0, %v842
      %v844 = vpop.f32.mrb[0].mxu0
      %v845 = vpop.f32.mrb[0].mxu0
      %v846 = vadd.f32 0.0, %v845
      %v847 = vpop.f32.mrb[0].mxu0
      %848 = vmatprep.mubr.bf16.mxu0 0
      %849 = vmatmul.mubr.bf16.gmra.mrb[0].mxu0 %v349
      %v850 = vpop.f32.mrb[0].mxu0
      %v851 = vadd.f32 0.0, %v850
      %v852 = vpop.f32.mrb[0].mxu0
      %v853 = vpop.f32.mrb[0].mxu0
      %v854 = vadd.f32 0.0, %v853
      %v855 = vpop.f32.mrb[0].mxu0
      %856 = vmatprep.mubr.bf16.mxu0 0
      %857 = vmatmul.mubr.bf16.gmra.mrb[0].mxu0 %v352
      %v858 = vpop.f32.mrb[0].mxu0
      %v859 = vadd.f32 0.0, %v858
      %v860 = vpop.f32.mrb[0].mxu0
      %v861 = vpop.f32.mrb[0].mxu0
      %v862 = vadd.f32 0.0, %v861
      %v863 = vpop.f32.mrb[0].mxu0
      %864 = vmatprep.mubr.bf16.mxu0 0
      %865 = vmatmul.mubr.bf16.gmra.mrb[0].mxu0 %v355
      %v866 = vpop.f32.mrb[0].mxu0
      %v867 = vadd.f32 0.0, %v866
      %v868 = vpop.f32.mrb[0].mxu0
      %v869 = vpop.f32.mrb[0].mxu0
      %v870 = vadd.f32 0.0, %v869
      %v871 = vpop.f32.mrb[0].mxu0
      %872 = vmatprep.mubr.bf16.mxu0 0
      %873 = vmatmul.mubr.bf16.gmra.mrb[0].mxu0 %v358
      %v874 = vpop.f32.mrb[0].mxu0
      %v875 = vadd.f32 0.0, %v874
      %v876 = vpop.f32.mrb[0].mxu0
      %v877 = vpop.f32.mrb[0].mxu0
      %v878 = vpop.f32.mrb[0].mxu0
      %879 = vdwg.mxu0
      %v889 = vrot.slane %v843, 4
      %v890 = vrot.slane %v846, 4
      %v891 = vsel %vm360, %v889, %v890
      %v892 = vrot.slane %v851, 4
      %v893 = vsel %vm360, %v890, %v892
      %v894 = vrot.slane %v854, 4
      %v895 = vsel %vm360, %v892, %v894
      %v896 = vrot.slane %v859, 4
      %v897 = vsel %vm360, %v894, %v896
      %v898 = vrot.slane %v862, 4
      %v899 = vsel %vm360, %v896, %v898
      %v900 = vrot.slane %v867, 4
      %v901 = vsel %vm360, %v898, %v900
      %v902 = vrot.slane %v870, 4
      %v903 = vsel %vm360, %v900, %v902
      %v904 = vrot.slane %v875, 4
      %v905 = vsel %vm360, %v902, %v904
      %v914 = vadd.f32 %v795, %v891
      %v915 = vadd.f32 %v796, %v893
      %v916 = vadd.f32 %v797, %v895
      %v917 = vadd.f32 %v798, %v897
      %v918 = vadd.f32 %v799, %v899
      %v919 = vadd.f32 %v800, %v901
      %v920 = vadd.f32 %v801, %v903
      %v921 = vadd.f32 %v802, %v905
      %s922 = scalar_lea.vmem %s2, 20
      %v923 = vld [vmem:[%s922] sm:$0xf]
      %v925 = vsel %vm360, %v923, 0
      %927 = vmatprep.subr.bf16.mxu0 0
      %928 = vmatpush1.bf16.msra.mxu0 %v925
      %929 = vmatprep.subr.bf16.mxu0 0
      %930 = vmatpush1.bf16.msra.mxu0 0
      %931 = vmatprep.subr.bf16.mxu0 0
      %932 = vmatpush1.bf16.msra.mxu0 0
      %933 = vmatprep.subr.bf16.mxu0 0
      %934 = vmatpush1.bf16.msra.mxu0 0
      %935 = vmatprep.subr.bf16.mxu0 0
      %936 = vmatpush1.bf16.msra.mxu0 0
      %937 = vmatprep.subr.bf16.mxu0 0
      %938 = vmatpush1.bf16.msra.mxu0 0
      %939 = vmatprep.subr.bf16.mxu0 0
      %940 = vmatpush1.bf16.msra.mxu0 0
      %941 = vmatprep.subr.bf16.mxu0 0
      %942 = vmatpush1.bf16.msra.mxu0 0
      %943 = vmatprep.subr.bf16.mxu0 0
      %944 = vmatpush1.bf16.msra.mxu0 0
      %945 = vmatprep.subr.bf16.mxu0 0
      %946 = vmatpush1.bf16.msra.mxu0 0
      %947 = vmatprep.subr.bf16.mxu0 0
      %948 = vmatpush1.bf16.msra.mxu0 0
      %949 = vmatprep.subr.bf16.mxu0 0
      %950 = vmatpush1.bf16.msra.mxu0 0
      %951 = vmatprep.subr.bf16.mxu0 0
      %952 = vmatpush1.bf16.msra.mxu0 0
      %953 = vmatprep.subr.bf16.mxu0 0
      %954 = vmatpush1.bf16.msra.mxu0 0
      %955 = vmatprep.subr.bf16.mxu0 0
      %956 = vmatpush1.bf16.msra.mxu0 0
      %957 = vmatprep.subr.bf16.mxu0 0
      %958 = vmatpush1.bf16.msra.mxu0 0
      %959 = vmatprep.mubr.bf16.mxu0 0
      %960 = vmatmul.mubr.bf16.gmra.mrb[0].mxu0 %v346
      %v961 = vpop.f32.mrb[0].mxu0
      %v962 = vadd.f32 0.0, %v961
      %v963 = vpop.f32.mrb[0].mxu0
      %v964 = vpop.f32.mrb[0].mxu0
      %v965 = vadd.f32 0.0, %v964
      %v966 = vpop.f32.mrb[0].mxu0
      %967 = vmatprep.mubr.bf16.mxu0 0
      %968 = vmatmul.mubr.bf16.gmra.mrb[0].mxu0 %v349
      %v969 = vpop.f32.mrb[0].mxu0
      %v970 = vadd.f32 0.0, %v969
      %v971 = vpop.f32.mrb[0].mxu0
      %v972 = vpop.f32.mrb[0].mxu0
      %v973 = vadd.f32 0.0, %v972
      %v974 = vpop.f32.mrb[0].mxu0
      %975 = vmatprep.mubr.bf16.mxu0 0
      %976 = vmatmul.mubr.bf16.gmra.mrb[0].mxu0 %v352
      %v977 = vpop.f32.mrb[0].mxu0
      %v978 = vadd.f32 0.0, %v977
      %v979 = vpop.f32.mrb[0].mxu0
      %v980 = vpop.f32.mrb[0].mxu0
      %v981 = vadd.f32 0.0, %v980
      %v982 = vpop.f32.mrb[0].mxu0
      %983 = vmatprep.mubr.bf16.mxu0 0
      %984 = vmatmul.mubr.bf16.gmra.mrb[0].mxu0 %v355
      %v985 = vpop.f32.mrb[0].mxu0
      %v986 = vadd.f32 0.0, %v985
      %v987 = vpop.f32.mrb[0].mxu0
      %v988 = vpop.f32.mrb[0].mxu0
      %v989 = vadd.f32 0.0, %v988
      %v990 = vpop.f32.mrb[0].mxu0
      %991 = vmatprep.mubr.bf16.mxu0 0
      %992 = vmatmul.mubr.bf16.gmra.mrb[0].mxu0 %v358
      %v993 = vpop.f32.mrb[0].mxu0
      %v994 = vadd.f32 0.0, %v993
      %v995 = vpop.f32.mrb[0].mxu0
      %v996 = vpop.f32.mrb[0].mxu0
      %v997 = vpop.f32.mrb[0].mxu0
      %998 = vdwg.mxu0
      %vm1008 = vcmask 1042432
      %v1009 = vrot.slane %v962, 5
      %v1010 = vrot.slane %v965, 5
      %v1011 = vsel %vm1008, %v1009, %v1010
      %v1012 = vrot.slane %v970, 5
      %v1013 = vsel %vm1008, %v1010, %v1012
      %v1014 = vrot.slane %v973, 5
      %v1015 = vsel %vm1008, %v1012, %v1014
      %v1016 = vrot.slane %v978, 5
      %v1017 = vsel %vm1008, %v1014, %v1016
      %v1018 = vrot.slane %v981, 5
      %v1019 = vsel %vm1008, %v1016, %v1018
      %v1020 = vrot.slane %v986, 5
      %v1021 = vsel %vm1008, %v1018, %v1020
      %v1022 = vrot.slane %v989, 5
      %v1023 = vsel %vm1008, %v1020, %v1022
      %v1024 = vrot.slane %v994, 5
      %v1025 = vsel %vm1008, %v1022, %v1024
      %v1034 = vadd.f32 %v914, %v1011
      %v1035 = vadd.f32 %v915, %v1013
      %v1036 = vadd.f32 %v916, %v1015
      %v1037 = vadd.f32 %v917, %v1017
      %v1038 = vadd.f32 %v918, %v1019
      %v1039 = vadd.f32 %v919, %v1021
      %v1040 = vadd.f32 %v920, %v1023
      %v1041 = vadd.f32 %v921, %v1025
      %s1042 = scalar_lea.vmem %s2, 24
      %v1043 = vld [vmem:[%s1042] sm:$0xf]
      %v1045 = vsel %vm360, %v1043, 0
      %1047 = vmatprep.subr.bf16.mxu0 0
      %1048 = vmatpush1.bf16.msra.mxu0 %v1045
      %1049 = vmatprep.subr.bf16.mxu0 0
      %1050 = vmatpush1.bf16.msra.mxu0 0
      %1051 = vmatprep.subr.bf16.mxu0 0
      %1052 = vmatpush1.bf16.msra.mxu0 0
      %1053 = vmatprep.subr.bf16.mxu0 0
      %1054 = vmatpush1.bf16.msra.mxu0 0
      %1055 = vmatprep.subr.bf16.mxu0 0
      %1056 = vmatpush1.bf16.msra.mxu0 0
      %1057 = vmatprep.subr.bf16.mxu0 0
      %1058 = vmatpush1.bf16.msra.mxu0 0
      %1059 = vmatprep.subr.bf16.mxu0 0
      %1060 = vmatpush1.bf16.msra.mxu0 0
      %1061 = vmatprep.subr.bf16.mxu0 0
      %1062 = vmatpush1.bf16.msra.mxu0 0
      %1063 = vmatprep.subr.bf16.mxu0 0
      %1064 = vmatpush1.bf16.msra.mxu0 0
      %1065 = vmatprep.subr.bf16.mxu0 0
      %1066 = vmatpush1.bf16.msra.mxu0 0
      %1067 = vmatprep.subr.bf16.mxu0 0
      %1068 = vmatpush1.bf16.msra.mxu0 0
      %1069 = vmatprep.subr.bf16.mxu0 0
      %1070 = vmatpush1.bf16.msra.mxu0 0
      %1071 = vmatprep.subr.bf16.mxu0 0
      %1072 = vmatpush1.bf16.msra.mxu0 0
      %1073 = vmatprep.subr.bf16.mxu0 0
      %1074 = vmatpush1.bf16.msra.mxu0 0
      %1075 = vmatprep.subr.bf16.mxu0 0
      %1076 = vmatpush1.bf16.msra.mxu0 0
      %1077 = vmatprep.subr.bf16.mxu0 0
      %1078 = vmatpush1.bf16.msra.mxu0 0
      %1079 = vmatprep.mubr.bf16.mxu0 0
      %1080 = vmatmul.mubr.bf16.gmra.mrb[0].mxu0 %v346
      %v1081 = vpop.f32.mrb[0].mxu0
      %v1082 = vadd.f32 0.0, %v1081
      %v1083 = vpop.f32.mrb[0].mxu0
      %v1084 = vpop.f32.mrb[0].mxu0
      %v1085 = vadd.f32 0.0, %v1084
      %v1086 = vpop.f32.mrb[0].mxu0
      %1087 = vmatprep.mubr.bf16.mxu0 0
      %1088 = vmatmul.mubr.bf16.gmra.mrb[0].mxu0 %v349
      %v1089 = vpop.f32.mrb[0].mxu0
      %v1090 = vadd.f32 0.0, %v1089
      %v1091 = vpop.f32.mrb[0].mxu0
      %v1092 = vpop.f32.mrb[0].mxu0
      %v1093 = vadd.f32 0.0, %v1092
      %v1094 = vpop.f32.mrb[0].mxu0
      %1095 = vmatprep.mubr.bf16.mxu0 0
      %1096 = vmatmul.mubr.bf16.gmra.mrb[0].mxu0 %v352
      %v1097 = vpop.f32.mrb[0].mxu0
      %v1098 = vadd.f32 0.0, %v1097
      %v1099 = vpop.f32.mrb[0].mxu0
      %v1100 = vpop.f32.mrb[0].mxu0
      %v1101 = vadd.f32 0.0, %v1100
      %v1102 = vpop.f32.mrb[0].mxu0
      %1103 = vmatprep.mubr.bf16.mxu0 0
      %1104 = vmatmul.mubr.bf16.gmra.mrb[0].mxu0 %v355
      %v1105 = vpop.f32.mrb[0].mxu0
      %v1106 = vadd.f32 0.0, %v1105
      %v1107 = vpop.f32.mrb[0].mxu0
      %v1108 = vpop.f32.mrb[0].mxu0
      %v1109 = vadd.f32 0.0, %v1108
      %v1110 = vpop.f32.mrb[0].mxu0
      %1111 = vmatprep.mubr.bf16.mxu0 0
      %1112 = vmatmul.mubr.bf16.gmra.mrb[0].mxu0 %v358
      %v1113 = vpop.f32.mrb[0].mxu0
      %v1114 = vadd.f32 0.0, %v1113
      %v1115 = vpop.f32.mrb[0].mxu0
      %v1116 = vpop.f32.mrb[0].mxu0
      %v1117 = vpop.f32.mrb[0].mxu0
      %1118 = vdwg.mxu0
      %vm1128 = vcmask 1041408
      %v1129 = vrot.slane %v1082, 6
      %v1130 = vrot.slane %v1085, 6
      %v1131 = vsel %vm1128, %v1129, %v1130
      %v1132 = vrot.slane %v1090, 6
      %v1133 = vsel %vm1128, %v1130, %v1132
      %v1134 = vrot.slane %v1093, 6
      %v1135 = vsel %vm1128, %v1132, %v1134
      %v1136 = vrot.slane %v1098, 6
      %v1137 = vsel %vm1128, %v1134, %v1136
      %v1138 = vrot.slane %v1101, 6
      %v1139 = vsel %vm1128, %v1136, %v1138
      %v1140 = vrot.slane %v1106, 6
      %v1141 = vsel %vm1128, %v1138, %v1140
      %v1142 = vrot.slane %v1109, 6
      %v1143 = vsel %vm1128, %v1140, %v1142
      %v1144 = vrot.slane %v1114, 6
      %v1145 = vsel %vm1128, %v1142, %v1144
      %v1154 = vadd.f32 %v1034, %v1131
      %v1155 = vadd.f32 %v1035, %v1133
      %v1156 = vadd.f32 %v1036, %v1135
      %v1157 = vadd.f32 %v1037, %v1137
      %v1158 = vadd.f32 %v1038, %v1139
      %v1159 = vadd.f32 %v1039, %v1141
      %v1160 = vadd.f32 %v1040, %v1143
      %v1161 = vadd.f32 %v1041, %v1145
      %v1162 = vld [vmem:[%s3] sm:$0x1]
      %v1164 = vlaneseq
      %v1165 = vshrl.u32 %v1164, 7
      %v1166 = vsub.s32 0, %v1165
      %v1167 = vrot.slane %v1162, %v1166
      %v1169 = vadd.f32 %v1154, %v1167
      %v1170 = vadd.f32 %v1155, %v1167
      %v1171 = vadd.f32 %v1156, %v1167
      %v1172 = vadd.f32 %v1157, %v1167
      %v1173 = vadd.f32 %v1158, %v1167
      %v1174 = vadd.f32 %v1159, %v1167
      %v1175 = vadd.f32 %v1160, %v1167
      %v1176 = vadd.f32 %v1161, %v1167
      %v1177 = vtanh.pop %v1169
      %v1178 = vtanh.pop %v1170
      %v1179 = vtanh.pop %v1171
      %v1180 = vtanh.pop %v1172
      %v1181 = vtanh.pop %v1173
      %v1182 = vtanh.pop %v1174
      %v1183 = vtanh.pop %v1175
      %v1184 = vtanh.pop %v1176
      %vm1185 = vcmask 31744
      %1186 = vst.msk [vmem:[%s305] sm:$0xff] %vm1185, %v1177
      %1187 = vst.msk [vmem:[%s305 + $0x8] sm:$0xff] %vm1185, %v1178
      %1188 = vst.msk [vmem:[%s305 + $0x10] sm:$0xff] %vm1185, %v1179
      %1189 = vst.msk [vmem:[%s305 + $0x18] sm:$0xff] %vm1185, %v1180
      %1190 = vst.msk [vmem:[%s305 + $0x20] sm:$0xff] %vm1185, %v1181
      %1191 = vst.msk [vmem:[%s305 + $0x28] sm:$0xff] %vm1185, %v1182
      %1192 = vst.msk [vmem:[%s305 + $0x30] sm:$0xff] %vm1185, %v1183
      %1193 = vst.msk [vmem:[%s305 + $0x38] sm:$0xff] %vm1185, %v1184
      %s1194 = smul.u32 8, %s20
      %p1195 = scmp.lt.s32.totalorder %s19, 1
      %s1196 = scalar_select %p1195, %s19, 1
      %p1197 = scmp.lt.s32.totalorder %s1194, 7
      %s1198 = scalar_select %p1197, %s1194, 7
      %s1199 = smul.addr %s1196, 8
      %s1200 = sadd.s32 %s1198, %s1199
      %s1201 = smul.addr %s1200, 8
      %s1202 = scalar_lea.vmem %s4, %s1201
      // Predicated region
      $region37: #{cycle_generator_forward.23} parent=35 // pred_check
        %p1203 = pneg %p149
      $region38: #{cycle_generator_forward.23} parent=35 // pred_check_branch
        %1205 = sbr.rel (%p1203) target = $region40
      $region39: #{cycle_generator_forward.23} parent=35 // pred_region
        %s1206 = smul.u32 8, %s20
      $region40: #{cycle_generator_forward.23} parent=35 // pred_fallthru
        _
    $region36: #{cycle_generator_forward.23} parent=5 // pred_fallthru
      _
    %p1207 = scmp.le.s32.totalorder 2, %s10
    // Predicated region
    $region41: #{cycle_generator_forward.23} parent=5 // pred_check
      %p1208 = pneg %p1207
    $region42: #{cycle_generator_forward.23} parent=5 // pred_check_branch
      %1210 = sbr.rel (%p1208) target = $region44
    $region43: #{cycle_generator_forward.23} parent=5 // pred_region
      %s1211 = ssub.s32 %s10, 2
      // Predicated region
      $region45: #{cycle_generator_forward.23} parent=43 // pred_check
        %p1212 = pneg %p155
      $region46: #{cycle_generator_forward.23} parent=43 // pred_check_branch
        %1214 = sbr.rel (%p1212) target = $region48
      $region47: #{cycle_generator_forward.23} parent=43 // pred_region
        %s1215 = smul.u32 8, %s22
        %p1216 = scmp.lt.s32.totalorder %s21, 1
        %s1217 = scalar_select %p1216, %s21, 1
        %p1218 = scmp.lt.s32.totalorder %s1215, 7
        %s1219 = scalar_select %p1218, %s1215, 7
        %s1220 = smul.addr %s1217, 8
        %s1221 = sadd.s32 %s1219, %s1220
        %s1222 = smul.addr %s1221, 8
        %s1223 = scalar_lea.vmem %s4, %s1222
      $region48: #{cycle_generator_forward.23} parent=43 // pred_fallthru
        _
    $region44: #{cycle_generator_forward.23} parent=5 // pred_fallthru
      _
  $region6: #{cycle_generator_forward.23} parent=0 // loop_footer
    %s14 = sadd.s32 1, %s10
  $region7: #{cycle_generator_forward.23} parent=0 // loop_footer_branch
    %9 = sbr.rel target = $region3
  $region8: #{cycle_generator_forward.23} parent=0 // loop_exit
    _

</llo_original>
